<compile_context>
chip_gen: v6e
topology: v6e:2x2x1
jax: 0.10.0
libtpu: 0.0.40
codegen_flags: <defaults>
</compile_context>

<pallas_src>
import functools

import jax
import jax.numpy as jnp
from jax.experimental import pallas as pl
from jax.experimental.pallas import tpu as pltpu

EPS_BN = 1e-5

TILE_ROWS = 512          # node-row tile (multiple of 128)
TILE_K = 512             # contraction tile for A @ x
LANE = 128               # lane-dense padding for feature/hidden/class dims


def _default_vmem_limit():
    # ~3/4 of physical VMEM: ~48 MiB on v7x (64 MiB/core), ~96 MiB on v5e/v6e.
    try:
        cap = pltpu.get_tpu_info().vmem_capacity_bytes
    except Exception:
        cap = 64 * 1024 * 1024
    return int(min(cap * 3 // 4, 100 * 1024 * 1024))


VMEM_LIMIT = _default_vmem_limit()


def _round_up(v, m):
    return ((v + m - 1) // m) * m


def _pad2(a, rows, cols):
    pr, pc = rows - a.shape[0], cols - a.shape[1]
    if pr == 0 and pc == 0:
        return a
    return jnp.pad(a, ((0, pr), (0, pc)))


def _pad1(a, n, value=0.0):
    p = n - a.shape[0]
    if p == 0:
        return a
    return jnp.pad(a, (0, p), constant_values=value)


# -----------------------------------------------------------------------------
# Kernel 1: per row-tile  z = lin2(relu(bn_folded_lin1(x)))  (+ fused hop-0 gate)
#   acc0 = sigmoid(<z, w_proj> + b_proj) * z
# Weights are full blocks (constant index_map) -> fetched once, VMEM-resident.
# BatchNorm (eval) is folded into w1/b1 at trace time; z is stored directly in
# the matmul dtype (lane-dense store).
# -----------------------------------------------------------------------------
def _mlp_kernel(x_ref, w1_ref, b1_ref, w2_ref, b2_ref, wproj_ref, bproj_ref,
                z_ref, acc_ref):
    h = jnp.dot(x_ref[...], w1_ref[...],
                preferred_element_type=jnp.float32) + b1_ref[...]   # [TM, Hp]
    h = jnp.maximum(h, 0.0)                                         # ReLU
    # TODO(synk): F.dropout with training=True (random mask) not implemented;
    # eval-mode identity is used here.
    z = jnp.dot(h, w2_ref[...],
                preferred_element_type=jnp.float32) + b2_ref[...]   # [TM, Cp]
    z_ref[...] = z.astype(z_ref.dtype)          # emit directly in matmul dtype
    # Fused hop-0 contribution of the adaptive combine.
    s = jnp.sum(z * wproj_ref[...], axis=-1, keepdims=True) + bproj_ref[...]
    acc_ref[...] = jax.nn.sigmoid(s) * z


def mlp_forward(x, w1_t, b1, w2_t, b2, w_proj, b_proj, out_dtype):
    n_pad, f_pad = x.shape
    c_pad = w2_t.shape[1]
    tm = TILE_ROWS
    grid = (n_pad // tm,)

    def const(a):
        return pl.BlockSpec(a.shape, lambda i: (0,) * a.ndim)

    def row():
        return pl.BlockSpec((tm, c_pad), lambda i: (i, 0))

    return pl.pallas_call(
        _mlp_kernel,
        out_shape=(jax.ShapeDtypeStruct((n_pad, c_pad), out_dtype),
                   jax.ShapeDtypeStruct((n_pad, c_pad), jnp.float32)),
        grid=grid,
        in_specs=[pl.BlockSpec((tm, f_pad), lambda i: (i, 0)),
                  const(w1_t), const(b1), const(w2_t), const(b2),
                  const(w_proj), const(b_proj)],
        out_specs=(row(), row()),
        compiler_params=pltpu.CompilerParams(
            dimension_semantics=("parallel",),
            vmem_limit_bytes=VMEM_LIMIT),
    )(x, w1_t, b1, w2_t, b2, w_proj, b_proj)


# -----------------------------------------------------------------------------
# Kernel 2: fused K-hop propagation + adaptive combine + log-softmax.
#   grid = (K, row tiles, k tiles), all "arbitrary" (hop h+1 depends on every
#   row tile of hop h, which lives in the VMEM ping-pong scratch).
#   For each hop h, row tile i:
#       p = sum_k A[i, k] @ x_h[k]                 (MXU, f32 accumulator)
#       xbuf[(h)%2][i]  = p                        (next hop's input, VMEM only)
#       acc[i]         += sigmoid(<p, w_proj>+b) * p
#   On the last hop's last k step the masked log-softmax of acc[i] is written
#   to HBM. Only the A tiles stream from HBM; z/acc0/w_proj are fetched once.
# -----------------------------------------------------------------------------
def _prop_kernel(adj_ref, z_ref, acc0_ref, wproj_ref, bproj_ref, out_ref,
                 xbuf, acc_sc, mm_sc, *, num_valid):
    h = pl.program_id(0)          # hop index (0 .. K-1)
    i = pl.program_id(1)          # row tile
    k = pl.program_id(2)          # contraction tile
    nh = pl.num_programs(0)
    nk = pl.num_programs(2)
    tm, _ = mm_sc.shape
    tk = adj_ref.shape[1]

    @pl.when(k == 0)
    def _():
        mm_sc[...] = jnp.zeros_like(mm_sc)

    kstart = pl.multiple_of(k * tk, tk)

    # Hop 0 reads the MLP output (VMEM-resident input); hop > 0 reads the
    # previous hop's activations from the ping-pong scratch buffer.
    @pl.when(h == 0)
    def _():
        mm_sc[...] += jnp.dot(adj_ref[...], z_ref[pl.ds(kstart, tk), :],
                              preferred_element_type=jnp.float32)

    @pl.when(h > 0)
    def _():
        slot_in = (h + 1) % 2
        mm_sc[...] += jnp.dot(adj_ref[...],
                              xbuf[slot_in, pl.ds(kstart, tk), :],
                              preferred_element_type=jnp.float32)

    @pl.when(k == nk - 1)
    def _():
        p = mm_sc[...]                                      # [tm, Cp] f32
        rstart = pl.multiple_of(i * tm, tm)
        slot_out = h % 2
        xbuf[slot_out, pl.ds(rstart, tm), :] = p.astype(xbuf.dtype)

        # Adaptive combine: acc += sigmoid(<p, w_proj> + b_proj) * p
        s = jnp.sum(p * wproj_ref[...], axis=-1, keepdims=True) + bproj_ref[...]
        gp = jax.nn.sigmoid(s) * p

        @pl.when(h == 0)
        def _():
            acc_sc[pl.ds(rstart, tm), :] = acc0_ref[pl.ds(rstart, tm), :] + gp

        @pl.when(h > 0)
        def _():
            acc_sc[pl.ds(rstart, tm), :] = acc_sc[pl.ds(rstart, tm), :] + gp

        # Fused log-softmax over the real class lanes on the final hop: the
        # exp/log land on the EUP slot, the row-reduce on the XLU slot, both
        # otherwise idle in this mem-bound epilogue.
        @pl.when(h == nh - 1)
        def _():
            a = acc_sc[pl.ds(rstart, tm), :]
            lane = jax.lax.broadcasted_iota(jnp.int32, a.shape, 1)
            mask = lane < num_valid
            m = jnp.max(jnp.where(mask, a, -jnp.inf), axis=-1, keepdims=True)
            e = jnp.where(mask, jnp.exp(a - m), 0.0)
            lse = jnp.log(jnp.sum(e, axis=-1, keepdims=True)) + m
            out_ref[...] = a - lse


def prop_forward(adj, z, acc0, w_proj, b_proj, *, K, num_valid):
    n_pad = adj.shape[0]
    c_pad = z.shape[1]
    tm, tk = TILE_ROWS, TILE_K
    grid = (K, n_pad // tm, n_pad // tk)

    def const(a):
        return pl.BlockSpec(a.shape, lambda h, i, k: (0,) * a.ndim)

    return pl.pallas_call(
        functools.partial(_prop_kernel, num_valid=num_valid),
        out_shape=jax.ShapeDtypeStruct((n_pad, c_pad), jnp.float32),
        grid=grid,
        in_specs=[
            # A tile: the dominant HBM stream (double-buffered by Pallas;
            # pipeline_mode=pl.Buffered(3) is a further knob to sweep).
            pl.BlockSpec((tm, tk), lambda h, i, k: (i, k)),
            const(z), const(acc0), const(w_proj), const(b_proj),
        ],
        out_specs=pl.BlockSpec((tm, c_pad), lambda h, i, k: (i, 0)),
        scratch_shapes=[
            pltpu.VMEM((2, n_pad, c_pad), z.dtype),     # hop ping-pong buffers
            pltpu.VMEM((n_pad, c_pad), jnp.float32),    # gated accumulator
            pltpu.VMEM((tm, c_pad), jnp.float32),       # row-tile matmul acc
        ],
        compiler_params=pltpu.CompilerParams(
            # Hops and row tiles must run sequentially on one core: hop h+1
            # consumes every row tile of hop h from the VMEM scratch buffers.
            dimension_semantics=("arbitrary", "arbitrary", "arbitrary"),
            vmem_limit_bytes=VMEM_LIMIT),
    )(adj, z, acc0, w_proj, b_proj)


# -----------------------------------------------------------------------------
# Full Net forward (JAX glue: padding, BN folding, pre-transposed weights)
# -----------------------------------------------------------------------------
@functools.partial(jax.jit, static_argnames=("K", "matmul_dtype"))
def net_forward(x, adj, params, K, matmul_dtype=jnp.bfloat16):
    assert K >= 1
    n, f = x.shape
    h_dim = params["w1"].shape[0]
    c = params["w2"].shape[0]

    n_pad = _round_up(n, max(TILE_ROWS, TILE_K))
    f_pad = _round_up(f, LANE)
    h_pad = _round_up(h_dim, LANE)
    c_pad = _round_up(c, LANE)

    # Resident-VMEM feasibility of the fused propagation kernel. (The dense
    # A matrix itself already caps N far below real ogbn-arxiv scale.)
    itemsize = jnp.dtype(matmul_dtype).itemsize
    resident = n_pad * c_pad * (2 * itemsize + 4)
    assert resident < VMEM_LIMIT // 2, (
        "fused propagation kernel requires x/acc VMEM residency; graph too big")
    # TODO(synk): per-hop HBM-pipelined fallback for N beyond VMEM residency.

    x_p = _pad2(x, n_pad, f_pad)
    adj_p = _pad2(adj, n_pad, n_pad).astype(matmul_dtype)

    # Fold BatchNorm1d (eval, running stats) into lin1.
    scale = params["gamma"] * jax.lax.rsqrt(params["rvar"] + EPS_BN)      # [H]
    w1_eff = params["w1"] * scale[:, None]                                # [H, F]
    b1_eff = (params["b1"] - params["rmean"]) * scale + params["beta"]    # [H]

    # Pre-transpose weights once (no in-kernel transposes).
    w1_t = _pad2(w1_eff.T, f_pad, h_pad)                       # [Fp, Hp]
    w2_t = _pad2(params["w2"].T, h_pad, c_pad)                 # [Hp, Cp]
    b1 = _pad1(b1_eff, h_pad).reshape(1, -1)
    b2 = _pad1(params["b2"], c_pad).reshape(1, -1)
    w_proj = _pad1(params["w_proj"][0], c_pad).reshape(1, -1)  # zero-padded lanes
    b_proj = params["b_proj"].reshape(1, 1)

    z, acc0 = mlp_forward(x_p, w1_t, b1, w2_t, b2, w_proj, b_proj,
                          out_dtype=matmul_dtype)
    out = prop_forward(adj_p, z, acc0, w_proj, b_proj, K=K, num_valid=c)
    return out[:n, :c]


# -----------------------------------------------------------------------------
# Pure-JAX reference for validation
# -----------------------------------------------------------------------------
def net_reference(x, adj, params, K):
    P = jax.lax.Precision.HIGHEST
    h = jnp.dot(x, params["w1"].T, precision=P) + params["b1"]
    h = (h - params["rmean"]) / jnp.sqrt(params["rvar"] + EPS_BN)
    h = h * params["gamma"] + params["beta"]
    h = jnp.maximum(h, 0.0)
    z = jnp.dot(h, params["w2"].T, precision=P) + params["b2"]
    preds = [z]
    cur = z
    for _ in range(K):
        cur = jnp.dot(adj, cur, precision=P)
        preds.append(cur)
    pps = jnp.stack(preds, axis=1)                               # [N, K+1, C]
    rs = jax.nn.sigmoid(
        jnp.einsum("nkc,c->nk", pps, params["w_proj"][0], precision=P)
        + params["b_proj"][0])
    out = jnp.einsum("nk,nkc->nc", rs, pps, precision=P)
    return jax.nn.log_softmax(out, axis=1)


if __name__ == "__main__":
    # Small synthetic shapes consistent with Net(num_features, num_classes, hidden, K)
    N = 500        # nodes        (pads to 512)
    F = 100        # num_features (pads to 128)
    H = 64         # hidden       (pads to 128)
    C = 40         # num_classes  (ogbn-arxiv-like; pads to 128)
    K = 3          # propagation hops
    E = 4000       # edges

    key = jax.random.PRNGKey(0)
    keys = jax.random.split(key, 12)

    x = jax.random.normal(keys[0], (N, F), dtype=jnp.float32)

    # Random directed edges + normalization-like edge weights (row sums ~1).
    src = jax.random.randint(keys[1], (E,), 0, N)
    dst = jax.random.randint(keys[2], (E,), 0, N)
    norm = jax.random.uniform(keys[3], (E,), jnp.float32, 0.05, 0.2)
    # Densified propagation matrix: out[i] = sum_{e: dst==i} norm[e] * x[src[e]]
    adj = jnp.zeros((N, N), dtype=jnp.float32).at[dst, src].add(norm)

    def lin_init(k, out_dim, in_dim):
        bound = 1.0 / jnp.sqrt(jnp.float32(in_dim))
        kw, kb = jax.random.split(k)
        w = jax.random.uniform(kw, (out_dim, in_dim), jnp.float32, -bound, bound)
        b = jax.random.uniform(kb, (out_dim,), jnp.float32, -bound, bound)
        return w, b

    w1, b1 = lin_init(keys[4], H, F)
    w2, b2 = lin_init(keys[5], C, H)
    w_proj, b_proj = lin_init(keys[6], 1, C)

    params = dict(
        w1=w1, b1=b1, w2=w2, b2=b2, w_proj=w_proj, b_proj=b_proj,
        gamma=1.0 + 0.1 * jax.random.normal(keys[7], (H,), jnp.float32),
        beta=0.1 * jax.random.normal(keys[8], (H,), jnp.float32),
        rmean=0.1 * jax.random.normal(keys[9], (H,), jnp.float32),
        rvar=jax.random.uniform(keys[10], (H,), jnp.float32, 0.5, 1.5),
    )

    ref = net_reference(x, adj, params, K)

    # f32 propagation path: tight tolerance vs reference.
    out_f32 = net_forward(x, adj, params, K=K, matmul_dtype=jnp.float32)
    out_f32 = jax.block_until_ready(out_f32)
    assert out_f32.shape == (N, C)
    assert jnp.allclose(out_f32, ref, rtol=5e-4, atol=5e-4), \
        "f32 mismatch vs reference"

    # Default bf16 A / hop stream (f32 MXU accumulation): looser tolerance.
    out_bf16 = net_forward(x, adj, params, K=K)
    out_bf16 = jax.block_until_ready(out_bf16)
    assert out_bf16.shape == (N, C)
    assert jnp.all(jnp.isfinite(out_bf16))
    assert jnp.allclose(out_bf16, ref, rtol=5e-2, atol=2.5e-1), \
        "bf16 mismatch vs reference"

    print("KERNEL_OK")
</pallas_src>

<mosaic_0001>
module attributes {stable_mosaic.version = 11 : i64} {
  func.func @_mlp_kernel(%arg0: i32, %arg1: memref<512x128xf32, #tpu.memory_space<vmem>>, %arg2: memref<128x128xf32, #tpu.memory_space<vmem>>, %arg3: memref<1x128xf32, #tpu.memory_space<vmem>>, %arg4: memref<128x128xf32, #tpu.memory_space<vmem>>, %arg5: memref<1x128xf32, #tpu.memory_space<vmem>>, %arg6: memref<1x128xf32, #tpu.memory_space<vmem>>, %arg7: memref<1x1xf32, #tpu.memory_space<vmem>>, %arg8: memref<512x128xf32, #tpu.memory_space<vmem>>, %arg9: memref<512x128xf32, #tpu.memory_space<vmem>>) attributes {dimension_semantics = [#tpu.dimension_semantics<parallel>], iteration_bounds = array<i64: 1>, scalar_prefetch = 0 : i64, scratch_operands = 0 : i64, tpu.core_type = #tpu.core_type<tc>, window_params = [{transform_indices = @transform_0, window_bounds = array<i64: 512, 128>}, {pipeline_mode = #tpu.pipeline_mode<synchronous>, transform_indices = @transform_1, window_bounds = array<i64: 128, 128>}, {pipeline_mode = #tpu.pipeline_mode<synchronous>, transform_indices = @transform_2, window_bounds = array<i64: 1, 128>}, {pipeline_mode = #tpu.pipeline_mode<synchronous>, transform_indices = @transform_3, window_bounds = array<i64: 128, 128>}, {pipeline_mode = #tpu.pipeline_mode<synchronous>, transform_indices = @transform_4, window_bounds = array<i64: 1, 128>}, {pipeline_mode = #tpu.pipeline_mode<synchronous>, transform_indices = @transform_5, window_bounds = array<i64: 1, 128>}, {pipeline_mode = #tpu.pipeline_mode<synchronous>, transform_indices = @transform_6, window_bounds = array<i64: 1, 1>}, {transform_indices = @transform_7, window_bounds = array<i64: 512, 128>}, {transform_indices = @transform_8, window_bounds = array<i64: 512, 128>}]} {
    %c0 = arith.constant 0 : index
    %c0_0 = arith.constant 0 : index
    %0 = vector.load %arg1[%c0, %c0_0] : memref<512x128xf32, #tpu.memory_space<vmem>>, vector<512x128xf32>
    %c0_1 = arith.constant 0 : index
    %c0_2 = arith.constant 0 : index
    %1 = vector.load %arg2[%c0_1, %c0_2] : memref<128x128xf32, #tpu.memory_space<vmem>>, vector<128x128xf32>
    %cst = arith.constant dense<0.000000e+00> : vector<512x128xf32>
    %2 = tpu.matmul %0, %1, %cst {dimension_numbers = #tpu.dot_dimension_numbers<[1], [0], [0], [1], [0, 0, 1, 1], [], []>} : vector<512x128xf32>, vector<128x128xf32>, vector<512x128xf32> -> vector<512x128xf32>
    %c0_3 = arith.constant 0 : index
    %c0_4 = arith.constant 0 : index
    %3 = vector.load %arg3[%c0_3, %c0_4] : memref<1x128xf32, #tpu.memory_space<vmem>>, vector<1x128xf32>
    %4 = vector.broadcast %3 : vector<1x128xf32> to vector<512x128xf32>
    %5 = arith.addf %2, %4 : vector<512x128xf32>
    %cst_5 = arith.constant 0.000000e+00 : f32
    %6 = vector.broadcast %cst_5 : f32 to vector<512x128xf32>
    %7 = arith.maximumf %5, %6 : vector<512x128xf32>
    %c0_6 = arith.constant 0 : index
    %c0_7 = arith.constant 0 : index
    %8 = vector.load %arg4[%c0_6, %c0_7] : memref<128x128xf32, #tpu.memory_space<vmem>>, vector<128x128xf32>
    %cst_8 = arith.constant dense<0.000000e+00> : vector<512x128xf32>
    %9 = tpu.matmul %7, %8, %cst_8 {dimension_numbers = #tpu.dot_dimension_numbers<[1], [0], [0], [1], [0, 0, 1, 1], [], []>} : vector<512x128xf32>, vector<128x128xf32>, vector<512x128xf32> -> vector<512x128xf32>
    %c0_9 = arith.constant 0 : index
    %c0_10 = arith.constant 0 : index
    %10 = vector.load %arg5[%c0_9, %c0_10] : memref<1x128xf32, #tpu.memory_space<vmem>>, vector<1x128xf32>
    %11 = vector.broadcast %10 : vector<1x128xf32> to vector<512x128xf32>
    %12 = arith.addf %9, %11 : vector<512x128xf32>
    %c0_11 = arith.constant 0 : index
    %c0_12 = arith.constant 0 : index
    %13 = vector.load %arg8[%c0_11, %c0_12] : memref<512x128xf32, #tpu.memory_space<vmem>>, vector<512x128xf32>
    tpu.vector_store %arg8[%c0_11, %c0_12], %12 {strides = array<i32>} : memref<512x128xf32, #tpu.memory_space<vmem>>, vector<512x128xf32>,
    %c0_13 = arith.constant 0 : index
    %c0_14 = arith.constant 0 : index
    %14 = vector.load %arg6[%c0_13, %c0_14] : memref<1x128xf32, #tpu.memory_space<vmem>>, vector<1x128xf32>
    %15 = vector.broadcast %14 : vector<1x128xf32> to vector<512x128xf32>
    %16 = arith.mulf %12, %15 : vector<512x128xf32>
    %cst_15 = arith.constant dense<0.000000e+00> : vector<512xf32>
    %17 = vector.multi_reduction <add>, %16, %cst_15 [1] : vector<512x128xf32> to vector<512xf32>
    %18 = vector.shape_cast %17 : vector<512xf32> to vector<512x1xf32>
    %c0_16 = arith.constant 0 : index
    %c0_17 = arith.constant 0 : index
    %19 = vector.load %arg7[%c0_16, %c0_17] : memref<1x1xf32, #tpu.memory_space<vmem>>, vector<1x1xf32>
    %20 = vector.broadcast %19 : vector<1x1xf32> to vector<512x1xf32>
    %21 = arith.addf %18, %20 : vector<512x1xf32>
    %22 = arith.negf %21 : vector<512x1xf32>
    %23 = math.exp %22 : vector<512x1xf32>
    %cst_18 = arith.constant 1.000000e+00 : f32
    %24 = vector.broadcast %cst_18 : f32 to vector<512x1xf32>
    %25 = arith.addf %24, %23 : vector<512x1xf32>
    %26 = arith.divf %24, %25 : vector<512x1xf32>
    %27 = vector.broadcast %26 : vector<512x1xf32> to vector<512x128xf32>
    %28 = arith.mulf %27, %12 : vector<512x128xf32>
    %c0_19 = arith.constant 0 : index
    %c0_20 = arith.constant 0 : index
    %29 = vector.load %arg9[%c0_19, %c0_20] : memref<512x128xf32, #tpu.memory_space<vmem>>, vector<512x128xf32>
    tpu.vector_store %arg9[%c0_19, %c0_20], %28 {strides = array<i32>} : memref<512x128xf32, #tpu.memory_space<vmem>>, vector<512x128xf32>,
    return
  }
  func.func @transform_0(%arg0: i32) -> (i32, i32) {
    %c0_i32 = arith.constant 0 : i32
    %c0_i32_0 = arith.constant 0 : i32
    return %arg0, %c0_i32 : i32, i32
  }
  func.func @transform_1(%arg0: i32) -> (i32, i32) {
    %c0_i32 = arith.constant 0 : i32
    %c0_i32_0 = arith.constant 0 : i32
    %c0_i32_1 = arith.constant 0 : i32
    return %c0_i32, %c0_i32_0 : i32, i32
  }
  func.func @transform_2(%arg0: i32) -> (i32, i32) {
    %c0_i32 = arith.constant 0 : i32
    %c0_i32_0 = arith.constant 0 : i32
    %c0_i32_1 = arith.constant 0 : i32
    return %c0_i32, %c0_i32_0 : i32, i32
  }
  func.func @transform_3(%arg0: i32) -> (i32, i32) {
    %c0_i32 = arith.constant 0 : i32
    %c0_i32_0 = arith.constant 0 : i32
    %c0_i32_1 = arith.constant 0 : i32
    return %c0_i32, %c0_i32_0 : i32, i32
  }
  func.func @transform_4(%arg0: i32) -> (i32, i32) {
    %c0_i32 = arith.constant 0 : i32
    %c0_i32_0 = arith.constant 0 : i32
    %c0_i32_1 = arith.constant 0 : i32
    return %c0_i32, %c0_i32_0 : i32, i32
  }
  func.func @transform_5(%arg0: i32) -> (i32, i32) {
    %c0_i32 = arith.constant 0 : i32
    %c0_i32_0 = arith.constant 0 : i32
    %c0_i32_1 = arith.constant 0 : i32
    return %c0_i32, %c0_i32_0 : i32, i32
  }
  func.func @transform_6(%arg0: i32) -> (i32, i32) {
    %c0_i32 = arith.constant 0 : i32
    %c0_i32_0 = arith.constant 0 : i32
    %c0_i32_1 = arith.constant 0 : i32
    return %c0_i32, %c0_i32_0 : i32, i32
  }
  func.func @transform_7(%arg0: i32) -> (i32, i32) {
    %c0_i32 = arith.constant 0 : i32
    %c0_i32_0 = arith.constant 0 : i32
    return %arg0, %c0_i32 : i32, i32
  }
  func.func @transform_8(%arg0: i32) -> (i32, i32) {
    %c0_i32 = arith.constant 0 : i32
    %c0_i32_0 = arith.constant 0 : i32
    return %arg0, %c0_i32 : i32, i32
  }
}

module attributes {stable_mosaic.version = 11 : i64} {
  func.func @_prop_kernel(%arg0: i32, %arg1: i32, %arg2: i32, %arg3: memref<512x512xf32, #tpu.memory_space<vmem>>, %arg4: memref<512x128xf32, #tpu.memory_space<vmem>>, %arg5: memref<512x128xf32, #tpu.memory_space<vmem>>, %arg6: memref<1x128xf32, #tpu.memory_space<vmem>>, %arg7: memref<1x1xf32, #tpu.memory_space<vmem>>, %arg8: memref<512x128xf32, #tpu.memory_space<vmem>>, %arg9: memref<2x512x128xf32, #tpu.memory_space<vmem>>, %arg10: memref<512x128xf32, #tpu.memory_space<vmem>>, %arg11: memref<512x128xf32, #tpu.memory_space<vmem>>) attributes {dimension_semantics = [#tpu.dimension_semantics<arbitrary>, #tpu.dimension_semantics<arbitrary>, #tpu.dimension_semantics<arbitrary>], iteration_bounds = array<i64: 3, 1, 1>, scalar_prefetch = 0 : i64, scratch_operands = 3 : i64, tpu.core_type = #tpu.core_type<tc>, window_params = [{transform_indices = @transform_0, window_bounds = array<i64: 512, 512>}, {pipeline_mode = #tpu.pipeline_mode<synchronous>, transform_indices = @transform_1, window_bounds = array<i64: 512, 128>}, {pipeline_mode = #tpu.pipeline_mode<synchronous>, transform_indices = @transform_2, window_bounds = array<i64: 512, 128>}, {pipeline_mode = #tpu.pipeline_mode<synchronous>, transform_indices = @transform_3, window_bounds = array<i64: 1, 128>}, {pipeline_mode = #tpu.pipeline_mode<synchronous>, transform_indices = @transform_4, window_bounds = array<i64: 1, 1>}, {transform_indices = @transform_5, window_bounds = array<i64: 512, 128>}]} {
    %c0_i32 = arith.constant 0 : i32
    %0 = arith.cmpi eq, %arg2, %c0_i32 : i32
    %1 = arith.extui %0 : i1 to i32
    %c0_i32_0 = arith.constant 0 : i32
    %2 = arith.cmpi ne, %1, %c0_i32_0 : i32
    scf.if %2 {
      %cst = arith.constant 0.000000e+00 : f32
      %14 = vector.broadcast %cst : f32 to vector<512x128xf32>
      %c0 = arith.constant 0 : index
      %c0_7 = arith.constant 0 : index
      %15 = vector.load %arg11[%c0, %c0_7] : memref<512x128xf32, #tpu.memory_space<vmem>>, vector<512x128xf32>
      tpu.vector_store %arg11[%c0, %c0_7], %14 {strides = array<i32>} : memref<512x128xf32, #tpu.memory_space<vmem>>, vector<512x128xf32>,
    } else {
    }
    %c512_i32 = arith.constant 512 : i32
    %3 = arith.muli %arg2, %c512_i32 : i32
    %4 = tpu.assume_multiple %3, 512 : i32
    %c0_i32_1 = arith.constant 0 : i32
    %5 = arith.cmpi eq, %arg0, %c0_i32_1 : i32
    %6 = arith.extui %5 : i1 to i32
    %c0_i32_2 = arith.constant 0 : i32
    %7 = arith.cmpi ne, %6, %c0_i32_2 : i32
    scf.if %7 {
      %c0 = arith.constant 0 : index
      %c0_7 = arith.constant 0 : index
      %14 = vector.load %arg11[%c0, %c0_7] : memref<512x128xf32, #tpu.memory_space<vmem>>, vector<512x128xf32>
      %c0_8 = arith.constant 0 : index
      %c0_9 = arith.constant 0 : index
      %15 = vector.load %arg3[%c0_8, %c0_9] : memref<512x512xf32, #tpu.memory_space<vmem>>, vector<512x512xf32>
      %16 = arith.index_cast %4 : i32 to index
      %c0_10 = arith.constant 0 : index
      %17 = vector.load %arg4[%16, %c0_10] : memref<512x128xf32, #tpu.memory_space<vmem>>, vector<512x128xf32>
      %cst = arith.constant dense<0.000000e+00> : vector<512x128xf32>
      %18 = tpu.matmul %15, %17, %cst {dimension_numbers = #tpu.dot_dimension_numbers<[1], [0], [0], [1], [0, 0, 1, 1], [], []>} : vector<512x512xf32>, vector<512x128xf32>, vector<512x128xf32> -> vector<512x128xf32>
      %19 = arith.addf %14, %18 : vector<512x128xf32>
      %c0_11 = arith.constant 0 : index
      %c0_12 = arith.constant 0 : index
      %20 = vector.load %arg11[%c0_11, %c0_12] : memref<512x128xf32, #tpu.memory_space<vmem>>, vector<512x128xf32>
      tpu.vector_store %arg11[%c0_11, %c0_12], %19 {strides = array<i32>} : memref<512x128xf32, #tpu.memory_space<vmem>>, vector<512x128xf32>,
    } else {
    }
    %c0_i32_3 = arith.constant 0 : i32
    %8 = arith.cmpi sgt, %arg0, %c0_i32_3 : i32
    %9 = arith.extui %8 : i1 to i32
    %c0_i32_4 = arith.constant 0 : i32
    %10 = arith.cmpi ne, %9, %c0_i32_4 : i32
    scf.if %10 {
      %c1_i32 = arith.constant 1 : i32
      %14 = arith.addi %arg0, %c1_i32 : i32
      %c2_i32 = arith.constant 2 : i32
      %c0_i32_7 = arith.constant 0 : i32
      %15 = arith.cmpi eq, %c2_i32, %c0_i32_7 : i32
      %c1_i32_8 = arith.constant 1 : i32
      %16 = arith.select %15, %c1_i32_8, %c2_i32 : i32
      %17 = arith.remsi %14, %16 : i32
      %c0_i32_9 = arith.constant 0 : i32
      %18 = arith.cmpi ne, %17, %c0_i32_9 : i32
      %c0_i32_10 = arith.constant 0 : i32
      %19 = arith.cmpi slt, %17, %c0_i32_10 : i32
      %c0_i32_11 = arith.constant 0 : i32
      %20 = arith.cmpi slt, %16, %c0_i32_11 : i32
      %21 = arith.xori %19, %20 : i1
      %22 = arith.andi %21, %18 : i1
      %23 = arith.addi %17, %16 : i32
      %24 = arith.select %22, %23, %17 : i32
      %c0 = arith.constant 0 : index
      %c0_12 = arith.constant 0 : index
      %25 = vector.load %arg11[%c0, %c0_12] : memref<512x128xf32, #tpu.memory_space<vmem>>, vector<512x128xf32>
      %c0_13 = arith.constant 0 : index
      %c0_14 = arith.constant 0 : index
      %26 = vector.load %arg3[%c0_13, %c0_14] : memref<512x512xf32, #tpu.memory_space<vmem>>, vector<512x512xf32>
      %27 = arith.index_cast %24 : i32 to index
      %28 = arith.index_cast %4 : i32 to index
      %c0_15 = arith.constant 0 : index
      %29 = vector.load %arg9[%27, %28, %c0_15] : memref<2x512x128xf32, #tpu.memory_space<vmem>>, vector<1x512x128xf32>
      %30 = vector.shape_cast %29 : vector<1x512x128xf32> to vector<512x128xf32>
      %cst = arith.constant dense<0.000000e+00> : vector<512x128xf32>
      %31 = tpu.matmul %26, %30, %cst {dimension_numbers = #tpu.dot_dimension_numbers<[1], [0], [0], [1], [0, 0, 1, 1], [], []>} : vector<512x512xf32>, vector<512x128xf32>, vector<512x128xf32> -> vector<512x128xf32>
      %32 = arith.addf %25, %31 : vector<512x128xf32>
      %c0_16 = arith.constant 0 : index
      %c0_17 = arith.constant 0 : index
      %33 = vector.load %arg11[%c0_16, %c0_17] : memref<512x128xf32, #tpu.memory_space<vmem>>, vector<512x128xf32>
      tpu.vector_store %arg11[%c0_16, %c0_17], %32 {strides = array<i32>} : memref<512x128xf32, #tpu.memory_space<vmem>>, vector<512x128xf32>,
    } else {
    }
    %c0_i32_5 = arith.constant 0 : i32
    %11 = arith.cmpi eq, %arg2, %c0_i32_5 : i32
    %12 = arith.extui %11 : i1 to i32
    %c0_i32_6 = arith.constant 0 : i32
    %13 = arith.cmpi ne, %12, %c0_i32_6 : i32
    scf.if %13 {
      %c0 = arith.constant 0 : index
      %c0_7 = arith.constant 0 : index
      %14 = vector.load %arg11[%c0, %c0_7] : memref<512x128xf32, #tpu.memory_space<vmem>>, vector<512x128xf32>
      %c512_i32_8 = arith.constant 512 : i32
      %15 = arith.muli %arg1, %c512_i32_8 : i32
      %16 = tpu.assume_multiple %15, 512 : i32
      %c2_i32 = arith.constant 2 : i32
      %c0_i32_9 = arith.constant 0 : i32
      %17 = arith.cmpi eq, %c2_i32, %c0_i32_9 : i32
      %c1_i32 = arith.constant 1 : i32
      %18 = arith.select %17, %c1_i32, %c2_i32 : i32
      %19 = arith.remsi %arg0, %18 : i32
      %c0_i32_10 = arith.constant 0 : i32
      %20 = arith.cmpi ne, %19, %c0_i32_10 : i32
      %c0_i32_11 = arith.constant 0 : i32
      %21 = arith.cmpi slt, %19, %c0_i32_11 : i32
      %c0_i32_12 = arith.constant 0 : i32
      %22 = arith.cmpi slt, %18, %c0_i32_12 : i32
      %23 = arith.xori %21, %22 : i1
      %24 = arith.andi %23, %20 : i1
      %25 = arith.addi %19, %18 : i32
      %26 = arith.select %24, %25, %19 : i32
      %27 = arith.index_cast %26 : i32 to index
      %28 = arith.index_cast %16 : i32 to index
      %c0_13 = arith.constant 0 : index
      %29 = vector.load %arg9[%27, %28, %c0_13] : memref<2x512x128xf32, #tpu.memory_space<vmem>>, vector<1x512x128xf32>
      %30 = vector.shape_cast %29 : vector<1x512x128xf32> to vector<512x128xf32>
      %31 = vector.shape_cast %14 : vector<512x128xf32> to vector<1x512x128xf32>
      tpu.vector_store %arg9[%27, %28, %c0_13], %31 {strides = array<i32>} : memref<2x512x128xf32, #tpu.memory_space<vmem>>, vector<1x512x128xf32>,
      %c0_14 = arith.constant 0 : index
      %c0_15 = arith.constant 0 : index
      %32 = vector.load %arg6[%c0_14, %c0_15] : memref<1x128xf32, #tpu.memory_space<vmem>>, vector<1x128xf32>
      %33 = vector.broadcast %32 : vector<1x128xf32> to vector<512x128xf32>
      %34 = arith.mulf %14, %33 : vector<512x128xf32>
      %cst = arith.constant dense<0.000000e+00> : vector<512xf32>
      %35 = vector.multi_reduction <add>, %34, %cst [1] : vector<512x128xf32> to vector<512xf32>
      %36 = vector.shape_cast %35 : vector<512xf32> to vector<512x1xf32>
      %c0_16 = arith.constant 0 : index
      %c0_17 = arith.constant 0 : index
      %37 = vector.load %arg7[%c0_16, %c0_17] : memref<1x1xf32, #tpu.memory_space<vmem>>, vector<1x1xf32>
      %38 = vector.broadcast %37 : vector<1x1xf32> to vector<512x1xf32>
      %39 = arith.addf %36, %38 : vector<512x1xf32>
      %40 = arith.negf %39 : vector<512x1xf32>
      %41 = math.exp %40 : vector<512x1xf32>
      %cst_18 = arith.constant 1.000000e+00 : f32
      %42 = vector.broadcast %cst_18 : f32 to vector<512x1xf32>
      %43 = arith.addf %42, %41 : vector<512x1xf32>
      %44 = arith.divf %42, %43 : vector<512x1xf32>
      %45 = vector.broadcast %44 : vector<512x1xf32> to vector<512x128xf32>
      %46 = arith.mulf %45, %14 : vector<512x128xf32>
      %c0_i32_19 = arith.constant 0 : i32
      %47 = arith.cmpi eq, %arg0, %c0_i32_19 : i32
      %48 = arith.extui %47 : i1 to i32
      %c0_i32_20 = arith.constant 0 : i32
      %49 = arith.cmpi ne, %48, %c0_i32_20 : i32
      scf.if %49 {
        %56 = arith.index_cast %16 : i32 to index
        %c0_25 = arith.constant 0 : index
        %57 = vector.load %arg5[%56, %c0_25] : memref<512x128xf32, #tpu.memory_space<vmem>>, vector<512x128xf32>
        %58 = arith.addf %57, %46 : vector<512x128xf32>
        %59 = arith.index_cast %16 : i32 to index
        %c0_26 = arith.constant 0 : index
        %60 = vector.load %arg10[%59, %c0_26] : memref<512x128xf32, #tpu.memory_space<vmem>>, vector<512x128xf32>
        tpu.vector_store %arg10[%59, %c0_26], %58 {strides = array<i32>} : memref<512x128xf32, #tpu.memory_space<vmem>>, vector<512x128xf32>,
      } else {
      }
      %c0_i32_21 = arith.constant 0 : i32
      %50 = arith.cmpi sgt, %arg0, %c0_i32_21 : i32
      %51 = arith.extui %50 : i1 to i32
      %c0_i32_22 = arith.constant 0 : i32
      %52 = arith.cmpi ne, %51, %c0_i32_22 : i32
      scf.if %52 {
        %56 = arith.index_cast %16 : i32 to index
        %c0_25 = arith.constant 0 : index
        %57 = vector.load %arg10[%56, %c0_25] : memref<512x128xf32, #tpu.memory_space<vmem>>, vector<512x128xf32>
        %58 = arith.addf %57, %46 : vector<512x128xf32>
        %59 = arith.index_cast %16 : i32 to index
        %c0_26 = arith.constant 0 : index
        %60 = vector.load %arg10[%59, %c0_26] : memref<512x128xf32, #tpu.memory_space<vmem>>, vector<512x128xf32>
        tpu.vector_store %arg10[%59, %c0_26], %58 {strides = array<i32>} : memref<512x128xf32, #tpu.memory_space<vmem>>, vector<512x128xf32>,
      } else {
      }
      %c2_i32_23 = arith.constant 2 : i32
      %53 = arith.cmpi eq, %arg0, %c2_i32_23 : i32
      %54 = arith.extui %53 : i1 to i32
      %c0_i32_24 = arith.constant 0 : i32
      %55 = arith.cmpi ne, %54, %c0_i32_24 : i32
      scf.if %55 {
        %56 = arith.index_cast %16 : i32 to index
        %c0_25 = arith.constant 0 : index
        %57 = vector.load %arg10[%56, %c0_25] : memref<512x128xf32, #tpu.memory_space<vmem>>, vector<512x128xf32>
        %58 = tpu.iota {dimensions = array<i32: 1>} : vector<512x128xi32>
        %c40_i32 = arith.constant 40 : i32
        %59 = vector.broadcast %c40_i32 : i32 to vector<512x128xi32>
        %60 = arith.cmpi slt, %58, %59 : vector<512x128xi32>
        %cst_26 = arith.constant 0xFF800000 : f32
        %61 = vector.broadcast %cst_26 : f32 to vector<512x128xf32>
        %62 = arith.select %60, %57, %61 : vector<512x128xi1>, vector<512x128xf32>
        %cst_27 = arith.constant dense<0xFF800000> : vector<512xf32>
        %63 = vector.multi_reduction <maximumf>, %62, %cst_27 [1] : vector<512x128xf32> to vector<512xf32>
        %64 = vector.shape_cast %63 : vector<512xf32> to vector<512x1xf32>
        %65 = vector.broadcast %64 : vector<512x1xf32> to vector<512x128xf32>
        %66 = arith.subf %57, %65 : vector<512x128xf32>
        %67 = math.exp %66 : vector<512x128xf32>
        %cst_28 = arith.constant 0.000000e+00 : f32
        %68 = vector.broadcast %cst_28 : f32 to vector<512x128xf32>
        %69 = arith.select %60, %67, %68 : vector<512x128xi1>, vector<512x128xf32>
        %cst_29 = arith.constant dense<0.000000e+00> : vector<512xf32>
        %70 = vector.multi_reduction <add>, %69, %cst_29 [1] : vector<512x128xf32> to vector<512xf32>
        %71 = vector.shape_cast %70 : vector<512xf32> to vector<512x1xf32>
        %72 = math.log %71 : vector<512x1xf32>
        %73 = arith.addf %72, %64 : vector<512x1xf32>
        %74 = vector.broadcast %73 : vector<512x1xf32> to vector<512x128xf32>
        %75 = arith.subf %57, %74 : vector<512x128xf32>
        %c0_30 = arith.constant 0 : index
        %c0_31 = arith.constant 0 : index
        %76 = vector.load %arg8[%c0_30, %c0_31] : memref<512x128xf32, #tpu.memory_space<vmem>>, vector<512x128xf32>
        tpu.vector_store %arg8[%c0_30, %c0_31], %75 {strides = array<i32>} : memref<512x128xf32, #tpu.memory_space<vmem>>, vector<512x128xf32>,
      } else {
      }
    } else {
    }
    return
  }
  func.func @transform_0(%arg0: i32, %arg1: i32, %arg2: i32) -> (i32, i32) {
    %c0_i32 = arith.constant 0 : i32
    return %arg1, %arg2 : i32, i32
  }
  func.func @transform_1(%arg0: i32, %arg1: i32, %arg2: i32) -> (i32, i32) {
    %c0_i32 = arith.constant 0 : i32
    %c0_i32_0 = arith.constant 0 : i32
    %c0_i32_1 = arith.constant 0 : i32
    return %c0_i32, %c0_i32_0 : i32, i32
  }
  func.func @transform_2(%arg0: i32, %arg1: i32, %arg2: i32) -> (i32, i32) {
    %c0_i32 = arith.constant 0 : i32
    %c0_i32_0 = arith.constant 0 : i32
    %c0_i32_1 = arith.constant 0 : i32
    return %c0_i32, %c0_i32_0 : i32, i32
  }
  func.func @transform_3(%arg0: i32, %arg1: i32, %arg2: i32) -> (i32, i32) {
    %c0_i32 = arith.constant 0 : i32
    %c0_i32_0 = arith.constant 0 : i32
    %c0_i32_1 = arith.constant 0 : i32
    return %c0_i32, %c0_i32_0 : i32, i32
  }
  func.func @transform_4(%arg0: i32, %arg1: i32, %arg2: i32) -> (i32, i32) {
    %c0_i32 = arith.constant 0 : i32
    %c0_i32_0 = arith.constant 0 : i32
    %c0_i32_1 = arith.constant 0 : i32
    return %c0_i32, %c0_i32_0 : i32, i32
  }
  func.func @transform_5(%arg0: i32, %arg1: i32, %arg2: i32) -> (i32, i32) {
    %c0_i32 = arith.constant 0 : i32
    %c0_i32_0 = arith.constant 0 : i32
    return %arg1, %c0_i32 : i32, i32
  }
}

</mosaic_0001>

<llo_original>
// kernel: net_forward.2
$region0: #{net_forward.2}
  #allocation0 [shape = 'u32[]', space=smem, size = 0x4, offset = 0x4, fixed_abs, tag = 'smem constant byte address 0x4 - core index']
  #allocation1 [shape = 'u32[144,128]{1,0:T(1,128)}', space=vmem, size = 0x12000, scoped, tag = 'internal scratch']
  #allocation2 [shape = 'f32[1,1]{1,0:T(1,128)S(1)}', space=vmem, size = 0x200, scoped, tag = 'scoped memory for net_forward.2']
  %s0 = inlined_call_operand.vmem [shape: f32[512,128], index: 0, kind: input, shape index: {}]
  %s1 = inlined_call_operand.vmem [shape: f32[128,128], index: 1, kind: input, shape index: {}]
  %s2 = inlined_call_operand.vmem [shape: f32[1,128], index: 2, kind: input, shape index: {}]
  %s3 = inlined_call_operand.vmem [shape: f32[128,128], index: 3, kind: input, shape index: {}]
  %s4 = inlined_call_operand.vmem [shape: f32[1,128], index: 4, kind: input, shape index: {}]
  %s5 = inlined_call_operand.vmem [shape: f32[1,128], index: 5, kind: input, shape index: {}]
  %s6 = inlined_call_operand.<no memory space> [shape: f32[1,1], index: 6, kind: input, shape index: {}]
  %s7 = inlined_call_operand.vmem [shape: f32[512,128], index: 7, kind: output, shape index: {0}]
  %s8 = inlined_call_operand.vmem [shape: f32[512,128], index: 8, kind: output, shape index: {1}]
  %9 = xla_tuple %s7, %s8
  %s10 = sld [smem:[#allocation0]]
  $region46: #{net_forward.2} parent=0
    _
  %s12 = ssub.s32 1, %s10
  %s13 = scalar_select 0, %s12, %s10
  %v14 = vstv %s6
  %15 = vst [vmem:[#allocation2] sm:$0x1] %v14
  // Predicated region
  $region2: #{net_forward.2} parent=0 // pred_check
    _
  $region3: #{net_forward.2} parent=0 // pred_check_branch
    %17 = sbr.rel (0) target = $region5
  $region4: #{net_forward.2} parent=0 // pred_region
    _
  $region5: #{net_forward.2} parent=0 // pred_fallthru
    _
  // Predicated region
  $region6: #{net_forward.2} parent=0 // pred_check
    _
  $region7: #{net_forward.2} parent=0 // pred_check_branch
    %19 = sbr.rel (0) target = $region9
  $region8: #{net_forward.2} parent=0 // pred_region
    _
  $region9: #{net_forward.2} parent=0 // pred_fallthru
    _
  // Predicated region
  $region10: #{net_forward.2} parent=0 // pred_check
    _
  $region11: #{net_forward.2} parent=0 // pred_check_branch
    %21 = sbr.rel (0) target = $region13
  $region12: #{net_forward.2} parent=0 // pred_region
    _
  $region13: #{net_forward.2} parent=0 // pred_fallthru
    _
  // Predicated region
  $region14: #{net_forward.2} parent=0 // pred_check
    _
  $region15: #{net_forward.2} parent=0 // pred_check_branch
    %23 = sbr.rel (0) target = $region17
  $region16: #{net_forward.2} parent=0 // pred_region
    _
  $region17: #{net_forward.2} parent=0 // pred_fallthru
    _
  // Predicated region
  $region18: #{net_forward.2} parent=0 // pred_check
    _
  $region19: #{net_forward.2} parent=0 // pred_check_branch
    %25 = sbr.rel (0) target = $region21
  $region20: #{net_forward.2} parent=0 // pred_region
    _
  $region21: #{net_forward.2} parent=0 // pred_fallthru
    _
  // Predicated region
  $region22: #{net_forward.2} parent=0 // pred_check
    _
  $region23: #{net_forward.2} parent=0 // pred_check_branch
    %27 = sbr.rel (0) target = $region25
  $region24: #{net_forward.2} parent=0 // pred_region
    _
  $region25: #{net_forward.2} parent=0 // pred_fallthru
    _
  // Predicated region
  $region26: #{net_forward.2} parent=0 // pred_check
    _
  $region27: #{net_forward.2} parent=0 // pred_check_branch
    %29 = sbr.rel (0) target = $region29
  $region28: #{net_forward.2} parent=0 // pred_region
    _
  $region29: #{net_forward.2} parent=0 // pred_fallthru
    _
  %v30 = vld [vmem:[%s0] sm:$0xff]
  %v31 = vld [vmem:[%s0 + $0x8] sm:$0xff]
  %v32 = vld [vmem:[%s0 + $0x10] sm:$0xff]
  %v33 = vld [vmem:[%s0 + $0x18] sm:$0xff]
  %v34 = vld [vmem:[%s0 + $0x20] sm:$0xff]
  %v35 = vld [vmem:[%s0 + $0x28] sm:$0xff]
  %v36 = vld [vmem:[%s0 + $0x30] sm:$0xff]
  %v37 = vld [vmem:[%s0 + $0x38] sm:$0xff]
  %v38 = vld [vmem:[%s0 + $0x40] sm:$0xff]
  %v39 = vld [vmem:[%s0 + $0x48] sm:$0xff]
  %v40 = vld [vmem:[%s0 + $0x50] sm:$0xff]
  %v41 = vld [vmem:[%s0 + $0x58] sm:$0xff]
  %v42 = vld [vmem:[%s0 + $0x60] sm:$0xff]
  %v43 = vld [vmem:[%s0 + $0x68] sm:$0xff]
  %v44 = vld [vmem:[%s0 + $0x70] sm:$0xff]
  %v45 = vld [vmem:[%s0 + $0x78] sm:$0xff]
  %v46 = vld [vmem:[%s0 + $0x80] sm:$0xff]
  %v47 = vld [vmem:[%s0 + $0x88] sm:$0xff]
  %v48 = vld [vmem:[%s0 + $0x90] sm:$0xff]
  %v49 = vld [vmem:[%s0 + $0x98] sm:$0xff]
  %v50 = vld [vmem:[%s0 + $0xa0] sm:$0xff]
  %v51 = vld [vmem:[%s0 + $0xa8] sm:$0xff]
  %v52 = vld [vmem:[%s0 + $0xb0] sm:$0xff]
  %v53 = vld [vmem:[%s0 + $0xb8] sm:$0xff]
  %v54 = vld [vmem:[%s0 + $0xc0] sm:$0xff]
  %v55 = vld [vmem:[%s0 + $0xc8] sm:$0xff]
  %v56 = vld [vmem:[%s0 + $0xd0] sm:$0xff]
  %v57 = vld [vmem:[%s0 + $0xd8] sm:$0xff]
  %v58 = vld [vmem:[%s0 + $0xe0] sm:$0xff]
  %v59 = vld [vmem:[%s0 + $0xe8] sm:$0xff]
  %v60 = vld [vmem:[%s0 + $0xf0] sm:$0xff]
  %v61 = vld [vmem:[%s0 + $0xf8] sm:$0xff]
  %v62 = vld [vmem:[%s0 + $0x100] sm:$0xff]
  %v63 = vld [vmem:[%s0 + $0x108] sm:$0xff]
  %v64 = vld [vmem:[%s0 + $0x110] sm:$0xff]
  %v65 = vld [vmem:[%s0 + $0x118] sm:$0xff]
  %v66 = vld [vmem:[%s0 + $0x120] sm:$0xff]
  %v67 = vld [vmem:[%s0 + $0x128] sm:$0xff]
  %v68 = vld [vmem:[%s0 + $0x130] sm:$0xff]
  %v69 = vld [vmem:[%s0 + $0x138] sm:$0xff]
  %v70 = vld [vmem:[%s0 + $0x140] sm:$0xff]
  %v71 = vld [vmem:[%s0 + $0x148] sm:$0xff]
  %v72 = vld [vmem:[%s0 + $0x150] sm:$0xff]
  %v73 = vld [vmem:[%s0 + $0x158] sm:$0xff]
  %v74 = vld [vmem:[%s0 + $0x160] sm:$0xff]
  %v75 = vld [vmem:[%s0 + $0x168] sm:$0xff]
  %v76 = vld [vmem:[%s0 + $0x170] sm:$0xff]
  %v77 = vld [vmem:[%s0 + $0x178] sm:$0xff]
  %v78 = vld [vmem:[%s0 + $0x180] sm:$0xff]
  %v79 = vld [vmem:[%s0 + $0x188] sm:$0xff]
  %v80 = vld [vmem:[%s0 + $0x190] sm:$0xff]
  %v81 = vld [vmem:[%s0 + $0x198] sm:$0xff]
  %v82 = vld [vmem:[%s0 + $0x1a0] sm:$0xff]
  %v83 = vld [vmem:[%s0 + $0x1a8] sm:$0xff]
  %v84 = vld [vmem:[%s0 + $0x1b0] sm:$0xff]
  %v85 = vld [vmem:[%s0 + $0x1b8] sm:$0xff]
  %v86 = vld [vmem:[%s0 + $0x1c0] sm:$0xff]
  %v87 = vld [vmem:[%s0 + $0x1c8] sm:$0xff]
  %v88 = vld [vmem:[%s0 + $0x1d0] sm:$0xff]
  %v89 = vld [vmem:[%s0 + $0x1d8] sm:$0xff]
  %v90 = vld [vmem:[%s0 + $0x1e0] sm:$0xff]
  %v91 = vld [vmem:[%s0 + $0x1e8] sm:$0xff]
  %v92 = vld [vmem:[%s0 + $0x1f0] sm:$0xff]
  %v93 = vld [vmem:[%s0 + $0x1f8] sm:$0xff]
  %v94 = vld [vmem:[%s1] sm:$0xff]
  %v95 = vld [vmem:[%s1 + $0x8] sm:$0xff]
  %v96 = vld [vmem:[%s1 + $0x10] sm:$0xff]
  %v97 = vld [vmem:[%s1 + $0x18] sm:$0xff]
  %v98 = vld [vmem:[%s1 + $0x20] sm:$0xff]
  %v99 = vld [vmem:[%s1 + $0x28] sm:$0xff]
  %v100 = vld [vmem:[%s1 + $0x30] sm:$0xff]
  %v101 = vld [vmem:[%s1 + $0x38] sm:$0xff]
  %v102 = vld [vmem:[%s1 + $0x40] sm:$0xff]
  %v103 = vld [vmem:[%s1 + $0x48] sm:$0xff]
  %v104 = vld [vmem:[%s1 + $0x50] sm:$0xff]
  %v105 = vld [vmem:[%s1 + $0x58] sm:$0xff]
  %v106 = vld [vmem:[%s1 + $0x60] sm:$0xff]
  %v107 = vld [vmem:[%s1 + $0x68] sm:$0xff]
  %v108 = vld [vmem:[%s1 + $0x70] sm:$0xff]
  %v109 = vld [vmem:[%s1 + $0x78] sm:$0xff]
  %v110 = vld [vmem:[%s2] sm:$0x1]
  %v112 = vlaneseq
  %v113 = vshrl.u32 %v112, 7
  %v114 = vsub.s32 0, %v113
  %v115 = vrot.slane %v110, %v114
  %117 = vmatprep.subr.mxu0 0.0
  %118 = vmatpush1.msra.mxu0 %v109
  %119 = vmatprep.subr.mxu0 0.0
  %120 = vmatpush1.msra.mxu0 %v108
  %121 = vmatprep.subr.mxu0 0.0
  %122 = vmatpush1.msra.mxu0 %v107
  %123 = vmatprep.subr.mxu0 0.0
  %124 = vmatpush1.msra.mxu0 %v106
  %125 = vmatprep.subr.mxu0 0.0
  %126 = vmatpush1.msra.mxu0 %v105
  %127 = vmatprep.subr.mxu0 0.0
  %128 = vmatpush1.msra.mxu0 %v104
  %129 = vmatprep.subr.mxu0 0.0
  %130 = vmatpush1.msra.mxu0 %v103
  %131 = vmatprep.subr.mxu0 0.0
  %132 = vmatpush1.msra.mxu0 %v102
  %133 = vmatprep.subr.mxu0 0.0
  %134 = vmatpush1.msra.mxu0 %v101
  %135 = vmatprep.subr.mxu0 0.0
  %136 = vmatpush1.msra.mxu0 %v100
  %137 = vmatprep.subr.mxu0 0.0
  %138 = vmatpush1.msra.mxu0 %v99
  %139 = vmatprep.subr.mxu0 0.0
  %140 = vmatpush1.msra.mxu0 %v98
  %141 = vmatprep.subr.mxu0 0.0
  %142 = vmatpush1.msra.mxu0 %v97
  %143 = vmatprep.subr.mxu0 0.0
  %144 = vmatpush1.msra.mxu0 %v96
  %145 = vmatprep.subr.mxu0 0.0
  %146 = vmatpush1.msra.mxu0 %v95
  %147 = vmatprep.subr.mxu0 0.0
  %148 = vmatpush1.msra.mxu0 %v94
  %149 = vmatprep.subr.mxu0 0.0
  %150 = vmatpush2.msra.mxu0 0.0
  %151 = vmatprep.subr.mxu0 0.0
  %152 = vmatpush2.msra.mxu0 0.0
  %153 = vmatprep.subr.mxu0 0.0
  %154 = vmatpush2.msra.mxu0 0.0
  %155 = vmatprep.subr.mxu0 0.0
  %156 = vmatpush2.msra.mxu0 0.0
  %157 = vmatprep.subr.mxu0 0.0
  %158 = vmatpush2.msra.mxu0 0.0
  %159 = vmatprep.subr.mxu0 0.0
  %160 = vmatpush2.msra.mxu0 0.0
  %161 = vmatprep.subr.mxu0 0.0
  %162 = vmatpush2.msra.mxu0 0.0
  %163 = vmatprep.subr.mxu0 0.0
  %164 = vmatpush2.msra.mxu0 0.0
  %165 = vmatprep.subr.mxu0 0.0
  %166 = vmatpush2.msra.mxu0 0.0
  %167 = vmatprep.subr.mxu0 0.0
  %168 = vmatpush2.msra.mxu0 0.0
  %169 = vmatprep.subr.mxu0 0.0
  %170 = vmatpush2.msra.mxu0 0.0
  %171 = vmatprep.subr.mxu0 0.0
  %172 = vmatpush2.msra.mxu0 0.0
  %173 = vmatprep.subr.mxu0 0.0
  %174 = vmatpush2.msra.mxu0 0.0
  %175 = vmatprep.subr.mxu0 0.0
  %176 = vmatpush2.msra.mxu0 0.0
  %177 = vmatprep.subr.mxu0 0.0
  %178 = vmatpush2.msra.mxu0 0.0
  %179 = vmatprep.subr.mxu0 0.0
  %180 = vmatpush2.msra.mxu0 0.0
  %181 = vmatprep.mubr.f32.mxu0 0.0
  %182 = vmatmul.mubr.f32.gmra.mxu0 %v30
  %v183 = vpop.f32.mrf.mxu0
  %v184 = vadd.f32 %v115, %v183
  %v185 = vpop.f32.mrf.mxu0
  %186 = vmatprep.mubr.f32.mxu0 0.0
  %187 = vmatmul.mubr.f32.gmra.mxu0 %v31
  %v188 = vpop.f32.mrf.mxu0
  %v189 = vadd.f32 %v115, %v188
  %v190 = vpop.f32.mrf.mxu0
  %191 = vmatprep.mubr.f32.mxu0 0.0
  %192 = vmatmul.mubr.f32.gmra.mxu0 %v32
  %v193 = vpop.f32.mrf.mxu0
  %v194 = vadd.f32 %v115, %v193
  %v195 = vpop.f32.mrf.mxu0
  %196 = vmatprep.mubr.f32.mxu0 0.0
  %197 = vmatmul.mubr.f32.gmra.mxu0 %v33
  %v198 = vpop.f32.mrf.mxu0
  %v199 = vadd.f32 %v115, %v198
  %v200 = vpop.f32.mrf.mxu0
  %201 = vmatprep.mubr.f32.mxu0 0.0
  %202 = vmatmul.mubr.f32.gmra.mxu0 %v34
  %v203 = vpop.f32.mrf.mxu0
  %v204 = vadd.f32 %v115, %v203
  %v205 = vpop.f32.mrf.mxu0
  %206 = vmatprep.mubr.f32.mxu0 0.0
  %207 = vmatmul.mubr.f32.gmra.mxu0 %v35
  %v208 = vpop.f32.mrf.mxu0
  %v209 = vadd.f32 %v115, %v208
  %v210 = vpop.f32.mrf.mxu0
  %211 = vmatprep.mubr.f32.mxu0 0.0
  %212 = vmatmul.mubr.f32.gmra.mxu0 %v36
  %v213 = vpop.f32.mrf.mxu0
  %v214 = vadd.f32 %v115, %v213
  %v215 = vpop.f32.mrf.mxu0
  %216 = vmatprep.mubr.f32.mxu0 0.0
  %217 = vmatmul.mubr.f32.gmra.mxu0 %v37
  %v218 = vpop.f32.mrf.mxu0
  %v219 = vadd.f32 %v115, %v218
  %v220 = vpop.f32.mrf.mxu0
  %221 = vmatprep.mubr.f32.mxu0 0.0
  %222 = vmatmul.mubr.f32.gmra.mxu0 %v38
  %v223 = vpop.f32.mrf.mxu0
  %v224 = vadd.f32 %v115, %v223
  %v225 = vpop.f32.mrf.mxu0
  %226 = vmatprep.mubr.f32.mxu0 0.0
  %227 = vmatmul.mubr.f32.gmra.mxu0 %v39
  %v228 = vpop.f32.mrf.mxu0
  %v229 = vadd.f32 %v115, %v228
  %v230 = vpop.f32.mrf.mxu0
  %231 = vmatprep.mubr.f32.mxu0 0.0
  %232 = vmatmul.mubr.f32.gmra.mxu0 %v40
  %v233 = vpop.f32.mrf.mxu0
  %v234 = vadd.f32 %v115, %v233
  %v235 = vpop.f32.mrf.mxu0
  %236 = vmatprep.mubr.f32.mxu0 0.0
  %237 = vmatmul.mubr.f32.gmra.mxu0 %v41
  %v238 = vpop.f32.mrf.mxu0
  %v239 = vadd.f32 %v115, %v238
  %v240 = vpop.f32.mrf.mxu0
  %241 = vmatprep.mubr.f32.mxu0 0.0
  %242 = vmatmul.mubr.f32.gmra.mxu0 %v42
  %v243 = vpop.f32.mrf.mxu0
  %v244 = vadd.f32 %v115, %v243
  %v245 = vpop.f32.mrf.mxu0
  %246 = vmatprep.mubr.f32.mxu0 0.0
  %247 = vmatmul.mubr.f32.gmra.mxu0 %v43
  %v248 = vpop.f32.mrf.mxu0
  %v249 = vadd.f32 %v115, %v248
  %v250 = vpop.f32.mrf.mxu0
  %251 = vmatprep.mubr.f32.mxu0 0.0
  %252 = vmatmul.mubr.f32.gmra.mxu0 %v44
  %v253 = vpop.f32.mrf.mxu0
  %v254 = vadd.f32 %v115, %v253
  %v255 = vpop.f32.mrf.mxu0
  %256 = vmatprep.mubr.f32.mxu0 0.0
  %257 = vmatmul.mubr.f32.gmra.mxu0 %v45
  %v258 = vpop.f32.mrf.mxu0
  %v259 = vadd.f32 %v115, %v258
  %v260 = vpop.f32.mrf.mxu0
  %261 = vmatprep.mubr.f32.mxu0 0.0
  %262 = vmatmul.mubr.f32.gmra.mxu0 %v46
  %v263 = vpop.f32.mrf.mxu0
  %v264 = vadd.f32 %v115, %v263
  %v265 = vpop.f32.mrf.mxu0
  %266 = vmatprep.mubr.f32.mxu0 0.0
  %267 = vmatmul.mubr.f32.gmra.mxu0 %v47
  %v268 = vpop.f32.mrf.mxu0
  %v269 = vadd.f32 %v115, %v268
  %v270 = vpop.f32.mrf.mxu0
  %271 = vmatprep.mubr.f32.mxu0 0.0
  %272 = vmatmul.mubr.f32.gmra.mxu0 %v48
  %v273 = vpop.f32.mrf.mxu0
  %v274 = vadd.f32 %v115, %v273
  %v275 = vpop.f32.mrf.mxu0
  %276 = vmatprep.mubr.f32.mxu0 0.0
  %277 = vmatmul.mubr.f32.gmra.mxu0 %v49
  %v278 = vpop.f32.mrf.mxu0
  %v279 = vadd.f32 %v115, %v278
  %v280 = vpop.f32.mrf.mxu0
  %281 = vmatprep.mubr.f32.mxu0 0.0
  %282 = vmatmul.mubr.f32.gmra.mxu0 %v50
  %v283 = vpop.f32.mrf.mxu0
  %v284 = vadd.f32 %v115, %v283
  %v285 = vpop.f32.mrf.mxu0
  %286 = vmatprep.mubr.f32.mxu0 0.0
  %287 = vmatmul.mubr.f32.gmra.mxu0 %v51
  %v288 = vpop.f32.mrf.mxu0
  %v289 = vadd.f32 %v115, %v288
  %v290 = vpop.f32.mrf.mxu0
  %291 = vmatprep.mubr.f32.mxu0 0.0
  %292 = vmatmul.mubr.f32.gmra.mxu0 %v52
  %v293 = vpop.f32.mrf.mxu0
  %v294 = vadd.f32 %v115, %v293
  %v295 = vpop.f32.mrf.mxu0
  %296 = vmatprep.mubr.f32.mxu0 0.0
  %297 = vmatmul.mubr.f32.gmra.mxu0 %v53
  %v298 = vpop.f32.mrf.mxu0
  %v299 = vadd.f32 %v115, %v298
  %v300 = vpop.f32.mrf.mxu0
  %301 = vmatprep.mubr.f32.mxu0 0.0
  %302 = vmatmul.mubr.f32.gmra.mxu0 %v54
  %v303 = vpop.f32.mrf.mxu0
  %v304 = vadd.f32 %v115, %v303
  %v305 = vpop.f32.mrf.mxu0
  %306 = vmatprep.mubr.f32.mxu0 0.0
  %307 = vmatmul.mubr.f32.gmra.mxu0 %v55
  %v308 = vpop.f32.mrf.mxu0
  %v309 = vadd.f32 %v115, %v308
  %v310 = vpop.f32.mrf.mxu0
  %311 = vmatprep.mubr.f32.mxu0 0.0
  %312 = vmatmul.mubr.f32.gmra.mxu0 %v56
  %v313 = vpop.f32.mrf.mxu0
  %v314 = vadd.f32 %v115, %v313
  %v315 = vpop.f32.mrf.mxu0
  %316 = vmatprep.mubr.f32.mxu0 0.0
  %317 = vmatmul.mubr.f32.gmra.mxu0 %v57
  %v318 = vpop.f32.mrf.mxu0
  %v319 = vadd.f32 %v115, %v318
  %v320 = vpop.f32.mrf.mxu0
  %321 = vmatprep.mubr.f32.mxu0 0.0
  %322 = vmatmul.mubr.f32.gmra.mxu0 %v58
  %v323 = vpop.f32.mrf.mxu0
  %v324 = vadd.f32 %v115, %v323
  %v325 = vpop.f32.mrf.mxu0
  %326 = vmatprep.mubr.f32.mxu0 0.0
  %327 = vmatmul.mubr.f32.gmra.mxu0 %v59
  %v328 = vpop.f32.mrf.mxu0
  %v329 = vadd.f32 %v115, %v328
  %v330 = vpop.f32.mrf.mxu0
  %331 = vmatprep.mubr.f32.mxu0 0.0
  %332 = vmatmul.mubr.f32.gmra.mxu0 %v60
  %v333 = vpop.f32.mrf.mxu0
  %v334 = vadd.f32 %v115, %v333
  %v335 = vpop.f32.mrf.mxu0
  %336 = vmatprep.mubr.f32.mxu0 0.0
  %337 = vmatmul.mubr.f32.gmra.mxu0 %v61
  %v338 = vpop.f32.mrf.mxu0
  %v339 = vadd.f32 %v115, %v338
  %v340 = vpop.f32.mrf.mxu0
  %341 = vmatprep.mubr.f32.mxu0 0.0
  %342 = vmatmul.mubr.f32.gmra.mxu0 %v62
  %v343 = vpop.f32.mrf.mxu0
  %v344 = vadd.f32 %v115, %v343
  %v345 = vpop.f32.mrf.mxu0
  %346 = vmatprep.mubr.f32.mxu0 0.0
  %347 = vmatmul.mubr.f32.gmra.mxu0 %v63
  %v348 = vpop.f32.mrf.mxu0
  %v349 = vadd.f32 %v115, %v348
  %v350 = vpop.f32.mrf.mxu0
  %351 = vmatprep.mubr.f32.mxu0 0.0
  %352 = vmatmul.mubr.f32.gmra.mxu0 %v64
  %v353 = vpop.f32.mrf.mxu0
  %v354 = vadd.f32 %v115, %v353
  %v355 = vpop.f32.mrf.mxu0
  %356 = vmatprep.mubr.f32.mxu0 0.0
  %357 = vmatmul.mubr.f32.gmra.mxu0 %v65
  %v358 = vpop.f32.mrf.mxu0
  %v359 = vadd.f32 %v115, %v358
  %v360 = vpop.f32.mrf.mxu0
  %361 = vmatprep.mubr.f32.mxu0 0.0
  %362 = vmatmul.mubr.f32.gmra.mxu0 %v66
  %v363 = vpop.f32.mrf.mxu0
  %v364 = vadd.f32 %v115, %v363
  %v365 = vpop.f32.mrf.mxu0
  %366 = vmatprep.mubr.f32.mxu0 0.0
  %367 = vmatmul.mubr.f32.gmra.mxu0 %v67
  %v368 = vpop.f32.mrf.mxu0
  %v369 = vadd.f32 %v115, %v368
  %v370 = vpop.f32.mrf.mxu0
  %371 = vmatprep.mubr.f32.mxu0 0.0
  %372 = vmatmul.mubr.f32.gmra.mxu0 %v68
  %v373 = vpop.f32.mrf.mxu0
  %v374 = vadd.f32 %v115, %v373
  %v375 = vpop.f32.mrf.mxu0
  %376 = vmatprep.mubr.f32.mxu0 0.0
  %377 = vmatmul.mubr.f32.gmra.mxu0 %v69
  %v378 = vpop.f32.mrf.mxu0
  %v379 = vadd.f32 %v115, %v378
  %v380 = vpop.f32.mrf.mxu0
  %381 = vmatprep.mubr.f32.mxu0 0.0
  %382 = vmatmul.mubr.f32.gmra.mxu0 %v70
  %v383 = vpop.f32.mrf.mxu0
  %v384 = vadd.f32 %v115, %v383
  %v385 = vpop.f32.mrf.mxu0
  %386 = vmatprep.mubr.f32.mxu0 0.0
  %387 = vmatmul.mubr.f32.gmra.mxu0 %v71
  %v388 = vpop.f32.mrf.mxu0
  %v389 = vadd.f32 %v115, %v388
  %v390 = vpop.f32.mrf.mxu0
  %391 = vmatprep.mubr.f32.mxu0 0.0
  %392 = vmatmul.mubr.f32.gmra.mxu0 %v72
  %v393 = vpop.f32.mrf.mxu0
  %v394 = vadd.f32 %v115, %v393
  %v395 = vpop.f32.mrf.mxu0
  %396 = vmatprep.mubr.f32.mxu0 0.0
  %397 = vmatmul.mubr.f32.gmra.mxu0 %v73
  %v398 = vpop.f32.mrf.mxu0
  %v399 = vadd.f32 %v115, %v398
  %v400 = vpop.f32.mrf.mxu0
  %401 = vmatprep.mubr.f32.mxu0 0.0
  %402 = vmatmul.mubr.f32.gmra.mxu0 %v74
  %v403 = vpop.f32.mrf.mxu0
  %v404 = vadd.f32 %v115, %v403
  %v405 = vpop.f32.mrf.mxu0
  %406 = vmatprep.mubr.f32.mxu0 0.0
  %407 = vmatmul.mubr.f32.gmra.mxu0 %v75
  %v408 = vpop.f32.mrf.mxu0
  %v409 = vadd.f32 %v115, %v408
  %v410 = vpop.f32.mrf.mxu0
  %411 = vmatprep.mubr.f32.mxu0 0.0
  %412 = vmatmul.mubr.f32.gmra.mxu0 %v76
  %v413 = vpop.f32.mrf.mxu0
  %v414 = vadd.f32 %v115, %v413
  %v415 = vpop.f32.mrf.mxu0
  %416 = vmatprep.mubr.f32.mxu0 0.0
  %417 = vmatmul.mubr.f32.gmra.mxu0 %v77
  %v418 = vpop.f32.mrf.mxu0
  %v419 = vadd.f32 %v115, %v418
  %v420 = vpop.f32.mrf.mxu0
  %421 = vmatprep.mubr.f32.mxu0 0.0
  %422 = vmatmul.mubr.f32.gmra.mxu0 %v78
  %v423 = vpop.f32.mrf.mxu0
  %v424 = vadd.f32 %v115, %v423
  %v425 = vpop.f32.mrf.mxu0
  %426 = vmatprep.mubr.f32.mxu0 0.0
  %427 = vmatmul.mubr.f32.gmra.mxu0 %v79
  %v428 = vpop.f32.mrf.mxu0
  %v429 = vadd.f32 %v115, %v428
  %v430 = vpop.f32.mrf.mxu0
  %431 = vmatprep.mubr.f32.mxu0 0.0
  %432 = vmatmul.mubr.f32.gmra.mxu0 %v80
  %v433 = vpop.f32.mrf.mxu0
  %v434 = vadd.f32 %v115, %v433
  %v435 = vpop.f32.mrf.mxu0
  %436 = vmatprep.mubr.f32.mxu0 0.0
  %437 = vmatmul.mubr.f32.gmra.mxu0 %v81
  %v438 = vpop.f32.mrf.mxu0
  %v439 = vadd.f32 %v115, %v438
  %v440 = vpop.f32.mrf.mxu0
  %441 = vmatprep.mubr.f32.mxu0 0.0
  %442 = vmatmul.mubr.f32.gmra.mxu0 %v82
  %v443 = vpop.f32.mrf.mxu0
  %v444 = vadd.f32 %v115, %v443
  %v445 = vpop.f32.mrf.mxu0
  %446 = vmatprep.mubr.f32.mxu0 0.0
  %447 = vmatmul.mubr.f32.gmra.mxu0 %v83
  %v448 = vpop.f32.mrf.mxu0
  %v449 = vadd.f32 %v115, %v448
  %v450 = vpop.f32.mrf.mxu0
  %451 = vmatprep.mubr.f32.mxu0 0.0
  %452 = vmatmul.mubr.f32.gmra.mxu0 %v84
  %v453 = vpop.f32.mrf.mxu0
  %v454 = vadd.f32 %v115, %v453
  %v455 = vpop.f32.mrf.mxu0
  %456 = vmatprep.mubr.f32.mxu0 0.0
  %457 = vmatmul.mubr.f32.gmra.mxu0 %v85
  %v458 = vpop.f32.mrf.mxu0
  %v459 = vadd.f32 %v115, %v458
  %v460 = vpop.f32.mrf.mxu0
  %461 = vmatprep.mubr.f32.mxu0 0.0
  %462 = vmatmul.mubr.f32.gmra.mxu0 %v86
  %v463 = vpop.f32.mrf.mxu0
  %v464 = vadd.f32 %v115, %v463
  %v465 = vpop.f32.mrf.mxu0
  %466 = vmatprep.mubr.f32.mxu0 0.0
  %467 = vmatmul.mubr.f32.gmra.mxu0 %v87
  %v468 = vpop.f32.mrf.mxu0
  %v469 = vadd.f32 %v115, %v468
  %v470 = vpop.f32.mrf.mxu0
  %471 = vmatprep.mubr.f32.mxu0 0.0
  %472 = vmatmul.mubr.f32.gmra.mxu0 %v88
  %v473 = vpop.f32.mrf.mxu0
  %v474 = vadd.f32 %v115, %v473
  %v475 = vpop.f32.mrf.mxu0
  %476 = vmatprep.mubr.f32.mxu0 0.0
  %477 = vmatmul.mubr.f32.gmra.mxu0 %v89
  %v478 = vpop.f32.mrf.mxu0
  %v479 = vadd.f32 %v115, %v478
  %v480 = vpop.f32.mrf.mxu0
  %481 = vmatprep.mubr.f32.mxu0 0.0
  %482 = vmatmul.mubr.f32.gmra.mxu0 %v90
  %v483 = vpop.f32.mrf.mxu0
  %v484 = vadd.f32 %v115, %v483
  %v485 = vpop.f32.mrf.mxu0
  %486 = vmatprep.mubr.f32.mxu0 0.0
  %487 = vmatmul.mubr.f32.gmra.mxu0 %v91
  %v488 = vpop.f32.mrf.mxu0
  %v489 = vadd.f32 %v115, %v488
  %v490 = vpop.f32.mrf.mxu0
  %491 = vmatprep.mubr.f32.mxu0 0.0
  %492 = vmatmul.mubr.f32.gmra.mxu0 %v92
  %v493 = vpop.f32.mrf.mxu0
  %v494 = vadd.f32 %v115, %v493
  %v495 = vpop.f32.mrf.mxu0
  %496 = vmatprep.mubr.f32.mxu0 0.0
  %497 = vmatmul.mubr.f32.gmra.mxu0 %v93
  %v498 = vpop.f32.mrf.mxu0
  %v499 = vadd.f32 %v115, %v498
  %v500 = vpop.f32.mrf.mxu0
  %501 = vdwg.mxu0
  %v502 = vmax.f32 %v184, 0.0
  %v503 = vmax.f32 %v189, 0.0
  %v504 = vmax.f32 %v194, 0.0
  %v505 = vmax.f32 %v199, 0.0
  %v506 = vmax.f32 %v204, 0.0
  %v507 = vmax.f32 %v209, 0.0
  %v508 = vmax.f32 %v214, 0.0
  %v509 = vmax.f32 %v219, 0.0
  %v510 = vmax.f32 %v224, 0.0
  %v511 = vmax.f32 %v229, 0.0
  %v512 = vmax.f32 %v234, 0.0
  %v513 = vmax.f32 %v239, 0.0
  %v514 = vmax.f32 %v244, 0.0
  %v515 = vmax.f32 %v249, 0.0
  %v516 = vmax.f32 %v254, 0.0
  %v517 = vmax.f32 %v259, 0.0
  %v518 = vmax.f32 %v264, 0.0
  %v519 = vmax.f32 %v269, 0.0
  %v520 = vmax.f32 %v274, 0.0
  %v521 = vmax.f32 %v279, 0.0
  %v522 = vmax.f32 %v284, 0.0
  %v523 = vmax.f32 %v289, 0.0
  %v524 = vmax.f32 %v294, 0.0
  %v525 = vmax.f32 %v299, 0.0
  %v526 = vmax.f32 %v304, 0.0
  %v527 = vmax.f32 %v309, 0.0
  %v528 = vmax.f32 %v314, 0.0
  %v529 = vmax.f32 %v319, 0.0
  %v530 = vmax.f32 %v324, 0.0
  %v531 = vmax.f32 %v329, 0.0
  %v532 = vmax.f32 %v334, 0.0
  %v533 = vmax.f32 %v339, 0.0
  %v534 = vmax.f32 %v344, 0.0
  %v535 = vmax.f32 %v349, 0.0
  %v536 = vmax.f32 %v354, 0.0
  %v537 = vmax.f32 %v359, 0.0
  %v538 = vmax.f32 %v364, 0.0
  %v539 = vmax.f32 %v369, 0.0
  %v540 = vmax.f32 %v374, 0.0
  %v541 = vmax.f32 %v379, 0.0
  %v542 = vmax.f32 %v384, 0.0
  %v543 = vmax.f32 %v389, 0.0
  %v544 = vmax.f32 %v394, 0.0
  %v545 = vmax.f32 %v399, 0.0
  %v546 = vmax.f32 %v404, 0.0
  %v547 = vmax.f32 %v409, 0.0
  %v548 = vmax.f32 %v414, 0.0
  %v549 = vmax.f32 %v419, 0.0
  %v550 = vmax.f32 %v424, 0.0
  %v551 = vmax.f32 %v429, 0.0
  %v552 = vmax.f32 %v434, 0.0
  %v553 = vmax.f32 %v439, 0.0
  %v554 = vmax.f32 %v444, 0.0
  %v555 = vmax.f32 %v449, 0.0
  %v556 = vmax.f32 %v454, 0.0
  %v557 = vmax.f32 %v459, 0.0
  %v558 = vmax.f32 %v464, 0.0
  %v559 = vmax.f32 %v469, 0.0
  %v560 = vmax.f32 %v474, 0.0
  %v561 = vmax.f32 %v479, 0.0
  %v562 = vmax.f32 %v484, 0.0
  %v563 = vmax.f32 %v489, 0.0
  %v564 = vmax.f32 %v494, 0.0
  %v565 = vmax.f32 %v499, 0.0
  %v566 = vld [vmem:[%s3] sm:$0xff]
  %v567 = vld [vmem:[%s3 + $0x8] sm:$0xff]
  %v568 = vld [vmem:[%s3 + $0x10] sm:$0xff]
  %v569 = vld [vmem:[%s3 + $0x18] sm:$0xff]
  %v570 = vld [vmem:[%s3 + $0x20] sm:$0xff]
  %v571 = vld [vmem:[%s3 + $0x28] sm:$0xff]
  %v572 = vld [vmem:[%s3 + $0x30] sm:$0xff]
  %v573 = vld [vmem:[%s3 + $0x38] sm:$0xff]
  %v574 = vld [vmem:[%s3 + $0x40] sm:$0xff]
  %v575 = vld [vmem:[%s3 + $0x48] sm:$0xff]
  %v576 = vld [vmem:[%s3 + $0x50] sm:$0xff]
  %v577 = vld [vmem:[%s3 + $0x58] sm:$0xff]
  %v578 = vld [vmem:[%s3 + $0x60] sm:$0xff]
  %v579 = vld [vmem:[%s3 + $0x68] sm:$0xff]
  %v580 = vld [vmem:[%s3 + $0x70] sm:$0xff]
  %v581 = vld [vmem:[%s3 + $0x78] sm:$0xff]
  %v582 = vld [vmem:[%s4] sm:$0x1]
  %v584 = vlaneseq
  %v585 = vshrl.u32 %v584, 7
  %v586 = vsub.s32 0, %v585
  %v587 = vrot.slane %v582, %v586
  %589 = vmatprep.subr.mxu0 0.0
  %590 = vmatpush1.msra.mxu0 %v581
  %591 = vmatprep.subr.mxu0 0.0
  %592 = vmatpush1.msra.mxu0 %v580
  %593 = vmatprep.subr.mxu0 0.0
  %594 = vmatpush1.msra.mxu0 %v579
  %595 = vmatprep.subr.mxu0 0.0
  %596 = vmatpush1.msra.mxu0 %v578
  %597 = vmatprep.subr.mxu0 0.0
  %598 = vmatpush1.msra.mxu0 %v577
  %599 = vmatprep.subr.mxu0 0.0
  %600 = vmatpush1.msra.mxu0 %v576
  %601 = vmatprep.subr.mxu0 0.0
  %602 = vmatpush1.msra.mxu0 %v575
  %603 = vmatprep.subr.mxu0 0.0
  %604 = vmatpush1.msra.mxu0 %v574
  %605 = vmatprep.subr.mxu0 0.0
  %606 = vmatpush1.msra.mxu0 %v573
  %607 = vmatprep.subr.mxu0 0.0
  %608 = vmatpush1.msra.mxu0 %v572
  %609 = vmatprep.subr.mxu0 0.0
  %610 = vmatpush1.msra.mxu0 %v571
  %611 = vmatprep.subr.mxu0 0.0
  %612 = vmatpush1.msra.mxu0 %v570
  %613 = vmatprep.subr.mxu0 0.0
  %614 = vmatpush1.msra.mxu0 %v569
  %615 = vmatprep.subr.mxu0 0.0
  %616 = vmatpush1.msra.mxu0 %v568
  %617 = vmatprep.subr.mxu0 0.0
  %618 = vmatpush1.msra.mxu0 %v567
  %619 = vmatprep.subr.mxu0 0.0
  %620 = vmatpush1.msra.mxu0 %v566
  %621 = vmatprep.subr.mxu0 0.0
  %622 = vmatpush2.msra.mxu0 0.0
  %623 = vmatprep.subr.mxu0 0.0
  %624 = vmatpush2.msra.mxu0 0.0
  %625 = vmatprep.subr.mxu0 0.0
  %626 = vmatpush2.msra.mxu0 0.0
  %627 = vmatprep.subr.mxu0 0.0
  %628 = vmatpush2.msra.mxu0 0.0
  %629 = vmatprep.subr.mxu0 0.0
  %630 = vmatpush2.msra.mxu0 0.0
  %631 = vmatprep.subr.mxu0 0.0
  %632 = vmatpush2.msra.mxu0 0.0
  %633 = vmatprep.subr.mxu0 0.0
  %634 = vmatpush2.msra.mxu0 0.0
  %635 = vmatprep.subr.mxu0 0.0
  %636 = vmatpush2.msra.mxu0 0.0
  %637 = vmatprep.subr.mxu0 0.0
  %638 = vmatpush2.msra.mxu0 0.0
  %639 = vmatprep.subr.mxu0 0.0
  %640 = vmatpush2.msra.mxu0 0.0
  %641 = vmatprep.subr.mxu0 0.0
  %642 = vmatpush2.msra.mxu0 0.0
  %643 = vmatprep.subr.mxu0 0.0
  %644 = vmatpush2.msra.mxu0 0.0
  %645 = vmatprep.subr.mxu0 0.0
  %646 = vmatpush2.msra.mxu0 0.0
  %647 = vmatprep.subr.mxu0 0.0
  %648 = vmatpush2.msra.mxu0 0.0
  %649 = vmatprep.subr.mxu0 0.0
  %650 = vmatpush2.msra.mxu0 0.0
  %651 = vmatprep.subr.mxu0 0.0
  %652 = vmatpush2.msra.mxu0 0.0
  %653 = vmatprep.mubr.f32.mxu0 0.0
  %654 = vmatmul.mubr.f32.gmra.mxu0 %v502
  %v655 = vpop.f32.mrf.mxu0
  %v656 = vadd.f32 %v587, %v655
  %v657 = vpop.f32.mrf.mxu0
  %658 = vmatprep.mubr.f32.mxu0 0.0
  %659 = vmatmul.mubr.f32.gmra.mxu0 %v503
  %v660 = vpop.f32.mrf.mxu0
  %v661 = vadd.f32 %v587, %v660
  %v662 = vpop.f32.mrf.mxu0
  %663 = vmatprep.mubr.f32.mxu0 0.0
  %664 = vmatmul.mubr.f32.gmra.mxu0 %v504
  %v665 = vpop.f32.mrf.mxu0
  %v666 = vadd.f32 %v587, %v665
  %v667 = vpop.f32.mrf.mxu0
  %668 = vmatprep.mubr.f32.mxu0 0.0
  %669 = vmatmul.mubr.f32.gmra.mxu0 %v505
  %v670 = vpop.f32.mrf.mxu0
  %v671 = vadd.f32 %v587, %v670
  %v672 = vpop.f32.mrf.mxu0
  %673 = vmatprep.mubr.f32.mxu0 0.0
  %674 = vmatmul.mubr.f32.gmra.mxu0 %v506
  %v675 = vpop.f32.mrf.mxu0
  %v676 = vadd.f32 %v587, %v675
  %v677 = vpop.f32.mrf.mxu0
  %678 = vmatprep.mubr.f32.mxu0 0.0
  %679 = vmatmul.mubr.f32.gmra.mxu0 %v507
  %v680 = vpop.f32.mrf.mxu0
  %v681 = vadd.f32 %v587, %v680
  %v682 = vpop.f32.mrf.mxu0
  %683 = vmatprep.mubr.f32.mxu0 0.0
  %684 = vmatmul.mubr.f32.gmra.mxu0 %v508
  %v685 = vpop.f32.mrf.mxu0
  %v686 = vadd.f32 %v587, %v685
  %v687 = vpop.f32.mrf.mxu0
  %688 = vmatprep.mubr.f32.mxu0 0.0
  %689 = vmatmul.mubr.f32.gmra.mxu0 %v509
  %v690 = vpop.f32.mrf.mxu0
  %v691 = vadd.f32 %v587, %v690
  %v692 = vpop.f32.mrf.mxu0
  %693 = vmatprep.mubr.f32.mxu0 0.0
  %694 = vmatmul.mubr.f32.gmra.mxu0 %v510
  %v695 = vpop.f32.mrf.mxu0
  %v696 = vadd.f32 %v587, %v695
  %v697 = vpop.f32.mrf.mxu0
  %698 = vmatprep.mubr.f32.mxu0 0.0
  %699 = vmatmul.mubr.f32.gmra.mxu0 %v511
  %v700 = vpop.f32.mrf.mxu0
  %v701 = vadd.f32 %v587, %v700
  %v702 = vpop.f32.mrf.mxu0
  %703 = vmatprep.mubr.f32.mxu0 0.0
  %704 = vmatmul.mubr.f32.gmra.mxu0 %v512
  %v705 = vpop.f32.mrf.mxu0
  %v706 = vadd.f32 %v587, %v705
  %v707 = vpop.f32.mrf.mxu0
  %708 = vmatprep.mubr.f32.mxu0 0.0
  %709 = vmatmul.mubr.f32.gmra.mxu0 %v513
  %v710 = vpop.f32.mrf.mxu0
  %v711 = vadd.f32 %v587, %v710
  %v712 = vpop.f32.mrf.mxu0
  %713 = vmatprep.mubr.f32.mxu0 0.0
  %714 = vmatmul.mubr.f32.gmra.mxu0 %v514
  %v715 = vpop.f32.mrf.mxu0
  %v716 = vadd.f32 %v587, %v715
  %v717 = vpop.f32.mrf.mxu0
  %718 = vmatprep.mubr.f32.mxu0 0.0
  %719 = vmatmul.mubr.f32.gmra.mxu0 %v515
  %v720 = vpop.f32.mrf.mxu0
  %v721 = vadd.f32 %v587, %v720
  %v722 = vpop.f32.mrf.mxu0
  %723 = vmatprep.mubr.f32.mxu0 0.0
  %724 = vmatmul.mubr.f32.gmra.mxu0 %v516
  %v725 = vpop.f32.mrf.mxu0
  %v726 = vadd.f32 %v587, %v725
  %v727 = vpop.f32.mrf.mxu0
  %728 = vmatprep.mubr.f32.mxu0 0.0
  %729 = vmatmul.mubr.f32.gmra.mxu0 %v517
  %v730 = vpop.f32.mrf.mxu0
  %v731 = vadd.f32 %v587, %v730
  %v732 = vpop.f32.mrf.mxu0
  %733 = vmatprep.mubr.f32.mxu0 0.0
  %734 = vmatmul.mubr.f32.gmra.mxu0 %v518
  %v735 = vpop.f32.mrf.mxu0
  %v736 = vadd.f32 %v587, %v735
  %v737 = vpop.f32.mrf.mxu0
  %738 = vmatprep.mubr.f32.mxu0 0.0
  %739 = vmatmul.mubr.f32.gmra.mxu0 %v519
  %v740 = vpop.f32.mrf.mxu0
  %v741 = vadd.f32 %v587, %v740
  %v742 = vpop.f32.mrf.mxu0
  %743 = vmatprep.mubr.f32.mxu0 0.0
  %744 = vmatmul.mubr.f32.gmra.mxu0 %v520
  %v745 = vpop.f32.mrf.mxu0
  %v746 = vadd.f32 %v587, %v745
  %v747 = vpop.f32.mrf.mxu0
  %748 = vmatprep.mubr.f32.mxu0 0.0
  %749 = vmatmul.mubr.f32.gmra.mxu0 %v521
  %v750 = vpop.f32.mrf.mxu0
  %v751 = vadd.f32 %v587, %v750
  %v752 = vpop.f32.mrf.mxu0
  %753 = vmatprep.mubr.f32.mxu0 0.0
  %754 = vmatmul.mubr.f32.gmra.mxu0 %v522
  %v755 = vpop.f32.mrf.mxu0
  %v756 = vadd.f32 %v587, %v755
  %v757 = vpop.f32.mrf.mxu0
  %758 = vmatprep.mubr.f32.mxu0 0.0
  %759 = vmatmul.mubr.f32.gmra.mxu0 %v523
  %v760 = vpop.f32.mrf.mxu0
  %v761 = vadd.f32 %v587, %v760
  %v762 = vpop.f32.mrf.mxu0
  %763 = vmatprep.mubr.f32.mxu0 0.0
  %764 = vmatmul.mubr.f32.gmra.mxu0 %v524
  %v765 = vpop.f32.mrf.mxu0
  %v766 = vadd.f32 %v587, %v765
  %v767 = vpop.f32.mrf.mxu0
  %768 = vmatprep.mubr.f32.mxu0 0.0
  %769 = vmatmul.mubr.f32.gmra.mxu0 %v525
  %v770 = vpop.f32.mrf.mxu0
  %v771 = vadd.f32 %v587, %v770
  %v772 = vpop.f32.mrf.mxu0
  %773 = vmatprep.mubr.f32.mxu0 0.0
  %774 = vmatmul.mubr.f32.gmra.mxu0 %v526
  %v775 = vpop.f32.mrf.mxu0
  %v776 = vadd.f32 %v587, %v775
  %v777 = vpop.f32.mrf.mxu0
  %778 = vmatprep.mubr.f32.mxu0 0.0
  %779 = vmatmul.mubr.f32.gmra.mxu0 %v527
  %v780 = vpop.f32.mrf.mxu0
  %v781 = vadd.f32 %v587, %v780
  %v782 = vpop.f32.mrf.mxu0
  %783 = vmatprep.mubr.f32.mxu0 0.0
  %784 = vmatmul.mubr.f32.gmra.mxu0 %v528
  %v785 = vpop.f32.mrf.mxu0
  %v786 = vadd.f32 %v587, %v785
  %v787 = vpop.f32.mrf.mxu0
  %788 = vmatprep.mubr.f32.mxu0 0.0
  %789 = vmatmul.mubr.f32.gmra.mxu0 %v529
  %v790 = vpop.f32.mrf.mxu0
  %v791 = vadd.f32 %v587, %v790
  %v792 = vpop.f32.mrf.mxu0
  %793 = vmatprep.mubr.f32.mxu0 0.0
  %794 = vmatmul.mubr.f32.gmra.mxu0 %v530
  %v795 = vpop.f32.mrf.mxu0
  %v796 = vadd.f32 %v587, %v795
  %v797 = vpop.f32.mrf.mxu0
  %798 = vmatprep.mubr.f32.mxu0 0.0
  %799 = vmatmul.mubr.f32.gmra.mxu0 %v531
  %v800 = vpop.f32.mrf.mxu0
  %v801 = vadd.f32 %v587, %v800
  %v802 = vpop.f32.mrf.mxu0
  %803 = vmatprep.mubr.f32.mxu0 0.0
  %804 = vmatmul.mubr.f32.gmra.mxu0 %v532
  %v805 = vpop.f32.mrf.mxu0
  %v806 = vadd.f32 %v587, %v805
  %v807 = vpop.f32.mrf.mxu0
  %808 = vmatprep.mubr.f32.mxu0 0.0
  %809 = vmatmul.mubr.f32.gmra.mxu0 %v533
  %v810 = vpop.f32.mrf.mxu0
  %v811 = vadd.f32 %v587, %v810
  %v812 = vpop.f32.mrf.mxu0
  %813 = vmatprep.mubr.f32.mxu0 0.0
  %814 = vmatmul.mubr.f32.gmra.mxu0 %v534
  %v815 = vpop.f32.mrf.mxu0
  %v816 = vadd.f32 %v587, %v815
  %v817 = vpop.f32.mrf.mxu0
  %818 = vmatprep.mubr.f32.mxu0 0.0
  %819 = vmatmul.mubr.f32.gmra.mxu0 %v535
  %v820 = vpop.f32.mrf.mxu0
  %v821 = vadd.f32 %v587, %v820
  %v822 = vpop.f32.mrf.mxu0
  %823 = vmatprep.mubr.f32.mxu0 0.0
  %824 = vmatmul.mubr.f32.gmra.mxu0 %v536
  %v825 = vpop.f32.mrf.mxu0
  %v826 = vadd.f32 %v587, %v825
  %v827 = vpop.f32.mrf.mxu0
  %828 = vmatprep.mubr.f32.mxu0 0.0
  %829 = vmatmul.mubr.f32.gmra.mxu0 %v537
  %v830 = vpop.f32.mrf.mxu0
  %v831 = vadd.f32 %v587, %v830
  %v832 = vpop.f32.mrf.mxu0
  %833 = vmatprep.mubr.f32.mxu0 0.0
  %834 = vmatmul.mubr.f32.gmra.mxu0 %v538
  %v835 = vpop.f32.mrf.mxu0
  %v836 = vadd.f32 %v587, %v835
  %v837 = vpop.f32.mrf.mxu0
  %838 = vmatprep.mubr.f32.mxu0 0.0
  %839 = vmatmul.mubr.f32.gmra.mxu0 %v539
  %v840 = vpop.f32.mrf.mxu0
  %v841 = vadd.f32 %v587, %v840
  %v842 = vpop.f32.mrf.mxu0
  %843 = vmatprep.mubr.f32.mxu0 0.0
  %844 = vmatmul.mubr.f32.gmra.mxu0 %v540
  %v845 = vpop.f32.mrf.mxu0
  %v846 = vadd.f32 %v587, %v845
  %v847 = vpop.f32.mrf.mxu0
  %848 = vmatprep.mubr.f32.mxu0 0.0
  %849 = vmatmul.mubr.f32.gmra.mxu0 %v541
  %v850 = vpop.f32.mrf.mxu0
  %v851 = vadd.f32 %v587, %v850
  %v852 = vpop.f32.mrf.mxu0
  %853 = vmatprep.mubr.f32.mxu0 0.0
  %854 = vmatmul.mubr.f32.gmra.mxu0 %v542
  %v855 = vpop.f32.mrf.mxu0
  %v856 = vadd.f32 %v587, %v855
  %v857 = vpop.f32.mrf.mxu0
  %858 = vmatprep.mubr.f32.mxu0 0.0
  %859 = vmatmul.mubr.f32.gmra.mxu0 %v543
  %v860 = vpop.f32.mrf.mxu0
  %v861 = vadd.f32 %v587, %v860
  %v862 = vpop.f32.mrf.mxu0
  %863 = vmatprep.mubr.f32.mxu0 0.0
  %864 = vmatmul.mubr.f32.gmra.mxu0 %v544
  %v865 = vpop.f32.mrf.mxu0
  %v866 = vadd.f32 %v587, %v865
  %v867 = vpop.f32.mrf.mxu0
  %868 = vmatprep.mubr.f32.mxu0 0.0
  %869 = vmatmul.mubr.f32.gmra.mxu0 %v545
  %v870 = vpop.f32.mrf.mxu0
  %v871 = vadd.f32 %v587, %v870
  %v872 = vpop.f32.mrf.mxu0
  %873 = vmatprep.mubr.f32.mxu0 0.0
  %874 = vmatmul.mubr.f32.gmra.mxu0 %v546
  %v875 = vpop.f32.mrf.mxu0
  %v876 = vadd.f32 %v587, %v875
  %v877 = vpop.f32.mrf.mxu0
  %878 = vmatprep.mubr.f32.mxu0 0.0
  %879 = vmatmul.mubr.f32.gmra.mxu0 %v547
  %v880 = vpop.f32.mrf.mxu0
  %v881 = vadd.f32 %v587, %v880
  %v882 = vpop.f32.mrf.mxu0
  %883 = vmatprep.mubr.f32.mxu0 0.0
  %884 = vmatmul.mubr.f32.gmra.mxu0 %v548
  %v885 = vpop.f32.mrf.mxu0
  %v886 = vadd.f32 %v587, %v885
  %v887 = vpop.f32.mrf.mxu0
  %888 = vmatprep.mubr.f32.mxu0 0.0
  %889 = vmatmul.mubr.f32.gmra.mxu0 %v549
  %v890 = vpop.f32.mrf.mxu0
  %v891 = vadd.f32 %v587, %v890
  %v892 = vpop.f32.mrf.mxu0
  %893 = vmatprep.mubr.f32.mxu0 0.0
  %894 = vmatmul.mubr.f32.gmra.mxu0 %v550
  %v895 = vpop.f32.mrf.mxu0
  %v896 = vadd.f32 %v587, %v895
  %v897 = vpop.f32.mrf.mxu0
  %898 = vmatprep.mubr.f32.mxu0 0.0
  %899 = vmatmul.mubr.f32.gmra.mxu0 %v551
  %v900 = vpop.f32.mrf.mxu0
  %v901 = vadd.f32 %v587, %v900
  %v902 = vpop.f32.mrf.mxu0
  %903 = vmatprep.mubr.f32.mxu0 0.0
  %904 = vmatmul.mubr.f32.gmra.mxu0 %v552
  %v905 = vpop.f32.mrf.mxu0
  %v906 = vadd.f32 %v587, %v905
  %v907 = vpop.f32.mrf.mxu0
  %908 = vmatprep.mubr.f32.mxu0 0.0
  %909 = vmatmul.mubr.f32.gmra.mxu0 %v553
  %v910 = vpop.f32.mrf.mxu0
  %v911 = vadd.f32 %v587, %v910
  %v912 = vpop.f32.mrf.mxu0
  %913 = vmatprep.mubr.f32.mxu0 0.0
  %914 = vmatmul.mubr.f32.gmra.mxu0 %v554
  %v915 = vpop.f32.mrf.mxu0
  %v916 = vadd.f32 %v587, %v915
  %v917 = vpop.f32.mrf.mxu0
  %918 = vmatprep.mubr.f32.mxu0 0.0
  %919 = vmatmul.mubr.f32.gmra.mxu0 %v555
  %v920 = vpop.f32.mrf.mxu0
  %v921 = vadd.f32 %v587, %v920
  %v922 = vpop.f32.mrf.mxu0
  %923 = vmatprep.mubr.f32.mxu0 0.0
  %924 = vmatmul.mubr.f32.gmra.mxu0 %v556
  %v925 = vpop.f32.mrf.mxu0
  %v926 = vadd.f32 %v587, %v925
  %v927 = vpop.f32.mrf.mxu0
  %928 = vmatprep.mubr.f32.mxu0 0.0
  %929 = vmatmul.mubr.f32.gmra.mxu0 %v557
  %v930 = vpop.f32.mrf.mxu0
  %v931 = vadd.f32 %v587, %v930
  %v932 = vpop.f32.mrf.mxu0
  %933 = vmatprep.mubr.f32.mxu0 0.0
  %934 = vmatmul.mubr.f32.gmra.mxu0 %v558
  %v935 = vpop.f32.mrf.mxu0
  %v936 = vadd.f32 %v587, %v935
  %v937 = vpop.f32.mrf.mxu0
  %938 = vmatprep.mubr.f32.mxu0 0.0
  %939 = vmatmul.mubr.f32.gmra.mxu0 %v559
  %v940 = vpop.f32.mrf.mxu0
  %v941 = vadd.f32 %v587, %v940
  %v942 = vpop.f32.mrf.mxu0
  %943 = vmatprep.mubr.f32.mxu0 0.0
  %944 = vmatmul.mubr.f32.gmra.mxu0 %v560
  %v945 = vpop.f32.mrf.mxu0
  %v946 = vadd.f32 %v587, %v945
  %v947 = vpop.f32.mrf.mxu0
  %948 = vmatprep.mubr.f32.mxu0 0.0
  %949 = vmatmul.mubr.f32.gmra.mxu0 %v561
  %v950 = vpop.f32.mrf.mxu0
  %v951 = vadd.f32 %v587, %v950
  %v952 = vpop.f32.mrf.mxu0
  %953 = vmatprep.mubr.f32.mxu0 0.0
  %954 = vmatmul.mubr.f32.gmra.mxu0 %v562
  %v955 = vpop.f32.mrf.mxu0
  %v956 = vadd.f32 %v587, %v955
  %v957 = vpop.f32.mrf.mxu0
  %958 = vmatprep.mubr.f32.mxu0 0.0
  %959 = vmatmul.mubr.f32.gmra.mxu0 %v563
  %v960 = vpop.f32.mrf.mxu0
  %v961 = vadd.f32 %v587, %v960
  %v962 = vpop.f32.mrf.mxu0
  %963 = vmatprep.mubr.f32.mxu0 0.0
  %964 = vmatmul.mubr.f32.gmra.mxu0 %v564
  %v965 = vpop.f32.mrf.mxu0
  %v966 = vadd.f32 %v587, %v965
  %v967 = vpop.f32.mrf.mxu0
  %968 = vmatprep.mubr.f32.mxu0 0.0
  %969 = vmatmul.mubr.f32.gmra.mxu0 %v565
  %v970 = vpop.f32.mrf.mxu0
  %v971 = vadd.f32 %v587, %v970
  %v972 = vpop.f32.mrf.mxu0
  %973 = vdwg.mxu0
  %974 = vst [vmem:[%s7] sm:$0xff] %v656
  %975 = vst [vmem:[%s7 + $0x8] sm:$0xff] %v661
  %976 = vst [vmem:[%s7 + $0x10] sm:$0xff] %v666
  %977 = vst [vmem:[%s7 + $0x18] sm:$0xff] %v671
  %978 = vst [vmem:[%s7 + $0x20] sm:$0xff] %v676
  %979 = vst [vmem:[%s7 + $0x28] sm:$0xff] %v681
  %980 = vst [vmem:[%s7 + $0x30] sm:$0xff] %v686
  %981 = vst [vmem:[%s7 + $0x38] sm:$0xff] %v691
  %982 = vst [vmem:[%s7 + $0x40] sm:$0xff] %v696
  %983 = vst [vmem:[%s7 + $0x48] sm:$0xff] %v701
  %984 = vst [vmem:[%s7 + $0x50] sm:$0xff] %v706
  %985 = vst [vmem:[%s7 + $0x58] sm:$0xff] %v711
  %986 = vst [vmem:[%s7 + $0x60] sm:$0xff] %v716
  %987 = vst [vmem:[%s7 + $0x68] sm:$0xff] %v721
  %988 = vst [vmem:[%s7 + $0x70] sm:$0xff] %v726
  %989 = vst [vmem:[%s7 + $0x78] sm:$0xff] %v731
  %990 = vst [vmem:[%s7 + $0x80] sm:$0xff] %v736
  %991 = vst [vmem:[%s7 + $0x88] sm:$0xff] %v741
  %992 = vst [vmem:[%s7 + $0x90] sm:$0xff] %v746
  %993 = vst [vmem:[%s7 + $0x98] sm:$0xff] %v751
  %994 = vst [vmem:[%s7 + $0xa0] sm:$0xff] %v756
  %995 = vst [vmem:[%s7 + $0xa8] sm:$0xff] %v761
  %996 = vst [vmem:[%s7 + $0xb0] sm:$0xff] %v766
  %997 = vst [vmem:[%s7 + $0xb8] sm:$0xff] %v771
  %998 = vst [vmem:[%s7 + $0xc0] sm:$0xff] %v776
  %999 = vst [vmem:[%s7 + $0xc8] sm:$0xff] %v781
  %1000 = vst [vmem:[%s7 + $0xd0] sm:$0xff] %v786
  %1001 = vst [vmem:[%s7 + $0xd8] sm:$0xff] %v791
  %1002 = vst [vmem:[%s7 + $0xe0] sm:$0xff] %v796
  %1003 = vst [vmem:[%s7 + $0xe8] sm:$0xff] %v801
  %1004 = vst [vmem:[%s7 + $0xf0] sm:$0xff] %v806
  %1005 = vst [vmem:[%s7 + $0xf8] sm:$0xff] %v811
  %1006 = vst [vmem:[%s7 + $0x100] sm:$0xff] %v816
  %1007 = vst [vmem:[%s7 + $0x108] sm:$0xff] %v821
  %1008 = vst [vmem:[%s7 + $0x110] sm:$0xff] %v826
  %1009 = vst [vmem:[%s7 + $0x118] sm:$0xff] %v831
  %1010 = vst [vmem:[%s7 + $0x120] sm:$0xff] %v836
  %1011 = vst [vmem:[%s7 + $0x128] sm:$0xff] %v841
  %1012 = vst [vmem:[%s7 + $0x130] sm:$0xff] %v846
  %1013 = vst [vmem:[%s7 + $0x138] sm:$0xff] %v851
  %1014 = vst [vmem:[%s7 + $0x140] sm:$0xff] %v856
  %1015 = vst [vmem:[%s7 + $0x148] sm:$0xff] %v861
  %1016 = vst [vmem:[%s7 + $0x150] sm:$0xff] %v866
  %1017 = vst [vmem:[%s7 + $0x158] sm:$0xff] %v871
  %1018 = vst [vmem:[%s7 + $0x160] sm:$0xff] %v876
  %1019 = vst [vmem:[%s7 + $0x168] sm:$0xff] %v881
  %1020 = vst [vmem:[%s7 + $0x170] sm:$0xff] %v886
  %1021 = vst [vmem:[%s7 + $0x178] sm:$0xff] %v891
  %1022 = vst [vmem:[%s7 + $0x180] sm:$0xff] %v896
  %1023 = vst [vmem:[%s7 + $0x188] sm:$0xff] %v901
  %1024 = vst [vmem:[%s7 + $0x190] sm:$0xff] %v906
  %1025 = vst [vmem:[%s7 + $0x198] sm:$0xff] %v911
  %1026 = vst [vmem:[%s7 + $0x1a0] sm:$0xff] %v916
  %1027 = vst [vmem:[%s7 + $0x1a8] sm:$0xff] %v921
  %1028 = vst [vmem:[%s7 + $0x1b0] sm:$0xff] %v926
  %1029 = vst [vmem:[%s7 + $0x1b8] sm:$0xff] %v931
  %1030 = vst [vmem:[%s7 + $0x1c0] sm:$0xff] %v936
  %1031 = vst [vmem:[%s7 + $0x1c8] sm:$0xff] %v941
  %1032 = vst [vmem:[%s7 + $0x1d0] sm:$0xff] %v946
  %1033 = vst [vmem:[%s7 + $0x1d8] sm:$0xff] %v951
  %1034 = vst [vmem:[%s7 + $0x1e0] sm:$0xff] %v956
  %1035 = vst [vmem:[%s7 + $0x1e8] sm:$0xff] %v961
  %1036 = vst [vmem:[%s7 + $0x1f0] sm:$0xff] %v966
  %1037 = vst [vmem:[%s7 + $0x1f8] sm:$0xff] %v971
  %v1038 = vld [vmem:[%s5] sm:$0x1]
  %v1040 = vlaneseq
  %v1041 = vshrl.u32 %v1040, 7
  %v1042 = vsub.s32 0, %v1041
  %v1043 = vrot.slane %v1038, %v1042
  %v1045 = vmul.f32 %v656, %v1043
  %v1046 = vmul.f32 %v661, %v1043
  %v1047 = vmul.f32 %v666, %v1043
  %v1048 = vmul.f32 %v671, %v1043
  %v1049 = vmul.f32 %v676, %v1043
  %v1050 = vmul.f32 %v681, %v1043
  %v1051 = vmul.f32 %v686, %v1043
  %v1052 = vmul.f32 %v691, %v1043
  %v1053 = vmul.f32 %v696, %v1043
  %v1054 = vmul.f32 %v701, %v1043
  %v1055 = vmul.f32 %v706, %v1043
  %v1056 = vmul.f32 %v711, %v1043
  %v1057 = vmul.f32 %v716, %v1043
  %v1058 = vmul.f32 %v721, %v1043
  %v1059 = vmul.f32 %v726, %v1043
  %v1060 = vmul.f32 %v731, %v1043
  %v1061 = vmul.f32 %v736, %v1043
  %v1062 = vmul.f32 %v741, %v1043
  %v1063 = vmul.f32 %v746, %v1043
  %v1064 = vmul.f32 %v751, %v1043
  %v1065 = vmul.f32 %v756, %v1043
  %v1066 = vmul.f32 %v761, %v1043
  %v1067 = vmul.f32 %v766, %v1043
  %v1068 = vmul.f32 %v771, %v1043
  %v1069 = vmul.f32 %v776, %v1043
  %v1070 = vmul.f32 %v781, %v1043
  %v1071 = vmul.f32 %v786, %v1043
  %v1072 = vmul.f32 %v791, %v1043
  %v1073 = vmul.f32 %v796, %v1043
  %v1074 = vmul.f32 %v801, %v1043
  %v1075 = vmul.f32 %v806, %v1043
  %v1076 = vmul.f32 %v811, %v1043
  %v1077 = vmul.f32 %v816, %v1043
  %v1078 = vmul.f32 %v821, %v1043
  %v1079 = vmul.f32 %v826, %v1043
  %v1080 = vmul.f32 %v831, %v1043
  %v1081 = vmul.f32 %v836, %v1043
  %v1082 = vmul.f32 %v841, %v1043
  %v1083 = vmul.f32 %v846, %v1043
  %v1084 = vmul.f32 %v851, %v1043
  %v1085 = vmul.f32 %v856, %v1043
  %v1086 = vmul.f32 %v861, %v1043
  %v1087 = vmul.f32 %v866, %v1043
  %v1088 = vmul.f32 %v871, %v1043
  %v1089 = vmul.f32 %v876, %v1043
  %v1090 = vmul.f32 %v881, %v1043
  %v1091 = vmul.f32 %v886, %v1043
  %v1092 = vmul.f32 %v891, %v1043
  %v1093 = vmul.f32 %v896, %v1043
  %v1094 = vmul.f32 %v901, %v1043
  %v1095 = vmul.f32 %v906, %v1043
  %v1096 = vmul.f32 %v911, %v1043
  %v1097 = vmul.f32 %v916, %v1043
  %v1098 = vmul.f32 %v921, %v1043
  %v1099 = vmul.f32 %v926, %v1043
  %v1100 = vmul.f32 %v931, %v1043
  %v1101 = vmul.f32 %v936, %v1043
  %v1102 = vmul.f32 %v941, %v1043
  %v1103 = vmul.f32 %v946, %v1043
  %v1104 = vmul.f32 %v951, %v1043
  %v1105 = vmul.f32 %v956, %v1043
  %v1106 = vmul.f32 %v961, %v1043
  %v1107 = vmul.f32 %v966, %v1043
  %v1108 = vmul.f32 %v971, %v1043
  %1109 = vadd.xlane.f32.xlu0 %v1045
  %v1110 = vpop.xlane.xlu0 %1109
  %1111 = vadd.xlane.f32.xlu0 %v1046
  %v1112 = vpop.xlane.xlu0 %1111
  %1113 = vadd.xlane.f32.xlu0 %v1047
  %v1114 = vpop.xlane.xlu0 %1113
  %1115 = vadd.xlane.f32.xlu0 %v1048
  %v1116 = vpop.xlane.xlu0 %1115
  %1117 = vadd.xlane.f32.xlu0 %v1049
  %v1118 = vpop.xlane.xlu0 %1117
  %1119 = vadd.xlane.f32.xlu0 %v1050
  %v1120 = vpop.xlane.xlu0 %1119
  %1121 = vadd.xlane.f32.xlu0 %v1051
  %v1122 = vpop.xlane.xlu0 %1121
  %1123 = vadd.xlane.f32.xlu0 %v1052
  %v1124 = vpop.xlane.xlu0 %1123
  %1125 = vadd.xlane.f32.xlu0 %v1053
  %v1126 = vpop.xlane.xlu0 %1125
  %1127 = vadd.xlane.f32.xlu0 %v1054
  %v1128 = vpop.xlane.xlu0 %1127
  %1129 = vadd.xlane.f32.xlu0 %v1055
  %v1130 = vpop.xlane.xlu0 %1129
  %1131 = vadd.xlane.f32.xlu0 %v1056
  %v1132 = vpop.xlane.xlu0 %1131
  %1133 = vadd.xlane.f32.xlu0 %v1057
  %v1134 = vpop.xlane.xlu0 %1133
  %1135 = vadd.xlane.f32.xlu0 %v1058
  %v1136 = vpop.xlane.xlu0 %1135
  %1137 = vadd.xlane.f32.xlu0 %v1059
  %v1138 = vpop.xlane.xlu0 %1137
  %1139 = vadd.xlane.f32.xlu0 %v1060
  %v1140 = vpop.xlane.xlu0 %1139
  %1141 = vadd.xlane.f32.xlu0 %v1061
  %v1142 = vpop.xlane.xlu0 %1141
  %1143 = vadd.xlane.f32.xlu0 %v1062
  %v1144 = vpop.xlane.xlu0 %1143
  %1145 = vadd.xlane.f32.xlu0 %v1063
  %v1146 = vpop.xlane.xlu0 %1145
  %1147 = vadd.xlane.f32.xlu0 %v1064
  %v1148 = vpop.xlane.xlu0 %1147
  %1149 = vadd.xlane.f32.xlu0 %v1065
  %v1150 = vpop.xlane.xlu0 %1149
  %1151 = vadd.xlane.f32.xlu0 %v1066
  %v1152 = vpop.xlane.xlu0 %1151
  %1153 = vadd.xlane.f32.xlu0 %v1067
  %v1154 = vpop.xlane.xlu0 %1153
  %1155 = vadd.xlane.f32.xlu0 %v1068
  %v1156 = vpop.xlane.xlu0 %1155
  %1157 = vadd.xlane.f32.xlu0 %v1069
  %v1158 = vpop.xlane.xlu0 %1157
  %1159 = vadd.xlane.f32.xlu0 %v1070
  %v1160 = vpop.xlane.xlu0 %1159
  %1161 = vadd.xlane.f32.xlu0 %v1071
  %v1162 = vpop.xlane.xlu0 %1161
  %1163 = vadd.xlane.f32.xlu0 %v1072
  %v1164 = vpop.xlane.xlu0 %1163
  %1165 = vadd.xlane.f32.xlu0 %v1073
  %v1166 = vpop.xlane.xlu0 %1165
  %1167 = vadd.xlane.f32.xlu0 %v1074
  %v1168 = vpop.xlane.xlu0 %1167
  %1169 = vadd.xlane.f32.xlu0 %v1075
  %v1170 = vpop.xlane.xlu0 %1169
  %1171 = vadd.xlane.f32.xlu0 %v1076
  %v1172 = vpop.xlane.xlu0 %1171
  %1173 = vadd.xlane.f32.xlu0 %v1077
  %v1174 = vpop.xlane.xlu0 %1173
  %1175 = vadd.xlane.f32.xlu0 %v1078
  %v1176 = vpop.xlane.xlu0 %1175
  %1177 = vadd.xlane.f32.xlu0 %v1079
  %v1178 = vpop.xlane.xlu0 %1177
  %1179 = vadd.xlane.f32.xlu0 %v1080
  %v1180 = vpop.xlane.xlu0 %1179
  %1181 = vadd.xlane.f32.xlu0 %v1081
  %v1182 = vpop.xlane.xlu0 %1181
  %1183 = vadd.xlane.f32.xlu0 %v1082
  %v1184 = vpop.xlane.xlu0 %1183
  %1185 = vadd.xlane.f32.xlu0 %v1083
  %v1186 = vpop.xlane.xlu0 %1185
  %1187 = vadd.xlane.f32.xlu0 %v1084
  %v1188 = vpop.xlane.xlu0 %1187
  %1189 = vadd.xlane.f32.xlu0 %v1085
  %v1190 = vpop.xlane.xlu0 %1189
  %1191 = vadd.xlane.f32.xlu0 %v1086
  %v1192 = vpop.xlane.xlu0 %1191
  %1193 = vadd.xlane.f32.xlu0 %v1087
  %v1194 = vpop.xlane.xlu0 %1193
  %1195 = vadd.xlane.f32.xlu0 %v1088
  %v1196 = vpop.xlane.xlu0 %1195
  %1197 = vadd.xlane.f32.xlu0 %v1089
  %v1198 = vpop.xlane.xlu0 %1197
  %1199 = vadd.xlane.f32.xlu0 %v1090
  %v1200 = vpop.xlane.xlu0 %1199
  %1201 = vadd.xlane.f32.xlu0 %v1091
  %v1202 = vpop.xlane.xlu0 %1201
  %1203 = vadd.xlane.f32.xlu0 %v1092
  %v1204 = vpop.xlane.xlu0 %1203
  %1205 = vadd.xlane.f32.xlu0 %v1093
  %v1206 = vpop.xlane.xlu0 %1205
  %1207 = vadd.xlane.f32.xlu0 %v1094
  %v1208 = vpop.xlane.xlu0 %1207
  %1209 = vadd.xlane.f32.xlu0 %v1095
  %v1210 = vpop.xlane.xlu0 %1209
  %1211 = vadd.xlane.f32.xlu0 %v1096
  %v1212 = vpop.xlane.xlu0 %1211
  %1213 = vadd.xlane.f32.xlu0 %v1097
  %v1214 = vpop.xlane.xlu0 %1213
  %1215 = vadd.xlane.f32.xlu0 %v1098
  %v1216 = vpop.xlane.xlu0 %1215
  %1217 = vadd.xlane.f32.xlu0 %v1099
  %v1218 = vpop.xlane.xlu0 %1217
  %1219 = vadd.xlane.f32.xlu0 %v1100
  %v1220 = vpop.xlane.xlu0 %1219
  %1221 = vadd.xlane.f32.xlu0 %v1101
  %v1222 = vpop.xlane.xlu0 %1221
  %1223 = vadd.xlane.f32.xlu0 %v1102
  %v1224 = vpop.xlane.xlu0 %1223
  %1225 = vadd.xlane.f32.xlu0 %v1103
  %v1226 = vpop.xlane.xlu0 %1225
  %1227 = vadd.xlane.f32.xlu0 %v1104
  %v1228 = vpop.xlane.xlu0 %1227
  %1229 = vadd.xlane.f32.xlu0 %v1105
  %v1230 = vpop.xlane.xlu0 %1229
  %1231 = vadd.xlane.f32.xlu0 %v1106
  %v1232 = vpop.xlane.xlu0 %1231
  %1233 = vadd.xlane.f32.xlu0 %v1107
  %v1234 = vpop.xlane.xlu0 %1233
  %1235 = vadd.xlane.f32.xlu0 %v1108
  %v1236 = vpop.xlane.xlu0 %1235
  %v1237 = vld [vmem:[#allocation2] sm:$0x1]
  %v1239 = vlaneseq
  %v1240 = vshrl.u32 %v1239, 7
  %v1241 = vsub.s32 0, %v1240
  %v1242 = vrot.slane %v1237, %v1241
  %v1244 = vadd.f32 %v1110, %v1242
  %v1245 = vadd.f32 %v1112, %v1242
  %v1246 = vadd.f32 %v1114, %v1242
  %v1247 = vadd.f32 %v1116, %v1242
  %v1248 = vadd.f32 %v1118, %v1242
  %v1249 = vadd.f32 %v1120, %v1242
  %v1250 = vadd.f32 %v1122, %v1242
  %v1251 = vadd.f32 %v1124, %v1242
  %v1252 = vadd.f32 %v1126, %v1242
  %v1253 = vadd.f32 %v1128, %v1242
  %v1254 = vadd.f32 %v1130, %v1242
  %v1255 = vadd.f32 %v1132, %v1242
  %v1256 = vadd.f32 %v1134, %v1242
  %v1257 = vadd.f32 %v1136, %v1242
  %v1258 = vadd.f32 %v1138, %v1242
  %v1259 = vadd.f32 %v1140, %v1242
  %v1260 = vadd.f32 %v1142, %v1242
  %v1261 = vadd.f32 %v1144, %v1242
  %v1262 = vadd.f32 %v1146, %v1242
  %v1263 = vadd.f32 %v1148, %v1242
  %v1264 = vadd.f32 %v1150, %v1242
  %v1265 = vadd.f32 %v1152, %v1242
  %v1266 = vadd.f32 %v1154, %v1242
  %v1267 = vadd.f32 %v1156, %v1242
  %v1268 = vadd.f32 %v1158, %v1242
  %v1269 = vadd.f32 %v1160, %v1242
  %v1270 = vadd.f32 %v1162, %v1242
  %v1271 = vadd.f32 %v1164, %v1242
  %v1272 = vadd.f32 %v1166, %v1242
  %v1273 = vadd.f32 %v1168, %v1242
  %v1274 = vadd.f32 %v1170, %v1242
  %v1275 = vadd.f32 %v1172, %v1242
  %v1276 = vadd.f32 %v1174, %v1242
  %v1277 = vadd.f32 %v1176, %v1242
  %v1278 = vadd.f32 %v1178, %v1242
  %v1279 = vadd.f32 %v1180, %v1242
  %v1280 = vadd.f32 %v1182, %v1242
  %v1281 = vadd.f32 %v1184, %v1242
  %v1282 = vadd.f32 %v1186, %v1242
  %v1283 = vadd.f32 %v1188, %v1242
  %v1284 = vadd.f32 %v1190, %v1242
  %v1285 = vadd.f32 %v1192, %v1242
  %v1286 = vadd.f32 %v1194, %v1242
  %v1287 = vadd.f32 %v1196, %v1242
  %v1288 = vadd.f32 %v1198, %v1242
  %v1289 = vadd.f32 %v1200, %v1242
  %v1290 = vadd.f32 %v1202, %v1242
  %v1291 = vadd.f32 %v1204, %v1242
  %v1292 = vadd.f32 %v1206, %v1242
  %v1293 = vadd.f32 %v1208, %v1242
  %v1294 = vadd.f32 %v1210, %v1242
  %v1295 = vadd.f32 %v1212, %v1242
  %v1296 = vadd.f32 %v1214, %v1242
  %v1297 = vadd.f32 %v1216, %v1242
  %v1298 = vadd.f32 %v1218, %v1242
  %v1299 = vadd.f32 %v1220, %v1242
  %v1300 = vadd.f32 %v1222, %v1242
  %v1301 = vadd.f32 %v1224, %v1242
  %v1302 = vadd.f32 %v1226, %v1242
  %v1303 = vadd.f32 %v1228, %v1242
  %v1304 = vadd.f32 %v1230, %v1242
  %v1305 = vadd.f32 %v1232, %v1242
  %v1306 = vadd.f32 %v1234, %v1242
  %v1307 = vadd.f32 %v1236, %v1242
  %v1308 = vxor.u32 %v1244, 2147483648
  %v1309 = vxor.u32 %v1245, 2147483648
  %v1310 = vxor.u32 %v1246, 2147483648
  %v1311 = vxor.u32 %v1247, 2147483648
  %v1312 = vxor.u32 %v1248, 2147483648
  %v1313 = vxor.u32 %v1249, 2147483648
  %v1314 = vxor.u32 %v1250, 2147483648
  %v1315 = vxor.u32 %v1251, 2147483648
  %v1316 = vxor.u32 %v1252, 2147483648
  %v1317 = vxor.u32 %v1253, 2147483648
  %v1318 = vxor.u32 %v1254, 2147483648
  %v1319 = vxor.u32 %v1255, 2147483648
  %v1320 = vxor.u32 %v1256, 2147483648
  %v1321 = vxor.u32 %v1257, 2147483648
  %v1322 = vxor.u32 %v1258, 2147483648
  %v1323 = vxor.u32 %v1259, 2147483648
  %v1324 = vxor.u32 %v1260, 2147483648
  %v1325 = vxor.u32 %v1261, 2147483648
  %v1326 = vxor.u32 %v1262, 2147483648
  %v1327 = vxor.u32 %v1263, 2147483648
  %v1328 = vxor.u32 %v1264, 2147483648
  %v1329 = vxor.u32 %v1265, 2147483648
  %v1330 = vxor.u32 %v1266, 2147483648
  %v1331 = vxor.u32 %v1267, 2147483648
  %v1332 = vxor.u32 %v1268, 2147483648
  %v1333 = vxor.u32 %v1269, 2147483648
  %v1334 = vxor.u32 %v1270, 2147483648
  %v1335 = vxor.u32 %v1271, 2147483648
  %v1336 = vxor.u32 %v1272, 2147483648
  %v1337 = vxor.u32 %v1273, 2147483648
  %v1338 = vxor.u32 %v1274, 2147483648
  %v1339 = vxor.u32 %v1275, 2147483648
  %v1340 = vxor.u32 %v1276, 2147483648
  %v1341 = vxor.u32 %v1277, 2147483648
  %v1342 = vxor.u32 %v1278, 2147483648
  %v1343 = vxor.u32 %v1279, 2147483648
  %v1344 = vxor.u32 %v1280, 2147483648
  %v1345 = vxor.u32 %v1281, 2147483648
  %v1346 = vxor.u32 %v1282, 2147483648
  %v1347 = vxor.u32 %v1283, 2147483648
  %v1348 = vxor.u32 %v1284, 2147483648
  %v1349 = vxor.u32 %v1285, 2147483648
  %v1350 = vxor.u32 %v1286, 2147483648
  %v1351 = vxor.u32 %v1287, 2147483648
  %v1352 = vxor.u32 %v1288, 2147483648
  %v1353 = vxor.u32 %v1289, 2147483648
  %v1354 = vxor.u32 %v1290, 2147483648
  %v1355 = vxor.u32 %v1291, 2147483648
  %v1356 = vxor.u32 %v1292, 2147483648
  %v1357 = vxor.u32 %v1293, 2147483648
  %v1358 = vxor.u32 %v1294, 2147483648
  %v1359 = vxor.u32 %v1295, 2147483648
  %v1360 = vxor.u32 %v1296, 2147483648
  %v1361 = vxor.u32 %v1297, 2147483648
  %v1362 = vxor.u32 %v1298, 2147483648
  %v1363 = vxor.u32 %v1299, 2147483648
  %v1364 = vxor.u32 %v1300, 2147483648
  %v1365 = vxor.u32 %v1301, 2147483648
  %v1366 = vxor.u32 %v1302, 2147483648
  %v1367 = vxor.u32 %v1303, 2147483648
  %v1368 = vxor.u32 %v1304, 2147483648
  %v1369 = vxor.u32 %v1305, 2147483648
  %v1370 = vxor.u32 %v1306, 2147483648
  %v1371 = vxor.u32 %v1307, 2147483648
  %v1372 = vmul.f32 %v1308, 1.442695
  %v1373 = vpow.pop %v1372
  %v1374 = vmul.f32 %v1309, 1.442695
  %v1375 = vpow.pop %v1374
  %v1376 = vmul.f32 %v1310, 1.442695
  %v1377 = vpow.pop %v1376
  %v1378 = vmul.f32 %v1311, 1.442695
  %v1379 = vpow.pop %v1378
  %v1380 = vmul.f32 %v1312, 1.442695
  %v1381 = vpow.pop %v1380
  %v1382 = vmul.f32 %v1313, 1.442695
  %v1383 = vpow.pop %v1382
  %v1384 = vmul.f32 %v1314, 1.442695
  %v1385 = vpow.pop %v1384
  %v1386 = vmul.f32 %v1315, 1.442695
  %v1387 = vpow.pop %v1386
  %v1388 = vmul.f32 %v1316, 1.442695
  %v1389 = vpow.pop %v1388
  %v1390 = vmul.f32 %v1317, 1.442695
  %v1391 = vpow.pop %v1390
  %v1392 = vmul.f32 %v1318, 1.442695
  %v1393 = vpow.pop %v1392
  %v1394 = vmul.f32 %v1319, 1.442695
  %v1395 = vpow.pop %v1394
  %v1396 = vmul.f32 %v1320, 1.442695
  %v1397 = vpow.pop %v1396
  %v1398 = vmul.f32 %v1321, 1.442695
  %v1399 = vpow.pop %v1398
  %v1400 = vmul.f32 %v1322, 1.442695
  %v1401 = vpow.pop %v1400
  %v1402 = vmul.f32 %v1323, 1.442695
  %v1403 = vpow.pop %v1402
  %v1404 = vmul.f32 %v1324, 1.442695
  %v1405 = vpow.pop %v1404
  %v1406 = vmul.f32 %v1325, 1.442695
  %v1407 = vpow.pop %v1406
  %v1408 = vmul.f32 %v1326, 1.442695
  %v1409 = vpow.pop %v1408
  %v1410 = vmul.f32 %v1327, 1.442695
  %v1411 = vpow.pop %v1410
  %v1412 = vmul.f32 %v1328, 1.442695
  %v1413 = vpow.pop %v1412
  %v1414 = vmul.f32 %v1329, 1.442695
  %v1415 = vpow.pop %v1414
  %v1416 = vmul.f32 %v1330, 1.442695
  %v1417 = vpow.pop %v1416
  %v1418 = vmul.f32 %v1331, 1.442695
  %v1419 = vpow.pop %v1418
  %v1420 = vmul.f32 %v1332, 1.442695
  %v1421 = vpow.pop %v1420
  %v1422 = vmul.f32 %v1333, 1.442695
  %v1423 = vpow.pop %v1422
  %v1424 = vmul.f32 %v1334, 1.442695
  %v1425 = vpow.pop %v1424
  %v1426 = vmul.f32 %v1335, 1.442695
  %v1427 = vpow.pop %v1426
  %v1428 = vmul.f32 %v1336, 1.442695
  %v1429 = vpow.pop %v1428
  %v1430 = vmul.f32 %v1337, 1.442695
  %v1431 = vpow.pop %v1430
  %v1432 = vmul.f32 %v1338, 1.442695
  %v1433 = vpow.pop %v1432
  %v1434 = vmul.f32 %v1339, 1.442695
  %v1435 = vpow.pop %v1434
  %v1436 = vmul.f32 %v1340, 1.442695
  %v1437 = vpow.pop %v1436
  %v1438 = vmul.f32 %v1341, 1.442695
  %v1439 = vpow.pop %v1438
  %v1440 = vmul.f32 %v1342, 1.442695
  %v1441 = vpow.pop %v1440
  %v1442 = vmul.f32 %v1343, 1.442695
  %v1443 = vpow.pop %v1442
  %v1444 = vmul.f32 %v1344, 1.442695
  %v1445 = vpow.pop %v1444
  %v1446 = vmul.f32 %v1345, 1.442695
  %v1447 = vpow.pop %v1446
  %v1448 = vmul.f32 %v1346, 1.442695
  %v1449 = vpow.pop %v1448
  %v1450 = vmul.f32 %v1347, 1.442695
  %v1451 = vpow.pop %v1450
  %v1452 = vmul.f32 %v1348, 1.442695
  %v1453 = vpow.pop %v1452
  %v1454 = vmul.f32 %v1349, 1.442695
  %v1455 = vpow.pop %v1454
  %v1456 = vmul.f32 %v1350, 1.442695
  %v1457 = vpow.pop %v1456
  %v1458 = vmul.f32 %v1351, 1.442695
  %v1459 = vpow.pop %v1458
  %v1460 = vmul.f32 %v1352, 1.442695
  %v1461 = vpow.pop %v1460
  %v1462 = vmul.f32 %v1353, 1.442695
  %v1463 = vpow.pop %v1462
  %v1464 = vmul.f32 %v1354, 1.442695
  %v1465 = vpow.pop %v1464
  %v1466 = vmul.f32 %v1355, 1.442695
  %v1467 = vpow.pop %v1466
  %v1468 = vmul.f32 %v1356, 1.442695
  %v1469 = vpow.pop %v1468
  %v1470 = vmul.f32 %v1357, 1.442695
  %v1471 = vpow.pop %v1470
  %v1472 = vmul.f32 %v1358, 1.442695
  %v1473 = vpow.pop %v1472
  %v1474 = vmul.f32 %v1359, 1.442695
  %v1475 = vpow.pop %v1474
  %v1476 = vmul.f32 %v1360, 1.442695
  %v1477 = vpow.pop %v1476
  %v1478 = vmul.f32 %v1361, 1.442695
  %v1479 = vpow.pop %v1478
  %v1480 = vmul.f32 %v1362, 1.442695
  %v1481 = vpow.pop %v1480
  %v1482 = vmul.f32 %v1363, 1.442695
  %v1483 = vpow.pop %v1482
  %v1484 = vmul.f32 %v1364, 1.442695
  %v1485 = vpow.pop %v1484
  %v1486 = vmul.f32 %v1365, 1.442695
  %v1487 = vpow.pop %v1486
  %v1488 = vmul.f32 %v1366, 1.442695
  %v1489 = vpow.pop %v1488
  %v1490 = vmul.f32 %v1367, 1.442695
  %v1491 = vpow.pop %v1490
  %v1492 = vmul.f32 %v1368, 1.442695
  %v1493 = vpow.pop %v1492
  %v1494 = vmul.f32 %v1369, 1.442695
  %v1495 = vpow.pop %v1494
  %v1496 = vmul.f32 %v1370, 1.442695
  %v1497 = vpow.pop %v1496
  %v1498 = vmul.f32 %v1371, 1.442695
  %v1499 = vpow.pop %v1498
  %v1500 = vadd.f32 %v1373, 1.0
  %v1501 = vadd.f32 %v1375, 1.0
  %v1502 = vadd.f32 %v1377, 1.0
  %v1503 = vadd.f32 %v1379, 1.0
  %v1504 = vadd.f32 %v1381, 1.0
  %v1505 = vadd.f32 %v1383, 1.0
  %v1506 = vadd.f32 %v1385, 1.0
  %v1507 = vadd.f32 %v1387, 1.0
  %v1508 = vadd.f32 %v1389, 1.0
  %v1509 = vadd.f32 %v1391, 1.0
  %v1510 = vadd.f32 %v1393, 1.0
  %v1511 = vadd.f32 %v1395, 1.0
  %v1512 = vadd.f32 %v1397, 1.0
  %v1513 = vadd.f32 %v1399, 1.0
  %v1514 = vadd.f32 %v1401, 1.0
  %v1515 = vadd.f32 %v1403, 1.0
  %v1516 = vadd.f32 %v1405, 1.0
  %v1517 = vadd.f32 %v1407, 1.0
  %v1518 = vadd.f32 %v1409, 1.0
  %v1519 = vadd.f32 %v1411, 1.0
  %v1520 = vadd.f32 %v1413, 1.0
  %v1521 = vadd.f32 %v1415, 1.0
  %v1522 = vadd.f32 %v1417, 1.0
  %v1523 = vadd.f32 %v1419, 1.0
  %v1524 = vadd.f32 %v1421, 1.0
  %v1525 = vadd.f32 %v1423, 1.0
  %v1526 = vadd.f32 %v1425, 1.0
  %v1527 = vadd.f32 %v1427, 1.0
  %v1528 = vadd.f32 %v1429, 1.0
  %v1529 = vadd.f32 %v1431, 1.0
  %v1530 = vadd.f32 %v1433, 1.0
  %v1531 = vadd.f32 %v1435, 1.0
  %v1532 = vadd.f32 %v1437, 1.0
  %v1533 = vadd.f32 %v1439, 1.0
  %v1534 = vadd.f32 %v1441, 1.0
  %v1535 = vadd.f32 %v1443, 1.0
  %v1536 = vadd.f32 %v1445, 1.0
  %v1537 = vadd.f32 %v1447, 1.0
  %v1538 = vadd.f32 %v1449, 1.0
  %v1539 = vadd.f32 %v1451, 1.0
  %v1540 = vadd.f32 %v1453, 1.0
  %v1541 = vadd.f32 %v1455, 1.0
  %v1542 = vadd.f32 %v1457, 1.0
  %v1543 = vadd.f32 %v1459, 1.0
  %v1544 = vadd.f32 %v1461, 1.0
  %v1545 = vadd.f32 %v1463, 1.0
  %v1546 = vadd.f32 %v1465, 1.0
  %v1547 = vadd.f32 %v1467, 1.0
  %v1548 = vadd.f32 %v1469, 1.0
  %v1549 = vadd.f32 %v1471, 1.0
  %v1550 = vadd.f32 %v1473, 1.0
  %v1551 = vadd.f32 %v1475, 1.0
  %v1552 = vadd.f32 %v1477, 1.0
  %v1553 = vadd.f32 %v1479, 1.0
  %v1554 = vadd.f32 %v1481, 1.0
  %v1555 = vadd.f32 %v1483, 1.0
  %v1556 = vadd.f32 %v1485, 1.0
  %v1557 = vadd.f32 %v1487, 1.0
  %v1558 = vadd.f32 %v1489, 1.0
  %v1559 = vadd.f32 %v1491, 1.0
  %v1560 = vadd.f32 %v1493, 1.0
  %v1561 = vadd.f32 %v1495, 1.0
  %v1562 = vadd.f32 %v1497, 1.0
  %v1563 = vadd.f32 %v1499, 1.0
  %v1564 = vrcp.pop %v1500
  %v1565 = vmul.f32 1.0, %v1564
  %v1566 = vrcp.pop %v1501
  %v1567 = vmul.f32 1.0, %v1566
  %v1568 = vrcp.pop %v1502
  %v1569 = vmul.f32 1.0, %v1568
  %v1570 = vrcp.pop %v1503
  %v1571 = vmul.f32 1.0, %v1570
  %v1572 = vrcp.pop %v1504
  %v1573 = vmul.f32 1.0, %v1572
  %v1574 = vrcp.pop %v1505
  %v1575 = vmul.f32 1.0, %v1574
  %v1576 = vrcp.pop %v1506
  %v1577 = vmul.f32 1.0, %v1576
  %v1578 = vrcp.pop %v1507
  %v1579 = vmul.f32 1.0, %v1578
  %v1580 = vrcp.pop %v1508
  %v1581 = vmul.f32 1.0, %v1580
  %v1582 = vrcp.pop %v1509
  %v1583 = vmul.f32 1.0, %v1582
  %v1584 = vrcp.pop %v1510
  %v1585 = vmul.f32 1.0, %v1584
  %v1586 = vrcp.pop %v1511
  %v1587 = vmul.f32 1.0, %v1586
  %v1588 = vrcp.pop %v1512
  %v1589 = vmul.f32 1.0, %v1588
  %v1590 = vrcp.pop %v1513
  %v1591 = vmul.f32 1.0, %v1590
  %v1592 = vrcp.pop %v1514
  %v1593 = vmul.f32 1.0, %v1592
  %v1594 = vrcp.pop %v1515
  %v1595 = vmul.f32 1.0, %v1594
  %v1596 = vrcp.pop %v1516
  %v1597 = vmul.f32 1.0, %v1596
  %v1598 = vrcp.pop %v1517
  %v1599 = vmul.f32 1.0, %v1598
  %v1600 = vrcp.pop %v1518
  %v1601 = vmul.f32 1.0, %v1600
  %v1602 = vrcp.pop %v1519
  %v1603 = vmul.f32 1.0, %v1602
  %v1604 = vrcp.pop %v1520
  %v1605 = vmul.f32 1.0, %v1604
  %v1606 = vrcp.pop %v1521
  %v1607 = vmul.f32 1.0, %v1606
  %v1608 = vrcp.pop %v1522
  %v1609 = vmul.f32 1.0, %v1608
  %v1610 = vrcp.pop %v1523
  %v1611 = vmul.f32 1.0, %v1610
  %v1612 = vrcp.pop %v1524
  %v1613 = vmul.f32 1.0, %v1612
  %v1614 = vrcp.pop %v1525
  %v1615 = vmul.f32 1.0, %v1614
  %v1616 = vrcp.pop %v1526
  %v1617 = vmul.f32 1.0, %v1616
  %v1618 = vrcp.pop %v1527
  %v1619 = vmul.f32 1.0, %v1618
  %v1620 = vrcp.pop %v1528
  %v1621 = vmul.f32 1.0, %v1620
  %v1622 = vrcp.pop %v1529
  %v1623 = vmul.f32 1.0, %v1622
  %v1624 = vrcp.pop %v1530
  %v1625 = vmul.f32 1.0, %v1624
  %v1626 = vrcp.pop %v1531
  %v1627 = vmul.f32 1.0, %v1626
  %v1628 = vrcp.pop %v1532
  %v1629 = vmul.f32 1.0, %v1628
  %v1630 = vrcp.pop %v1533
  %v1631 = vmul.f32 1.0, %v1630
  %v1632 = vrcp.pop %v1534
  %v1633 = vmul.f32 1.0, %v1632
  %v1634 = vrcp.pop %v1535
  %v1635 = vmul.f32 1.0, %v1634
  %v1636 = vrcp.pop %v1536
  %v1637 = vmul.f32 1.0, %v1636
  %v1638 = vrcp.pop %v1537
  %v1639 = vmul.f32 1.0, %v1638
  %v1640 = vrcp.pop %v1538
  %v1641 = vmul.f32 1.0, %v1640
  %v1642 = vrcp.pop %v1539
  %v1643 = vmul.f32 1.0, %v1642
  %v1644 = vrcp.pop %v1540
  %v1645 = vmul.f32 1.0, %v1644
  %v1646 = vrcp.pop %v1541
  %v1647 = vmul.f32 1.0, %v1646
  %v1648 = vrcp.pop %v1542
  %v1649 = vmul.f32 1.0, %v1648
  %v1650 = vrcp.pop %v1543
  %v1651 = vmul.f32 1.0, %v1650
  %v1652 = vrcp.pop %v1544
  %v1653 = vmul.f32 1.0, %v1652
  %v1654 = vrcp.pop %v1545
  %v1655 = vmul.f32 1.0, %v1654
  %v1656 = vrcp.pop %v1546
  %v1657 = vmul.f32 1.0, %v1656
  %v1658 = vrcp.pop %v1547
  %v1659 = vmul.f32 1.0, %v1658
  %v1660 = vrcp.pop %v1548
  %v1661 = vmul.f32 1.0, %v1660
  %v1662 = vrcp.pop %v1549
  %v1663 = vmul.f32 1.0, %v1662
  %v1664 = vrcp.pop %v1550
  %v1665 = vmul.f32 1.0, %v1664
  %v1666 = vrcp.pop %v1551
  %v1667 = vmul.f32 1.0, %v1666
  %v1668 = vrcp.pop %v1552
  %v1669 = vmul.f32 1.0, %v1668
  %v1670 = vrcp.pop %v1553
  %v1671 = vmul.f32 1.0, %v1670
  %v1672 = vrcp.pop %v1554
  %v1673 = vmul.f32 1.0, %v1672
  %v1674 = vrcp.pop %v1555
  %v1675 = vmul.f32 1.0, %v1674
  %v1676 = vrcp.pop %v1556
  %v1677 = vmul.f32 1.0, %v1676
  %v1678 = vrcp.pop %v1557
  %v1679 = vmul.f32 1.0, %v1678
  %v1680 = vrcp.pop %v1558
  %v1681 = vmul.f32 1.0, %v1680
  %v1682 = vrcp.pop %v1559
  %v1683 = vmul.f32 1.0, %v1682
  %v1684 = vrcp.pop %v1560
  %v1685 = vmul.f32 1.0, %v1684
  %v1686 = vrcp.pop %v1561
  %v1687 = vmul.f32 1.0, %v1686
  %v1688 = vrcp.pop %v1562
  %v1689 = vmul.f32 1.0, %v1688
  %v1690 = vrcp.pop %v1563
  %v1691 = vmul.f32 1.0, %v1690
  %1693 = vset.pattern.permute.xlu0 0
  %1694 = vperm.xlu0 %1693, %v1565
  %v1695 = vpop.permute.xlu0 %1694
  %1698 = vset.pattern.permute.xlu0 0
  %1699 = vperm.xlu0 %1698, %v1567
  %v1700 = vpop.permute.xlu0 %1699
  %1703 = vset.pattern.permute.xlu0 0
  %1704 = vperm.xlu0 %1703, %v1569
  %v1705 = vpop.permute.xlu0 %1704
  %1708 = vset.pattern.permute.xlu0 0
  %1709 = vperm.xlu0 %1708, %v1571
  %v1710 = vpop.permute.xlu0 %1709
  %1713 = vset.pattern.permute.xlu0 0
  %1714 = vperm.xlu0 %1713, %v1573
  %v1715 = vpop.permute.xlu0 %1714
  %1718 = vset.pattern.permute.xlu0 0
  %1719 = vperm.xlu0 %1718, %v1575
  %v1720 = vpop.permute.xlu0 %1719
  %1723 = vset.pattern.permute.xlu0 0
  %1724 = vperm.xlu0 %1723, %v1577
  %v1725 = vpop.permute.xlu0 %1724
  %1728 = vset.pattern.permute.xlu0 0
  %1729 = vperm.xlu0 %1728, %v1579
  %v1730 = vpop.permute.xlu0 %1729
  %1733 = vset.pattern.permute.xlu0 0
  %1734 = vperm.xlu0 %1733, %v1581
  %v1735 = vpop.permute.xlu0 %1734
  %1738 = vset.pattern.permute.xlu0 0
  %1739 = vperm.xlu0 %1738, %v1583
  %v1740 = vpop.permute.xlu0 %1739
  %1743 = vset.pattern.permute.xlu0 0
  %1744 = vperm.xlu0 %1743, %v1585
  %v1745 = vpop.permute.xlu0 %1744
  %1748 = vset.pattern.permute.xlu0 0
  %1749 = vperm.xlu0 %1748, %v1587
  %v1750 = vpop.permute.xlu0 %1749
  %1753 = vset.pattern.permute.xlu0 0
  %1754 = vperm.xlu0 %1753, %v1589
  %v1755 = vpop.permute.xlu0 %1754
  %1758 = vset.pattern.permute.xlu0 0
  %1759 = vperm.xlu0 %1758, %v1591
  %v1760 = vpop.permute.xlu0 %1759
  %1763 = vset.pattern.permute.xlu0 0
  %1764 = vperm.xlu0 %1763, %v1593
  %v1765 = vpop.permute.xlu0 %1764
  %1768 = vset.pattern.permute.xlu0 0
  %1769 = vperm.xlu0 %1768, %v1595
  %v1770 = vpop.permute.xlu0 %1769
  %1773 = vset.pattern.permute.xlu0 0
  %1774 = vperm.xlu0 %1773, %v1597
  %v1775 = vpop.permute.xlu0 %1774
  %1778 = vset.pattern.permute.xlu0 0
  %1779 = vperm.xlu0 %1778, %v1599
  %v1780 = vpop.permute.xlu0 %1779
  %1783 = vset.pattern.permute.xlu0 0
  %1784 = vperm.xlu0 %1783, %v1601
  %v1785 = vpop.permute.xlu0 %1784
  %1788 = vset.pattern.permute.xlu0 0
  %1789 = vperm.xlu0 %1788, %v1603
  %v1790 = vpop.permute.xlu0 %1789
  %1793 = vset.pattern.permute.xlu0 0
  %1794 = vperm.xlu0 %1793, %v1605
  %v1795 = vpop.permute.xlu0 %1794
  %1798 = vset.pattern.permute.xlu0 0
  %1799 = vperm.xlu0 %1798, %v1607
  %v1800 = vpop.permute.xlu0 %1799
  %1803 = vset.pattern.permute.xlu0 0
  %1804 = vperm.xlu0 %1803, %v1609
  %v1805 = vpop.permute.xlu0 %1804
  %1808 = vset.pattern.permute.xlu0 0
  %1809 = vperm.xlu0 %1808, %v1611
  %v1810 = vpop.permute.xlu0 %1809
  %1813 = vset.pattern.permute.xlu0 0
  %1814 = vperm.xlu0 %1813, %v1613
  %v1815 = vpop.permute.xlu0 %1814
  %1818 = vset.pattern.permute.xlu0 0
  %1819 = vperm.xlu0 %1818, %v1615
  %v1820 = vpop.permute.xlu0 %1819
  %1823 = vset.pattern.permute.xlu0 0
  %1824 = vperm.xlu0 %1823, %v1617
  %v1825 = vpop.permute.xlu0 %1824
  %1828 = vset.pattern.permute.xlu0 0
  %1829 = vperm.xlu0 %1828, %v1619
  %v1830 = vpop.permute.xlu0 %1829
  %1833 = vset.pattern.permute.xlu0 0
  %1834 = vperm.xlu0 %1833, %v1621
  %v1835 = vpop.permute.xlu0 %1834
  %1838 = vset.pattern.permute.xlu0 0
  %1839 = vperm.xlu0 %1838, %v1623
  %v1840 = vpop.permute.xlu0 %1839
  %1843 = vset.pattern.permute.xlu0 0
  %1844 = vperm.xlu0 %1843, %v1625
  %v1845 = vpop.permute.xlu0 %1844
  %1848 = vset.pattern.permute.xlu0 0
  %1849 = vperm.xlu0 %1848, %v1627
  %v1850 = vpop.permute.xlu0 %1849
  %1853 = vset.pattern.permute.xlu0 0
  %1854 = vperm.xlu0 %1853, %v1629
  %v1855 = vpop.permute.xlu0 %1854
  %1858 = vset.pattern.permute.xlu0 0
  %1859 = vperm.xlu0 %1858, %v1631
  %v1860 = vpop.permute.xlu0 %1859
  %1863 = vset.pattern.permute.xlu0 0
  %1864 = vperm.xlu0 %1863, %v1633
  %v1865 = vpop.permute.xlu0 %1864
  %1868 = vset.pattern.permute.xlu0 0
  %1869 = vperm.xlu0 %1868, %v1635
  %v1870 = vpop.permute.xlu0 %1869
  %1873 = vset.pattern.permute.xlu0 0
  %1874 = vperm.xlu0 %1873, %v1637
  %v1875 = vpop.permute.xlu0 %1874
  %1878 = vset.pattern.permute.xlu0 0
  %1879 = vperm.xlu0 %1878, %v1639
  %v1880 = vpop.permute.xlu0 %1879
  %1883 = vset.pattern.permute.xlu0 0
  %1884 = vperm.xlu0 %1883, %v1641
  %v1885 = vpop.permute.xlu0 %1884
  %1888 = vset.pattern.permute.xlu0 0
  %1889 = vperm.xlu0 %1888, %v1643
  %v1890 = vpop.permute.xlu0 %1889
  %1893 = vset.pattern.permute.xlu0 0
  %1894 = vperm.xlu0 %1893, %v1645
  %v1895 = vpop.permute.xlu0 %1894
  %1898 = vset.pattern.permute.xlu0 0
  %1899 = vperm.xlu0 %1898, %v1647
  %v1900 = vpop.permute.xlu0 %1899
  %1903 = vset.pattern.permute.xlu0 0
  %1904 = vperm.xlu0 %1903, %v1649
  %v1905 = vpop.permute.xlu0 %1904
  %1908 = vset.pattern.permute.xlu0 0
  %1909 = vperm.xlu0 %1908, %v1651
  %v1910 = vpop.permute.xlu0 %1909
  %1913 = vset.pattern.permute.xlu0 0
  %1914 = vperm.xlu0 %1913, %v1653
  %v1915 = vpop.permute.xlu0 %1914
  %1918 = vset.pattern.permute.xlu0 0
  %1919 = vperm.xlu0 %1918, %v1655
  %v1920 = vpop.permute.xlu0 %1919
  %1923 = vset.pattern.permute.xlu0 0
  %1924 = vperm.xlu0 %1923, %v1657
  %v1925 = vpop.permute.xlu0 %1924
  %1928 = vset.pattern.permute.xlu0 0
  %1929 = vperm.xlu0 %1928, %v1659
  %v1930 = vpop.permute.xlu0 %1929
  %1933 = vset.pattern.permute.xlu0 0
  %1934 = vperm.xlu0 %1933, %v1661
  %v1935 = vpop.permute.xlu0 %1934
  %1938 = vset.pattern.permute.xlu0 0
  %1939 = vperm.xlu0 %1938, %v1663
  %v1940 = vpop.permute.xlu0 %1939
  %1943 = vset.pattern.permute.xlu0 0
  %1944 = vperm.xlu0 %1943, %v1665
  %v1945 = vpop.permute.xlu0 %1944
  %1948 = vset.pattern.permute.xlu0 0
  %1949 = vperm.xlu0 %1948, %v1667
  %v1950 = vpop.permute.xlu0 %1949
  %1953 = vset.pattern.permute.xlu0 0
  %1954 = vperm.xlu0 %1953, %v1669
  %v1955 = vpop.permute.xlu0 %1954
  %1958 = vset.pattern.permute.xlu0 0
  %1959 = vperm.xlu0 %1958, %v1671
  %v1960 = vpop.permute.xlu0 %1959
  %1963 = vset.pattern.permute.xlu0 0
  %1964 = vperm.xlu0 %1963, %v1673
  %v1965 = vpop.permute.xlu0 %1964
  %1968 = vset.pattern.permute.xlu0 0
  %1969 = vperm.xlu0 %1968, %v1675
  %v1970 = vpop.permute.xlu0 %1969
  %1973 = vset.pattern.permute.xlu0 0
  %1974 = vperm.xlu0 %1973, %v1677
  %v1975 = vpop.permute.xlu0 %1974
  %1978 = vset.pattern.permute.xlu0 0
  %1979 = vperm.xlu0 %1978, %v1679
  %v1980 = vpop.permute.xlu0 %1979
  %1983 = vset.pattern.permute.xlu0 0
  %1984 = vperm.xlu0 %1983, %v1681
  %v1985 = vpop.permute.xlu0 %1984
  %1988 = vset.pattern.permute.xlu0 0
  %1989 = vperm.xlu0 %1988, %v1683
  %v1990 = vpop.permute.xlu0 %1989
  %1993 = vset.pattern.permute.xlu0 0
  %1994 = vperm.xlu0 %1993, %v1685
  %v1995 = vpop.permute.xlu0 %1994
  %1998 = vset.pattern.permute.xlu0 0
  %1999 = vperm.xlu0 %1998, %v1687
  %v2000 = vpop.permute.xlu0 %1999
  %2003 = vset.pattern.permute.xlu0 0
  %2004 = vperm.xlu0 %2003, %v1689
  %v2005 = vpop.permute.xlu0 %2004
  %2008 = vset.pattern.permute.xlu0 0
  %2009 = vperm.xlu0 %2008, %v1691
  %v2010 = vpop.permute.xlu0 %2009
  %v2012 = vmul.f32 %v1695, %v656
  %v2013 = vmul.f32 %v1700, %v661
  %v2014 = vmul.f32 %v1705, %v666
  %v2015 = vmul.f32 %v1710, %v671
  %v2016 = vmul.f32 %v1715, %v676
  %v2017 = vmul.f32 %v1720, %v681
  %v2018 = vmul.f32 %v1725, %v686
  %v2019 = vmul.f32 %v1730, %v691
  %v2020 = vmul.f32 %v1735, %v696
  %v2021 = vmul.f32 %v1740, %v701
  %v2022 = vmul.f32 %v1745, %v706
  %v2023 = vmul.f32 %v1750, %v711
  %v2024 = vmul.f32 %v1755, %v716
  %v2025 = vmul.f32 %v1760, %v721
  %v2026 = vmul.f32 %v1765, %v726
  %v2027 = vmul.f32 %v1770, %v731
  %v2028 = vmul.f32 %v1775, %v736
  %v2029 = vmul.f32 %v1780, %v741
  %v2030 = vmul.f32 %v1785, %v746
  %v2031 = vmul.f32 %v1790, %v751
  %v2032 = vmul.f32 %v1795, %v756
  %v2033 = vmul.f32 %v1800, %v761
  %v2034 = vmul.f32 %v1805, %v766
  %v2035 = vmul.f32 %v1810, %v771
  %v2036 = vmul.f32 %v1815, %v776
  %v2037 = vmul.f32 %v1820, %v781
  %v2038 = vmul.f32 %v1825, %v786
  %v2039 = vmul.f32 %v1830, %v791
  %v2040 = vmul.f32 %v1835, %v796
  %v2041 = vmul.f32 %v1840, %v801
  %v2042 = vmul.f32 %v1845, %v806
  %v2043 = vmul.f32 %v1850, %v811
  %v2044 = vmul.f32 %v1855, %v816
  %v2045 = vmul.f32 %v1860, %v821
  %v2046 = vmul.f32 %v1865, %v826
  %v2047 = vmul.f32 %v1870, %v831
  %v2048 = vmul.f32 %v1875, %v836
  %v2049 = vmul.f32 %v1880, %v841
  %v2050 = vmul.f32 %v1885, %v846
  %v2051 = vmul.f32 %v1890, %v851
  %v2052 = vmul.f32 %v1895, %v856
  %v2053 = vmul.f32 %v1900, %v861
  %v2054 = vmul.f32 %v1905, %v866
  %v2055 = vmul.f32 %v1910, %v871
  %v2056 = vmul.f32 %v1915, %v876
  %v2057 = vmul.f32 %v1920, %v881
  %v2058 = vmul.f32 %v1925, %v886
  %v2059 = vmul.f32 %v1930, %v891
  %v2060 = vmul.f32 %v1935, %v896
  %v2061 = vmul.f32 %v1940, %v901
  %v2062 = vmul.f32 %v1945, %v906
  %v2063 = vmul.f32 %v1950, %v911
  %v2064 = vmul.f32 %v1955, %v916
  %v2065 = vmul.f32 %v1960, %v921
  %v2066 = vmul.f32 %v1965, %v926
  %v2067 = vmul.f32 %v1970, %v931
  %v2068 = vmul.f32 %v1975, %v936
  %v2069 = vmul.f32 %v1980, %v941
  %v2070 = vmul.f32 %v1985, %v946
  %v2071 = vmul.f32 %v1990, %v951
  %v2072 = vmul.f32 %v1995, %v956
  %v2073 = vmul.f32 %v2000, %v961
  %v2074 = vmul.f32 %v2005, %v966
  %v2075 = vmul.f32 %v2010, %v971
  %2076 = vst [vmem:[%s8] sm:$0xff] %v2012
  %2077 = vst [vmem:[%s8 + $0x8] sm:$0xff] %v2013
  %2078 = vst [vmem:[%s8 + $0x10] sm:$0xff] %v2014
  %2079 = vst [vmem:[%s8 + $0x18] sm:$0xff] %v2015
  %2080 = vst [vmem:[%s8 + $0x20] sm:$0xff] %v2016
  %2081 = vst [vmem:[%s8 + $0x28] sm:$0xff] %v2017
  %2082 = vst [vmem:[%s8 + $0x30] sm:$0xff] %v2018
  %2083 = vst [vmem:[%s8 + $0x38] sm:$0xff] %v2019
  %2084 = vst [vmem:[%s8 + $0x40] sm:$0xff] %v2020
  %2085 = vst [vmem:[%s8 + $0x48] sm:$0xff] %v2021
  %2086 = vst [vmem:[%s8 + $0x50] sm:$0xff] %v2022
  %2087 = vst [vmem:[%s8 + $0x58] sm:$0xff] %v2023
  %2088 = vst [vmem:[%s8 + $0x60] sm:$0xff] %v2024
  %2089 = vst [vmem:[%s8 + $0x68] sm:$0xff] %v2025
  %2090 = vst [vmem:[%s8 + $0x70] sm:$0xff] %v2026
  %2091 = vst [vmem:[%s8 + $0x78] sm:$0xff] %v2027
  %2092 = vst [vmem:[%s8 + $0x80] sm:$0xff] %v2028
  %2093 = vst [vmem:[%s8 + $0x88] sm:$0xff] %v2029
  %2094 = vst [vmem:[%s8 + $0x90] sm:$0xff] %v2030
  %2095 = vst [vmem:[%s8 + $0x98] sm:$0xff] %v2031
  %2096 = vst [vmem:[%s8 + $0xa0] sm:$0xff] %v2032
  %2097 = vst [vmem:[%s8 + $0xa8] sm:$0xff] %v2033
  %2098 = vst [vmem:[%s8 + $0xb0] sm:$0xff] %v2034
  %2099 = vst [vmem:[%s8 + $0xb8] sm:$0xff] %v2035
  %2100 = vst [vmem:[%s8 + $0xc0] sm:$0xff] %v2036
  %2101 = vst [vmem:[%s8 + $0xc8] sm:$0xff] %v2037
  %2102 = vst [vmem:[%s8 + $0xd0] sm:$0xff] %v2038
  %2103 = vst [vmem:[%s8 + $0xd8] sm:$0xff] %v2039
  %2104 = vst [vmem:[%s8 + $0xe0] sm:$0xff] %v2040
  %2105 = vst [vmem:[%s8 + $0xe8] sm:$0xff] %v2041
  %2106 = vst [vmem:[%s8 + $0xf0] sm:$0xff] %v2042
  %2107 = vst [vmem:[%s8 + $0xf8] sm:$0xff] %v2043
  %2108 = vst [vmem:[%s8 + $0x100] sm:$0xff] %v2044
  %2109 = vst [vmem:[%s8 + $0x108] sm:$0xff] %v2045
  %2110 = vst [vmem:[%s8 + $0x110] sm:$0xff] %v2046
  %2111 = vst [vmem:[%s8 + $0x118] sm:$0xff] %v2047
  %2112 = vst [vmem:[%s8 + $0x120] sm:$0xff] %v2048
  %2113 = vst [vmem:[%s8 + $0x128] sm:$0xff] %v2049
  %2114 = vst [vmem:[%s8 + $0x130] sm:$0xff] %v2050
  %2115 = vst [vmem:[%s8 + $0x138] sm:$0xff] %v2051
  %2116 = vst [vmem:[%s8 + $0x140] sm:$0xff] %v2052
  %2117 = vst [vmem:[%s8 + $0x148] sm:$0xff] %v2053
  %2118 = vst [vmem:[%s8 + $0x150] sm:$0xff] %v2054
  %2119 = vst [vmem:[%s8 + $0x158] sm:$0xff] %v2055
  %2120 = vst [vmem:[%s8 + $0x160] sm:$0xff] %v2056
  %2121 = vst [vmem:[%s8 + $0x168] sm:$0xff] %v2057
  %2122 = vst [vmem:[%s8 + $0x170] sm:$0xff] %v2058
  %2123 = vst [vmem:[%s8 + $0x178] sm:$0xff] %v2059
  %2124 = vst [vmem:[%s8 + $0x180] sm:$0xff] %v2060
  %2125 = vst [vmem:[%s8 + $0x188] sm:$0xff] %v2061
  %2126 = vst [vmem:[%s8 + $0x190] sm:$0xff] %v2062
  %2127 = vst [vmem:[%s8 + $0x198] sm:$0xff] %v2063
  %2128 = vst [vmem:[%s8 + $0x1a0] sm:$0xff] %v2064
  %2129 = vst [vmem:[%s8 + $0x1a8] sm:$0xff] %v2065
  %2130 = vst [vmem:[%s8 + $0x1b0] sm:$0xff] %v2066
  %2131 = vst [vmem:[%s8 + $0x1b8] sm:$0xff] %v2067
  %2132 = vst [vmem:[%s8 + $0x1c0] sm:$0xff] %v2068
  %2133 = vst [vmem:[%s8 + $0x1c8] sm:$0xff] %v2069
  %2134 = vst [vmem:[%s8 + $0x1d0] sm:$0xff] %v2070
  %2135 = vst [vmem:[%s8 + $0x1d8] sm:$0xff] %v2071
  %2136 = vst [vmem:[%s8 + $0x1e0] sm:$0xff] %v2072
  %2137 = vst [vmem:[%s8 + $0x1e8] sm:$0xff] %v2073
  %2138 = vst [vmem:[%s8 + $0x1f0] sm:$0xff] %v2074
  %2139 = vst [vmem:[%s8 + $0x1f8] sm:$0xff] %v2075
  // Predicated region
  $region30: #{net_forward.2} parent=0 // pred_check
    _
  $region31: #{net_forward.2} parent=0 // pred_check_branch
    %2141 = sbr.rel (0) target = $region33
  $region32: #{net_forward.2} parent=0 // pred_region
    _
  $region33: #{net_forward.2} parent=0 // pred_fallthru
    _
  // Predicated region
  $region34: #{net_forward.2} parent=0 // pred_check
    _
  $region35: #{net_forward.2} parent=0 // pred_check_branch
    %2143 = sbr.rel (0) target = $region37
  $region36: #{net_forward.2} parent=0 // pred_region
    _
  $region37: #{net_forward.2} parent=0 // pred_fallthru
    _
  // Predicated region
  $region38: #{net_forward.2} parent=0 // pred_check
    _
  $region39: #{net_forward.2} parent=0 // pred_check_branch
    %2145 = sbr.rel (0) target = $region41
  $region40: #{net_forward.2} parent=0 // pred_region
    _
  $region41: #{net_forward.2} parent=0 // pred_fallthru
    _
  // Predicated region
  $region42: #{net_forward.2} parent=0 // pred_check
    _
  $region43: #{net_forward.2} parent=0 // pred_check_branch
    %2147 = sbr.rel (0) target = $region45
  $region44: #{net_forward.2} parent=0 // pred_region
    _
  $region45: #{net_forward.2} parent=0 // pred_fallthru
    _

// kernel: net_forward.3
$region0: #{net_forward.3}
  #allocation0 [shape = 'u32[]', space=smem, size = 0x4, offset = 0x4, fixed_abs, tag = 'smem constant byte address 0x4 - core index']
  #allocation1 [shape = 'u32[144,128]{1,0:T(1,128)}', space=vmem, size = 0x12000, scoped, tag = 'internal scratch']
  #allocation2 [shape = 'f32[2,512,128]{2,1,0:T(8,128)}', space=vmem, size = 0x80000, scoped, tag = 'scratch operand']
  #allocation3 [shape = 'f32[512,128]{1,0:T(8,128)}', space=vmem, size = 0x40000, scoped, tag = 'scratch operand']
  #allocation4 [shape = 'f32[512,128]{1,0:T(8,128)}', space=vmem, size = 0x40000, scoped, tag = 'scratch operand']
  #allocation5 [shape = 'f32[1,1]{1,0:T(1,128)S(1)}', space=vmem, size = 0x200, scoped, tag = 'scoped memory for net_forward.3']
  %s0 = inlined_call_operand.vmem [shape: f32[512,512], index: 0, kind: input, shape index: {}]
  %s1 = inlined_call_operand.vmem [shape: f32[512,128], index: 1, kind: input, shape index: {}]
  %s2 = inlined_call_operand.vmem [shape: f32[512,128], index: 2, kind: input, shape index: {}]
  %s3 = inlined_call_operand.vmem [shape: f32[1,128], index: 3, kind: input, shape index: {}]
  %s4 = inlined_call_operand.<no memory space> [shape: f32[1,1], index: 4, kind: input, shape index: {}]
  %s5 = inlined_call_operand.vmem [shape: f32[512,128], index: 5, kind: output, shape index: {}]
  %s6 = sld [smem:[#allocation0]]
  $region81: #{net_forward.3} parent=0
    _
  %s8 = ssub.s32 1, %s6
  %s9 = scalar_select 0, %s8, %s6
  %v10 = vstv %s4
  %11 = vst [vmem:[#allocation5] sm:$0x1] %v10
  loop: start=0, step=1, limit=5
  $region2: #{net_forward.3} parent=0 // loop_pre_header
    _
  $region3: #{net_forward.3} parent=0 // loop_header
    %s13 = sphi 0, %s17
    %p14 = scmp.ge.s32.totalorder %s13, 5
    %s20 = sphi 0, %s39
    %s21 = sphi 0, %s35
    %s22 = sphi 0, %s31
    %s23 = sphi 0, %s20
    %s24 = sphi 0, %s21
    %s25 = sphi 0, %s22
    %s26 = sphi 0, %s23
    %s27 = sphi 0, %s24
    %s28 = sphi 0, %s25
    %s44 = sphi 0, %s46
    %s47 = sphi 0, %s44
    %s48 = sphi 0, %s47
    %s64 = sphi 0, %s48
    %s68 = sphi 0, %s68
    %s70 = sphi 0, %s68
    %s71 = sphi 0, %s70
    %s85 = sphi 0, %s71
    %s89 = sphi 0, %s89
    %s91 = sphi 0, %s89
    %s92 = sphi 0, %s91
    %s106 = sphi 0, %s92
    %s110 = sphi 0, %s110
    %s112 = sphi 0, %s110
    %s113 = sphi 0, %s112
    %s127 = sphi 0, %s113
    %s131 = sphi 0, %s131
    %s133 = sphi 0, %s131
    %s134 = sphi 0, %s133
    %s148 = sphi 0, %s134
    %s154 = sphi 0, %s156
    %s157 = sphi 0, %s154
    %s158 = sphi 0, %s157
    %s174 = sphi 0, %s158
  $region4: #{net_forward.3} parent=0 // loop_header_branch
    %16 = sbr.rel (%p14) target = $region8
  $region5: #{net_forward.3} parent=0 // loop_body
    %s18 = ssub.s32 %s13, 1
    %s19 = ssub.s32 %s13, 2
    %s29 = sadd.s32 1, %s22
    %p30 = scmp.ge.s32.totalorder %s29, 1
    %s31 = scalar_select %p30, 0, %s29
    %s32 = sadd.s32 1, %s21
    %s33 = scalar_select %p30, %s32, %s21
    %p34 = scmp.ge.s32.totalorder %s33, 1
    %s35 = scalar_select %p34, 0, %s33
    %s36 = sadd.s32 1, %s20
    %s37 = scalar_select %p34, %s36, %s20
    %p38 = scmp.ge.s32.totalorder %s37, 3
    %s39 = scalar_select %p38, 0, %s37
    %s40 = ssub.s32 %s21, %s35
    %s41 = ssub.s32 %s22, %s31
    %s42 = sor.u32 %s40, %s41
    %p43 = scmp.eq.s32.totalorder %s42, 0
    %s45 = sadd.s32 %s44, 1
    %s46 = scalar_select %p43, %s44, %s45
    %p49 = pneg %p43
    %p50 = scmp.eq.s32.totalorder %s13, 2
    %p51 = por %p49, %p50
    %p52 = scmp.ne.s32.totalorder %s44, %s47
    %p53 = scmp.eq.s32.totalorder %s13, 0
    %p54 = por %p52, %p53
    %p55 = scmp.ne.s32.totalorder %s44, %s47
    %p56 = scmp.eq.s32.totalorder %s18, 2
    %p57 = por %p55, %p56
    %p58 = scmp.ne.s32.totalorder %s47, %s48
    %p59 = scmp.eq.s32.totalorder %s18, 0
    %p60 = por %p58, %p59
    %p61 = scmp.ne.s32.totalorder %s47, %s48
    %p62 = scmp.eq.s32.totalorder %s19, 2
    %p63 = por %p61, %p62
    %p65 = scmp.ne.s32.totalorder %s48, %s64
    %p66 = scmp.eq.s32.totalorder %s19, 0
    %p67 = por %p65, %p66
    %s69 = sadd.s32 %s68, 1
    %p72 = scmp.eq.s32.totalorder %s13, 2
    %p73 = scmp.ne.s32.totalorder %s68, %s70
    %p74 = scmp.eq.s32.totalorder %s13, 0
    %p75 = por %p73, %p74
    %p76 = scmp.ne.s32.totalorder %s68, %s70
    %p77 = scmp.eq.s32.totalorder %s18, 2
    %p78 = por %p76, %p77
    %p79 = scmp.ne.s32.totalorder %s70, %s71
    %p80 = scmp.eq.s32.totalorder %s18, 0
    %p81 = por %p79, %p80
    %p82 = scmp.ne.s32.totalorder %s70, %s71
    %p83 = scmp.eq.s32.totalorder %s19, 2
    %p84 = por %p82, %p83
    %p86 = scmp.ne.s32.totalorder %s71, %s85
    %p87 = scmp.eq.s32.totalorder %s19, 0
    %p88 = por %p86, %p87
    %s90 = sadd.s32 %s89, 1
    %p93 = scmp.eq.s32.totalorder %s13, 2
    %p94 = scmp.ne.s32.totalorder %s89, %s91
    %p95 = scmp.eq.s32.totalorder %s13, 0
    %p96 = por %p94, %p95
    %p97 = scmp.ne.s32.totalorder %s89, %s91
    %p98 = scmp.eq.s32.totalorder %s18, 2
    %p99 = por %p97, %p98
    %p100 = scmp.ne.s32.totalorder %s91, %s92
    %p101 = scmp.eq.s32.totalorder %s18, 0
    %p102 = por %p100, %p101
    %p103 = scmp.ne.s32.totalorder %s91, %s92
    %p104 = scmp.eq.s32.totalorder %s19, 2
    %p105 = por %p103, %p104
    %p107 = scmp.ne.s32.totalorder %s92, %s106
    %p108 = scmp.eq.s32.totalorder %s19, 0
    %p109 = por %p107, %p108
    %s111 = sadd.s32 %s110, 1
    %p114 = scmp.eq.s32.totalorder %s13, 2
    %p115 = scmp.ne.s32.totalorder %s110, %s112
    %p116 = scmp.eq.s32.totalorder %s13, 0
    %p117 = por %p115, %p116
    %p118 = scmp.ne.s32.totalorder %s110, %s112
    %p119 = scmp.eq.s32.totalorder %s18, 2
    %p120 = por %p118, %p119
    %p121 = scmp.ne.s32.totalorder %s112, %s113
    %p122 = scmp.eq.s32.totalorder %s18, 0
    %p123 = por %p121, %p122
    %p124 = scmp.ne.s32.totalorder %s112, %s113
    %p125 = scmp.eq.s32.totalorder %s19, 2
    %p126 = por %p124, %p125
    %p128 = scmp.ne.s32.totalorder %s113, %s127
    %p129 = scmp.eq.s32.totalorder %s19, 0
    %p130 = por %p128, %p129
    %s132 = sadd.s32 %s131, 1
    %p135 = scmp.eq.s32.totalorder %s13, 2
    %p136 = scmp.ne.s32.totalorder %s131, %s133
    %p137 = scmp.eq.s32.totalorder %s13, 0
    %p138 = por %p136, %p137
    %p139 = scmp.ne.s32.totalorder %s131, %s133
    %p140 = scmp.eq.s32.totalorder %s18, 2
    %p141 = por %p139, %p140
    %p142 = scmp.ne.s32.totalorder %s133, %s134
    %p143 = scmp.eq.s32.totalorder %s18, 0
    %p144 = por %p142, %p143
    %p145 = scmp.ne.s32.totalorder %s133, %s134
    %p146 = scmp.eq.s32.totalorder %s19, 2
    %p147 = por %p145, %p146
    %p149 = scmp.ne.s32.totalorder %s134, %s148
    %p150 = scmp.eq.s32.totalorder %s19, 0
    %p151 = por %p149, %p150
    %s152 = ssub.s32 %s21, %s35
    %p153 = scmp.eq.s32.totalorder %s152, 0
    %s155 = sadd.s32 %s154, 1
    %s156 = scalar_select %p153, %s154, %s155
    %p159 = pneg %p153
    %p160 = scmp.eq.s32.totalorder %s13, 2
    %p161 = por %p159, %p160
    %p162 = scmp.ne.s32.totalorder %s154, %s157
    %p163 = scmp.eq.s32.totalorder %s13, 0
    %p164 = por %p162, %p163
    %p165 = scmp.ne.s32.totalorder %s154, %s157
    %p166 = scmp.eq.s32.totalorder %s18, 2
    %p167 = por %p165, %p166
    %p168 = scmp.ne.s32.totalorder %s157, %s158
    %p169 = scmp.eq.s32.totalorder %s18, 0
    %p170 = por %p168, %p169
    %p171 = scmp.ne.s32.totalorder %s157, %s158
    %p172 = scmp.eq.s32.totalorder %s19, 2
    %p173 = por %p171, %p172
    %p175 = scmp.ne.s32.totalorder %s158, %s174
    %p176 = scmp.eq.s32.totalorder %s19, 0
    %p177 = por %p175, %p176
    %p178 = scmp.le.s32.totalorder 1, %s13
    %p179 = scmp.lt.s32.totalorder %s13, 4
    %p180 = pnand %p178, %p179
    %p181 = pneg %p180
    // Predicated region
    $region9: #{net_forward.3} parent=5 // pred_check
      _
    $region10: #{net_forward.3} parent=5 // pred_check_branch
      %183 = sbr.rel (%p180) target = $region12
    $region11: #{net_forward.3} parent=5 // pred_region
      %s184 = ssub.s32 %s13, 1
      // Predicated region
      $region13: #{net_forward.3} parent=11 // pred_check
        %p185 = pneg %p60
      $region14: #{net_forward.3} parent=11 // pred_check_branch
        %187 = sbr.rel (%p185) target = $region16
      $region15: #{net_forward.3} parent=11 // pred_region
        %s188 = smul.u32 64, %s24
        %s189 = smul.u32 4, %s25
        %p190 = scmp.lt.s32.totalorder %s188, 63
        %s191 = scalar_select %p190, %s188, 63
        %p192 = scmp.lt.s32.totalorder %s189, 3
        %s193 = scalar_select %p192, %s189, 3
        %s194 = smul.addr %s191, 4
        %s195 = sadd.s32 %s193, %s194
        %s196 = smul.addr %s195, 8
        %s197 = scalar_lea.vmem %s0, %s196
        %s198 = smul.u32 64, %s24
        %s199 = smul.u32 4, %s25
      $region16: #{net_forward.3} parent=11 // pred_fallthru
        _
      // Predicated region
      $region17: #{net_forward.3} parent=11 // pred_check
        %p200 = pneg %p81
      $region18: #{net_forward.3} parent=11 // pred_check_branch
        %202 = sbr.rel (%p200) target = $region20
      $region19: #{net_forward.3} parent=11 // pred_region
        _
      $region20: #{net_forward.3} parent=11 // pred_fallthru
        _
      // Predicated region
      $region21: #{net_forward.3} parent=11 // pred_check
        %p203 = pneg %p102
      $region22: #{net_forward.3} parent=11 // pred_check_branch
        %205 = sbr.rel (%p203) target = $region24
      $region23: #{net_forward.3} parent=11 // pred_region
        _
      $region24: #{net_forward.3} parent=11 // pred_fallthru
        _
      // Predicated region
      $region25: #{net_forward.3} parent=11 // pred_check
        %p206 = pneg %p123
      $region26: #{net_forward.3} parent=11 // pred_check_branch
        %208 = sbr.rel (%p206) target = $region28
      $region27: #{net_forward.3} parent=11 // pred_region
        _
      $region28: #{net_forward.3} parent=11 // pred_fallthru
        _
      // Predicated region
      $region29: #{net_forward.3} parent=11 // pred_check
        %p209 = pneg %p144
      $region30: #{net_forward.3} parent=11 // pred_check_branch
        %211 = sbr.rel (%p209) target = $region32
      $region31: #{net_forward.3} parent=11 // pred_region
        _
      $region32: #{net_forward.3} parent=11 // pred_fallthru
        _
    $region12: #{net_forward.3} parent=5 // pred_fallthru
      _
    %p212 = scmp.lt.s32.totalorder %s13, 3
    // Predicated region
    $region33: #{net_forward.3} parent=5 // pred_check
      %p213 = pneg %p212
    $region34: #{net_forward.3} parent=5 // pred_check_branch
      %215 = sbr.rel (%p213) target = $region36
    $region35: #{net_forward.3} parent=5 // pred_region
      _
    $region36: #{net_forward.3} parent=5 // pred_fallthru
      _
    %p216 = scmp.le.s32.totalorder 1, %s13
    %p217 = scmp.lt.s32.totalorder %s13, 4
    %p218 = pnand %p216, %p217
    %p219 = pneg %p218
    // Predicated region
    $region37: #{net_forward.3} parent=5 // pred_check
      _
    $region38: #{net_forward.3} parent=5 // pred_check_branch
      %221 = sbr.rel (%p218) target = $region40
    $region39: #{net_forward.3} parent=5 // pred_region
      %s222 = ssub.s32 %s13, 1
      %s223 = smul.u32 64, %s24
      %s224 = smul.u32 4, %s25
      %p225 = scmp.lt.s32.totalorder %s223, 63
      %s226 = scalar_select %p225, %s223, 63
      %p227 = scmp.lt.s32.totalorder %s224, 3
      %s228 = scalar_select %p227, %s224, 3
      %s229 = smul.addr %s226, 4
      %s230 = sadd.s32 %s228, %s229
      %s231 = smul.addr %s230, 8
      %s232 = scalar_lea.vmem %s0, %s231
      %p233 = pneg %p60
      %p234 = pneg %p57
      %p235 = pneg %p81
      %p236 = pneg %p78
      %p237 = pneg %p102
      %p238 = pneg %p99
      %p239 = pneg %p123
      %p240 = pneg %p120
      %p241 = pneg %p144
      %p242 = pneg %p141
      %p243 = pneg %p170
      %p244 = pneg %p167
      %s245 = smul.u32 64, %s24
      %p246 = scmp.lt.s32.totalorder %s245, 63
      %s247 = scalar_select %p246, %s245, 63
      %s248 = smul.addr %s247, 8
      %s249 = scalar_lea.vmem %s5, %s248
      %s250 = smul.u32 64, %s24
      %s251 = smul.u32 4, %s25
      %p252 = scmp.lt.s32.totalorder %s250, 63
      %s253 = scalar_select %p252, %s250, 63
      %p254 = scmp.lt.s32.totalorder %s251, 3
      %s255 = scalar_select %p254, %s251, 3
      %s256 = smul.addr %s253, 4
      %s257 = sadd.s32 %s255, %s256
      %s258 = smul.addr %s257, 8
      %s259 = scalar_lea.vmem %s0, %s258
      %s260 = smul.u32 64, %s24
      %s261 = smul.u32 4, %s25
      %s262 = smul.u32 64, %s24
      %p263 = scmp.lt.s32.totalorder %s262, 63
      %s264 = scalar_select %p263, %s262, 63
      %s265 = smul.addr %s264, 8
      %s266 = scalar_lea.vmem %s5, %s265
      %s267 = smul.u32 64, %s24
      %p268 = scmp.eq.s32.totalorder %s25, 0
      // Predicated region
      $region41: #{net_forward.3} parent=39 // pred_check
        %p269 = pneg %p268
      $region42: #{net_forward.3} parent=39 // pred_check_branch
        %271 = sbr.rel (%p269) target = $region44
      $region43: #{net_forward.3} parent=39 // pred_region
        %272 = vst [vmem:[#allocation4] sm:$0xff] 0.0
        %273 = vst [vmem:[#allocation4 + $0x8] sm:$0xff] 0.0
        %274 = vst [vmem:[#allocation4 + $0x10] sm:$0xff] 0.0
        %275 = vst [vmem:[#allocation4 + $0x18] sm:$0xff] 0.0
        %276 = vst [vmem:[#allocation4 + $0x20] sm:$0xff] 0.0
        %277 = vst [vmem:[#allocation4 + $0x28] sm:$0xff] 0.0
        %278 = vst [vmem:[#allocation4 + $0x30] sm:$0xff] 0.0
        %279 = vst [vmem:[#allocation4 + $0x38] sm:$0xff] 0.0
        %280 = vst [vmem:[#allocation4 + $0x40] sm:$0xff] 0.0
        %281 = vst [vmem:[#allocation4 + $0x48] sm:$0xff] 0.0
        %282 = vst [vmem:[#allocation4 + $0x50] sm:$0xff] 0.0
        %283 = vst [vmem:[#allocation4 + $0x58] sm:$0xff] 0.0
        %284 = vst [vmem:[#allocation4 + $0x60] sm:$0xff] 0.0
        %285 = vst [vmem:[#allocation4 + $0x68] sm:$0xff] 0.0
        %286 = vst [vmem:[#allocation4 + $0x70] sm:$0xff] 0.0
        %287 = vst [vmem:[#allocation4 + $0x78] sm:$0xff] 0.0
        %288 = vst [vmem:[#allocation4 + $0x80] sm:$0xff] 0.0
        %289 = vst [vmem:[#allocation4 + $0x88] sm:$0xff] 0.0
        %290 = vst [vmem:[#allocation4 + $0x90] sm:$0xff] 0.0
        %291 = vst [vmem:[#allocation4 + $0x98] sm:$0xff] 0.0
        %292 = vst [vmem:[#allocation4 + $0xa0] sm:$0xff] 0.0
        %293 = vst [vmem:[#allocation4 + $0xa8] sm:$0xff] 0.0
        %294 = vst [vmem:[#allocation4 + $0xb0] sm:$0xff] 0.0
        %295 = vst [vmem:[#allocation4 + $0xb8] sm:$0xff] 0.0
        %296 = vst [vmem:[#allocation4 + $0xc0] sm:$0xff] 0.0
        %297 = vst [vmem:[#allocation4 + $0xc8] sm:$0xff] 0.0
        %298 = vst [vmem:[#allocation4 + $0xd0] sm:$0xff] 0.0
        %299 = vst [vmem:[#allocation4 + $0xd8] sm:$0xff] 0.0
        %300 = vst [vmem:[#allocation4 + $0xe0] sm:$0xff] 0.0
        %301 = vst [vmem:[#allocation4 + $0xe8] sm:$0xff] 0.0
        %302 = vst [vmem:[#allocation4 + $0xf0] sm:$0xff] 0.0
        %303 = vst [vmem:[#allocation4 + $0xf8] sm:$0xff] 0.0
        %304 = vst [vmem:[#allocation4 + $0x100] sm:$0xff] 0.0
        %305 = vst [vmem:[#allocation4 + $0x108] sm:$0xff] 0.0
        %306 = vst [vmem:[#allocation4 + $0x110] sm:$0xff] 0.0
        %307 = vst [vmem:[#allocation4 + $0x118] sm:$0xff] 0.0
        %308 = vst [vmem:[#allocation4 + $0x120] sm:$0xff] 0.0
        %309 = vst [vmem:[#allocation4 + $0x128] sm:$0xff] 0.0
        %310 = vst [vmem:[#allocation4 + $0x130] sm:$0xff] 0.0
        %311 = vst [vmem:[#allocation4 + $0x138] sm:$0xff] 0.0
        %312 = vst [vmem:[#allocation4 + $0x140] sm:$0xff] 0.0
        %313 = vst [vmem:[#allocation4 + $0x148] sm:$0xff] 0.0
        %314 = vst [vmem:[#allocation4 + $0x150] sm:$0xff] 0.0
        %315 = vst [vmem:[#allocation4 + $0x158] sm:$0xff] 0.0
        %316 = vst [vmem:[#allocation4 + $0x160] sm:$0xff] 0.0
        %317 = vst [vmem:[#allocation4 + $0x168] sm:$0xff] 0.0
        %318 = vst [vmem:[#allocation4 + $0x170] sm:$0xff] 0.0
        %319 = vst [vmem:[#allocation4 + $0x178] sm:$0xff] 0.0
        %320 = vst [vmem:[#allocation4 + $0x180] sm:$0xff] 0.0
        %321 = vst [vmem:[#allocation4 + $0x188] sm:$0xff] 0.0
        %322 = vst [vmem:[#allocation4 + $0x190] sm:$0xff] 0.0
        %323 = vst [vmem:[#allocation4 + $0x198] sm:$0xff] 0.0
        %324 = vst [vmem:[#allocation4 + $0x1a0] sm:$0xff] 0.0
        %325 = vst [vmem:[#allocation4 + $0x1a8] sm:$0xff] 0.0
        %326 = vst [vmem:[#allocation4 + $0x1b0] sm:$0xff] 0.0
        %327 = vst [vmem:[#allocation4 + $0x1b8] sm:$0xff] 0.0
        %328 = vst [vmem:[#allocation4 + $0x1c0] sm:$0xff] 0.0
        %329 = vst [vmem:[#allocation4 + $0x1c8] sm:$0xff] 0.0
        %330 = vst [vmem:[#allocation4 + $0x1d0] sm:$0xff] 0.0
        %331 = vst [vmem:[#allocation4 + $0x1d8] sm:$0xff] 0.0
        %332 = vst [vmem:[#allocation4 + $0x1e0] sm:$0xff] 0.0
        %333 = vst [vmem:[#allocation4 + $0x1e8] sm:$0xff] 0.0
        %334 = vst [vmem:[#allocation4 + $0x1f0] sm:$0xff] 0.0
        %335 = vst [vmem:[#allocation4 + $0x1f8] sm:$0xff] 0.0
      $region44: #{net_forward.3} parent=39 // pred_fallthru
        _
      %s336 = smul.u32 %s25, 512
      %p337 = scmp.eq.s32.totalorder %s23, 0
      // Predicated region
      $region45: #{net_forward.3} parent=39 // pred_check
        %p338 = pneg %p337
      $region46: #{net_forward.3} parent=39 // pred_check_branch
        %340 = sbr.rel (%p338) target = $region48
      $region47: #{net_forward.3} parent=39 // pred_region
        %v341 = vld [vmem:[#allocation4] sm:$0xff]
        %v342 = vld [vmem:[#allocation4 + $0x8] sm:$0xff]
        %v343 = vld [vmem:[#allocation4 + $0x10] sm:$0xff]
        %v344 = vld [vmem:[#allocation4 + $0x18] sm:$0xff]
        %v345 = vld [vmem:[#allocation4 + $0x20] sm:$0xff]
        %v346 = vld [vmem:[#allocation4 + $0x28] sm:$0xff]
        %v347 = vld [vmem:[#allocation4 + $0x30] sm:$0xff]
        %v348 = vld [vmem:[#allocation4 + $0x38] sm:$0xff]
        %v349 = vld [vmem:[#allocation4 + $0x40] sm:$0xff]
        %v350 = vld [vmem:[#allocation4 + $0x48] sm:$0xff]
        %v351 = vld [vmem:[#allocation4 + $0x50] sm:$0xff]
        %v352 = vld [vmem:[#allocation4 + $0x58] sm:$0xff]
        %v353 = vld [vmem:[#allocation4 + $0x60] sm:$0xff]
        %v354 = vld [vmem:[#allocation4 + $0x68] sm:$0xff]
        %v355 = vld [vmem:[#allocation4 + $0x70] sm:$0xff]
        %v356 = vld [vmem:[#allocation4 + $0x78] sm:$0xff]
        %v357 = vld [vmem:[#allocation4 + $0x80] sm:$0xff]
        %v358 = vld [vmem:[#allocation4 + $0x88] sm:$0xff]
        %v359 = vld [vmem:[#allocation4 + $0x90] sm:$0xff]
        %v360 = vld [vmem:[#allocation4 + $0x98] sm:$0xff]
        %v361 = vld [vmem:[#allocation4 + $0xa0] sm:$0xff]
        %v362 = vld [vmem:[#allocation4 + $0xa8] sm:$0xff]
        %v363 = vld [vmem:[#allocation4 + $0xb0] sm:$0xff]
        %v364 = vld [vmem:[#allocation4 + $0xb8] sm:$0xff]
        %v365 = vld [vmem:[#allocation4 + $0xc0] sm:$0xff]
        %v366 = vld [vmem:[#allocation4 + $0xc8] sm:$0xff]
        %v367 = vld [vmem:[#allocation4 + $0xd0] sm:$0xff]
        %v368 = vld [vmem:[#allocation4 + $0xd8] sm:$0xff]
        %v369 = vld [vmem:[#allocation4 + $0xe0] sm:$0xff]
        %v370 = vld [vmem:[#allocation4 + $0xe8] sm:$0xff]
        %v371 = vld [vmem:[#allocation4 + $0xf0] sm:$0xff]
        %v372 = vld [vmem:[#allocation4 + $0xf8] sm:$0xff]
        %v373 = vld [vmem:[#allocation4 + $0x100] sm:$0xff]
        %v374 = vld [vmem:[#allocation4 + $0x108] sm:$0xff]
        %v375 = vld [vmem:[#allocation4 + $0x110] sm:$0xff]
        %v376 = vld [vmem:[#allocation4 + $0x118] sm:$0xff]
        %v377 = vld [vmem:[#allocation4 + $0x120] sm:$0xff]
        %v378 = vld [vmem:[#allocation4 + $0x128] sm:$0xff]
        %v379 = vld [vmem:[#allocation4 + $0x130] sm:$0xff]
        %v380 = vld [vmem:[#allocation4 + $0x138] sm:$0xff]
        %v381 = vld [vmem:[#allocation4 + $0x140] sm:$0xff]
        %v382 = vld [vmem:[#allocation4 + $0x148] sm:$0xff]
        %v383 = vld [vmem:[#allocation4 + $0x150] sm:$0xff]
        %v384 = vld [vmem:[#allocation4 + $0x158] sm:$0xff]
        %v385 = vld [vmem:[#allocation4 + $0x160] sm:$0xff]
        %v386 = vld [vmem:[#allocation4 + $0x168] sm:$0xff]
        %v387 = vld [vmem:[#allocation4 + $0x170] sm:$0xff]
        %v388 = vld [vmem:[#allocation4 + $0x178] sm:$0xff]
        %v389 = vld [vmem:[#allocation4 + $0x180] sm:$0xff]
        %v390 = vld [vmem:[#allocation4 + $0x188] sm:$0xff]
        %v391 = vld [vmem:[#allocation4 + $0x190] sm:$0xff]
        %v392 = vld [vmem:[#allocation4 + $0x198] sm:$0xff]
        %v393 = vld [vmem:[#allocation4 + $0x1a0] sm:$0xff]
        %v394 = vld [vmem:[#allocation4 + $0x1a8] sm:$0xff]
        %v395 = vld [vmem:[#allocation4 + $0x1b0] sm:$0xff]
        %v396 = vld [vmem:[#allocation4 + $0x1b8] sm:$0xff]
        %v397 = vld [vmem:[#allocation4 + $0x1c0] sm:$0xff]
        %v398 = vld [vmem:[#allocation4 + $0x1c8] sm:$0xff]
        %v399 = vld [vmem:[#allocation4 + $0x1d0] sm:$0xff]
        %v400 = vld [vmem:[#allocation4 + $0x1d8] sm:$0xff]
        %v401 = vld [vmem:[#allocation4 + $0x1e0] sm:$0xff]
        %v402 = vld [vmem:[#allocation4 + $0x1e8] sm:$0xff]
        %v403 = vld [vmem:[#allocation4 + $0x1f0] sm:$0xff]
        %v404 = vld [vmem:[#allocation4 + $0x1f8] sm:$0xff]
        %v405 = vld [vmem:[%s259] sm:$0xff]
        %v406 = vld [vmem:[%s259 + $0x8] sm:$0xff]
        %v407 = vld [vmem:[%s259 + $0x10] sm:$0xff]
        %v408 = vld [vmem:[%s259 + $0x18] sm:$0xff]
        %v409 = vld [vmem:[%s259 + $0x20] sm:$0xff]
        %v410 = vld [vmem:[%s259 + $0x28] sm:$0xff]
        %v411 = vld [vmem:[%s259 + $0x30] sm:$0xff]
        %v412 = vld [vmem:[%s259 + $0x38] sm:$0xff]
        %v413 = vld [vmem:[%s259 + $0x40] sm:$0xff]
        %v414 = vld [vmem:[%s259 + $0x48] sm:$0xff]
        %v415 = vld [vmem:[%s259 + $0x50] sm:$0xff]
        %v416 = vld [vmem:[%s259 + $0x58] sm:$0xff]
        %v417 = vld [vmem:[%s259 + $0x60] sm:$0xff]
        %v418 = vld [vmem:[%s259 + $0x68] sm:$0xff]
        %v419 = vld [vmem:[%s259 + $0x70] sm:$0xff]
        %v420 = vld [vmem:[%s259 + $0x78] sm:$0xff]
        %v421 = vld [vmem:[%s259 + $0x80] sm:$0xff]
        %v422 = vld [vmem:[%s259 + $0x88] sm:$0xff]
        %v423 = vld [vmem:[%s259 + $0x90] sm:$0xff]
        %v424 = vld [vmem:[%s259 + $0x98] sm:$0xff]
        %v425 = vld [vmem:[%s259 + $0xa0] sm:$0xff]
        %v426 = vld [vmem:[%s259 + $0xa8] sm:$0xff]
        %v427 = vld [vmem:[%s259 + $0xb0] sm:$0xff]
        %v428 = vld [vmem:[%s259 + $0xb8] sm:$0xff]
        %v429 = vld [vmem:[%s259 + $0xc0] sm:$0xff]
        %v430 = vld [vmem:[%s259 + $0xc8] sm:$0xff]
        %v431 = vld [vmem:[%s259 + $0xd0] sm:$0xff]
        %v432 = vld [vmem:[%s259 + $0xd8] sm:$0xff]
        %v433 = vld [vmem:[%s259 + $0xe0] sm:$0xff]
        %v434 = vld [vmem:[%s259 + $0xe8] sm:$0xff]
        %v435 = vld [vmem:[%s259 + $0xf0] sm:$0xff]
        %v436 = vld [vmem:[%s259 + $0xf8] sm:$0xff]
        %v437 = vld [vmem:[%s259 + $0x100] sm:$0xff]
        %v438 = vld [vmem:[%s259 + $0x108] sm:$0xff]
        %v439 = vld [vmem:[%s259 + $0x110] sm:$0xff]
        %v440 = vld [vmem:[%s259 + $0x118] sm:$0xff]
        %v441 = vld [vmem:[%s259 + $0x120] sm:$0xff]
        %v442 = vld [vmem:[%s259 + $0x128] sm:$0xff]
        %v443 = vld [vmem:[%s259 + $0x130] sm:$0xff]
        %v444 = vld [vmem:[%s259 + $0x138] sm:$0xff]
        %v445 = vld [vmem:[%s259 + $0x140] sm:$0xff]
        %v446 = vld [vmem:[%s259 + $0x148] sm:$0xff]
        %v447 = vld [vmem:[%s259 + $0x150] sm:$0xff]
        %v448 = vld [vmem:[%s259 + $0x158] sm:$0xff]
        %v449 = vld [vmem:[%s259 + $0x160] sm:$0xff]
        %v450 = vld [vmem:[%s259 + $0x168] sm:$0xff]
        %v451 = vld [vmem:[%s259 + $0x170] sm:$0xff]
        %v452 = vld [vmem:[%s259 + $0x178] sm:$0xff]
        %v453 = vld [vmem:[%s259 + $0x180] sm:$0xff]
        %v454 = vld [vmem:[%s259 + $0x188] sm:$0xff]
        %v455 = vld [vmem:[%s259 + $0x190] sm:$0xff]
        %v456 = vld [vmem:[%s259 + $0x198] sm:$0xff]
        %v457 = vld [vmem:[%s259 + $0x1a0] sm:$0xff]
        %v458 = vld [vmem:[%s259 + $0x1a8] sm:$0xff]
        %v459 = vld [vmem:[%s259 + $0x1b0] sm:$0xff]
        %v460 = vld [vmem:[%s259 + $0x1b8] sm:$0xff]
        %v461 = vld [vmem:[%s259 + $0x1c0] sm:$0xff]
        %v462 = vld [vmem:[%s259 + $0x1c8] sm:$0xff]
        %v463 = vld [vmem:[%s259 + $0x1d0] sm:$0xff]
        %v464 = vld [vmem:[%s259 + $0x1d8] sm:$0xff]
        %v465 = vld [vmem:[%s259 + $0x1e0] sm:$0xff]
        %v466 = vld [vmem:[%s259 + $0x1e8] sm:$0xff]
        %v467 = vld [vmem:[%s259 + $0x1f0] sm:$0xff]
        %v468 = vld [vmem:[%s259 + $0x1f8] sm:$0xff]
        %v469 = vld [vmem:[%s259 + $0x200] sm:$0xff]
        %v470 = vld [vmem:[%s259 + $0x208] sm:$0xff]
        %v471 = vld [vmem:[%s259 + $0x210] sm:$0xff]
        %v472 = vld [vmem:[%s259 + $0x218] sm:$0xff]
        %v473 = vld [vmem:[%s259 + $0x220] sm:$0xff]
        %v474 = vld [vmem:[%s259 + $0x228] sm:$0xff]
        %v475 = vld [vmem:[%s259 + $0x230] sm:$0xff]
        %v476 = vld [vmem:[%s259 + $0x238] sm:$0xff]
        %v477 = vld [vmem:[%s259 + $0x240] sm:$0xff]
        %v478 = vld [vmem:[%s259 + $0x248] sm:$0xff]
        %v479 = vld [vmem:[%s259 + $0x250] sm:$0xff]
        %v480 = vld [vmem:[%s259 + $0x258] sm:$0xff]
        %v481 = vld [vmem:[%s259 + $0x260] sm:$0xff]
        %v482 = vld [vmem:[%s259 + $0x268] sm:$0xff]
        %v483 = vld [vmem:[%s259 + $0x270] sm:$0xff]
        %v484 = vld [vmem:[%s259 + $0x278] sm:$0xff]
        %v485 = vld [vmem:[%s259 + $0x280] sm:$0xff]
        %v486 = vld [vmem:[%s259 + $0x288] sm:$0xff]
        %v487 = vld [vmem:[%s259 + $0x290] sm:$0xff]
        %v488 = vld [vmem:[%s259 + $0x298] sm:$0xff]
        %v489 = vld [vmem:[%s259 + $0x2a0] sm:$0xff]
        %v490 = vld [vmem:[%s259 + $0x2a8] sm:$0xff]
        %v491 = vld [vmem:[%s259 + $0x2b0] sm:$0xff]
        %v492 = vld [vmem:[%s259 + $0x2b8] sm:$0xff]
        %v493 = vld [vmem:[%s259 + $0x2c0] sm:$0xff]
        %v494 = vld [vmem:[%s259 + $0x2c8] sm:$0xff]
        %v495 = vld [vmem:[%s259 + $0x2d0] sm:$0xff]
        %v496 = vld [vmem:[%s259 + $0x2d8] sm:$0xff]
        %v497 = vld [vmem:[%s259 + $0x2e0] sm:$0xff]
        %v498 = vld [vmem:[%s259 + $0x2e8] sm:$0xff]
        %v499 = vld [vmem:[%s259 + $0x2f0] sm:$0xff]
        %v500 = vld [vmem:[%s259 + $0x2f8] sm:$0xff]
        %v501 = vld [vmem:[%s259 + $0x300] sm:$0xff]
        %v502 = vld [vmem:[%s259 + $0x308] sm:$0xff]
        %v503 = vld [vmem:[%s259 + $0x310] sm:$0xff]
        %v504 = vld [vmem:[%s259 + $0x318] sm:$0xff]
        %v505 = vld [vmem:[%s259 + $0x320] sm:$0xff]
        %v506 = vld [vmem:[%s259 + $0x328] sm:$0xff]
        %v507 = vld [vmem:[%s259 + $0x330] sm:$0xff]
        %v508 = vld [vmem:[%s259 + $0x338] sm:$0xff]
        %v509 = vld [vmem:[%s259 + $0x340] sm:$0xff]
        %v510 = vld [vmem:[%s259 + $0x348] sm:$0xff]
        %v511 = vld [vmem:[%s259 + $0x350] sm:$0xff]
        %v512 = vld [vmem:[%s259 + $0x358] sm:$0xff]
        %v513 = vld [vmem:[%s259 + $0x360] sm:$0xff]
        %v514 = vld [vmem:[%s259 + $0x368] sm:$0xff]
        %v515 = vld [vmem:[%s259 + $0x370] sm:$0xff]
        %v516 = vld [vmem:[%s259 + $0x378] sm:$0xff]
        %v517 = vld [vmem:[%s259 + $0x380] sm:$0xff]
        %v518 = vld [vmem:[%s259 + $0x388] sm:$0xff]
        %v519 = vld [vmem:[%s259 + $0x390] sm:$0xff]
        %v520 = vld [vmem:[%s259 + $0x398] sm:$0xff]
        %v521 = vld [vmem:[%s259 + $0x3a0] sm:$0xff]
        %v522 = vld [vmem:[%s259 + $0x3a8] sm:$0xff]
        %v523 = vld [vmem:[%s259 + $0x3b0] sm:$0xff]
        %v524 = vld [vmem:[%s259 + $0x3b8] sm:$0xff]
        %v525 = vld [vmem:[%s259 + $0x3c0] sm:$0xff]
        %v526 = vld [vmem:[%s259 + $0x3c8] sm:$0xff]
        %v527 = vld [vmem:[%s259 + $0x3d0] sm:$0xff]
        %v528 = vld [vmem:[%s259 + $0x3d8] sm:$0xff]
        %v529 = vld [vmem:[%s259 + $0x3e0] sm:$0xff]
        %v530 = vld [vmem:[%s259 + $0x3e8] sm:$0xff]
        %v531 = vld [vmem:[%s259 + $0x3f0] sm:$0xff]
        %v532 = vld [vmem:[%s259 + $0x3f8] sm:$0xff]
        %v533 = vld [vmem:[%s259 + $0x400] sm:$0xff]
        %v534 = vld [vmem:[%s259 + $0x408] sm:$0xff]
        %v535 = vld [vmem:[%s259 + $0x410] sm:$0xff]
        %v536 = vld [vmem:[%s259 + $0x418] sm:$0xff]
        %v537 = vld [vmem:[%s259 + $0x420] sm:$0xff]
        %v538 = vld [vmem:[%s259 + $0x428] sm:$0xff]
        %v539 = vld [vmem:[%s259 + $0x430] sm:$0xff]
        %v540 = vld [vmem:[%s259 + $0x438] sm:$0xff]
        %v541 = vld [vmem:[%s259 + $0x440] sm:$0xff]
        %v542 = vld [vmem:[%s259 + $0x448] sm:$0xff]
        %v543 = vld [vmem:[%s259 + $0x450] sm:$0xff]
        %v544 = vld [vmem:[%s259 + $0x458] sm:$0xff]
        %v545 = vld [vmem:[%s259 + $0x460] sm:$0xff]
        %v546 = vld [vmem:[%s259 + $0x468] sm:$0xff]
        %v547 = vld [vmem:[%s259 + $0x470] sm:$0xff]
        %v548 = vld [vmem:[%s259 + $0x478] sm:$0xff]
        %v549 = vld [vmem:[%s259 + $0x480] sm:$0xff]
        %v550 = vld [vmem:[%s259 + $0x488] sm:$0xff]
        %v551 = vld [vmem:[%s259 + $0x490] sm:$0xff]
        %v552 = vld [vmem:[%s259 + $0x498] sm:$0xff]
        %v553 = vld [vmem:[%s259 + $0x4a0] sm:$0xff]
        %v554 = vld [vmem:[%s259 + $0x4a8] sm:$0xff]
        %v555 = vld [vmem:[%s259 + $0x4b0] sm:$0xff]
        %v556 = vld [vmem:[%s259 + $0x4b8] sm:$0xff]
        %v557 = vld [vmem:[%s259 + $0x4c0] sm:$0xff]
        %v558 = vld [vmem:[%s259 + $0x4c8] sm:$0xff]
        %v559 = vld [vmem:[%s259 + $0x4d0] sm:$0xff]
        %v560 = vld [vmem:[%s259 + $0x4d8] sm:$0xff]
        %v561 = vld [vmem:[%s259 + $0x4e0] sm:$0xff]
        %v562 = vld [vmem:[%s259 + $0x4e8] sm:$0xff]
        %v563 = vld [vmem:[%s259 + $0x4f0] sm:$0xff]
        %v564 = vld [vmem:[%s259 + $0x4f8] sm:$0xff]
        %v565 = vld [vmem:[%s259 + $0x500] sm:$0xff]
        %v566 = vld [vmem:[%s259 + $0x508] sm:$0xff]
        %v567 = vld [vmem:[%s259 + $0x510] sm:$0xff]
        %v568 = vld [vmem:[%s259 + $0x518] sm:$0xff]
        %v569 = vld [vmem:[%s259 + $0x520] sm:$0xff]
        %v570 = vld [vmem:[%s259 + $0x528] sm:$0xff]
        %v571 = vld [vmem:[%s259 + $0x530] sm:$0xff]
        %v572 = vld [vmem:[%s259 + $0x538] sm:$0xff]
        %v573 = vld [vmem:[%s259 + $0x540] sm:$0xff]
        %v574 = vld [vmem:[%s259 + $0x548] sm:$0xff]
        %v575 = vld [vmem:[%s259 + $0x550] sm:$0xff]
        %v576 = vld [vmem:[%s259 + $0x558] sm:$0xff]
        %v577 = vld [vmem:[%s259 + $0x560] sm:$0xff]
        %v578 = vld [vmem:[%s259 + $0x568] sm:$0xff]
        %v579 = vld [vmem:[%s259 + $0x570] sm:$0xff]
        %v580 = vld [vmem:[%s259 + $0x578] sm:$0xff]
        %v581 = vld [vmem:[%s259 + $0x580] sm:$0xff]
        %v582 = vld [vmem:[%s259 + $0x588] sm:$0xff]
        %v583 = vld [vmem:[%s259 + $0x590] sm:$0xff]
        %v584 = vld [vmem:[%s259 + $0x598] sm:$0xff]
        %v585 = vld [vmem:[%s259 + $0x5a0] sm:$0xff]
        %v586 = vld [vmem:[%s259 + $0x5a8] sm:$0xff]
        %v587 = vld [vmem:[%s259 + $0x5b0] sm:$0xff]
        %v588 = vld [vmem:[%s259 + $0x5b8] sm:$0xff]
        %v589 = vld [vmem:[%s259 + $0x5c0] sm:$0xff]
        %v590 = vld [vmem:[%s259 + $0x5c8] sm:$0xff]
        %v591 = vld [vmem:[%s259 + $0x5d0] sm:$0xff]
        %v592 = vld [vmem:[%s259 + $0x5d8] sm:$0xff]
        %v593 = vld [vmem:[%s259 + $0x5e0] sm:$0xff]
        %v594 = vld [vmem:[%s259 + $0x5e8] sm:$0xff]
        %v595 = vld [vmem:[%s259 + $0x5f0] sm:$0xff]
        %v596 = vld [vmem:[%s259 + $0x5f8] sm:$0xff]
        %v597 = vld [vmem:[%s259 + $0x600] sm:$0xff]
        %v598 = vld [vmem:[%s259 + $0x608] sm:$0xff]
        %v599 = vld [vmem:[%s259 + $0x610] sm:$0xff]
        %v600 = vld [vmem:[%s259 + $0x618] sm:$0xff]
        %v601 = vld [vmem:[%s259 + $0x620] sm:$0xff]
        %v602 = vld [vmem:[%s259 + $0x628] sm:$0xff]
        %v603 = vld [vmem:[%s259 + $0x630] sm:$0xff]
        %v604 = vld [vmem:[%s259 + $0x638] sm:$0xff]
        %v605 = vld [vmem:[%s259 + $0x640] sm:$0xff]
        %v606 = vld [vmem:[%s259 + $0x648] sm:$0xff]
        %v607 = vld [vmem:[%s259 + $0x650] sm:$0xff]
        %v608 = vld [vmem:[%s259 + $0x658] sm:$0xff]
        %v609 = vld [vmem:[%s259 + $0x660] sm:$0xff]
        %v610 = vld [vmem:[%s259 + $0x668] sm:$0xff]
        %v611 = vld [vmem:[%s259 + $0x670] sm:$0xff]
        %v612 = vld [vmem:[%s259 + $0x678] sm:$0xff]
        %v613 = vld [vmem:[%s259 + $0x680] sm:$0xff]
        %v614 = vld [vmem:[%s259 + $0x688] sm:$0xff]
        %v615 = vld [vmem:[%s259 + $0x690] sm:$0xff]
        %v616 = vld [vmem:[%s259 + $0x698] sm:$0xff]
        %v617 = vld [vmem:[%s259 + $0x6a0] sm:$0xff]
        %v618 = vld [vmem:[%s259 + $0x6a8] sm:$0xff]
        %v619 = vld [vmem:[%s259 + $0x6b0] sm:$0xff]
        %v620 = vld [vmem:[%s259 + $0x6b8] sm:$0xff]
        %v621 = vld [vmem:[%s259 + $0x6c0] sm:$0xff]
        %v622 = vld [vmem:[%s259 + $0x6c8] sm:$0xff]
        %v623 = vld [vmem:[%s259 + $0x6d0] sm:$0xff]
        %v624 = vld [vmem:[%s259 + $0x6d8] sm:$0xff]
        %v625 = vld [vmem:[%s259 + $0x6e0] sm:$0xff]
        %v626 = vld [vmem:[%s259 + $0x6e8] sm:$0xff]
        %v627 = vld [vmem:[%s259 + $0x6f0] sm:$0xff]
        %v628 = vld [vmem:[%s259 + $0x6f8] sm:$0xff]
        %v629 = vld [vmem:[%s259 + $0x700] sm:$0xff]
        %v630 = vld [vmem:[%s259 + $0x708] sm:$0xff]
        %v631 = vld [vmem:[%s259 + $0x710] sm:$0xff]
        %v632 = vld [vmem:[%s259 + $0x718] sm:$0xff]
        %v633 = vld [vmem:[%s259 + $0x720] sm:$0xff]
        %v634 = vld [vmem:[%s259 + $0x728] sm:$0xff]
        %v635 = vld [vmem:[%s259 + $0x730] sm:$0xff]
        %v636 = vld [vmem:[%s259 + $0x738] sm:$0xff]
        %v637 = vld [vmem:[%s259 + $0x740] sm:$0xff]
        %v638 = vld [vmem:[%s259 + $0x748] sm:$0xff]
        %v639 = vld [vmem:[%s259 + $0x750] sm:$0xff]
        %v640 = vld [vmem:[%s259 + $0x758] sm:$0xff]
        %v641 = vld [vmem:[%s259 + $0x760] sm:$0xff]
        %v642 = vld [vmem:[%s259 + $0x768] sm:$0xff]
        %v643 = vld [vmem:[%s259 + $0x770] sm:$0xff]
        %v644 = vld [vmem:[%s259 + $0x778] sm:$0xff]
        %v645 = vld [vmem:[%s259 + $0x780] sm:$0xff]
        %v646 = vld [vmem:[%s259 + $0x788] sm:$0xff]
        %v647 = vld [vmem:[%s259 + $0x790] sm:$0xff]
        %v648 = vld [vmem:[%s259 + $0x798] sm:$0xff]
        %v649 = vld [vmem:[%s259 + $0x7a0] sm:$0xff]
        %v650 = vld [vmem:[%s259 + $0x7a8] sm:$0xff]
        %v651 = vld [vmem:[%s259 + $0x7b0] sm:$0xff]
        %v652 = vld [vmem:[%s259 + $0x7b8] sm:$0xff]
        %v653 = vld [vmem:[%s259 + $0x7c0] sm:$0xff]
        %v654 = vld [vmem:[%s259 + $0x7c8] sm:$0xff]
        %v655 = vld [vmem:[%s259 + $0x7d0] sm:$0xff]
        %v656 = vld [vmem:[%s259 + $0x7d8] sm:$0xff]
        %v657 = vld [vmem:[%s259 + $0x7e0] sm:$0xff]
        %v658 = vld [vmem:[%s259 + $0x7e8] sm:$0xff]
        %v659 = vld [vmem:[%s259 + $0x7f0] sm:$0xff]
        %v660 = vld [vmem:[%s259 + $0x7f8] sm:$0xff]
        %s661 = scalar_lea.vmem %s1, %s336
        %v662 = vld [vmem:[%s661] sm:$0xff]
        %v663 = vld [vmem:[%s661 + $0x8] sm:$0xff]
        %v664 = vld [vmem:[%s661 + $0x10] sm:$0xff]
        %v665 = vld [vmem:[%s661 + $0x18] sm:$0xff]
        %v666 = vld [vmem:[%s661 + $0x20] sm:$0xff]
        %v667 = vld [vmem:[%s661 + $0x28] sm:$0xff]
        %v668 = vld [vmem:[%s661 + $0x30] sm:$0xff]
        %v669 = vld [vmem:[%s661 + $0x38] sm:$0xff]
        %v670 = vld [vmem:[%s661 + $0x40] sm:$0xff]
        %v671 = vld [vmem:[%s661 + $0x48] sm:$0xff]
        %v672 = vld [vmem:[%s661 + $0x50] sm:$0xff]
        %v673 = vld [vmem:[%s661 + $0x58] sm:$0xff]
        %v674 = vld [vmem:[%s661 + $0x60] sm:$0xff]
        %v675 = vld [vmem:[%s661 + $0x68] sm:$0xff]
        %v676 = vld [vmem:[%s661 + $0x70] sm:$0xff]
        %v677 = vld [vmem:[%s661 + $0x78] sm:$0xff]
        %v678 = vld [vmem:[%s661 + $0x80] sm:$0xff]
        %v679 = vld [vmem:[%s661 + $0x88] sm:$0xff]
        %v680 = vld [vmem:[%s661 + $0x90] sm:$0xff]
        %v681 = vld [vmem:[%s661 + $0x98] sm:$0xff]
        %v682 = vld [vmem:[%s661 + $0xa0] sm:$0xff]
        %v683 = vld [vmem:[%s661 + $0xa8] sm:$0xff]
        %v684 = vld [vmem:[%s661 + $0xb0] sm:$0xff]
        %v685 = vld [vmem:[%s661 + $0xb8] sm:$0xff]
        %v686 = vld [vmem:[%s661 + $0xc0] sm:$0xff]
        %v687 = vld [vmem:[%s661 + $0xc8] sm:$0xff]
        %v688 = vld [vmem:[%s661 + $0xd0] sm:$0xff]
        %v689 = vld [vmem:[%s661 + $0xd8] sm:$0xff]
        %v690 = vld [vmem:[%s661 + $0xe0] sm:$0xff]
        %v691 = vld [vmem:[%s661 + $0xe8] sm:$0xff]
        %v692 = vld [vmem:[%s661 + $0xf0] sm:$0xff]
        %v693 = vld [vmem:[%s661 + $0xf8] sm:$0xff]
        %v694 = vld [vmem:[%s661 + $0x100] sm:$0xff]
        %v695 = vld [vmem:[%s661 + $0x108] sm:$0xff]
        %v696 = vld [vmem:[%s661 + $0x110] sm:$0xff]
        %v697 = vld [vmem:[%s661 + $0x118] sm:$0xff]
        %v698 = vld [vmem:[%s661 + $0x120] sm:$0xff]
        %v699 = vld [vmem:[%s661 + $0x128] sm:$0xff]
        %v700 = vld [vmem:[%s661 + $0x130] sm:$0xff]
        %v701 = vld [vmem:[%s661 + $0x138] sm:$0xff]
        %v702 = vld [vmem:[%s661 + $0x140] sm:$0xff]
        %v703 = vld [vmem:[%s661 + $0x148] sm:$0xff]
        %v704 = vld [vmem:[%s661 + $0x150] sm:$0xff]
        %v705 = vld [vmem:[%s661 + $0x158] sm:$0xff]
        %v706 = vld [vmem:[%s661 + $0x160] sm:$0xff]
        %v707 = vld [vmem:[%s661 + $0x168] sm:$0xff]
        %v708 = vld [vmem:[%s661 + $0x170] sm:$0xff]
        %v709 = vld [vmem:[%s661 + $0x178] sm:$0xff]
        %v710 = vld [vmem:[%s661 + $0x180] sm:$0xff]
        %v711 = vld [vmem:[%s661 + $0x188] sm:$0xff]
        %v712 = vld [vmem:[%s661 + $0x190] sm:$0xff]
        %v713 = vld [vmem:[%s661 + $0x198] sm:$0xff]
        %v714 = vld [vmem:[%s661 + $0x1a0] sm:$0xff]
        %v715 = vld [vmem:[%s661 + $0x1a8] sm:$0xff]
        %v716 = vld [vmem:[%s661 + $0x1b0] sm:$0xff]
        %v717 = vld [vmem:[%s661 + $0x1b8] sm:$0xff]
        %v718 = vld [vmem:[%s661 + $0x1c0] sm:$0xff]
        %v719 = vld [vmem:[%s661 + $0x1c8] sm:$0xff]
        %v720 = vld [vmem:[%s661 + $0x1d0] sm:$0xff]
        %v721 = vld [vmem:[%s661 + $0x1d8] sm:$0xff]
        %v722 = vld [vmem:[%s661 + $0x1e0] sm:$0xff]
        %v723 = vld [vmem:[%s661 + $0x1e8] sm:$0xff]
        %v724 = vld [vmem:[%s661 + $0x1f0] sm:$0xff]
        %v725 = vld [vmem:[%s661 + $0x1f8] sm:$0xff]
        %726 = vmatprep.subr.mxu0 0.0
        %727 = vmatpush1.msra.mxu0 %v677
        %728 = vmatprep.subr.mxu0 0.0
        %729 = vmatpush1.msra.mxu0 %v676
        %730 = vmatprep.subr.mxu0 0.0
        %731 = vmatpush1.msra.mxu0 %v675
        %732 = vmatprep.subr.mxu0 0.0
        %733 = vmatpush1.msra.mxu0 %v674
        %734 = vmatprep.subr.mxu0 0.0
        %735 = vmatpush1.msra.mxu0 %v673
        %736 = vmatprep.subr.mxu0 0.0
        %737 = vmatpush1.msra.mxu0 %v672
        %738 = vmatprep.subr.mxu0 0.0
        %739 = vmatpush1.msra.mxu0 %v671
        %740 = vmatprep.subr.mxu0 0.0
        %741 = vmatpush1.msra.mxu0 %v670
        %742 = vmatprep.subr.mxu0 0.0
        %743 = vmatpush1.msra.mxu0 %v669
        %744 = vmatprep.subr.mxu0 0.0
        %745 = vmatpush1.msra.mxu0 %v668
        %746 = vmatprep.subr.mxu0 0.0
        %747 = vmatpush1.msra.mxu0 %v667
        %748 = vmatprep.subr.mxu0 0.0
        %749 = vmatpush1.msra.mxu0 %v666
        %750 = vmatprep.subr.mxu0 0.0
        %751 = vmatpush1.msra.mxu0 %v665
        %752 = vmatprep.subr.mxu0 0.0
        %753 = vmatpush1.msra.mxu0 %v664
        %754 = vmatprep.subr.mxu0 0.0
        %755 = vmatpush1.msra.mxu0 %v663
        %756 = vmatprep.subr.mxu0 0.0
        %757 = vmatpush1.msra.mxu0 %v662
        %758 = vmatprep.subr.mxu0 0.0
        %759 = vmatpush2.msra.mxu0 %v693
        %760 = vmatprep.subr.mxu0 0.0
        %761 = vmatpush2.msra.mxu0 %v692
        %762 = vmatprep.subr.mxu0 0.0
        %763 = vmatpush2.msra.mxu0 %v691
        %764 = vmatprep.subr.mxu0 0.0
        %765 = vmatpush2.msra.mxu0 %v690
        %766 = vmatprep.subr.mxu0 0.0
        %767 = vmatpush2.msra.mxu0 %v689
        %768 = vmatprep.subr.mxu0 0.0
        %769 = vmatpush2.msra.mxu0 %v688
        %770 = vmatprep.subr.mxu0 0.0
        %771 = vmatpush2.msra.mxu0 %v687
        %772 = vmatprep.subr.mxu0 0.0
        %773 = vmatpush2.msra.mxu0 %v686
        %774 = vmatprep.subr.mxu0 0.0
        %775 = vmatpush2.msra.mxu0 %v685
        %776 = vmatprep.subr.mxu0 0.0
        %777 = vmatpush2.msra.mxu0 %v684
        %778 = vmatprep.subr.mxu0 0.0
        %779 = vmatpush2.msra.mxu0 %v683
        %780 = vmatprep.subr.mxu0 0.0
        %781 = vmatpush2.msra.mxu0 %v682
        %782 = vmatprep.subr.mxu0 0.0
        %783 = vmatpush2.msra.mxu0 %v681
        %784 = vmatprep.subr.mxu0 0.0
        %785 = vmatpush2.msra.mxu0 %v680
        %786 = vmatprep.subr.mxu0 0.0
        %787 = vmatpush2.msra.mxu0 %v679
        %788 = vmatprep.subr.mxu0 0.0
        %789 = vmatpush2.msra.mxu0 %v678
        %790 = vmatprep.mubr.f32.mxu0 %v406
        %791 = vmatmul.mubr.f32.gmra.mxu0 %v405
        %v792 = vpop.f32.mrf.mxu0
        %v793 = vadd.f32 0.0, %v792
        %v794 = vpop.f32.mrf.mxu0
        %795 = vmatprep.mubr.f32.mxu0 %v410
        %796 = vmatmul.mubr.f32.gmra.mxu0 %v409
        %v797 = vpop.f32.mrf.mxu0
        %v798 = vadd.f32 0.0, %v797
        %v799 = vpop.f32.mrf.mxu0
        %800 = vmatprep.mubr.f32.mxu0 %v414
        %801 = vmatmul.mubr.f32.gmra.mxu0 %v413
        %v802 = vpop.f32.mrf.mxu0
        %v803 = vadd.f32 0.0, %v802
        %v804 = vpop.f32.mrf.mxu0
        %805 = vmatprep.mubr.f32.mxu0 %v418
        %806 = vmatmul.mubr.f32.gmra.mxu0 %v417
        %v807 = vpop.f32.mrf.mxu0
        %v808 = vadd.f32 0.0, %v807
        %v809 = vpop.f32.mrf.mxu0
        %810 = vmatprep.mubr.f32.mxu0 %v422
        %811 = vmatmul.mubr.f32.gmra.mxu0 %v421
        %v812 = vpop.f32.mrf.mxu0
        %v813 = vadd.f32 0.0, %v812
        %v814 = vpop.f32.mrf.mxu0
        %815 = vmatprep.mubr.f32.mxu0 %v426
        %816 = vmatmul.mubr.f32.gmra.mxu0 %v425
        %v817 = vpop.f32.mrf.mxu0
        %v818 = vadd.f32 0.0, %v817
        %v819 = vpop.f32.mrf.mxu0
        %820 = vmatprep.mubr.f32.mxu0 %v430
        %821 = vmatmul.mubr.f32.gmra.mxu0 %v429
        %v822 = vpop.f32.mrf.mxu0
        %v823 = vadd.f32 0.0, %v822
        %v824 = vpop.f32.mrf.mxu0
        %825 = vmatprep.mubr.f32.mxu0 %v434
        %826 = vmatmul.mubr.f32.gmra.mxu0 %v433
        %v827 = vpop.f32.mrf.mxu0
        %v828 = vadd.f32 0.0, %v827
        %v829 = vpop.f32.mrf.mxu0
        %830 = vmatprep.mubr.f32.mxu0 %v438
        %831 = vmatmul.mubr.f32.gmra.mxu0 %v437
        %v832 = vpop.f32.mrf.mxu0
        %v833 = vadd.f32 0.0, %v832
        %v834 = vpop.f32.mrf.mxu0
        %835 = vmatprep.mubr.f32.mxu0 %v442
        %836 = vmatmul.mubr.f32.gmra.mxu0 %v441
        %v837 = vpop.f32.mrf.mxu0
        %v838 = vadd.f32 0.0, %v837
        %v839 = vpop.f32.mrf.mxu0
        %840 = vmatprep.mubr.f32.mxu0 %v446
        %841 = vmatmul.mubr.f32.gmra.mxu0 %v445
        %v842 = vpop.f32.mrf.mxu0
        %v843 = vadd.f32 0.0, %v842
        %v844 = vpop.f32.mrf.mxu0
        %845 = vmatprep.mubr.f32.mxu0 %v450
        %846 = vmatmul.mubr.f32.gmra.mxu0 %v449
        %v847 = vpop.f32.mrf.mxu0
        %v848 = vadd.f32 0.0, %v847
        %v849 = vpop.f32.mrf.mxu0
        %850 = vmatprep.mubr.f32.mxu0 %v454
        %851 = vmatmul.mubr.f32.gmra.mxu0 %v453
        %v852 = vpop.f32.mrf.mxu0
        %v853 = vadd.f32 0.0, %v852
        %v854 = vpop.f32.mrf.mxu0
        %855 = vmatprep.mubr.f32.mxu0 %v458
        %856 = vmatmul.mubr.f32.gmra.mxu0 %v457
        %v857 = vpop.f32.mrf.mxu0
        %v858 = vadd.f32 0.0, %v857
        %v859 = vpop.f32.mrf.mxu0
        %860 = vmatprep.mubr.f32.mxu0 %v462
        %861 = vmatmul.mubr.f32.gmra.mxu0 %v461
        %v862 = vpop.f32.mrf.mxu0
        %v863 = vadd.f32 0.0, %v862
        %v864 = vpop.f32.mrf.mxu0
        %865 = vmatprep.mubr.f32.mxu0 %v466
        %866 = vmatmul.mubr.f32.gmra.mxu0 %v465
        %v867 = vpop.f32.mrf.mxu0
        %v868 = vadd.f32 0.0, %v867
        %v869 = vpop.f32.mrf.mxu0
        %870 = vmatprep.mubr.f32.mxu0 %v470
        %871 = vmatmul.mubr.f32.gmra.mxu0 %v469
        %v872 = vpop.f32.mrf.mxu0
        %v873 = vadd.f32 0.0, %v872
        %v874 = vpop.f32.mrf.mxu0
        %875 = vmatprep.mubr.f32.mxu0 %v474
        %876 = vmatmul.mubr.f32.gmra.mxu0 %v473
        %v877 = vpop.f32.mrf.mxu0
        %v878 = vadd.f32 0.0, %v877
        %v879 = vpop.f32.mrf.mxu0
        %880 = vmatprep.mubr.f32.mxu0 %v478
        %881 = vmatmul.mubr.f32.gmra.mxu0 %v477
        %v882 = vpop.f32.mrf.mxu0
        %v883 = vadd.f32 0.0, %v882
        %v884 = vpop.f32.mrf.mxu0
        %885 = vmatprep.mubr.f32.mxu0 %v482
        %886 = vmatmul.mubr.f32.gmra.mxu0 %v481
        %v887 = vpop.f32.mrf.mxu0
        %v888 = vadd.f32 0.0, %v887
        %v889 = vpop.f32.mrf.mxu0
        %890 = vmatprep.mubr.f32.mxu0 %v486
        %891 = vmatmul.mubr.f32.gmra.mxu0 %v485
        %v892 = vpop.f32.mrf.mxu0
        %v893 = vadd.f32 0.0, %v892
        %v894 = vpop.f32.mrf.mxu0
        %895 = vmatprep.mubr.f32.mxu0 %v490
        %896 = vmatmul.mubr.f32.gmra.mxu0 %v489
        %v897 = vpop.f32.mrf.mxu0
        %v898 = vadd.f32 0.0, %v897
        %v899 = vpop.f32.mrf.mxu0
        %900 = vmatprep.mubr.f32.mxu0 %v494
        %901 = vmatmul.mubr.f32.gmra.mxu0 %v493
        %v902 = vpop.f32.mrf.mxu0
        %v903 = vadd.f32 0.0, %v902
        %v904 = vpop.f32.mrf.mxu0
        %905 = vmatprep.mubr.f32.mxu0 %v498
        %906 = vmatmul.mubr.f32.gmra.mxu0 %v497
        %v907 = vpop.f32.mrf.mxu0
        %v908 = vadd.f32 0.0, %v907
        %v909 = vpop.f32.mrf.mxu0
        %910 = vmatprep.mubr.f32.mxu0 %v502
        %911 = vmatmul.mubr.f32.gmra.mxu0 %v501
        %v912 = vpop.f32.mrf.mxu0
        %v913 = vadd.f32 0.0, %v912
        %v914 = vpop.f32.mrf.mxu0
        %915 = vmatprep.mubr.f32.mxu0 %v506
        %916 = vmatmul.mubr.f32.gmra.mxu0 %v505
        %v917 = vpop.f32.mrf.mxu0
        %v918 = vadd.f32 0.0, %v917
        %v919 = vpop.f32.mrf.mxu0
        %920 = vmatprep.mubr.f32.mxu0 %v510
        %921 = vmatmul.mubr.f32.gmra.mxu0 %v509
        %v922 = vpop.f32.mrf.mxu0
        %v923 = vadd.f32 0.0, %v922
        %v924 = vpop.f32.mrf.mxu0
        %925 = vmatprep.mubr.f32.mxu0 %v514
        %926 = vmatmul.mubr.f32.gmra.mxu0 %v513
        %v927 = vpop.f32.mrf.mxu0
        %v928 = vadd.f32 0.0, %v927
        %v929 = vpop.f32.mrf.mxu0
        %930 = vmatprep.mubr.f32.mxu0 %v518
        %931 = vmatmul.mubr.f32.gmra.mxu0 %v517
        %v932 = vpop.f32.mrf.mxu0
        %v933 = vadd.f32 0.0, %v932
        %v934 = vpop.f32.mrf.mxu0
        %935 = vmatprep.mubr.f32.mxu0 %v522
        %936 = vmatmul.mubr.f32.gmra.mxu0 %v521
        %v937 = vpop.f32.mrf.mxu0
        %v938 = vadd.f32 0.0, %v937
        %v939 = vpop.f32.mrf.mxu0
        %940 = vmatprep.mubr.f32.mxu0 %v526
        %941 = vmatmul.mubr.f32.gmra.mxu0 %v525
        %v942 = vpop.f32.mrf.mxu0
        %v943 = vadd.f32 0.0, %v942
        %v944 = vpop.f32.mrf.mxu0
        %945 = vmatprep.mubr.f32.mxu0 %v530
        %946 = vmatmul.mubr.f32.gmra.mxu0 %v529
        %v947 = vpop.f32.mrf.mxu0
        %v948 = vadd.f32 0.0, %v947
        %v949 = vpop.f32.mrf.mxu0
        %950 = vmatprep.mubr.f32.mxu0 %v534
        %951 = vmatmul.mubr.f32.gmra.mxu0 %v533
        %v952 = vpop.f32.mrf.mxu0
        %v953 = vadd.f32 0.0, %v952
        %v954 = vpop.f32.mrf.mxu0
        %955 = vmatprep.mubr.f32.mxu0 %v538
        %956 = vmatmul.mubr.f32.gmra.mxu0 %v537
        %v957 = vpop.f32.mrf.mxu0
        %v958 = vadd.f32 0.0, %v957
        %v959 = vpop.f32.mrf.mxu0
        %960 = vmatprep.mubr.f32.mxu0 %v542
        %961 = vmatmul.mubr.f32.gmra.mxu0 %v541
        %v962 = vpop.f32.mrf.mxu0
        %v963 = vadd.f32 0.0, %v962
        %v964 = vpop.f32.mrf.mxu0
        %965 = vmatprep.mubr.f32.mxu0 %v546
        %966 = vmatmul.mubr.f32.gmra.mxu0 %v545
        %v967 = vpop.f32.mrf.mxu0
        %v968 = vadd.f32 0.0, %v967
        %v969 = vpop.f32.mrf.mxu0
        %970 = vmatprep.mubr.f32.mxu0 %v550
        %971 = vmatmul.mubr.f32.gmra.mxu0 %v549
        %v972 = vpop.f32.mrf.mxu0
        %v973 = vadd.f32 0.0, %v972
        %v974 = vpop.f32.mrf.mxu0
        %975 = vmatprep.mubr.f32.mxu0 %v554
        %976 = vmatmul.mubr.f32.gmra.mxu0 %v553
        %v977 = vpop.f32.mrf.mxu0
        %v978 = vadd.f32 0.0, %v977
        %v979 = vpop.f32.mrf.mxu0
        %980 = vmatprep.mubr.f32.mxu0 %v558
        %981 = vmatmul.mubr.f32.gmra.mxu0 %v557
        %v982 = vpop.f32.mrf.mxu0
        %v983 = vadd.f32 0.0, %v982
        %v984 = vpop.f32.mrf.mxu0
        %985 = vmatprep.mubr.f32.mxu0 %v562
        %986 = vmatmul.mubr.f32.gmra.mxu0 %v561
        %v987 = vpop.f32.mrf.mxu0
        %v988 = vadd.f32 0.0, %v987
        %v989 = vpop.f32.mrf.mxu0
        %990 = vmatprep.mubr.f32.mxu0 %v566
        %991 = vmatmul.mubr.f32.gmra.mxu0 %v565
        %v992 = vpop.f32.mrf.mxu0
        %v993 = vadd.f32 0.0, %v992
        %v994 = vpop.f32.mrf.mxu0
        %995 = vmatprep.mubr.f32.mxu0 %v570
        %996 = vmatmul.mubr.f32.gmra.mxu0 %v569
        %v997 = vpop.f32.mrf.mxu0
        %v998 = vadd.f32 0.0, %v997
        %v999 = vpop.f32.mrf.mxu0
        %1000 = vmatprep.mubr.f32.mxu0 %v574
        %1001 = vmatmul.mubr.f32.gmra.mxu0 %v573
        %v1002 = vpop.f32.mrf.mxu0
        %v1003 = vadd.f32 0.0, %v1002
        %v1004 = vpop.f32.mrf.mxu0
        %1005 = vmatprep.mubr.f32.mxu0 %v578
        %1006 = vmatmul.mubr.f32.gmra.mxu0 %v577
        %v1007 = vpop.f32.mrf.mxu0
        %v1008 = vadd.f32 0.0, %v1007
        %v1009 = vpop.f32.mrf.mxu0
        %1010 = vmatprep.mubr.f32.mxu0 %v582
        %1011 = vmatmul.mubr.f32.gmra.mxu0 %v581
        %v1012 = vpop.f32.mrf.mxu0
        %v1013 = vadd.f32 0.0, %v1012
        %v1014 = vpop.f32.mrf.mxu0
        %1015 = vmatprep.mubr.f32.mxu0 %v586
        %1016 = vmatmul.mubr.f32.gmra.mxu0 %v585
        %v1017 = vpop.f32.mrf.mxu0
        %v1018 = vadd.f32 0.0, %v1017
        %v1019 = vpop.f32.mrf.mxu0
        %1020 = vmatprep.mubr.f32.mxu0 %v590
        %1021 = vmatmul.mubr.f32.gmra.mxu0 %v589
        %v1022 = vpop.f32.mrf.mxu0
        %v1023 = vadd.f32 0.0, %v1022
        %v1024 = vpop.f32.mrf.mxu0
        %1025 = vmatprep.mubr.f32.mxu0 %v594
        %1026 = vmatmul.mubr.f32.gmra.mxu0 %v593
        %v1027 = vpop.f32.mrf.mxu0
        %v1028 = vadd.f32 0.0, %v1027
        %v1029 = vpop.f32.mrf.mxu0
        %1030 = vmatprep.mubr.f32.mxu0 %v598
        %1031 = vmatmul.mubr.f32.gmra.mxu0 %v597
        %v1032 = vpop.f32.mrf.mxu0
        %v1033 = vadd.f32 0.0, %v1032
        %v1034 = vpop.f32.mrf.mxu0
        %1035 = vmatprep.mubr.f32.mxu0 %v602
        %1036 = vmatmul.mubr.f32.gmra.mxu0 %v601
        %v1037 = vpop.f32.mrf.mxu0
        %v1038 = vadd.f32 0.0, %v1037
        %v1039 = vpop.f32.mrf.mxu0
        %1040 = vmatprep.mubr.f32.mxu0 %v606
        %1041 = vmatmul.mubr.f32.gmra.mxu0 %v605
        %v1042 = vpop.f32.mrf.mxu0
        %v1043 = vadd.f32 0.0, %v1042
        %v1044 = vpop.f32.mrf.mxu0
        %1045 = vmatprep.mubr.f32.mxu0 %v610
        %1046 = vmatmul.mubr.f32.gmra.mxu0 %v609
        %v1047 = vpop.f32.mrf.mxu0
        %v1048 = vadd.f32 0.0, %v1047
        %v1049 = vpop.f32.mrf.mxu0
        %1050 = vmatprep.mubr.f32.mxu0 %v614
        %1051 = vmatmul.mubr.f32.gmra.mxu0 %v613
        %v1052 = vpop.f32.mrf.mxu0
        %v1053 = vadd.f32 0.0, %v1052
        %v1054 = vpop.f32.mrf.mxu0
        %1055 = vmatprep.mubr.f32.mxu0 %v618
        %1056 = vmatmul.mubr.f32.gmra.mxu0 %v617
        %v1057 = vpop.f32.mrf.mxu0
        %v1058 = vadd.f32 0.0, %v1057
        %v1059 = vpop.f32.mrf.mxu0
        %1060 = vmatprep.mubr.f32.mxu0 %v622
        %1061 = vmatmul.mubr.f32.gmra.mxu0 %v621
        %v1062 = vpop.f32.mrf.mxu0
        %v1063 = vadd.f32 0.0, %v1062
        %v1064 = vpop.f32.mrf.mxu0
        %1065 = vmatprep.mubr.f32.mxu0 %v626
        %1066 = vmatmul.mubr.f32.gmra.mxu0 %v625
        %v1067 = vpop.f32.mrf.mxu0
        %v1068 = vadd.f32 0.0, %v1067
        %v1069 = vpop.f32.mrf.mxu0
        %1070 = vmatprep.mubr.f32.mxu0 %v630
        %1071 = vmatmul.mubr.f32.gmra.mxu0 %v629
        %v1072 = vpop.f32.mrf.mxu0
        %v1073 = vadd.f32 0.0, %v1072
        %v1074 = vpop.f32.mrf.mxu0
        %1075 = vmatprep.mubr.f32.mxu0 %v634
        %1076 = vmatmul.mubr.f32.gmra.mxu0 %v633
        %v1077 = vpop.f32.mrf.mxu0
        %v1078 = vadd.f32 0.0, %v1077
        %v1079 = vpop.f32.mrf.mxu0
        %1080 = vmatprep.mubr.f32.mxu0 %v638
        %1081 = vmatmul.mubr.f32.gmra.mxu0 %v637
        %v1082 = vpop.f32.mrf.mxu0
        %v1083 = vadd.f32 0.0, %v1082
        %v1084 = vpop.f32.mrf.mxu0
        %1085 = vmatprep.mubr.f32.mxu0 %v642
        %1086 = vmatmul.mubr.f32.gmra.mxu0 %v641
        %v1087 = vpop.f32.mrf.mxu0
        %v1088 = vadd.f32 0.0, %v1087
        %v1089 = vpop.f32.mrf.mxu0
        %1090 = vmatprep.mubr.f32.mxu0 %v646
        %1091 = vmatmul.mubr.f32.gmra.mxu0 %v645
        %v1092 = vpop.f32.mrf.mxu0
        %v1093 = vadd.f32 0.0, %v1092
        %v1094 = vpop.f32.mrf.mxu0
        %1095 = vmatprep.mubr.f32.mxu0 %v650
        %1096 = vmatmul.mubr.f32.gmra.mxu0 %v649
        %v1097 = vpop.f32.mrf.mxu0
        %v1098 = vadd.f32 0.0, %v1097
        %v1099 = vpop.f32.mrf.mxu0
        %1100 = vmatprep.mubr.f32.mxu0 %v654
        %1101 = vmatmul.mubr.f32.gmra.mxu0 %v653
        %v1102 = vpop.f32.mrf.mxu0
        %v1103 = vadd.f32 0.0, %v1102
        %v1104 = vpop.f32.mrf.mxu0
        %1105 = vmatprep.mubr.f32.mxu0 %v658
        %1106 = vmatmul.mubr.f32.gmra.mxu0 %v657
        %v1107 = vpop.f32.mrf.mxu0
        %v1108 = vadd.f32 0.0, %v1107
        %v1109 = vpop.f32.mrf.mxu0
        %1110 = vdwg.mxu0
        %1111 = vmatprep.subr.mxu0 0.0
        %1112 = vmatpush1.msra.mxu0 %v709
        %1113 = vmatprep.subr.mxu0 0.0
        %1114 = vmatpush1.msra.mxu0 %v708
        %1115 = vmatprep.subr.mxu0 0.0
        %1116 = vmatpush1.msra.mxu0 %v707
        %1117 = vmatprep.subr.mxu0 0.0
        %1118 = vmatpush1.msra.mxu0 %v706
        %1119 = vmatprep.subr.mxu0 0.0
        %1120 = vmatpush1.msra.mxu0 %v705
        %1121 = vmatprep.subr.mxu0 0.0
        %1122 = vmatpush1.msra.mxu0 %v704
        %1123 = vmatprep.subr.mxu0 0.0
        %1124 = vmatpush1.msra.mxu0 %v703
        %1125 = vmatprep.subr.mxu0 0.0
        %1126 = vmatpush1.msra.mxu0 %v702
        %1127 = vmatprep.subr.mxu0 0.0
        %1128 = vmatpush1.msra.mxu0 %v701
        %1129 = vmatprep.subr.mxu0 0.0
        %1130 = vmatpush1.msra.mxu0 %v700
        %1131 = vmatprep.subr.mxu0 0.0
        %1132 = vmatpush1.msra.mxu0 %v699
        %1133 = vmatprep.subr.mxu0 0.0
        %1134 = vmatpush1.msra.mxu0 %v698
        %1135 = vmatprep.subr.mxu0 0.0
        %1136 = vmatpush1.msra.mxu0 %v697
        %1137 = vmatprep.subr.mxu0 0.0
        %1138 = vmatpush1.msra.mxu0 %v696
        %1139 = vmatprep.subr.mxu0 0.0
        %1140 = vmatpush1.msra.mxu0 %v695
        %1141 = vmatprep.subr.mxu0 0.0
        %1142 = vmatpush1.msra.mxu0 %v694
        %1143 = vmatprep.subr.mxu0 0.0
        %1144 = vmatpush2.msra.mxu0 %v725
        %1145 = vmatprep.subr.mxu0 0.0
        %1146 = vmatpush2.msra.mxu0 %v724
        %1147 = vmatprep.subr.mxu0 0.0
        %1148 = vmatpush2.msra.mxu0 %v723
        %1149 = vmatprep.subr.mxu0 0.0
        %1150 = vmatpush2.msra.mxu0 %v722
        %1151 = vmatprep.subr.mxu0 0.0
        %1152 = vmatpush2.msra.mxu0 %v721
        %1153 = vmatprep.subr.mxu0 0.0
        %1154 = vmatpush2.msra.mxu0 %v720
        %1155 = vmatprep.subr.mxu0 0.0
        %1156 = vmatpush2.msra.mxu0 %v719
        %1157 = vmatprep.subr.mxu0 0.0
        %1158 = vmatpush2.msra.mxu0 %v718
        %1159 = vmatprep.subr.mxu0 0.0
        %1160 = vmatpush2.msra.mxu0 %v717
        %1161 = vmatprep.subr.mxu0 0.0
        %1162 = vmatpush2.msra.mxu0 %v716
        %1163 = vmatprep.subr.mxu0 0.0
        %1164 = vmatpush2.msra.mxu0 %v715
        %1165 = vmatprep.subr.mxu0 0.0
        %1166 = vmatpush2.msra.mxu0 %v714
        %1167 = vmatprep.subr.mxu0 0.0
        %1168 = vmatpush2.msra.mxu0 %v713
        %1169 = vmatprep.subr.mxu0 0.0
        %1170 = vmatpush2.msra.mxu0 %v712
        %1171 = vmatprep.subr.mxu0 0.0
        %1172 = vmatpush2.msra.mxu0 %v711
        %1173 = vmatprep.subr.mxu0 0.0
        %1174 = vmatpush2.msra.mxu0 %v710
        %1175 = vmatprep.mubr.f32.mxu0 %v408
        %1176 = vmatmul.mubr.f32.gmra.mxu0 %v407
        %v1177 = vpop.f32.mrf.mxu0
        %v1178 = vadd.f32 %v793, %v1177
        %v1179 = vpop.f32.mrf.mxu0
        %1180 = vmatprep.mubr.f32.mxu0 %v412
        %1181 = vmatmul.mubr.f32.gmra.mxu0 %v411
        %v1182 = vpop.f32.mrf.mxu0
        %v1183 = vadd.f32 %v798, %v1182
        %v1184 = vpop.f32.mrf.mxu0
        %1185 = vmatprep.mubr.f32.mxu0 %v416
        %1186 = vmatmul.mubr.f32.gmra.mxu0 %v415
        %v1187 = vpop.f32.mrf.mxu0
        %v1188 = vadd.f32 %v803, %v1187
        %v1189 = vpop.f32.mrf.mxu0
        %1190 = vmatprep.mubr.f32.mxu0 %v420
        %1191 = vmatmul.mubr.f32.gmra.mxu0 %v419
        %v1192 = vpop.f32.mrf.mxu0
        %v1193 = vadd.f32 %v808, %v1192
        %v1194 = vpop.f32.mrf.mxu0
        %1195 = vmatprep.mubr.f32.mxu0 %v424
        %1196 = vmatmul.mubr.f32.gmra.mxu0 %v423
        %v1197 = vpop.f32.mrf.mxu0
        %v1198 = vadd.f32 %v813, %v1197
        %v1199 = vpop.f32.mrf.mxu0
        %1200 = vmatprep.mubr.f32.mxu0 %v428
        %1201 = vmatmul.mubr.f32.gmra.mxu0 %v427
        %v1202 = vpop.f32.mrf.mxu0
        %v1203 = vadd.f32 %v818, %v1202
        %v1204 = vpop.f32.mrf.mxu0
        %1205 = vmatprep.mubr.f32.mxu0 %v432
        %1206 = vmatmul.mubr.f32.gmra.mxu0 %v431
        %v1207 = vpop.f32.mrf.mxu0
        %v1208 = vadd.f32 %v823, %v1207
        %v1209 = vpop.f32.mrf.mxu0
        %1210 = vmatprep.mubr.f32.mxu0 %v436
        %1211 = vmatmul.mubr.f32.gmra.mxu0 %v435
        %v1212 = vpop.f32.mrf.mxu0
        %v1213 = vadd.f32 %v828, %v1212
        %v1214 = vpop.f32.mrf.mxu0
        %1215 = vmatprep.mubr.f32.mxu0 %v440
        %1216 = vmatmul.mubr.f32.gmra.mxu0 %v439
        %v1217 = vpop.f32.mrf.mxu0
        %v1218 = vadd.f32 %v833, %v1217
        %v1219 = vpop.f32.mrf.mxu0
        %1220 = vmatprep.mubr.f32.mxu0 %v444
        %1221 = vmatmul.mubr.f32.gmra.mxu0 %v443
        %v1222 = vpop.f32.mrf.mxu0
        %v1223 = vadd.f32 %v838, %v1222
        %v1224 = vpop.f32.mrf.mxu0
        %1225 = vmatprep.mubr.f32.mxu0 %v448
        %1226 = vmatmul.mubr.f32.gmra.mxu0 %v447
        %v1227 = vpop.f32.mrf.mxu0
        %v1228 = vadd.f32 %v843, %v1227
        %v1229 = vpop.f32.mrf.mxu0
        %1230 = vmatprep.mubr.f32.mxu0 %v452
        %1231 = vmatmul.mubr.f32.gmra.mxu0 %v451
        %v1232 = vpop.f32.mrf.mxu0
        %v1233 = vadd.f32 %v848, %v1232
        %v1234 = vpop.f32.mrf.mxu0
        %1235 = vmatprep.mubr.f32.mxu0 %v456
        %1236 = vmatmul.mubr.f32.gmra.mxu0 %v455
        %v1237 = vpop.f32.mrf.mxu0
        %v1238 = vadd.f32 %v853, %v1237
        %v1239 = vpop.f32.mrf.mxu0
        %1240 = vmatprep.mubr.f32.mxu0 %v460
        %1241 = vmatmul.mubr.f32.gmra.mxu0 %v459
        %v1242 = vpop.f32.mrf.mxu0
        %v1243 = vadd.f32 %v858, %v1242
        %v1244 = vpop.f32.mrf.mxu0
        %1245 = vmatprep.mubr.f32.mxu0 %v464
        %1246 = vmatmul.mubr.f32.gmra.mxu0 %v463
        %v1247 = vpop.f32.mrf.mxu0
        %v1248 = vadd.f32 %v863, %v1247
        %v1249 = vpop.f32.mrf.mxu0
        %1250 = vmatprep.mubr.f32.mxu0 %v468
        %1251 = vmatmul.mubr.f32.gmra.mxu0 %v467
        %v1252 = vpop.f32.mrf.mxu0
        %v1253 = vadd.f32 %v868, %v1252
        %v1254 = vpop.f32.mrf.mxu0
        %1255 = vmatprep.mubr.f32.mxu0 %v472
        %1256 = vmatmul.mubr.f32.gmra.mxu0 %v471
        %v1257 = vpop.f32.mrf.mxu0
        %v1258 = vadd.f32 %v873, %v1257
        %v1259 = vpop.f32.mrf.mxu0
        %1260 = vmatprep.mubr.f32.mxu0 %v476
        %1261 = vmatmul.mubr.f32.gmra.mxu0 %v475
        %v1262 = vpop.f32.mrf.mxu0
        %v1263 = vadd.f32 %v878, %v1262
        %v1264 = vpop.f32.mrf.mxu0
        %1265 = vmatprep.mubr.f32.mxu0 %v480
        %1266 = vmatmul.mubr.f32.gmra.mxu0 %v479
        %v1267 = vpop.f32.mrf.mxu0
        %v1268 = vadd.f32 %v883, %v1267
        %v1269 = vpop.f32.mrf.mxu0
        %1270 = vmatprep.mubr.f32.mxu0 %v484
        %1271 = vmatmul.mubr.f32.gmra.mxu0 %v483
        %v1272 = vpop.f32.mrf.mxu0
        %v1273 = vadd.f32 %v888, %v1272
        %v1274 = vpop.f32.mrf.mxu0
        %1275 = vmatprep.mubr.f32.mxu0 %v488
        %1276 = vmatmul.mubr.f32.gmra.mxu0 %v487
        %v1277 = vpop.f32.mrf.mxu0
        %v1278 = vadd.f32 %v893, %v1277
        %v1279 = vpop.f32.mrf.mxu0
        %1280 = vmatprep.mubr.f32.mxu0 %v492
        %1281 = vmatmul.mubr.f32.gmra.mxu0 %v491
        %v1282 = vpop.f32.mrf.mxu0
        %v1283 = vadd.f32 %v898, %v1282
        %v1284 = vpop.f32.mrf.mxu0
        %1285 = vmatprep.mubr.f32.mxu0 %v496
        %1286 = vmatmul.mubr.f32.gmra.mxu0 %v495
        %v1287 = vpop.f32.mrf.mxu0
        %v1288 = vadd.f32 %v903, %v1287
        %v1289 = vpop.f32.mrf.mxu0
        %1290 = vmatprep.mubr.f32.mxu0 %v500
        %1291 = vmatmul.mubr.f32.gmra.mxu0 %v499
        %v1292 = vpop.f32.mrf.mxu0
        %v1293 = vadd.f32 %v908, %v1292
        %v1294 = vpop.f32.mrf.mxu0
        %1295 = vmatprep.mubr.f32.mxu0 %v504
        %1296 = vmatmul.mubr.f32.gmra.mxu0 %v503
        %v1297 = vpop.f32.mrf.mxu0
        %v1298 = vadd.f32 %v913, %v1297
        %v1299 = vpop.f32.mrf.mxu0
        %1300 = vmatprep.mubr.f32.mxu0 %v508
        %1301 = vmatmul.mubr.f32.gmra.mxu0 %v507
        %v1302 = vpop.f32.mrf.mxu0
        %v1303 = vadd.f32 %v918, %v1302
        %v1304 = vpop.f32.mrf.mxu0
        %1305 = vmatprep.mubr.f32.mxu0 %v512
        %1306 = vmatmul.mubr.f32.gmra.mxu0 %v511
        %v1307 = vpop.f32.mrf.mxu0
        %v1308 = vadd.f32 %v923, %v1307
        %v1309 = vpop.f32.mrf.mxu0
        %1310 = vmatprep.mubr.f32.mxu0 %v516
        %1311 = vmatmul.mubr.f32.gmra.mxu0 %v515
        %v1312 = vpop.f32.mrf.mxu0
        %v1313 = vadd.f32 %v928, %v1312
        %v1314 = vpop.f32.mrf.mxu0
        %1315 = vmatprep.mubr.f32.mxu0 %v520
        %1316 = vmatmul.mubr.f32.gmra.mxu0 %v519
        %v1317 = vpop.f32.mrf.mxu0
        %v1318 = vadd.f32 %v933, %v1317
        %v1319 = vpop.f32.mrf.mxu0
        %1320 = vmatprep.mubr.f32.mxu0 %v524
        %1321 = vmatmul.mubr.f32.gmra.mxu0 %v523
        %v1322 = vpop.f32.mrf.mxu0
        %v1323 = vadd.f32 %v938, %v1322
        %v1324 = vpop.f32.mrf.mxu0
        %1325 = vmatprep.mubr.f32.mxu0 %v528
        %1326 = vmatmul.mubr.f32.gmra.mxu0 %v527
        %v1327 = vpop.f32.mrf.mxu0
        %v1328 = vadd.f32 %v943, %v1327
        %v1329 = vpop.f32.mrf.mxu0
        %1330 = vmatprep.mubr.f32.mxu0 %v532
        %1331 = vmatmul.mubr.f32.gmra.mxu0 %v531
        %v1332 = vpop.f32.mrf.mxu0
        %v1333 = vadd.f32 %v948, %v1332
        %v1334 = vpop.f32.mrf.mxu0
        %1335 = vmatprep.mubr.f32.mxu0 %v536
        %1336 = vmatmul.mubr.f32.gmra.mxu0 %v535
        %v1337 = vpop.f32.mrf.mxu0
        %v1338 = vadd.f32 %v953, %v1337
        %v1339 = vpop.f32.mrf.mxu0
        %1340 = vmatprep.mubr.f32.mxu0 %v540
        %1341 = vmatmul.mubr.f32.gmra.mxu0 %v539
        %v1342 = vpop.f32.mrf.mxu0
        %v1343 = vadd.f32 %v958, %v1342
        %v1344 = vpop.f32.mrf.mxu0
        %1345 = vmatprep.mubr.f32.mxu0 %v544
        %1346 = vmatmul.mubr.f32.gmra.mxu0 %v543
        %v1347 = vpop.f32.mrf.mxu0
        %v1348 = vadd.f32 %v963, %v1347
        %v1349 = vpop.f32.mrf.mxu0
        %1350 = vmatprep.mubr.f32.mxu0 %v548
        %1351 = vmatmul.mubr.f32.gmra.mxu0 %v547
        %v1352 = vpop.f32.mrf.mxu0
        %v1353 = vadd.f32 %v968, %v1352
        %v1354 = vpop.f32.mrf.mxu0
        %1355 = vmatprep.mubr.f32.mxu0 %v552
        %1356 = vmatmul.mubr.f32.gmra.mxu0 %v551
        %v1357 = vpop.f32.mrf.mxu0
        %v1358 = vadd.f32 %v973, %v1357
        %v1359 = vpop.f32.mrf.mxu0
        %1360 = vmatprep.mubr.f32.mxu0 %v556
        %1361 = vmatmul.mubr.f32.gmra.mxu0 %v555
        %v1362 = vpop.f32.mrf.mxu0
        %v1363 = vadd.f32 %v978, %v1362
        %v1364 = vpop.f32.mrf.mxu0
        %1365 = vmatprep.mubr.f32.mxu0 %v560
        %1366 = vmatmul.mubr.f32.gmra.mxu0 %v559
        %v1367 = vpop.f32.mrf.mxu0
        %v1368 = vadd.f32 %v983, %v1367
        %v1369 = vpop.f32.mrf.mxu0
        %1370 = vmatprep.mubr.f32.mxu0 %v564
        %1371 = vmatmul.mubr.f32.gmra.mxu0 %v563
        %v1372 = vpop.f32.mrf.mxu0
        %v1373 = vadd.f32 %v988, %v1372
        %v1374 = vpop.f32.mrf.mxu0
        %1375 = vmatprep.mubr.f32.mxu0 %v568
        %1376 = vmatmul.mubr.f32.gmra.mxu0 %v567
        %v1377 = vpop.f32.mrf.mxu0
        %v1378 = vadd.f32 %v993, %v1377
        %v1379 = vpop.f32.mrf.mxu0
        %1380 = vmatprep.mubr.f32.mxu0 %v572
        %1381 = vmatmul.mubr.f32.gmra.mxu0 %v571
        %v1382 = vpop.f32.mrf.mxu0
        %v1383 = vadd.f32 %v998, %v1382
        %v1384 = vpop.f32.mrf.mxu0
        %1385 = vmatprep.mubr.f32.mxu0 %v576
        %1386 = vmatmul.mubr.f32.gmra.mxu0 %v575
        %v1387 = vpop.f32.mrf.mxu0
        %v1388 = vadd.f32 %v1003, %v1387
        %v1389 = vpop.f32.mrf.mxu0
        %1390 = vmatprep.mubr.f32.mxu0 %v580
        %1391 = vmatmul.mubr.f32.gmra.mxu0 %v579
        %v1392 = vpop.f32.mrf.mxu0
        %v1393 = vadd.f32 %v1008, %v1392
        %v1394 = vpop.f32.mrf.mxu0
        %1395 = vmatprep.mubr.f32.mxu0 %v584
        %1396 = vmatmul.mubr.f32.gmra.mxu0 %v583
        %v1397 = vpop.f32.mrf.mxu0
        %v1398 = vadd.f32 %v1013, %v1397
        %v1399 = vpop.f32.mrf.mxu0
        %1400 = vmatprep.mubr.f32.mxu0 %v588
        %1401 = vmatmul.mubr.f32.gmra.mxu0 %v587
        %v1402 = vpop.f32.mrf.mxu0
        %v1403 = vadd.f32 %v1018, %v1402
        %v1404 = vpop.f32.mrf.mxu0
        %1405 = vmatprep.mubr.f32.mxu0 %v592
        %1406 = vmatmul.mubr.f32.gmra.mxu0 %v591
        %v1407 = vpop.f32.mrf.mxu0
        %v1408 = vadd.f32 %v1023, %v1407
        %v1409 = vpop.f32.mrf.mxu0
        %1410 = vmatprep.mubr.f32.mxu0 %v596
        %1411 = vmatmul.mubr.f32.gmra.mxu0 %v595
        %v1412 = vpop.f32.mrf.mxu0
        %v1413 = vadd.f32 %v1028, %v1412
        %v1414 = vpop.f32.mrf.mxu0
        %1415 = vmatprep.mubr.f32.mxu0 %v600
        %1416 = vmatmul.mubr.f32.gmra.mxu0 %v599
        %v1417 = vpop.f32.mrf.mxu0
        %v1418 = vadd.f32 %v1033, %v1417
        %v1419 = vpop.f32.mrf.mxu0
        %1420 = vmatprep.mubr.f32.mxu0 %v604
        %1421 = vmatmul.mubr.f32.gmra.mxu0 %v603
        %v1422 = vpop.f32.mrf.mxu0
        %v1423 = vadd.f32 %v1038, %v1422
        %v1424 = vpop.f32.mrf.mxu0
        %1425 = vmatprep.mubr.f32.mxu0 %v608
        %1426 = vmatmul.mubr.f32.gmra.mxu0 %v607
        %v1427 = vpop.f32.mrf.mxu0
        %v1428 = vadd.f32 %v1043, %v1427
        %v1429 = vpop.f32.mrf.mxu0
        %1430 = vmatprep.mubr.f32.mxu0 %v612
        %1431 = vmatmul.mubr.f32.gmra.mxu0 %v611
        %v1432 = vpop.f32.mrf.mxu0
        %v1433 = vadd.f32 %v1048, %v1432
        %v1434 = vpop.f32.mrf.mxu0
        %1435 = vmatprep.mubr.f32.mxu0 %v616
        %1436 = vmatmul.mubr.f32.gmra.mxu0 %v615
        %v1437 = vpop.f32.mrf.mxu0
        %v1438 = vadd.f32 %v1053, %v1437
        %v1439 = vpop.f32.mrf.mxu0
        %1440 = vmatprep.mubr.f32.mxu0 %v620
        %1441 = vmatmul.mubr.f32.gmra.mxu0 %v619
        %v1442 = vpop.f32.mrf.mxu0
        %v1443 = vadd.f32 %v1058, %v1442
        %v1444 = vpop.f32.mrf.mxu0
        %1445 = vmatprep.mubr.f32.mxu0 %v624
        %1446 = vmatmul.mubr.f32.gmra.mxu0 %v623
        %v1447 = vpop.f32.mrf.mxu0
        %v1448 = vadd.f32 %v1063, %v1447
        %v1449 = vpop.f32.mrf.mxu0
        %1450 = vmatprep.mubr.f32.mxu0 %v628
        %1451 = vmatmul.mubr.f32.gmra.mxu0 %v627
        %v1452 = vpop.f32.mrf.mxu0
        %v1453 = vadd.f32 %v1068, %v1452
        %v1454 = vpop.f32.mrf.mxu0
        %1455 = vmatprep.mubr.f32.mxu0 %v632
        %1456 = vmatmul.mubr.f32.gmra.mxu0 %v631
        %v1457 = vpop.f32.mrf.mxu0
        %v1458 = vadd.f32 %v1073, %v1457
        %v1459 = vpop.f32.mrf.mxu0
        %1460 = vmatprep.mubr.f32.mxu0 %v636
        %1461 = vmatmul.mubr.f32.gmra.mxu0 %v635
        %v1462 = vpop.f32.mrf.mxu0
        %v1463 = vadd.f32 %v1078, %v1462
        %v1464 = vpop.f32.mrf.mxu0
        %1465 = vmatprep.mubr.f32.mxu0 %v640
        %1466 = vmatmul.mubr.f32.gmra.mxu0 %v639
        %v1467 = vpop.f32.mrf.mxu0
        %v1468 = vadd.f32 %v1083, %v1467
        %v1469 = vpop.f32.mrf.mxu0
        %1470 = vmatprep.mubr.f32.mxu0 %v644
        %1471 = vmatmul.mubr.f32.gmra.mxu0 %v643
        %v1472 = vpop.f32.mrf.mxu0
        %v1473 = vadd.f32 %v1088, %v1472
        %v1474 = vpop.f32.mrf.mxu0
        %1475 = vmatprep.mubr.f32.mxu0 %v648
        %1476 = vmatmul.mubr.f32.gmra.mxu0 %v647
        %v1477 = vpop.f32.mrf.mxu0
        %v1478 = vadd.f32 %v1093, %v1477
        %v1479 = vpop.f32.mrf.mxu0
        %1480 = vmatprep.mubr.f32.mxu0 %v652
        %1481 = vmatmul.mubr.f32.gmra.mxu0 %v651
        %v1482 = vpop.f32.mrf.mxu0
        %v1483 = vadd.f32 %v1098, %v1482
        %v1484 = vpop.f32.mrf.mxu0
        %1485 = vmatprep.mubr.f32.mxu0 %v656
        %1486 = vmatmul.mubr.f32.gmra.mxu0 %v655
        %v1487 = vpop.f32.mrf.mxu0
        %v1488 = vadd.f32 %v1103, %v1487
        %v1489 = vpop.f32.mrf.mxu0
        %1490 = vmatprep.mubr.f32.mxu0 %v660
        %1491 = vmatmul.mubr.f32.gmra.mxu0 %v659
        %v1492 = vpop.f32.mrf.mxu0
        %v1493 = vadd.f32 %v1108, %v1492
        %v1494 = vpop.f32.mrf.mxu0
        %1495 = vdwg.mxu0
        %v1496 = vadd.f32 %v341, %v1178
        %v1497 = vadd.f32 %v342, %v1183
        %v1498 = vadd.f32 %v343, %v1188
        %v1499 = vadd.f32 %v344, %v1193
        %v1500 = vadd.f32 %v345, %v1198
        %v1501 = vadd.f32 %v346, %v1203
        %v1502 = vadd.f32 %v347, %v1208
        %v1503 = vadd.f32 %v348, %v1213
        %v1504 = vadd.f32 %v349, %v1218
        %v1505 = vadd.f32 %v350, %v1223
        %v1506 = vadd.f32 %v351, %v1228
        %v1507 = vadd.f32 %v352, %v1233
        %v1508 = vadd.f32 %v353, %v1238
        %v1509 = vadd.f32 %v354, %v1243
        %v1510 = vadd.f32 %v355, %v1248
        %v1511 = vadd.f32 %v356, %v1253
        %v1512 = vadd.f32 %v357, %v1258
        %v1513 = vadd.f32 %v358, %v1263
        %v1514 = vadd.f32 %v359, %v1268
        %v1515 = vadd.f32 %v360, %v1273
        %v1516 = vadd.f32 %v361, %v1278
        %v1517 = vadd.f32 %v362, %v1283
        %v1518 = vadd.f32 %v363, %v1288
        %v1519 = vadd.f32 %v364, %v1293
        %v1520 = vadd.f32 %v365, %v1298
        %v1521 = vadd.f32 %v366, %v1303
        %v1522 = vadd.f32 %v367, %v1308
        %v1523 = vadd.f32 %v368, %v1313
        %v1524 = vadd.f32 %v369, %v1318
        %v1525 = vadd.f32 %v370, %v1323
        %v1526 = vadd.f32 %v371, %v1328
        %v1527 = vadd.f32 %v372, %v1333
        %v1528 = vadd.f32 %v373, %v1338
        %v1529 = vadd.f32 %v374, %v1343
        %v1530 = vadd.f32 %v375, %v1348
        %v1531 = vadd.f32 %v376, %v1353
        %v1532 = vadd.f32 %v377, %v1358
        %v1533 = vadd.f32 %v378, %v1363
        %v1534 = vadd.f32 %v379, %v1368
        %v1535 = vadd.f32 %v380, %v1373
        %v1536 = vadd.f32 %v381, %v1378
        %v1537 = vadd.f32 %v382, %v1383
        %v1538 = vadd.f32 %v383, %v1388
        %v1539 = vadd.f32 %v384, %v1393
        %v1540 = vadd.f32 %v385, %v1398
        %v1541 = vadd.f32 %v386, %v1403
        %v1542 = vadd.f32 %v387, %v1408
        %v1543 = vadd.f32 %v388, %v1413
        %v1544 = vadd.f32 %v389, %v1418
        %v1545 = vadd.f32 %v390, %v1423
        %v1546 = vadd.f32 %v391, %v1428
        %v1547 = vadd.f32 %v392, %v1433
        %v1548 = vadd.f32 %v393, %v1438
        %v1549 = vadd.f32 %v394, %v1443
        %v1550 = vadd.f32 %v395, %v1448
        %v1551 = vadd.f32 %v396, %v1453
        %v1552 = vadd.f32 %v397, %v1458
        %v1553 = vadd.f32 %v398, %v1463
        %v1554 = vadd.f32 %v399, %v1468
        %v1555 = vadd.f32 %v400, %v1473
        %v1556 = vadd.f32 %v401, %v1478
        %v1557 = vadd.f32 %v402, %v1483
        %v1558 = vadd.f32 %v403, %v1488
        %v1559 = vadd.f32 %v404, %v1493
        %1560 = vst [vmem:[#allocation4] sm:$0xff] %v1496
        %1561 = vst [vmem:[#allocation4 + $0x8] sm:$0xff] %v1497
        %1562 = vst [vmem:[#allocation4 + $0x10] sm:$0xff] %v1498
        %1563 = vst [vmem:[#allocation4 + $0x18] sm:$0xff] %v1499
        %1564 = vst [vmem:[#allocation4 + $0x20] sm:$0xff] %v1500
        %1565 = vst [vmem:[#allocation4 + $0x28] sm:$0xff] %v1501
        %1566 = vst [vmem:[#allocation4 + $0x30] sm:$0xff] %v1502
        %1567 = vst [vmem:[#allocation4 + $0x38] sm:$0xff] %v1503
        %1568 = vst [vmem:[#allocation4 + $0x40] sm:$0xff] %v1504
        %1569 = vst [vmem:[#allocation4 + $0x48] sm:$0xff] %v1505
        %1570 = vst [vmem:[#allocation4 + $0x50] sm:$0xff] %v1506
        %1571 = vst [vmem:[#allocation4 + $0x58] sm:$0xff] %v1507
        %1572 = vst [vmem:[#allocation4 + $0x60] sm:$0xff] %v1508
        %1573 = vst [vmem:[#allocation4 + $0x68] sm:$0xff] %v1509
        %1574 = vst [vmem:[#allocation4 + $0x70] sm:$0xff] %v1510
        %1575 = vst [vmem:[#allocation4 + $0x78] sm:$0xff] %v1511
        %1576 = vst [vmem:[#allocation4 + $0x80] sm:$0xff] %v1512
        %1577 = vst [vmem:[#allocation4 + $0x88] sm:$0xff] %v1513
        %1578 = vst [vmem:[#allocation4 + $0x90] sm:$0xff] %v1514
        %1579 = vst [vmem:[#allocation4 + $0x98] sm:$0xff] %v1515
        %1580 = vst [vmem:[#allocation4 + $0xa0] sm:$0xff] %v1516
        %1581 = vst [vmem:[#allocation4 + $0xa8] sm:$0xff] %v1517
        %1582 = vst [vmem:[#allocation4 + $0xb0] sm:$0xff] %v1518
        %1583 = vst [vmem:[#allocation4 + $0xb8] sm:$0xff] %v1519
        %1584 = vst [vmem:[#allocation4 + $0xc0] sm:$0xff] %v1520
        %1585 = vst [vmem:[#allocation4 + $0xc8] sm:$0xff] %v1521
        %1586 = vst [vmem:[#allocation4 + $0xd0] sm:$0xff] %v1522
        %1587 = vst [vmem:[#allocation4 + $0xd8] sm:$0xff] %v1523
        %1588 = vst [vmem:[#allocation4 + $0xe0] sm:$0xff] %v1524
        %1589 = vst [vmem:[#allocation4 + $0xe8] sm:$0xff] %v1525
        %1590 = vst [vmem:[#allocation4 + $0xf0] sm:$0xff] %v1526
        %1591 = vst [vmem:[#allocation4 + $0xf8] sm:$0xff] %v1527
        %1592 = vst [vmem:[#allocation4 + $0x100] sm:$0xff] %v1528
        %1593 = vst [vmem:[#allocation4 + $0x108] sm:$0xff] %v1529
        %1594 = vst [vmem:[#allocation4 + $0x110] sm:$0xff] %v1530
        %1595 = vst [vmem:[#allocation4 + $0x118] sm:$0xff] %v1531
        %1596 = vst [vmem:[#allocation4 + $0x120] sm:$0xff] %v1532
        %1597 = vst [vmem:[#allocation4 + $0x128] sm:$0xff] %v1533
        %1598 = vst [vmem:[#allocation4 + $0x130] sm:$0xff] %v1534
        %1599 = vst [vmem:[#allocation4 + $0x138] sm:$0xff] %v1535
        %1600 = vst [vmem:[#allocation4 + $0x140] sm:$0xff] %v1536
        %1601 = vst [vmem:[#allocation4 + $0x148] sm:$0xff] %v1537
        %1602 = vst [vmem:[#allocation4 + $0x150] sm:$0xff] %v1538
        %1603 = vst [vmem:[#allocation4 + $0x158] sm:$0xff] %v1539
        %1604 = vst [vmem:[#allocation4 + $0x160] sm:$0xff] %v1540
        %1605 = vst [vmem:[#allocation4 + $0x168] sm:$0xff] %v1541
        %1606 = vst [vmem:[#allocation4 + $0x170] sm:$0xff] %v1542
        %1607 = vst [vmem:[#allocation4 + $0x178] sm:$0xff] %v1543
        %1608 = vst [vmem:[#allocation4 + $0x180] sm:$0xff] %v1544
        %1609 = vst [vmem:[#allocation4 + $0x188] sm:$0xff] %v1545
        %1610 = vst [vmem:[#allocation4 + $0x190] sm:$0xff] %v1546
        %1611 = vst [vmem:[#allocation4 + $0x198] sm:$0xff] %v1547
        %1612 = vst [vmem:[#allocation4 + $0x1a0] sm:$0xff] %v1548
        %1613 = vst [vmem:[#allocation4 + $0x1a8] sm:$0xff] %v1549
        %1614 = vst [vmem:[#allocation4 + $0x1b0] sm:$0xff] %v1550
        %1615 = vst [vmem:[#allocation4 + $0x1b8] sm:$0xff] %v1551
        %1616 = vst [vmem:[#allocation4 + $0x1c0] sm:$0xff] %v1552
        %1617 = vst [vmem:[#allocation4 + $0x1c8] sm:$0xff] %v1553
        %1618 = vst [vmem:[#allocation4 + $0x1d0] sm:$0xff] %v1554
        %1619 = vst [vmem:[#allocation4 + $0x1d8] sm:$0xff] %v1555
        %1620 = vst [vmem:[#allocation4 + $0x1e0] sm:$0xff] %v1556
        %1621 = vst [vmem:[#allocation4 + $0x1e8] sm:$0xff] %v1557
        %1622 = vst [vmem:[#allocation4 + $0x1f0] sm:$0xff] %v1558
        %1623 = vst [vmem:[#allocation4 + $0x1f8] sm:$0xff] %v1559
      $region48: #{net_forward.3} parent=39 // pred_fallthru
        _
      %p1624 = scmp.gt.s32.totalorder %s23, 0
      // Predicated region
      $region49: #{net_forward.3} parent=39 // pred_check
        %p1625 = pneg %p1624
      $region50: #{net_forward.3} parent=39 // pred_check_branch
        %1627 = sbr.rel (%p1625) target = $region52
      $region51: #{net_forward.3} parent=39 // pred_region
        %s1628 = sadd.s32 %s23, 1
        %p1629 = scmp.lt.s32.totalorder %s1628, 0
        %s1630 = ssub.s32 0, %s1628
        %s1631 = scalar_select %p1629, %s1630, %s1628
        %s1632 = sand.u32 %s1631, 1
        %s1633 = ssub.s32 0, %s1632
        %s1634 = scalar_select %p1629, %s1633, %s1632
        %p1635 = scmp.ne.s32.totalorder %s1634, 0
        %p1636 = scmp.lt.s32.totalorder %s1634, 0
        %p1637 = pnand %p1636, %p1635
        %p1638 = pneg %p1637
        %s1639 = sadd.s32 %s1634, 2
        %s1640 = scalar_select %p1638, %s1639, %s1634
        %v1641 = vld [vmem:[#allocation4] sm:$0xff]
        %v1642 = vld [vmem:[#allocation4 + $0x8] sm:$0xff]
        %v1643 = vld [vmem:[#allocation4 + $0x10] sm:$0xff]
        %v1644 = vld [vmem:[#allocation4 + $0x18] sm:$0xff]
        %v1645 = vld [vmem:[#allocation4 + $0x20] sm:$0xff]
        %v1646 = vld [vmem:[#allocation4 + $0x28] sm:$0xff]
        %v1647 = vld [vmem:[#allocation4 + $0x30] sm:$0xff]
        %v1648 = vld [vmem:[#allocation4 + $0x38] sm:$0xff]
        %v1649 = vld [vmem:[#allocation4 + $0x40] sm:$0xff]
        %v1650 = vld [vmem:[#allocation4 + $0x48] sm:$0xff]
        %v1651 = vld [vmem:[#allocation4 + $0x50] sm:$0xff]
        %v1652 = vld [vmem:[#allocation4 + $0x58] sm:$0xff]
        %v1653 = vld [vmem:[#allocation4 + $0x60] sm:$0xff]
        %v1654 = vld [vmem:[#allocation4 + $0x68] sm:$0xff]
        %v1655 = vld [vmem:[#allocation4 + $0x70] sm:$0xff]
        %v1656 = vld [vmem:[#allocation4 + $0x78] sm:$0xff]
        %v1657 = vld [vmem:[#allocation4 + $0x80] sm:$0xff]
        %v1658 = vld [vmem:[#allocation4 + $0x88] sm:$0xff]
        %v1659 = vld [vmem:[#allocation4 + $0x90] sm:$0xff]
        %v1660 = vld [vmem:[#allocation4 + $0x98] sm:$0xff]
        %v1661 = vld [vmem:[#allocation4 + $0xa0] sm:$0xff]
        %v1662 = vld [vmem:[#allocation4 + $0xa8] sm:$0xff]
        %v1663 = vld [vmem:[#allocation4 + $0xb0] sm:$0xff]
        %v1664 = vld [vmem:[#allocation4 + $0xb8] sm:$0xff]
        %v1665 = vld [vmem:[#allocation4 + $0xc0] sm:$0xff]
        %v1666 = vld [vmem:[#allocation4 + $0xc8] sm:$0xff]
        %v1667 = vld [vmem:[#allocation4 + $0xd0] sm:$0xff]
        %v1668 = vld [vmem:[#allocation4 + $0xd8] sm:$0xff]
        %v1669 = vld [vmem:[#allocation4 + $0xe0] sm:$0xff]
        %v1670 = vld [vmem:[#allocation4 + $0xe8] sm:$0xff]
        %v1671 = vld [vmem:[#allocation4 + $0xf0] sm:$0xff]
        %v1672 = vld [vmem:[#allocation4 + $0xf8] sm:$0xff]
        %v1673 = vld [vmem:[#allocation4 + $0x100] sm:$0xff]
        %v1674 = vld [vmem:[#allocation4 + $0x108] sm:$0xff]
        %v1675 = vld [vmem:[#allocation4 + $0x110] sm:$0xff]
        %v1676 = vld [vmem:[#allocation4 + $0x118] sm:$0xff]
        %v1677 = vld [vmem:[#allocation4 + $0x120] sm:$0xff]
        %v1678 = vld [vmem:[#allocation4 + $0x128] sm:$0xff]
        %v1679 = vld [vmem:[#allocation4 + $0x130] sm:$0xff]
        %v1680 = vld [vmem:[#allocation4 + $0x138] sm:$0xff]
        %v1681 = vld [vmem:[#allocation4 + $0x140] sm:$0xff]
        %v1682 = vld [vmem:[#allocation4 + $0x148] sm:$0xff]
        %v1683 = vld [vmem:[#allocation4 + $0x150] sm:$0xff]
        %v1684 = vld [vmem:[#allocation4 + $0x158] sm:$0xff]
        %v1685 = vld [vmem:[#allocation4 + $0x160] sm:$0xff]
        %v1686 = vld [vmem:[#allocation4 + $0x168] sm:$0xff]
        %v1687 = vld [vmem:[#allocation4 + $0x170] sm:$0xff]
        %v1688 = vld [vmem:[#allocation4 + $0x178] sm:$0xff]
        %v1689 = vld [vmem:[#allocation4 + $0x180] sm:$0xff]
        %v1690 = vld [vmem:[#allocation4 + $0x188] sm:$0xff]
        %v1691 = vld [vmem:[#allocation4 + $0x190] sm:$0xff]
        %v1692 = vld [vmem:[#allocation4 + $0x198] sm:$0xff]
        %v1693 = vld [vmem:[#allocation4 + $0x1a0] sm:$0xff]
        %v1694 = vld [vmem:[#allocation4 + $0x1a8] sm:$0xff]
        %v1695 = vld [vmem:[#allocation4 + $0x1b0] sm:$0xff]
        %v1696 = vld [vmem:[#allocation4 + $0x1b8] sm:$0xff]
        %v1697 = vld [vmem:[#allocation4 + $0x1c0] sm:$0xff]
        %v1698 = vld [vmem:[#allocation4 + $0x1c8] sm:$0xff]
        %v1699 = vld [vmem:[#allocation4 + $0x1d0] sm:$0xff]
        %v1700 = vld [vmem:[#allocation4 + $0x1d8] sm:$0xff]
        %v1701 = vld [vmem:[#allocation4 + $0x1e0] sm:$0xff]
        %v1702 = vld [vmem:[#allocation4 + $0x1e8] sm:$0xff]
        %v1703 = vld [vmem:[#allocation4 + $0x1f0] sm:$0xff]
        %v1704 = vld [vmem:[#allocation4 + $0x1f8] sm:$0xff]
        %v1705 = vld [vmem:[%s259] sm:$0xff]
        %v1706 = vld [vmem:[%s259 + $0x8] sm:$0xff]
        %v1707 = vld [vmem:[%s259 + $0x10] sm:$0xff]
        %v1708 = vld [vmem:[%s259 + $0x18] sm:$0xff]
        %v1709 = vld [vmem:[%s259 + $0x20] sm:$0xff]
        %v1710 = vld [vmem:[%s259 + $0x28] sm:$0xff]
        %v1711 = vld [vmem:[%s259 + $0x30] sm:$0xff]
        %v1712 = vld [vmem:[%s259 + $0x38] sm:$0xff]
        %v1713 = vld [vmem:[%s259 + $0x40] sm:$0xff]
        %v1714 = vld [vmem:[%s259 + $0x48] sm:$0xff]
        %v1715 = vld [vmem:[%s259 + $0x50] sm:$0xff]
        %v1716 = vld [vmem:[%s259 + $0x58] sm:$0xff]
        %v1717 = vld [vmem:[%s259 + $0x60] sm:$0xff]
        %v1718 = vld [vmem:[%s259 + $0x68] sm:$0xff]
        %v1719 = vld [vmem:[%s259 + $0x70] sm:$0xff]
        %v1720 = vld [vmem:[%s259 + $0x78] sm:$0xff]
        %v1721 = vld [vmem:[%s259 + $0x80] sm:$0xff]
        %v1722 = vld [vmem:[%s259 + $0x88] sm:$0xff]
        %v1723 = vld [vmem:[%s259 + $0x90] sm:$0xff]
        %v1724 = vld [vmem:[%s259 + $0x98] sm:$0xff]
        %v1725 = vld [vmem:[%s259 + $0xa0] sm:$0xff]
        %v1726 = vld [vmem:[%s259 + $0xa8] sm:$0xff]
        %v1727 = vld [vmem:[%s259 + $0xb0] sm:$0xff]
        %v1728 = vld [vmem:[%s259 + $0xb8] sm:$0xff]
        %v1729 = vld [vmem:[%s259 + $0xc0] sm:$0xff]
        %v1730 = vld [vmem:[%s259 + $0xc8] sm:$0xff]
        %v1731 = vld [vmem:[%s259 + $0xd0] sm:$0xff]
        %v1732 = vld [vmem:[%s259 + $0xd8] sm:$0xff]
        %v1733 = vld [vmem:[%s259 + $0xe0] sm:$0xff]
        %v1734 = vld [vmem:[%s259 + $0xe8] sm:$0xff]
        %v1735 = vld [vmem:[%s259 + $0xf0] sm:$0xff]
        %v1736 = vld [vmem:[%s259 + $0xf8] sm:$0xff]
        %v1737 = vld [vmem:[%s259 + $0x100] sm:$0xff]
        %v1738 = vld [vmem:[%s259 + $0x108] sm:$0xff]
        %v1739 = vld [vmem:[%s259 + $0x110] sm:$0xff]
        %v1740 = vld [vmem:[%s259 + $0x118] sm:$0xff]
        %v1741 = vld [vmem:[%s259 + $0x120] sm:$0xff]
        %v1742 = vld [vmem:[%s259 + $0x128] sm:$0xff]
        %v1743 = vld [vmem:[%s259 + $0x130] sm:$0xff]
        %v1744 = vld [vmem:[%s259 + $0x138] sm:$0xff]
        %v1745 = vld [vmem:[%s259 + $0x140] sm:$0xff]
        %v1746 = vld [vmem:[%s259 + $0x148] sm:$0xff]
        %v1747 = vld [vmem:[%s259 + $0x150] sm:$0xff]
        %v1748 = vld [vmem:[%s259 + $0x158] sm:$0xff]
        %v1749 = vld [vmem:[%s259 + $0x160] sm:$0xff]
        %v1750 = vld [vmem:[%s259 + $0x168] sm:$0xff]
        %v1751 = vld [vmem:[%s259 + $0x170] sm:$0xff]
        %v1752 = vld [vmem:[%s259 + $0x178] sm:$0xff]
        %v1753 = vld [vmem:[%s259 + $0x180] sm:$0xff]
        %v1754 = vld [vmem:[%s259 + $0x188] sm:$0xff]
        %v1755 = vld [vmem:[%s259 + $0x190] sm:$0xff]
        %v1756 = vld [vmem:[%s259 + $0x198] sm:$0xff]
        %v1757 = vld [vmem:[%s259 + $0x1a0] sm:$0xff]
        %v1758 = vld [vmem:[%s259 + $0x1a8] sm:$0xff]
        %v1759 = vld [vmem:[%s259 + $0x1b0] sm:$0xff]
        %v1760 = vld [vmem:[%s259 + $0x1b8] sm:$0xff]
        %v1761 = vld [vmem:[%s259 + $0x1c0] sm:$0xff]
        %v1762 = vld [vmem:[%s259 + $0x1c8] sm:$0xff]
        %v1763 = vld [vmem:[%s259 + $0x1d0] sm:$0xff]
        %v1764 = vld [vmem:[%s259 + $0x1d8] sm:$0xff]
        %v1765 = vld [vmem:[%s259 + $0x1e0] sm:$0xff]
        %v1766 = vld [vmem:[%s259 + $0x1e8] sm:$0xff]
        %v1767 = vld [vmem:[%s259 + $0x1f0] sm:$0xff]
        %v1768 = vld [vmem:[%s259 + $0x1f8] sm:$0xff]
        %v1769 = vld [vmem:[%s259 + $0x200] sm:$0xff]
        %v1770 = vld [vmem:[%s259 + $0x208] sm:$0xff]
        %v1771 = vld [vmem:[%s259 + $0x210] sm:$0xff]
        %v1772 = vld [vmem:[%s259 + $0x218] sm:$0xff]
        %v1773 = vld [vmem:[%s259 + $0x220] sm:$0xff]
        %v1774 = vld [vmem:[%s259 + $0x228] sm:$0xff]
        %v1775 = vld [vmem:[%s259 + $0x230] sm:$0xff]
        %v1776 = vld [vmem:[%s259 + $0x238] sm:$0xff]
        %v1777 = vld [vmem:[%s259 + $0x240] sm:$0xff]
        %v1778 = vld [vmem:[%s259 + $0x248] sm:$0xff]
        %v1779 = vld [vmem:[%s259 + $0x250] sm:$0xff]
        %v1780 = vld [vmem:[%s259 + $0x258] sm:$0xff]
        %v1781 = vld [vmem:[%s259 + $0x260] sm:$0xff]
        %v1782 = vld [vmem:[%s259 + $0x268] sm:$0xff]
        %v1783 = vld [vmem:[%s259 + $0x270] sm:$0xff]
        %v1784 = vld [vmem:[%s259 + $0x278] sm:$0xff]
        %v1785 = vld [vmem:[%s259 + $0x280] sm:$0xff]
        %v1786 = vld [vmem:[%s259 + $0x288] sm:$0xff]
        %v1787 = vld [vmem:[%s259 + $0x290] sm:$0xff]
        %v1788 = vld [vmem:[%s259 + $0x298] sm:$0xff]
        %v1789 = vld [vmem:[%s259 + $0x2a0] sm:$0xff]
        %v1790 = vld [vmem:[%s259 + $0x2a8] sm:$0xff]
        %v1791 = vld [vmem:[%s259 + $0x2b0] sm:$0xff]
        %v1792 = vld [vmem:[%s259 + $0x2b8] sm:$0xff]
        %v1793 = vld [vmem:[%s259 + $0x2c0] sm:$0xff]
        %v1794 = vld [vmem:[%s259 + $0x2c8] sm:$0xff]
        %v1795 = vld [vmem:[%s259 + $0x2d0] sm:$0xff]
        %v1796 = vld [vmem:[%s259 + $0x2d8] sm:$0xff]
        %v1797 = vld [vmem:[%s259 + $0x2e0] sm:$0xff]
        %v1798 = vld [vmem:[%s259 + $0x2e8] sm:$0xff]
        %v1799 = vld [vmem:[%s259 + $0x2f0] sm:$0xff]
        %v1800 = vld [vmem:[%s259 + $0x2f8] sm:$0xff]
        %v1801 = vld [vmem:[%s259 + $0x300] sm:$0xff]
        %v1802 = vld [vmem:[%s259 + $0x308] sm:$0xff]
        %v1803 = vld [vmem:[%s259 + $0x310] sm:$0xff]
        %v1804 = vld [vmem:[%s259 + $0x318] sm:$0xff]
        %v1805 = vld [vmem:[%s259 + $0x320] sm:$0xff]
        %v1806 = vld [vmem:[%s259 + $0x328] sm:$0xff]
        %v1807 = vld [vmem:[%s259 + $0x330] sm:$0xff]
        %v1808 = vld [vmem:[%s259 + $0x338] sm:$0xff]
        %v1809 = vld [vmem:[%s259 + $0x340] sm:$0xff]
        %v1810 = vld [vmem:[%s259 + $0x348] sm:$0xff]
        %v1811 = vld [vmem:[%s259 + $0x350] sm:$0xff]
        %v1812 = vld [vmem:[%s259 + $0x358] sm:$0xff]
        %v1813 = vld [vmem:[%s259 + $0x360] sm:$0xff]
        %v1814 = vld [vmem:[%s259 + $0x368] sm:$0xff]
        %v1815 = vld [vmem:[%s259 + $0x370] sm:$0xff]
        %v1816 = vld [vmem:[%s259 + $0x378] sm:$0xff]
        %v1817 = vld [vmem:[%s259 + $0x380] sm:$0xff]
        %v1818 = vld [vmem:[%s259 + $0x388] sm:$0xff]
        %v1819 = vld [vmem:[%s259 + $0x390] sm:$0xff]
        %v1820 = vld [vmem:[%s259 + $0x398] sm:$0xff]
        %v1821 = vld [vmem:[%s259 + $0x3a0] sm:$0xff]
        %v1822 = vld [vmem:[%s259 + $0x3a8] sm:$0xff]
        %v1823 = vld [vmem:[%s259 + $0x3b0] sm:$0xff]
        %v1824 = vld [vmem:[%s259 + $0x3b8] sm:$0xff]
        %v1825 = vld [vmem:[%s259 + $0x3c0] sm:$0xff]
        %v1826 = vld [vmem:[%s259 + $0x3c8] sm:$0xff]
        %v1827 = vld [vmem:[%s259 + $0x3d0] sm:$0xff]
        %v1828 = vld [vmem:[%s259 + $0x3d8] sm:$0xff]
        %v1829 = vld [vmem:[%s259 + $0x3e0] sm:$0xff]
        %v1830 = vld [vmem:[%s259 + $0x3e8] sm:$0xff]
        %v1831 = vld [vmem:[%s259 + $0x3f0] sm:$0xff]
        %v1832 = vld [vmem:[%s259 + $0x3f8] sm:$0xff]
        %v1833 = vld [vmem:[%s259 + $0x400] sm:$0xff]
        %v1834 = vld [vmem:[%s259 + $0x408] sm:$0xff]
        %v1835 = vld [vmem:[%s259 + $0x410] sm:$0xff]
        %v1836 = vld [vmem:[%s259 + $0x418] sm:$0xff]
        %v1837 = vld [vmem:[%s259 + $0x420] sm:$0xff]
        %v1838 = vld [vmem:[%s259 + $0x428] sm:$0xff]
        %v1839 = vld [vmem:[%s259 + $0x430] sm:$0xff]
        %v1840 = vld [vmem:[%s259 + $0x438] sm:$0xff]
        %v1841 = vld [vmem:[%s259 + $0x440] sm:$0xff]
        %v1842 = vld [vmem:[%s259 + $0x448] sm:$0xff]
        %v1843 = vld [vmem:[%s259 + $0x450] sm:$0xff]
        %v1844 = vld [vmem:[%s259 + $0x458] sm:$0xff]
        %v1845 = vld [vmem:[%s259 + $0x460] sm:$0xff]
        %v1846 = vld [vmem:[%s259 + $0x468] sm:$0xff]
        %v1847 = vld [vmem:[%s259 + $0x470] sm:$0xff]
        %v1848 = vld [vmem:[%s259 + $0x478] sm:$0xff]
        %v1849 = vld [vmem:[%s259 + $0x480] sm:$0xff]
        %v1850 = vld [vmem:[%s259 + $0x488] sm:$0xff]
        %v1851 = vld [vmem:[%s259 + $0x490] sm:$0xff]
        %v1852 = vld [vmem:[%s259 + $0x498] sm:$0xff]
        %v1853 = vld [vmem:[%s259 + $0x4a0] sm:$0xff]
        %v1854 = vld [vmem:[%s259 + $0x4a8] sm:$0xff]
        %v1855 = vld [vmem:[%s259 + $0x4b0] sm:$0xff]
        %v1856 = vld [vmem:[%s259 + $0x4b8] sm:$0xff]
        %v1857 = vld [vmem:[%s259 + $0x4c0] sm:$0xff]
        %v1858 = vld [vmem:[%s259 + $0x4c8] sm:$0xff]
        %v1859 = vld [vmem:[%s259 + $0x4d0] sm:$0xff]
        %v1860 = vld [vmem:[%s259 + $0x4d8] sm:$0xff]
        %v1861 = vld [vmem:[%s259 + $0x4e0] sm:$0xff]
        %v1862 = vld [vmem:[%s259 + $0x4e8] sm:$0xff]
        %v1863 = vld [vmem:[%s259 + $0x4f0] sm:$0xff]
        %v1864 = vld [vmem:[%s259 + $0x4f8] sm:$0xff]
        %v1865 = vld [vmem:[%s259 + $0x500] sm:$0xff]
        %v1866 = vld [vmem:[%s259 + $0x508] sm:$0xff]
        %v1867 = vld [vmem:[%s259 + $0x510] sm:$0xff]
        %v1868 = vld [vmem:[%s259 + $0x518] sm:$0xff]
        %v1869 = vld [vmem:[%s259 + $0x520] sm:$0xff]
        %v1870 = vld [vmem:[%s259 + $0x528] sm:$0xff]
        %v1871 = vld [vmem:[%s259 + $0x530] sm:$0xff]
        %v1872 = vld [vmem:[%s259 + $0x538] sm:$0xff]
        %v1873 = vld [vmem:[%s259 + $0x540] sm:$0xff]
        %v1874 = vld [vmem:[%s259 + $0x548] sm:$0xff]
        %v1875 = vld [vmem:[%s259 + $0x550] sm:$0xff]
        %v1876 = vld [vmem:[%s259 + $0x558] sm:$0xff]
        %v1877 = vld [vmem:[%s259 + $0x560] sm:$0xff]
        %v1878 = vld [vmem:[%s259 + $0x568] sm:$0xff]
        %v1879 = vld [vmem:[%s259 + $0x570] sm:$0xff]
        %v1880 = vld [vmem:[%s259 + $0x578] sm:$0xff]
        %v1881 = vld [vmem:[%s259 + $0x580] sm:$0xff]
        %v1882 = vld [vmem:[%s259 + $0x588] sm:$0xff]
        %v1883 = vld [vmem:[%s259 + $0x590] sm:$0xff]
        %v1884 = vld [vmem:[%s259 + $0x598] sm:$0xff]
        %v1885 = vld [vmem:[%s259 + $0x5a0] sm:$0xff]
        %v1886 = vld [vmem:[%s259 + $0x5a8] sm:$0xff]
        %v1887 = vld [vmem:[%s259 + $0x5b0] sm:$0xff]
        %v1888 = vld [vmem:[%s259 + $0x5b8] sm:$0xff]
        %v1889 = vld [vmem:[%s259 + $0x5c0] sm:$0xff]
        %v1890 = vld [vmem:[%s259 + $0x5c8] sm:$0xff]
        %v1891 = vld [vmem:[%s259 + $0x5d0] sm:$0xff]
        %v1892 = vld [vmem:[%s259 + $0x5d8] sm:$0xff]
        %v1893 = vld [vmem:[%s259 + $0x5e0] sm:$0xff]
        %v1894 = vld [vmem:[%s259 + $0x5e8] sm:$0xff]
        %v1895 = vld [vmem:[%s259 + $0x5f0] sm:$0xff]
        %v1896 = vld [vmem:[%s259 + $0x5f8] sm:$0xff]
        %v1897 = vld [vmem:[%s259 + $0x600] sm:$0xff]
        %v1898 = vld [vmem:[%s259 + $0x608] sm:$0xff]
        %v1899 = vld [vmem:[%s259 + $0x610] sm:$0xff]
        %v1900 = vld [vmem:[%s259 + $0x618] sm:$0xff]
        %v1901 = vld [vmem:[%s259 + $0x620] sm:$0xff]
        %v1902 = vld [vmem:[%s259 + $0x628] sm:$0xff]
        %v1903 = vld [vmem:[%s259 + $0x630] sm:$0xff]
        %v1904 = vld [vmem:[%s259 + $0x638] sm:$0xff]
        %v1905 = vld [vmem:[%s259 + $0x640] sm:$0xff]
        %v1906 = vld [vmem:[%s259 + $0x648] sm:$0xff]
        %v1907 = vld [vmem:[%s259 + $0x650] sm:$0xff]
        %v1908 = vld [vmem:[%s259 + $0x658] sm:$0xff]
        %v1909 = vld [vmem:[%s259 + $0x660] sm:$0xff]
        %v1910 = vld [vmem:[%s259 + $0x668] sm:$0xff]
        %v1911 = vld [vmem:[%s259 + $0x670] sm:$0xff]
        %v1912 = vld [vmem:[%s259 + $0x678] sm:$0xff]
        %v1913 = vld [vmem:[%s259 + $0x680] sm:$0xff]
        %v1914 = vld [vmem:[%s259 + $0x688] sm:$0xff]
        %v1915 = vld [vmem:[%s259 + $0x690] sm:$0xff]
        %v1916 = vld [vmem:[%s259 + $0x698] sm:$0xff]
        %v1917 = vld [vmem:[%s259 + $0x6a0] sm:$0xff]
        %v1918 = vld [vmem:[%s259 + $0x6a8] sm:$0xff]
        %v1919 = vld [vmem:[%s259 + $0x6b0] sm:$0xff]
        %v1920 = vld [vmem:[%s259 + $0x6b8] sm:$0xff]
        %v1921 = vld [vmem:[%s259 + $0x6c0] sm:$0xff]
        %v1922 = vld [vmem:[%s259 + $0x6c8] sm:$0xff]
        %v1923 = vld [vmem:[%s259 + $0x6d0] sm:$0xff]
        %v1924 = vld [vmem:[%s259 + $0x6d8] sm:$0xff]
        %v1925 = vld [vmem:[%s259 + $0x6e0] sm:$0xff]
        %v1926 = vld [vmem:[%s259 + $0x6e8] sm:$0xff]
        %v1927 = vld [vmem:[%s259 + $0x6f0] sm:$0xff]
        %v1928 = vld [vmem:[%s259 + $0x6f8] sm:$0xff]
        %v1929 = vld [vmem:[%s259 + $0x700] sm:$0xff]
        %v1930 = vld [vmem:[%s259 + $0x708] sm:$0xff]
        %v1931 = vld [vmem:[%s259 + $0x710] sm:$0xff]
        %v1932 = vld [vmem:[%s259 + $0x718] sm:$0xff]
        %v1933 = vld [vmem:[%s259 + $0x720] sm:$0xff]
        %v1934 = vld [vmem:[%s259 + $0x728] sm:$0xff]
        %v1935 = vld [vmem:[%s259 + $0x730] sm:$0xff]
        %v1936 = vld [vmem:[%s259 + $0x738] sm:$0xff]
        %v1937 = vld [vmem:[%s259 + $0x740] sm:$0xff]
        %v1938 = vld [vmem:[%s259 + $0x748] sm:$0xff]
        %v1939 = vld [vmem:[%s259 + $0x750] sm:$0xff]
        %v1940 = vld [vmem:[%s259 + $0x758] sm:$0xff]
        %v1941 = vld [vmem:[%s259 + $0x760] sm:$0xff]
        %v1942 = vld [vmem:[%s259 + $0x768] sm:$0xff]
        %v1943 = vld [vmem:[%s259 + $0x770] sm:$0xff]
        %v1944 = vld [vmem:[%s259 + $0x778] sm:$0xff]
        %v1945 = vld [vmem:[%s259 + $0x780] sm:$0xff]
        %v1946 = vld [vmem:[%s259 + $0x788] sm:$0xff]
        %v1947 = vld [vmem:[%s259 + $0x790] sm:$0xff]
        %v1948 = vld [vmem:[%s259 + $0x798] sm:$0xff]
        %v1949 = vld [vmem:[%s259 + $0x7a0] sm:$0xff]
        %v1950 = vld [vmem:[%s259 + $0x7a8] sm:$0xff]
        %v1951 = vld [vmem:[%s259 + $0x7b0] sm:$0xff]
        %v1952 = vld [vmem:[%s259 + $0x7b8] sm:$0xff]
        %v1953 = vld [vmem:[%s259 + $0x7c0] sm:$0xff]
        %v1954 = vld [vmem:[%s259 + $0x7c8] sm:$0xff]
        %v1955 = vld [vmem:[%s259 + $0x7d0] sm:$0xff]
        %v1956 = vld [vmem:[%s259 + $0x7d8] sm:$0xff]
        %v1957 = vld [vmem:[%s259 + $0x7e0] sm:$0xff]
        %v1958 = vld [vmem:[%s259 + $0x7e8] sm:$0xff]
        %v1959 = vld [vmem:[%s259 + $0x7f0] sm:$0xff]
        %v1960 = vld [vmem:[%s259 + $0x7f8] sm:$0xff]
        %s1961 = smul.u32 %s1640, 512
        %s1962 = sadd.s32 %s336, %s1961
        %s1963 = scalar_lea.vmem [#allocation2], %s1962
        %v1964 = vld [vmem:[%s1963] sm:$0xff]
        %v1965 = vld [vmem:[%s1963 + $0x8] sm:$0xff]
        %v1966 = vld [vmem:[%s1963 + $0x10] sm:$0xff]
        %v1967 = vld [vmem:[%s1963 + $0x18] sm:$0xff]
        %v1968 = vld [vmem:[%s1963 + $0x20] sm:$0xff]
        %v1969 = vld [vmem:[%s1963 + $0x28] sm:$0xff]
        %v1970 = vld [vmem:[%s1963 + $0x30] sm:$0xff]
        %v1971 = vld [vmem:[%s1963 + $0x38] sm:$0xff]
        %v1972 = vld [vmem:[%s1963 + $0x40] sm:$0xff]
        %v1973 = vld [vmem:[%s1963 + $0x48] sm:$0xff]
        %v1974 = vld [vmem:[%s1963 + $0x50] sm:$0xff]
        %v1975 = vld [vmem:[%s1963 + $0x58] sm:$0xff]
        %v1976 = vld [vmem:[%s1963 + $0x60] sm:$0xff]
        %v1977 = vld [vmem:[%s1963 + $0x68] sm:$0xff]
        %v1978 = vld [vmem:[%s1963 + $0x70] sm:$0xff]
        %v1979 = vld [vmem:[%s1963 + $0x78] sm:$0xff]
        %v1980 = vld [vmem:[%s1963 + $0x80] sm:$0xff]
        %v1981 = vld [vmem:[%s1963 + $0x88] sm:$0xff]
        %v1982 = vld [vmem:[%s1963 + $0x90] sm:$0xff]
        %v1983 = vld [vmem:[%s1963 + $0x98] sm:$0xff]
        %v1984 = vld [vmem:[%s1963 + $0xa0] sm:$0xff]
        %v1985 = vld [vmem:[%s1963 + $0xa8] sm:$0xff]
        %v1986 = vld [vmem:[%s1963 + $0xb0] sm:$0xff]
        %v1987 = vld [vmem:[%s1963 + $0xb8] sm:$0xff]
        %v1988 = vld [vmem:[%s1963 + $0xc0] sm:$0xff]
        %v1989 = vld [vmem:[%s1963 + $0xc8] sm:$0xff]
        %v1990 = vld [vmem:[%s1963 + $0xd0] sm:$0xff]
        %v1991 = vld [vmem:[%s1963 + $0xd8] sm:$0xff]
        %v1992 = vld [vmem:[%s1963 + $0xe0] sm:$0xff]
        %v1993 = vld [vmem:[%s1963 + $0xe8] sm:$0xff]
        %v1994 = vld [vmem:[%s1963 + $0xf0] sm:$0xff]
        %v1995 = vld [vmem:[%s1963 + $0xf8] sm:$0xff]
        %v1996 = vld [vmem:[%s1963 + $0x100] sm:$0xff]
        %v1997 = vld [vmem:[%s1963 + $0x108] sm:$0xff]
        %v1998 = vld [vmem:[%s1963 + $0x110] sm:$0xff]
        %v1999 = vld [vmem:[%s1963 + $0x118] sm:$0xff]
        %v2000 = vld [vmem:[%s1963 + $0x120] sm:$0xff]
        %v2001 = vld [vmem:[%s1963 + $0x128] sm:$0xff]
        %v2002 = vld [vmem:[%s1963 + $0x130] sm:$0xff]
        %v2003 = vld [vmem:[%s1963 + $0x138] sm:$0xff]
        %v2004 = vld [vmem:[%s1963 + $0x140] sm:$0xff]
        %v2005 = vld [vmem:[%s1963 + $0x148] sm:$0xff]
        %v2006 = vld [vmem:[%s1963 + $0x150] sm:$0xff]
        %v2007 = vld [vmem:[%s1963 + $0x158] sm:$0xff]
        %v2008 = vld [vmem:[%s1963 + $0x160] sm:$0xff]
        %v2009 = vld [vmem:[%s1963 + $0x168] sm:$0xff]
        %v2010 = vld [vmem:[%s1963 + $0x170] sm:$0xff]
        %v2011 = vld [vmem:[%s1963 + $0x178] sm:$0xff]
        %v2012 = vld [vmem:[%s1963 + $0x180] sm:$0xff]
        %v2013 = vld [vmem:[%s1963 + $0x188] sm:$0xff]
        %v2014 = vld [vmem:[%s1963 + $0x190] sm:$0xff]
        %v2015 = vld [vmem:[%s1963 + $0x198] sm:$0xff]
        %v2016 = vld [vmem:[%s1963 + $0x1a0] sm:$0xff]
        %v2017 = vld [vmem:[%s1963 + $0x1a8] sm:$0xff]
        %v2018 = vld [vmem:[%s1963 + $0x1b0] sm:$0xff]
        %v2019 = vld [vmem:[%s1963 + $0x1b8] sm:$0xff]
        %v2020 = vld [vmem:[%s1963 + $0x1c0] sm:$0xff]
        %v2021 = vld [vmem:[%s1963 + $0x1c8] sm:$0xff]
        %v2022 = vld [vmem:[%s1963 + $0x1d0] sm:$0xff]
        %v2023 = vld [vmem:[%s1963 + $0x1d8] sm:$0xff]
        %v2024 = vld [vmem:[%s1963 + $0x1e0] sm:$0xff]
        %v2025 = vld [vmem:[%s1963 + $0x1e8] sm:$0xff]
        %v2026 = vld [vmem:[%s1963 + $0x1f0] sm:$0xff]
        %v2027 = vld [vmem:[%s1963 + $0x1f8] sm:$0xff]
        %2028 = vmatprep.subr.mxu0 0.0
        %2029 = vmatpush1.msra.mxu0 %v1979
        %2030 = vmatprep.subr.mxu0 0.0
        %2031 = vmatpush1.msra.mxu0 %v1978
        %2032 = vmatprep.subr.mxu0 0.0
        %2033 = vmatpush1.msra.mxu0 %v1977
        %2034 = vmatprep.subr.mxu0 0.0
        %2035 = vmatpush1.msra.mxu0 %v1976
        %2036 = vmatprep.subr.mxu0 0.0
        %2037 = vmatpush1.msra.mxu0 %v1975
        %2038 = vmatprep.subr.mxu0 0.0
        %2039 = vmatpush1.msra.mxu0 %v1974
        %2040 = vmatprep.subr.mxu0 0.0
        %2041 = vmatpush1.msra.mxu0 %v1973
        %2042 = vmatprep.subr.mxu0 0.0
        %2043 = vmatpush1.msra.mxu0 %v1972
        %2044 = vmatprep.subr.mxu0 0.0
        %2045 = vmatpush1.msra.mxu0 %v1971
        %2046 = vmatprep.subr.mxu0 0.0
        %2047 = vmatpush1.msra.mxu0 %v1970
        %2048 = vmatprep.subr.mxu0 0.0
        %2049 = vmatpush1.msra.mxu0 %v1969
        %2050 = vmatprep.subr.mxu0 0.0
        %2051 = vmatpush1.msra.mxu0 %v1968
        %2052 = vmatprep.subr.mxu0 0.0
        %2053 = vmatpush1.msra.mxu0 %v1967
        %2054 = vmatprep.subr.mxu0 0.0
        %2055 = vmatpush1.msra.mxu0 %v1966
        %2056 = vmatprep.subr.mxu0 0.0
        %2057 = vmatpush1.msra.mxu0 %v1965
        %2058 = vmatprep.subr.mxu0 0.0
        %2059 = vmatpush1.msra.mxu0 %v1964
        %2060 = vmatprep.subr.mxu0 0.0
        %2061 = vmatpush2.msra.mxu0 %v1995
        %2062 = vmatprep.subr.mxu0 0.0
        %2063 = vmatpush2.msra.mxu0 %v1994
        %2064 = vmatprep.subr.mxu0 0.0
        %2065 = vmatpush2.msra.mxu0 %v1993
        %2066 = vmatprep.subr.mxu0 0.0
        %2067 = vmatpush2.msra.mxu0 %v1992
        %2068 = vmatprep.subr.mxu0 0.0
        %2069 = vmatpush2.msra.mxu0 %v1991
        %2070 = vmatprep.subr.mxu0 0.0
        %2071 = vmatpush2.msra.mxu0 %v1990
        %2072 = vmatprep.subr.mxu0 0.0
        %2073 = vmatpush2.msra.mxu0 %v1989
        %2074 = vmatprep.subr.mxu0 0.0
        %2075 = vmatpush2.msra.mxu0 %v1988
        %2076 = vmatprep.subr.mxu0 0.0
        %2077 = vmatpush2.msra.mxu0 %v1987
        %2078 = vmatprep.subr.mxu0 0.0
        %2079 = vmatpush2.msra.mxu0 %v1986
        %2080 = vmatprep.subr.mxu0 0.0
        %2081 = vmatpush2.msra.mxu0 %v1985
        %2082 = vmatprep.subr.mxu0 0.0
        %2083 = vmatpush2.msra.mxu0 %v1984
        %2084 = vmatprep.subr.mxu0 0.0
        %2085 = vmatpush2.msra.mxu0 %v1983
        %2086 = vmatprep.subr.mxu0 0.0
        %2087 = vmatpush2.msra.mxu0 %v1982
        %2088 = vmatprep.subr.mxu0 0.0
        %2089 = vmatpush2.msra.mxu0 %v1981
        %2090 = vmatprep.subr.mxu0 0.0
        %2091 = vmatpush2.msra.mxu0 %v1980
        %2092 = vmatprep.mubr.f32.mxu0 %v1706
        %2093 = vmatmul.mubr.f32.gmra.mxu0 %v1705
        %v2094 = vpop.f32.mrf.mxu0
        %v2095 = vadd.f32 0.0, %v2094
        %v2096 = vpop.f32.mrf.mxu0
        %2097 = vmatprep.mubr.f32.mxu0 %v1710
        %2098 = vmatmul.mubr.f32.gmra.mxu0 %v1709
        %v2099 = vpop.f32.mrf.mxu0
        %v2100 = vadd.f32 0.0, %v2099
        %v2101 = vpop.f32.mrf.mxu0
        %2102 = vmatprep.mubr.f32.mxu0 %v1714
        %2103 = vmatmul.mubr.f32.gmra.mxu0 %v1713
        %v2104 = vpop.f32.mrf.mxu0
        %v2105 = vadd.f32 0.0, %v2104
        %v2106 = vpop.f32.mrf.mxu0
        %2107 = vmatprep.mubr.f32.mxu0 %v1718
        %2108 = vmatmul.mubr.f32.gmra.mxu0 %v1717
        %v2109 = vpop.f32.mrf.mxu0
        %v2110 = vadd.f32 0.0, %v2109
        %v2111 = vpop.f32.mrf.mxu0
        %2112 = vmatprep.mubr.f32.mxu0 %v1722
        %2113 = vmatmul.mubr.f32.gmra.mxu0 %v1721
        %v2114 = vpop.f32.mrf.mxu0
        %v2115 = vadd.f32 0.0, %v2114
        %v2116 = vpop.f32.mrf.mxu0
        %2117 = vmatprep.mubr.f32.mxu0 %v1726
        %2118 = vmatmul.mubr.f32.gmra.mxu0 %v1725
        %v2119 = vpop.f32.mrf.mxu0
        %v2120 = vadd.f32 0.0, %v2119
        %v2121 = vpop.f32.mrf.mxu0
        %2122 = vmatprep.mubr.f32.mxu0 %v1730
        %2123 = vmatmul.mubr.f32.gmra.mxu0 %v1729
        %v2124 = vpop.f32.mrf.mxu0
        %v2125 = vadd.f32 0.0, %v2124
        %v2126 = vpop.f32.mrf.mxu0
        %2127 = vmatprep.mubr.f32.mxu0 %v1734
        %2128 = vmatmul.mubr.f32.gmra.mxu0 %v1733
        %v2129 = vpop.f32.mrf.mxu0
        %v2130 = vadd.f32 0.0, %v2129
        %v2131 = vpop.f32.mrf.mxu0
        %2132 = vmatprep.mubr.f32.mxu0 %v1738
        %2133 = vmatmul.mubr.f32.gmra.mxu0 %v1737
        %v2134 = vpop.f32.mrf.mxu0
        %v2135 = vadd.f32 0.0, %v2134
        %v2136 = vpop.f32.mrf.mxu0
        %2137 = vmatprep.mubr.f32.mxu0 %v1742
        %2138 = vmatmul.mubr.f32.gmra.mxu0 %v1741
        %v2139 = vpop.f32.mrf.mxu0
        %v2140 = vadd.f32 0.0, %v2139
        %v2141 = vpop.f32.mrf.mxu0
        %2142 = vmatprep.mubr.f32.mxu0 %v1746
        %2143 = vmatmul.mubr.f32.gmra.mxu0 %v1745
        %v2144 = vpop.f32.mrf.mxu0
        %v2145 = vadd.f32 0.0, %v2144
        %v2146 = vpop.f32.mrf.mxu0
        %2147 = vmatprep.mubr.f32.mxu0 %v1750
        %2148 = vmatmul.mubr.f32.gmra.mxu0 %v1749
        %v2149 = vpop.f32.mrf.mxu0
        %v2150 = vadd.f32 0.0, %v2149
        %v2151 = vpop.f32.mrf.mxu0
        %2152 = vmatprep.mubr.f32.mxu0 %v1754
        %2153 = vmatmul.mubr.f32.gmra.mxu0 %v1753
        %v2154 = vpop.f32.mrf.mxu0
        %v2155 = vadd.f32 0.0, %v2154
        %v2156 = vpop.f32.mrf.mxu0
        %2157 = vmatprep.mubr.f32.mxu0 %v1758
        %2158 = vmatmul.mubr.f32.gmra.mxu0 %v1757
        %v2159 = vpop.f32.mrf.mxu0
        %v2160 = vadd.f32 0.0, %v2159
        %v2161 = vpop.f32.mrf.mxu0
        %2162 = vmatprep.mubr.f32.mxu0 %v1762
        %2163 = vmatmul.mubr.f32.gmra.mxu0 %v1761
        %v2164 = vpop.f32.mrf.mxu0
        %v2165 = vadd.f32 0.0, %v2164
        %v2166 = vpop.f32.mrf.mxu0
        %2167 = vmatprep.mubr.f32.mxu0 %v1766
        %2168 = vmatmul.mubr.f32.gmra.mxu0 %v1765
        %v2169 = vpop.f32.mrf.mxu0
        %v2170 = vadd.f32 0.0, %v2169
        %v2171 = vpop.f32.mrf.mxu0
        %2172 = vmatprep.mubr.f32.mxu0 %v1770
        %2173 = vmatmul.mubr.f32.gmra.mxu0 %v1769
        %v2174 = vpop.f32.mrf.mxu0
        %v2175 = vadd.f32 0.0, %v2174
        %v2176 = vpop.f32.mrf.mxu0
        %2177 = vmatprep.mubr.f32.mxu0 %v1774
        %2178 = vmatmul.mubr.f32.gmra.mxu0 %v1773
        %v2179 = vpop.f32.mrf.mxu0
        %v2180 = vadd.f32 0.0, %v2179
        %v2181 = vpop.f32.mrf.mxu0
        %2182 = vmatprep.mubr.f32.mxu0 %v1778
        %2183 = vmatmul.mubr.f32.gmra.mxu0 %v1777
        %v2184 = vpop.f32.mrf.mxu0
        %v2185 = vadd.f32 0.0, %v2184
        %v2186 = vpop.f32.mrf.mxu0
        %2187 = vmatprep.mubr.f32.mxu0 %v1782
        %2188 = vmatmul.mubr.f32.gmra.mxu0 %v1781
        %v2189 = vpop.f32.mrf.mxu0
        %v2190 = vadd.f32 0.0, %v2189
        %v2191 = vpop.f32.mrf.mxu0
        %2192 = vmatprep.mubr.f32.mxu0 %v1786
        %2193 = vmatmul.mubr.f32.gmra.mxu0 %v1785
        %v2194 = vpop.f32.mrf.mxu0
        %v2195 = vadd.f32 0.0, %v2194
        %v2196 = vpop.f32.mrf.mxu0
        %2197 = vmatprep.mubr.f32.mxu0 %v1790
        %2198 = vmatmul.mubr.f32.gmra.mxu0 %v1789
        %v2199 = vpop.f32.mrf.mxu0
        %v2200 = vadd.f32 0.0, %v2199
        %v2201 = vpop.f32.mrf.mxu0
        %2202 = vmatprep.mubr.f32.mxu0 %v1794
        %2203 = vmatmul.mubr.f32.gmra.mxu0 %v1793
        %v2204 = vpop.f32.mrf.mxu0
        %v2205 = vadd.f32 0.0, %v2204
        %v2206 = vpop.f32.mrf.mxu0
        %2207 = vmatprep.mubr.f32.mxu0 %v1798
        %2208 = vmatmul.mubr.f32.gmra.mxu0 %v1797
        %v2209 = vpop.f32.mrf.mxu0
        %v2210 = vadd.f32 0.0, %v2209
        %v2211 = vpop.f32.mrf.mxu0
        %2212 = vmatprep.mubr.f32.mxu0 %v1802
        %2213 = vmatmul.mubr.f32.gmra.mxu0 %v1801
        %v2214 = vpop.f32.mrf.mxu0
        %v2215 = vadd.f32 0.0, %v2214
        %v2216 = vpop.f32.mrf.mxu0
        %2217 = vmatprep.mubr.f32.mxu0 %v1806
        %2218 = vmatmul.mubr.f32.gmra.mxu0 %v1805
        %v2219 = vpop.f32.mrf.mxu0
        %v2220 = vadd.f32 0.0, %v2219
        %v2221 = vpop.f32.mrf.mxu0
        %2222 = vmatprep.mubr.f32.mxu0 %v1810
        %2223 = vmatmul.mubr.f32.gmra.mxu0 %v1809
        %v2224 = vpop.f32.mrf.mxu0
        %v2225 = vadd.f32 0.0, %v2224
        %v2226 = vpop.f32.mrf.mxu0
        %2227 = vmatprep.mubr.f32.mxu0 %v1814
        %2228 = vmatmul.mubr.f32.gmra.mxu0 %v1813
        %v2229 = vpop.f32.mrf.mxu0
        %v2230 = vadd.f32 0.0, %v2229
        %v2231 = vpop.f32.mrf.mxu0
        %2232 = vmatprep.mubr.f32.mxu0 %v1818
        %2233 = vmatmul.mubr.f32.gmra.mxu0 %v1817
        %v2234 = vpop.f32.mrf.mxu0
        %v2235 = vadd.f32 0.0, %v2234
        %v2236 = vpop.f32.mrf.mxu0
        %2237 = vmatprep.mubr.f32.mxu0 %v1822
        %2238 = vmatmul.mubr.f32.gmra.mxu0 %v1821
        %v2239 = vpop.f32.mrf.mxu0
        %v2240 = vadd.f32 0.0, %v2239
        %v2241 = vpop.f32.mrf.mxu0
        %2242 = vmatprep.mubr.f32.mxu0 %v1826
        %2243 = vmatmul.mubr.f32.gmra.mxu0 %v1825
        %v2244 = vpop.f32.mrf.mxu0
        %v2245 = vadd.f32 0.0, %v2244
        %v2246 = vpop.f32.mrf.mxu0
        %2247 = vmatprep.mubr.f32.mxu0 %v1830
        %2248 = vmatmul.mubr.f32.gmra.mxu0 %v1829
        %v2249 = vpop.f32.mrf.mxu0
        %v2250 = vadd.f32 0.0, %v2249
        %v2251 = vpop.f32.mrf.mxu0
        %2252 = vmatprep.mubr.f32.mxu0 %v1834
        %2253 = vmatmul.mubr.f32.gmra.mxu0 %v1833
        %v2254 = vpop.f32.mrf.mxu0
        %v2255 = vadd.f32 0.0, %v2254
        %v2256 = vpop.f32.mrf.mxu0
        %2257 = vmatprep.mubr.f32.mxu0 %v1838
        %2258 = vmatmul.mubr.f32.gmra.mxu0 %v1837
        %v2259 = vpop.f32.mrf.mxu0
        %v2260 = vadd.f32 0.0, %v2259
        %v2261 = vpop.f32.mrf.mxu0
        %2262 = vmatprep.mubr.f32.mxu0 %v1842
        %2263 = vmatmul.mubr.f32.gmra.mxu0 %v1841
        %v2264 = vpop.f32.mrf.mxu0
        %v2265 = vadd.f32 0.0, %v2264
        %v2266 = vpop.f32.mrf.mxu0
        %2267 = vmatprep.mubr.f32.mxu0 %v1846
        %2268 = vmatmul.mubr.f32.gmra.mxu0 %v1845
        %v2269 = vpop.f32.mrf.mxu0
        %v2270 = vadd.f32 0.0, %v2269
        %v2271 = vpop.f32.mrf.mxu0
        %2272 = vmatprep.mubr.f32.mxu0 %v1850
        %2273 = vmatmul.mubr.f32.gmra.mxu0 %v1849
        %v2274 = vpop.f32.mrf.mxu0
        %v2275 = vadd.f32 0.0, %v2274
        %v2276 = vpop.f32.mrf.mxu0
        %2277 = vmatprep.mubr.f32.mxu0 %v1854
        %2278 = vmatmul.mubr.f32.gmra.mxu0 %v1853
        %v2279 = vpop.f32.mrf.mxu0
        %v2280 = vadd.f32 0.0, %v2279
        %v2281 = vpop.f32.mrf.mxu0
        %2282 = vmatprep.mubr.f32.mxu0 %v1858
        %2283 = vmatmul.mubr.f32.gmra.mxu0 %v1857
        %v2284 = vpop.f32.mrf.mxu0
        %v2285 = vadd.f32 0.0, %v2284
        %v2286 = vpop.f32.mrf.mxu0
        %2287 = vmatprep.mubr.f32.mxu0 %v1862
        %2288 = vmatmul.mubr.f32.gmra.mxu0 %v1861
        %v2289 = vpop.f32.mrf.mxu0
        %v2290 = vadd.f32 0.0, %v2289
        %v2291 = vpop.f32.mrf.mxu0
        %2292 = vmatprep.mubr.f32.mxu0 %v1866
        %2293 = vmatmul.mubr.f32.gmra.mxu0 %v1865
        %v2294 = vpop.f32.mrf.mxu0
        %v2295 = vadd.f32 0.0, %v2294
        %v2296 = vpop.f32.mrf.mxu0
        %2297 = vmatprep.mubr.f32.mxu0 %v1870
        %2298 = vmatmul.mubr.f32.gmra.mxu0 %v1869
        %v2299 = vpop.f32.mrf.mxu0
        %v2300 = vadd.f32 0.0, %v2299
        %v2301 = vpop.f32.mrf.mxu0
        %2302 = vmatprep.mubr.f32.mxu0 %v1874
        %2303 = vmatmul.mubr.f32.gmra.mxu0 %v1873
        %v2304 = vpop.f32.mrf.mxu0
        %v2305 = vadd.f32 0.0, %v2304
        %v2306 = vpop.f32.mrf.mxu0
        %2307 = vmatprep.mubr.f32.mxu0 %v1878
        %2308 = vmatmul.mubr.f32.gmra.mxu0 %v1877
        %v2309 = vpop.f32.mrf.mxu0
        %v2310 = vadd.f32 0.0, %v2309
        %v2311 = vpop.f32.mrf.mxu0
        %2312 = vmatprep.mubr.f32.mxu0 %v1882
        %2313 = vmatmul.mubr.f32.gmra.mxu0 %v1881
        %v2314 = vpop.f32.mrf.mxu0
        %v2315 = vadd.f32 0.0, %v2314
        %v2316 = vpop.f32.mrf.mxu0
        %2317 = vmatprep.mubr.f32.mxu0 %v1886
        %2318 = vmatmul.mubr.f32.gmra.mxu0 %v1885
        %v2319 = vpop.f32.mrf.mxu0
        %v2320 = vadd.f32 0.0, %v2319
        %v2321 = vpop.f32.mrf.mxu0
        %2322 = vmatprep.mubr.f32.mxu0 %v1890
        %2323 = vmatmul.mubr.f32.gmra.mxu0 %v1889
        %v2324 = vpop.f32.mrf.mxu0
        %v2325 = vadd.f32 0.0, %v2324
        %v2326 = vpop.f32.mrf.mxu0
        %2327 = vmatprep.mubr.f32.mxu0 %v1894
        %2328 = vmatmul.mubr.f32.gmra.mxu0 %v1893
        %v2329 = vpop.f32.mrf.mxu0
        %v2330 = vadd.f32 0.0, %v2329
        %v2331 = vpop.f32.mrf.mxu0
        %2332 = vmatprep.mubr.f32.mxu0 %v1898
        %2333 = vmatmul.mubr.f32.gmra.mxu0 %v1897
        %v2334 = vpop.f32.mrf.mxu0
        %v2335 = vadd.f32 0.0, %v2334
        %v2336 = vpop.f32.mrf.mxu0
        %2337 = vmatprep.mubr.f32.mxu0 %v1902
        %2338 = vmatmul.mubr.f32.gmra.mxu0 %v1901
        %v2339 = vpop.f32.mrf.mxu0
        %v2340 = vadd.f32 0.0, %v2339
        %v2341 = vpop.f32.mrf.mxu0
        %2342 = vmatprep.mubr.f32.mxu0 %v1906
        %2343 = vmatmul.mubr.f32.gmra.mxu0 %v1905
        %v2344 = vpop.f32.mrf.mxu0
        %v2345 = vadd.f32 0.0, %v2344
        %v2346 = vpop.f32.mrf.mxu0
        %2347 = vmatprep.mubr.f32.mxu0 %v1910
        %2348 = vmatmul.mubr.f32.gmra.mxu0 %v1909
        %v2349 = vpop.f32.mrf.mxu0
        %v2350 = vadd.f32 0.0, %v2349
        %v2351 = vpop.f32.mrf.mxu0
        %2352 = vmatprep.mubr.f32.mxu0 %v1914
        %2353 = vmatmul.mubr.f32.gmra.mxu0 %v1913
        %v2354 = vpop.f32.mrf.mxu0
        %v2355 = vadd.f32 0.0, %v2354
        %v2356 = vpop.f32.mrf.mxu0
        %2357 = vmatprep.mubr.f32.mxu0 %v1918
        %2358 = vmatmul.mubr.f32.gmra.mxu0 %v1917
        %v2359 = vpop.f32.mrf.mxu0
        %v2360 = vadd.f32 0.0, %v2359
        %v2361 = vpop.f32.mrf.mxu0
        %2362 = vmatprep.mubr.f32.mxu0 %v1922
        %2363 = vmatmul.mubr.f32.gmra.mxu0 %v1921
        %v2364 = vpop.f32.mrf.mxu0
        %v2365 = vadd.f32 0.0, %v2364
        %v2366 = vpop.f32.mrf.mxu0
        %2367 = vmatprep.mubr.f32.mxu0 %v1926
        %2368 = vmatmul.mubr.f32.gmra.mxu0 %v1925
        %v2369 = vpop.f32.mrf.mxu0
        %v2370 = vadd.f32 0.0, %v2369
        %v2371 = vpop.f32.mrf.mxu0
        %2372 = vmatprep.mubr.f32.mxu0 %v1930
        %2373 = vmatmul.mubr.f32.gmra.mxu0 %v1929
        %v2374 = vpop.f32.mrf.mxu0
        %v2375 = vadd.f32 0.0, %v2374
        %v2376 = vpop.f32.mrf.mxu0
        %2377 = vmatprep.mubr.f32.mxu0 %v1934
        %2378 = vmatmul.mubr.f32.gmra.mxu0 %v1933
        %v2379 = vpop.f32.mrf.mxu0
        %v2380 = vadd.f32 0.0, %v2379
        %v2381 = vpop.f32.mrf.mxu0
        %2382 = vmatprep.mubr.f32.mxu0 %v1938
        %2383 = vmatmul.mubr.f32.gmra.mxu0 %v1937
        %v2384 = vpop.f32.mrf.mxu0
        %v2385 = vadd.f32 0.0, %v2384
        %v2386 = vpop.f32.mrf.mxu0
        %2387 = vmatprep.mubr.f32.mxu0 %v1942
        %2388 = vmatmul.mubr.f32.gmra.mxu0 %v1941
        %v2389 = vpop.f32.mrf.mxu0
        %v2390 = vadd.f32 0.0, %v2389
        %v2391 = vpop.f32.mrf.mxu0
        %2392 = vmatprep.mubr.f32.mxu0 %v1946
        %2393 = vmatmul.mubr.f32.gmra.mxu0 %v1945
        %v2394 = vpop.f32.mrf.mxu0
        %v2395 = vadd.f32 0.0, %v2394
        %v2396 = vpop.f32.mrf.mxu0
        %2397 = vmatprep.mubr.f32.mxu0 %v1950
        %2398 = vmatmul.mubr.f32.gmra.mxu0 %v1949
        %v2399 = vpop.f32.mrf.mxu0
        %v2400 = vadd.f32 0.0, %v2399
        %v2401 = vpop.f32.mrf.mxu0
        %2402 = vmatprep.mubr.f32.mxu0 %v1954
        %2403 = vmatmul.mubr.f32.gmra.mxu0 %v1953
        %v2404 = vpop.f32.mrf.mxu0
        %v2405 = vadd.f32 0.0, %v2404
        %v2406 = vpop.f32.mrf.mxu0
        %2407 = vmatprep.mubr.f32.mxu0 %v1958
        %2408 = vmatmul.mubr.f32.gmra.mxu0 %v1957
        %v2409 = vpop.f32.mrf.mxu0
        %v2410 = vadd.f32 0.0, %v2409
        %v2411 = vpop.f32.mrf.mxu0
        %2412 = vdwg.mxu0
        %2413 = vmatprep.subr.mxu0 0.0
        %2414 = vmatpush1.msra.mxu0 %v2011
        %2415 = vmatprep.subr.mxu0 0.0
        %2416 = vmatpush1.msra.mxu0 %v2010
        %2417 = vmatprep.subr.mxu0 0.0
        %2418 = vmatpush1.msra.mxu0 %v2009
        %2419 = vmatprep.subr.mxu0 0.0
        %2420 = vmatpush1.msra.mxu0 %v2008
        %2421 = vmatprep.subr.mxu0 0.0
        %2422 = vmatpush1.msra.mxu0 %v2007
        %2423 = vmatprep.subr.mxu0 0.0
        %2424 = vmatpush1.msra.mxu0 %v2006
        %2425 = vmatprep.subr.mxu0 0.0
        %2426 = vmatpush1.msra.mxu0 %v2005
        %2427 = vmatprep.subr.mxu0 0.0
        %2428 = vmatpush1.msra.mxu0 %v2004
        %2429 = vmatprep.subr.mxu0 0.0
        %2430 = vmatpush1.msra.mxu0 %v2003
        %2431 = vmatprep.subr.mxu0 0.0
        %2432 = vmatpush1.msra.mxu0 %v2002
        %2433 = vmatprep.subr.mxu0 0.0
        %2434 = vmatpush1.msra.mxu0 %v2001
        %2435 = vmatprep.subr.mxu0 0.0
        %2436 = vmatpush1.msra.mxu0 %v2000
        %2437 = vmatprep.subr.mxu0 0.0
        %2438 = vmatpush1.msra.mxu0 %v1999
        %2439 = vmatprep.subr.mxu0 0.0
        %2440 = vmatpush1.msra.mxu0 %v1998
        %2441 = vmatprep.subr.mxu0 0.0
        %2442 = vmatpush1.msra.mxu0 %v1997
        %2443 = vmatprep.subr.mxu0 0.0
        %2444 = vmatpush1.msra.mxu0 %v1996
        %2445 = vmatprep.subr.mxu0 0.0
        %2446 = vmatpush2.msra.mxu0 %v2027
        %2447 = vmatprep.subr.mxu0 0.0
        %2448 = vmatpush2.msra.mxu0 %v2026
        %2449 = vmatprep.subr.mxu0 0.0
        %2450 = vmatpush2.msra.mxu0 %v2025
        %2451 = vmatprep.subr.mxu0 0.0
        %2452 = vmatpush2.msra.mxu0 %v2024
        %2453 = vmatprep.subr.mxu0 0.0
        %2454 = vmatpush2.msra.mxu0 %v2023
        %2455 = vmatprep.subr.mxu0 0.0
        %2456 = vmatpush2.msra.mxu0 %v2022
        %2457 = vmatprep.subr.mxu0 0.0
        %2458 = vmatpush2.msra.mxu0 %v2021
        %2459 = vmatprep.subr.mxu0 0.0
        %2460 = vmatpush2.msra.mxu0 %v2020
        %2461 = vmatprep.subr.mxu0 0.0
        %2462 = vmatpush2.msra.mxu0 %v2019
        %2463 = vmatprep.subr.mxu0 0.0
        %2464 = vmatpush2.msra.mxu0 %v2018
        %2465 = vmatprep.subr.mxu0 0.0
        %2466 = vmatpush2.msra.mxu0 %v2017
        %2467 = vmatprep.subr.mxu0 0.0
        %2468 = vmatpush2.msra.mxu0 %v2016
        %2469 = vmatprep.subr.mxu0 0.0
        %2470 = vmatpush2.msra.mxu0 %v2015
        %2471 = vmatprep.subr.mxu0 0.0
        %2472 = vmatpush2.msra.mxu0 %v2014
        %2473 = vmatprep.subr.mxu0 0.0
        %2474 = vmatpush2.msra.mxu0 %v2013
        %2475 = vmatprep.subr.mxu0 0.0
        %2476 = vmatpush2.msra.mxu0 %v2012
        %2477 = vmatprep.mubr.f32.mxu0 %v1708
        %2478 = vmatmul.mubr.f32.gmra.mxu0 %v1707
        %v2479 = vpop.f32.mrf.mxu0
        %v2480 = vadd.f32 %v2095, %v2479
        %v2481 = vpop.f32.mrf.mxu0
        %2482 = vmatprep.mubr.f32.mxu0 %v1712
        %2483 = vmatmul.mubr.f32.gmra.mxu0 %v1711
        %v2484 = vpop.f32.mrf.mxu0
        %v2485 = vadd.f32 %v2100, %v2484
        %v2486 = vpop.f32.mrf.mxu0
        %2487 = vmatprep.mubr.f32.mxu0 %v1716
        %2488 = vmatmul.mubr.f32.gmra.mxu0 %v1715
        %v2489 = vpop.f32.mrf.mxu0
        %v2490 = vadd.f32 %v2105, %v2489
        %v2491 = vpop.f32.mrf.mxu0
        %2492 = vmatprep.mubr.f32.mxu0 %v1720
        %2493 = vmatmul.mubr.f32.gmra.mxu0 %v1719
        %v2494 = vpop.f32.mrf.mxu0
        %v2495 = vadd.f32 %v2110, %v2494
        %v2496 = vpop.f32.mrf.mxu0
        %2497 = vmatprep.mubr.f32.mxu0 %v1724
        %2498 = vmatmul.mubr.f32.gmra.mxu0 %v1723
        %v2499 = vpop.f32.mrf.mxu0
        %v2500 = vadd.f32 %v2115, %v2499
        %v2501 = vpop.f32.mrf.mxu0
        %2502 = vmatprep.mubr.f32.mxu0 %v1728
        %2503 = vmatmul.mubr.f32.gmra.mxu0 %v1727
        %v2504 = vpop.f32.mrf.mxu0
        %v2505 = vadd.f32 %v2120, %v2504
        %v2506 = vpop.f32.mrf.mxu0
        %2507 = vmatprep.mubr.f32.mxu0 %v1732
        %2508 = vmatmul.mubr.f32.gmra.mxu0 %v1731
        %v2509 = vpop.f32.mrf.mxu0
        %v2510 = vadd.f32 %v2125, %v2509
        %v2511 = vpop.f32.mrf.mxu0
        %2512 = vmatprep.mubr.f32.mxu0 %v1736
        %2513 = vmatmul.mubr.f32.gmra.mxu0 %v1735
        %v2514 = vpop.f32.mrf.mxu0
        %v2515 = vadd.f32 %v2130, %v2514
        %v2516 = vpop.f32.mrf.mxu0
        %2517 = vmatprep.mubr.f32.mxu0 %v1740
        %2518 = vmatmul.mubr.f32.gmra.mxu0 %v1739
        %v2519 = vpop.f32.mrf.mxu0
        %v2520 = vadd.f32 %v2135, %v2519
        %v2521 = vpop.f32.mrf.mxu0
        %2522 = vmatprep.mubr.f32.mxu0 %v1744
        %2523 = vmatmul.mubr.f32.gmra.mxu0 %v1743
        %v2524 = vpop.f32.mrf.mxu0
        %v2525 = vadd.f32 %v2140, %v2524
        %v2526 = vpop.f32.mrf.mxu0
        %2527 = vmatprep.mubr.f32.mxu0 %v1748
        %2528 = vmatmul.mubr.f32.gmra.mxu0 %v1747
        %v2529 = vpop.f32.mrf.mxu0
        %v2530 = vadd.f32 %v2145, %v2529
        %v2531 = vpop.f32.mrf.mxu0
        %2532 = vmatprep.mubr.f32.mxu0 %v1752
        %2533 = vmatmul.mubr.f32.gmra.mxu0 %v1751
        %v2534 = vpop.f32.mrf.mxu0
        %v2535 = vadd.f32 %v2150, %v2534
        %v2536 = vpop.f32.mrf.mxu0
        %2537 = vmatprep.mubr.f32.mxu0 %v1756
        %2538 = vmatmul.mubr.f32.gmra.mxu0 %v1755
        %v2539 = vpop.f32.mrf.mxu0
        %v2540 = vadd.f32 %v2155, %v2539
        %v2541 = vpop.f32.mrf.mxu0
        %2542 = vmatprep.mubr.f32.mxu0 %v1760
        %2543 = vmatmul.mubr.f32.gmra.mxu0 %v1759
        %v2544 = vpop.f32.mrf.mxu0
        %v2545 = vadd.f32 %v2160, %v2544
        %v2546 = vpop.f32.mrf.mxu0
        %2547 = vmatprep.mubr.f32.mxu0 %v1764
        %2548 = vmatmul.mubr.f32.gmra.mxu0 %v1763
        %v2549 = vpop.f32.mrf.mxu0
        %v2550 = vadd.f32 %v2165, %v2549
        %v2551 = vpop.f32.mrf.mxu0
        %2552 = vmatprep.mubr.f32.mxu0 %v1768
        %2553 = vmatmul.mubr.f32.gmra.mxu0 %v1767
        %v2554 = vpop.f32.mrf.mxu0
        %v2555 = vadd.f32 %v2170, %v2554
        %v2556 = vpop.f32.mrf.mxu0
        %2557 = vmatprep.mubr.f32.mxu0 %v1772
        %2558 = vmatmul.mubr.f32.gmra.mxu0 %v1771
        %v2559 = vpop.f32.mrf.mxu0
        %v2560 = vadd.f32 %v2175, %v2559
        %v2561 = vpop.f32.mrf.mxu0
        %2562 = vmatprep.mubr.f32.mxu0 %v1776
        %2563 = vmatmul.mubr.f32.gmra.mxu0 %v1775
        %v2564 = vpop.f32.mrf.mxu0
        %v2565 = vadd.f32 %v2180, %v2564
        %v2566 = vpop.f32.mrf.mxu0
        %2567 = vmatprep.mubr.f32.mxu0 %v1780
        %2568 = vmatmul.mubr.f32.gmra.mxu0 %v1779
        %v2569 = vpop.f32.mrf.mxu0
        %v2570 = vadd.f32 %v2185, %v2569
        %v2571 = vpop.f32.mrf.mxu0
        %2572 = vmatprep.mubr.f32.mxu0 %v1784
        %2573 = vmatmul.mubr.f32.gmra.mxu0 %v1783
        %v2574 = vpop.f32.mrf.mxu0
        %v2575 = vadd.f32 %v2190, %v2574
        %v2576 = vpop.f32.mrf.mxu0
        %2577 = vmatprep.mubr.f32.mxu0 %v1788
        %2578 = vmatmul.mubr.f32.gmra.mxu0 %v1787
        %v2579 = vpop.f32.mrf.mxu0
        %v2580 = vadd.f32 %v2195, %v2579
        %v2581 = vpop.f32.mrf.mxu0
        %2582 = vmatprep.mubr.f32.mxu0 %v1792
        %2583 = vmatmul.mubr.f32.gmra.mxu0 %v1791
        %v2584 = vpop.f32.mrf.mxu0
        %v2585 = vadd.f32 %v2200, %v2584
        %v2586 = vpop.f32.mrf.mxu0
        %2587 = vmatprep.mubr.f32.mxu0 %v1796
        %2588 = vmatmul.mubr.f32.gmra.mxu0 %v1795
        %v2589 = vpop.f32.mrf.mxu0
        %v2590 = vadd.f32 %v2205, %v2589
        %v2591 = vpop.f32.mrf.mxu0
        %2592 = vmatprep.mubr.f32.mxu0 %v1800
        %2593 = vmatmul.mubr.f32.gmra.mxu0 %v1799
        %v2594 = vpop.f32.mrf.mxu0
        %v2595 = vadd.f32 %v2210, %v2594
        %v2596 = vpop.f32.mrf.mxu0
        %2597 = vmatprep.mubr.f32.mxu0 %v1804
        %2598 = vmatmul.mubr.f32.gmra.mxu0 %v1803
        %v2599 = vpop.f32.mrf.mxu0
        %v2600 = vadd.f32 %v2215, %v2599
        %v2601 = vpop.f32.mrf.mxu0
        %2602 = vmatprep.mubr.f32.mxu0 %v1808
        %2603 = vmatmul.mubr.f32.gmra.mxu0 %v1807
        %v2604 = vpop.f32.mrf.mxu0
        %v2605 = vadd.f32 %v2220, %v2604
        %v2606 = vpop.f32.mrf.mxu0
        %2607 = vmatprep.mubr.f32.mxu0 %v1812
        %2608 = vmatmul.mubr.f32.gmra.mxu0 %v1811
        %v2609 = vpop.f32.mrf.mxu0
        %v2610 = vadd.f32 %v2225, %v2609
        %v2611 = vpop.f32.mrf.mxu0
        %2612 = vmatprep.mubr.f32.mxu0 %v1816
        %2613 = vmatmul.mubr.f32.gmra.mxu0 %v1815
        %v2614 = vpop.f32.mrf.mxu0
        %v2615 = vadd.f32 %v2230, %v2614
        %v2616 = vpop.f32.mrf.mxu0
        %2617 = vmatprep.mubr.f32.mxu0 %v1820
        %2618 = vmatmul.mubr.f32.gmra.mxu0 %v1819
        %v2619 = vpop.f32.mrf.mxu0
        %v2620 = vadd.f32 %v2235, %v2619
        %v2621 = vpop.f32.mrf.mxu0
        %2622 = vmatprep.mubr.f32.mxu0 %v1824
        %2623 = vmatmul.mubr.f32.gmra.mxu0 %v1823
        %v2624 = vpop.f32.mrf.mxu0
        %v2625 = vadd.f32 %v2240, %v2624
        %v2626 = vpop.f32.mrf.mxu0
        %2627 = vmatprep.mubr.f32.mxu0 %v1828
        %2628 = vmatmul.mubr.f32.gmra.mxu0 %v1827
        %v2629 = vpop.f32.mrf.mxu0
        %v2630 = vadd.f32 %v2245, %v2629
        %v2631 = vpop.f32.mrf.mxu0
        %2632 = vmatprep.mubr.f32.mxu0 %v1832
        %2633 = vmatmul.mubr.f32.gmra.mxu0 %v1831
        %v2634 = vpop.f32.mrf.mxu0
        %v2635 = vadd.f32 %v2250, %v2634
        %v2636 = vpop.f32.mrf.mxu0
        %2637 = vmatprep.mubr.f32.mxu0 %v1836
        %2638 = vmatmul.mubr.f32.gmra.mxu0 %v1835
        %v2639 = vpop.f32.mrf.mxu0
        %v2640 = vadd.f32 %v2255, %v2639
        %v2641 = vpop.f32.mrf.mxu0
        %2642 = vmatprep.mubr.f32.mxu0 %v1840
        %2643 = vmatmul.mubr.f32.gmra.mxu0 %v1839
        %v2644 = vpop.f32.mrf.mxu0
        %v2645 = vadd.f32 %v2260, %v2644
        %v2646 = vpop.f32.mrf.mxu0
        %2647 = vmatprep.mubr.f32.mxu0 %v1844
        %2648 = vmatmul.mubr.f32.gmra.mxu0 %v1843
        %v2649 = vpop.f32.mrf.mxu0
        %v2650 = vadd.f32 %v2265, %v2649
        %v2651 = vpop.f32.mrf.mxu0
        %2652 = vmatprep.mubr.f32.mxu0 %v1848
        %2653 = vmatmul.mubr.f32.gmra.mxu0 %v1847
        %v2654 = vpop.f32.mrf.mxu0
        %v2655 = vadd.f32 %v2270, %v2654
        %v2656 = vpop.f32.mrf.mxu0
        %2657 = vmatprep.mubr.f32.mxu0 %v1852
        %2658 = vmatmul.mubr.f32.gmra.mxu0 %v1851
        %v2659 = vpop.f32.mrf.mxu0
        %v2660 = vadd.f32 %v2275, %v2659
        %v2661 = vpop.f32.mrf.mxu0
        %2662 = vmatprep.mubr.f32.mxu0 %v1856
        %2663 = vmatmul.mubr.f32.gmra.mxu0 %v1855
        %v2664 = vpop.f32.mrf.mxu0
        %v2665 = vadd.f32 %v2280, %v2664
        %v2666 = vpop.f32.mrf.mxu0
        %2667 = vmatprep.mubr.f32.mxu0 %v1860
        %2668 = vmatmul.mubr.f32.gmra.mxu0 %v1859
        %v2669 = vpop.f32.mrf.mxu0
        %v2670 = vadd.f32 %v2285, %v2669
        %v2671 = vpop.f32.mrf.mxu0
        %2672 = vmatprep.mubr.f32.mxu0 %v1864
        %2673 = vmatmul.mubr.f32.gmra.mxu0 %v1863
        %v2674 = vpop.f32.mrf.mxu0
        %v2675 = vadd.f32 %v2290, %v2674
        %v2676 = vpop.f32.mrf.mxu0
        %2677 = vmatprep.mubr.f32.mxu0 %v1868
        %2678 = vmatmul.mubr.f32.gmra.mxu0 %v1867
        %v2679 = vpop.f32.mrf.mxu0
        %v2680 = vadd.f32 %v2295, %v2679
        %v2681 = vpop.f32.mrf.mxu0
        %2682 = vmatprep.mubr.f32.mxu0 %v1872
        %2683 = vmatmul.mubr.f32.gmra.mxu0 %v1871
        %v2684 = vpop.f32.mrf.mxu0
        %v2685 = vadd.f32 %v2300, %v2684
        %v2686 = vpop.f32.mrf.mxu0
        %2687 = vmatprep.mubr.f32.mxu0 %v1876
        %2688 = vmatmul.mubr.f32.gmra.mxu0 %v1875
        %v2689 = vpop.f32.mrf.mxu0
        %v2690 = vadd.f32 %v2305, %v2689
        %v2691 = vpop.f32.mrf.mxu0
        %2692 = vmatprep.mubr.f32.mxu0 %v1880
        %2693 = vmatmul.mubr.f32.gmra.mxu0 %v1879
        %v2694 = vpop.f32.mrf.mxu0
        %v2695 = vadd.f32 %v2310, %v2694
        %v2696 = vpop.f32.mrf.mxu0
        %2697 = vmatprep.mubr.f32.mxu0 %v1884
        %2698 = vmatmul.mubr.f32.gmra.mxu0 %v1883
        %v2699 = vpop.f32.mrf.mxu0
        %v2700 = vadd.f32 %v2315, %v2699
        %v2701 = vpop.f32.mrf.mxu0
        %2702 = vmatprep.mubr.f32.mxu0 %v1888
        %2703 = vmatmul.mubr.f32.gmra.mxu0 %v1887
        %v2704 = vpop.f32.mrf.mxu0
        %v2705 = vadd.f32 %v2320, %v2704
        %v2706 = vpop.f32.mrf.mxu0
        %2707 = vmatprep.mubr.f32.mxu0 %v1892
        %2708 = vmatmul.mubr.f32.gmra.mxu0 %v1891
        %v2709 = vpop.f32.mrf.mxu0
        %v2710 = vadd.f32 %v2325, %v2709
        %v2711 = vpop.f32.mrf.mxu0
        %2712 = vmatprep.mubr.f32.mxu0 %v1896
        %2713 = vmatmul.mubr.f32.gmra.mxu0 %v1895
        %v2714 = vpop.f32.mrf.mxu0
        %v2715 = vadd.f32 %v2330, %v2714
        %v2716 = vpop.f32.mrf.mxu0
        %2717 = vmatprep.mubr.f32.mxu0 %v1900
        %2718 = vmatmul.mubr.f32.gmra.mxu0 %v1899
        %v2719 = vpop.f32.mrf.mxu0
        %v2720 = vadd.f32 %v2335, %v2719
        %v2721 = vpop.f32.mrf.mxu0
        %2722 = vmatprep.mubr.f32.mxu0 %v1904
        %2723 = vmatmul.mubr.f32.gmra.mxu0 %v1903
        %v2724 = vpop.f32.mrf.mxu0
        %v2725 = vadd.f32 %v2340, %v2724
        %v2726 = vpop.f32.mrf.mxu0
        %2727 = vmatprep.mubr.f32.mxu0 %v1908
        %2728 = vmatmul.mubr.f32.gmra.mxu0 %v1907
        %v2729 = vpop.f32.mrf.mxu0
        %v2730 = vadd.f32 %v2345, %v2729
        %v2731 = vpop.f32.mrf.mxu0
        %2732 = vmatprep.mubr.f32.mxu0 %v1912
        %2733 = vmatmul.mubr.f32.gmra.mxu0 %v1911
        %v2734 = vpop.f32.mrf.mxu0
        %v2735 = vadd.f32 %v2350, %v2734
        %v2736 = vpop.f32.mrf.mxu0
        %2737 = vmatprep.mubr.f32.mxu0 %v1916
        %2738 = vmatmul.mubr.f32.gmra.mxu0 %v1915
        %v2739 = vpop.f32.mrf.mxu0
        %v2740 = vadd.f32 %v2355, %v2739
        %v2741 = vpop.f32.mrf.mxu0
        %2742 = vmatprep.mubr.f32.mxu0 %v1920
        %2743 = vmatmul.mubr.f32.gmra.mxu0 %v1919
        %v2744 = vpop.f32.mrf.mxu0
        %v2745 = vadd.f32 %v2360, %v2744
        %v2746 = vpop.f32.mrf.mxu0
        %2747 = vmatprep.mubr.f32.mxu0 %v1924
        %2748 = vmatmul.mubr.f32.gmra.mxu0 %v1923
        %v2749 = vpop.f32.mrf.mxu0
        %v2750 = vadd.f32 %v2365, %v2749
        %v2751 = vpop.f32.mrf.mxu0
        %2752 = vmatprep.mubr.f32.mxu0 %v1928
        %2753 = vmatmul.mubr.f32.gmra.mxu0 %v1927
        %v2754 = vpop.f32.mrf.mxu0
        %v2755 = vadd.f32 %v2370, %v2754
        %v2756 = vpop.f32.mrf.mxu0
        %2757 = vmatprep.mubr.f32.mxu0 %v1932
        %2758 = vmatmul.mubr.f32.gmra.mxu0 %v1931
        %v2759 = vpop.f32.mrf.mxu0
        %v2760 = vadd.f32 %v2375, %v2759
        %v2761 = vpop.f32.mrf.mxu0
        %2762 = vmatprep.mubr.f32.mxu0 %v1936
        %2763 = vmatmul.mubr.f32.gmra.mxu0 %v1935
        %v2764 = vpop.f32.mrf.mxu0
        %v2765 = vadd.f32 %v2380, %v2764
        %v2766 = vpop.f32.mrf.mxu0
        %2767 = vmatprep.mubr.f32.mxu0 %v1940
        %2768 = vmatmul.mubr.f32.gmra.mxu0 %v1939
        %v2769 = vpop.f32.mrf.mxu0
        %v2770 = vadd.f32 %v2385, %v2769
        %v2771 = vpop.f32.mrf.mxu0
        %2772 = vmatprep.mubr.f32.mxu0 %v1944
        %2773 = vmatmul.mubr.f32.gmra.mxu0 %v1943
        %v2774 = vpop.f32.mrf.mxu0
        %v2775 = vadd.f32 %v2390, %v2774
        %v2776 = vpop.f32.mrf.mxu0
        %2777 = vmatprep.mubr.f32.mxu0 %v1948
        %2778 = vmatmul.mubr.f32.gmra.mxu0 %v1947
        %v2779 = vpop.f32.mrf.mxu0
        %v2780 = vadd.f32 %v2395, %v2779
        %v2781 = vpop.f32.mrf.mxu0
        %2782 = vmatprep.mubr.f32.mxu0 %v1952
        %2783 = vmatmul.mubr.f32.gmra.mxu0 %v1951
        %v2784 = vpop.f32.mrf.mxu0
        %v2785 = vadd.f32 %v2400, %v2784
        %v2786 = vpop.f32.mrf.mxu0
        %2787 = vmatprep.mubr.f32.mxu0 %v1956
        %2788 = vmatmul.mubr.f32.gmra.mxu0 %v1955
        %v2789 = vpop.f32.mrf.mxu0
        %v2790 = vadd.f32 %v2405, %v2789
        %v2791 = vpop.f32.mrf.mxu0
        %2792 = vmatprep.mubr.f32.mxu0 %v1960
        %2793 = vmatmul.mubr.f32.gmra.mxu0 %v1959
        %v2794 = vpop.f32.mrf.mxu0
        %v2795 = vadd.f32 %v2410, %v2794
        %v2796 = vpop.f32.mrf.mxu0
        %2797 = vdwg.mxu0
        %v2798 = vadd.f32 %v1641, %v2480
        %v2799 = vadd.f32 %v1642, %v2485
        %v2800 = vadd.f32 %v1643, %v2490
        %v2801 = vadd.f32 %v1644, %v2495
        %v2802 = vadd.f32 %v1645, %v2500
        %v2803 = vadd.f32 %v1646, %v2505
        %v2804 = vadd.f32 %v1647, %v2510
        %v2805 = vadd.f32 %v1648, %v2515
        %v2806 = vadd.f32 %v1649, %v2520
        %v2807 = vadd.f32 %v1650, %v2525
        %v2808 = vadd.f32 %v1651, %v2530
        %v2809 = vadd.f32 %v1652, %v2535
        %v2810 = vadd.f32 %v1653, %v2540
        %v2811 = vadd.f32 %v1654, %v2545
        %v2812 = vadd.f32 %v1655, %v2550
        %v2813 = vadd.f32 %v1656, %v2555
        %v2814 = vadd.f32 %v1657, %v2560
        %v2815 = vadd.f32 %v1658, %v2565
        %v2816 = vadd.f32 %v1659, %v2570
        %v2817 = vadd.f32 %v1660, %v2575
        %v2818 = vadd.f32 %v1661, %v2580
        %v2819 = vadd.f32 %v1662, %v2585
        %v2820 = vadd.f32 %v1663, %v2590
        %v2821 = vadd.f32 %v1664, %v2595
        %v2822 = vadd.f32 %v1665, %v2600
        %v2823 = vadd.f32 %v1666, %v2605
        %v2824 = vadd.f32 %v1667, %v2610
        %v2825 = vadd.f32 %v1668, %v2615
        %v2826 = vadd.f32 %v1669, %v2620
        %v2827 = vadd.f32 %v1670, %v2625
        %v2828 = vadd.f32 %v1671, %v2630
        %v2829 = vadd.f32 %v1672, %v2635
        %v2830 = vadd.f32 %v1673, %v2640
        %v2831 = vadd.f32 %v1674, %v2645
        %v2832 = vadd.f32 %v1675, %v2650
        %v2833 = vadd.f32 %v1676, %v2655
        %v2834 = vadd.f32 %v1677, %v2660
        %v2835 = vadd.f32 %v1678, %v2665
        %v2836 = vadd.f32 %v1679, %v2670
        %v2837 = vadd.f32 %v1680, %v2675
        %v2838 = vadd.f32 %v1681, %v2680
        %v2839 = vadd.f32 %v1682, %v2685
        %v2840 = vadd.f32 %v1683, %v2690
        %v2841 = vadd.f32 %v1684, %v2695
        %v2842 = vadd.f32 %v1685, %v2700
        %v2843 = vadd.f32 %v1686, %v2705
        %v2844 = vadd.f32 %v1687, %v2710
        %v2845 = vadd.f32 %v1688, %v2715
        %v2846 = vadd.f32 %v1689, %v2720
        %v2847 = vadd.f32 %v1690, %v2725
        %v2848 = vadd.f32 %v1691, %v2730
        %v2849 = vadd.f32 %v1692, %v2735
        %v2850 = vadd.f32 %v1693, %v2740
        %v2851 = vadd.f32 %v1694, %v2745
        %v2852 = vadd.f32 %v1695, %v2750
        %v2853 = vadd.f32 %v1696, %v2755
        %v2854 = vadd.f32 %v1697, %v2760
        %v2855 = vadd.f32 %v1698, %v2765
        %v2856 = vadd.f32 %v1699, %v2770
        %v2857 = vadd.f32 %v1700, %v2775
        %v2858 = vadd.f32 %v1701, %v2780
        %v2859 = vadd.f32 %v1702, %v2785
        %v2860 = vadd.f32 %v1703, %v2790
        %v2861 = vadd.f32 %v1704, %v2795
        %2862 = vst [vmem:[#allocation4] sm:$0xff] %v2798
        %2863 = vst [vmem:[#allocation4 + $0x8] sm:$0xff] %v2799
        %2864 = vst [vmem:[#allocation4 + $0x10] sm:$0xff] %v2800
        %2865 = vst [vmem:[#allocation4 + $0x18] sm:$0xff] %v2801
        %2866 = vst [vmem:[#allocation4 + $0x20] sm:$0xff] %v2802
        %2867 = vst [vmem:[#allocation4 + $0x28] sm:$0xff] %v2803
        %2868 = vst [vmem:[#allocation4 + $0x30] sm:$0xff] %v2804
        %2869 = vst [vmem:[#allocation4 + $0x38] sm:$0xff] %v2805
        %2870 = vst [vmem:[#allocation4 + $0x40] sm:$0xff] %v2806
        %2871 = vst [vmem:[#allocation4 + $0x48] sm:$0xff] %v2807
        %2872 = vst [vmem:[#allocation4 + $0x50] sm:$0xff] %v2808
        %2873 = vst [vmem:[#allocation4 + $0x58] sm:$0xff] %v2809
        %2874 = vst [vmem:[#allocation4 + $0x60] sm:$0xff] %v2810
        %2875 = vst [vmem:[#allocation4 + $0x68] sm:$0xff] %v2811
        %2876 = vst [vmem:[#allocation4 + $0x70] sm:$0xff] %v2812
        %2877 = vst [vmem:[#allocation4 + $0x78] sm:$0xff] %v2813
        %2878 = vst [vmem:[#allocation4 + $0x80] sm:$0xff] %v2814
        %2879 = vst [vmem:[#allocation4 + $0x88] sm:$0xff] %v2815
        %2880 = vst [vmem:[#allocation4 + $0x90] sm:$0xff] %v2816
        %2881 = vst [vmem:[#allocation4 + $0x98] sm:$0xff] %v2817
        %2882 = vst [vmem:[#allocation4 + $0xa0] sm:$0xff] %v2818
        %2883 = vst [vmem:[#allocation4 + $0xa8] sm:$0xff] %v2819
        %2884 = vst [vmem:[#allocation4 + $0xb0] sm:$0xff] %v2820
        %2885 = vst [vmem:[#allocation4 + $0xb8] sm:$0xff] %v2821
        %2886 = vst [vmem:[#allocation4 + $0xc0] sm:$0xff] %v2822
        %2887 = vst [vmem:[#allocation4 + $0xc8] sm:$0xff] %v2823
        %2888 = vst [vmem:[#allocation4 + $0xd0] sm:$0xff] %v2824
        %2889 = vst [vmem:[#allocation4 + $0xd8] sm:$0xff] %v2825
        %2890 = vst [vmem:[#allocation4 + $0xe0] sm:$0xff] %v2826
        %2891 = vst [vmem:[#allocation4 + $0xe8] sm:$0xff] %v2827
        %2892 = vst [vmem:[#allocation4 + $0xf0] sm:$0xff] %v2828
        %2893 = vst [vmem:[#allocation4 + $0xf8] sm:$0xff] %v2829
        %2894 = vst [vmem:[#allocation4 + $0x100] sm:$0xff] %v2830
        %2895 = vst [vmem:[#allocation4 + $0x108] sm:$0xff] %v2831
        %2896 = vst [vmem:[#allocation4 + $0x110] sm:$0xff] %v2832
        %2897 = vst [vmem:[#allocation4 + $0x118] sm:$0xff] %v2833
        %2898 = vst [vmem:[#allocation4 + $0x120] sm:$0xff] %v2834
        %2899 = vst [vmem:[#allocation4 + $0x128] sm:$0xff] %v2835
        %2900 = vst [vmem:[#allocation4 + $0x130] sm:$0xff] %v2836
        %2901 = vst [vmem:[#allocation4 + $0x138] sm:$0xff] %v2837
        %2902 = vst [vmem:[#allocation4 + $0x140] sm:$0xff] %v2838
        %2903 = vst [vmem:[#allocation4 + $0x148] sm:$0xff] %v2839
        %2904 = vst [vmem:[#allocation4 + $0x150] sm:$0xff] %v2840
        %2905 = vst [vmem:[#allocation4 + $0x158] sm:$0xff] %v2841
        %2906 = vst [vmem:[#allocation4 + $0x160] sm:$0xff] %v2842
        %2907 = vst [vmem:[#allocation4 + $0x168] sm:$0xff] %v2843
        %2908 = vst [vmem:[#allocation4 + $0x170] sm:$0xff] %v2844
        %2909 = vst [vmem:[#allocation4 + $0x178] sm:$0xff] %v2845
        %2910 = vst [vmem:[#allocation4 + $0x180] sm:$0xff] %v2846
        %2911 = vst [vmem:[#allocation4 + $0x188] sm:$0xff] %v2847
        %2912 = vst [vmem:[#allocation4 + $0x190] sm:$0xff] %v2848
        %2913 = vst [vmem:[#allocation4 + $0x198] sm:$0xff] %v2849
        %2914 = vst [vmem:[#allocation4 + $0x1a0] sm:$0xff] %v2850
        %2915 = vst [vmem:[#allocation4 + $0x1a8] sm:$0xff] %v2851
        %2916 = vst [vmem:[#allocation4 + $0x1b0] sm:$0xff] %v2852
        %2917 = vst [vmem:[#allocation4 + $0x1b8] sm:$0xff] %v2853
        %2918 = vst [vmem:[#allocation4 + $0x1c0] sm:$0xff] %v2854
        %2919 = vst [vmem:[#allocation4 + $0x1c8] sm:$0xff] %v2855
        %2920 = vst [vmem:[#allocation4 + $0x1d0] sm:$0xff] %v2856
        %2921 = vst [vmem:[#allocation4 + $0x1d8] sm:$0xff] %v2857
        %2922 = vst [vmem:[#allocation4 + $0x1e0] sm:$0xff] %v2858
        %2923 = vst [vmem:[#allocation4 + $0x1e8] sm:$0xff] %v2859
        %2924 = vst [vmem:[#allocation4 + $0x1f0] sm:$0xff] %v2860
        %2925 = vst [vmem:[#allocation4 + $0x1f8] sm:$0xff] %v2861
      $region52: #{net_forward.3} parent=39 // pred_fallthru
        _
      // Predicated region
      $region53: #{net_forward.3} parent=39 // pred_check
        %p2926 = pneg %p268
      $region54: #{net_forward.3} parent=39 // pred_check_branch
        %2928 = sbr.rel (%p2926) target = $region56
      $region55: #{net_forward.3} parent=39 // pred_region
        %v2929 = vld [vmem:[#allocation4] sm:$0xff]
        %v2930 = vld [vmem:[#allocation4 + $0x8] sm:$0xff]
        %v2931 = vld [vmem:[#allocation4 + $0x10] sm:$0xff]
        %v2932 = vld [vmem:[#allocation4 + $0x18] sm:$0xff]
        %v2933 = vld [vmem:[#allocation4 + $0x20] sm:$0xff]
        %v2934 = vld [vmem:[#allocation4 + $0x28] sm:$0xff]
        %v2935 = vld [vmem:[#allocation4 + $0x30] sm:$0xff]
        %v2936 = vld [vmem:[#allocation4 + $0x38] sm:$0xff]
        %v2937 = vld [vmem:[#allocation4 + $0x40] sm:$0xff]
        %v2938 = vld [vmem:[#allocation4 + $0x48] sm:$0xff]
        %v2939 = vld [vmem:[#allocation4 + $0x50] sm:$0xff]
        %v2940 = vld [vmem:[#allocation4 + $0x58] sm:$0xff]
        %v2941 = vld [vmem:[#allocation4 + $0x60] sm:$0xff]
        %v2942 = vld [vmem:[#allocation4 + $0x68] sm:$0xff]
        %v2943 = vld [vmem:[#allocation4 + $0x70] sm:$0xff]
        %v2944 = vld [vmem:[#allocation4 + $0x78] sm:$0xff]
        %v2945 = vld [vmem:[#allocation4 + $0x80] sm:$0xff]
        %v2946 = vld [vmem:[#allocation4 + $0x88] sm:$0xff]
        %v2947 = vld [vmem:[#allocation4 + $0x90] sm:$0xff]
        %v2948 = vld [vmem:[#allocation4 + $0x98] sm:$0xff]
        %v2949 = vld [vmem:[#allocation4 + $0xa0] sm:$0xff]
        %v2950 = vld [vmem:[#allocation4 + $0xa8] sm:$0xff]
        %v2951 = vld [vmem:[#allocation4 + $0xb0] sm:$0xff]
        %v2952 = vld [vmem:[#allocation4 + $0xb8] sm:$0xff]
        %v2953 = vld [vmem:[#allocation4 + $0xc0] sm:$0xff]
        %v2954 = vld [vmem:[#allocation4 + $0xc8] sm:$0xff]
        %v2955 = vld [vmem:[#allocation4 + $0xd0] sm:$0xff]
        %v2956 = vld [vmem:[#allocation4 + $0xd8] sm:$0xff]
        %v2957 = vld [vmem:[#allocation4 + $0xe0] sm:$0xff]
        %v2958 = vld [vmem:[#allocation4 + $0xe8] sm:$0xff]
        %v2959 = vld [vmem:[#allocation4 + $0xf0] sm:$0xff]
        %v2960 = vld [vmem:[#allocation4 + $0xf8] sm:$0xff]
        %v2961 = vld [vmem:[#allocation4 + $0x100] sm:$0xff]
        %v2962 = vld [vmem:[#allocation4 + $0x108] sm:$0xff]
        %v2963 = vld [vmem:[#allocation4 + $0x110] sm:$0xff]
        %v2964 = vld [vmem:[#allocation4 + $0x118] sm:$0xff]
        %v2965 = vld [vmem:[#allocation4 + $0x120] sm:$0xff]
        %v2966 = vld [vmem:[#allocation4 + $0x128] sm:$0xff]
        %v2967 = vld [vmem:[#allocation4 + $0x130] sm:$0xff]
        %v2968 = vld [vmem:[#allocation4 + $0x138] sm:$0xff]
        %v2969 = vld [vmem:[#allocation4 + $0x140] sm:$0xff]
        %v2970 = vld [vmem:[#allocation4 + $0x148] sm:$0xff]
        %v2971 = vld [vmem:[#allocation4 + $0x150] sm:$0xff]
        %v2972 = vld [vmem:[#allocation4 + $0x158] sm:$0xff]
        %v2973 = vld [vmem:[#allocation4 + $0x160] sm:$0xff]
        %v2974 = vld [vmem:[#allocation4 + $0x168] sm:$0xff]
        %v2975 = vld [vmem:[#allocation4 + $0x170] sm:$0xff]
        %v2976 = vld [vmem:[#allocation4 + $0x178] sm:$0xff]
        %v2977 = vld [vmem:[#allocation4 + $0x180] sm:$0xff]
        %v2978 = vld [vmem:[#allocation4 + $0x188] sm:$0xff]
        %v2979 = vld [vmem:[#allocation4 + $0x190] sm:$0xff]
        %v2980 = vld [vmem:[#allocation4 + $0x198] sm:$0xff]
        %v2981 = vld [vmem:[#allocation4 + $0x1a0] sm:$0xff]
        %v2982 = vld [vmem:[#allocation4 + $0x1a8] sm:$0xff]
        %v2983 = vld [vmem:[#allocation4 + $0x1b0] sm:$0xff]
        %v2984 = vld [vmem:[#allocation4 + $0x1b8] sm:$0xff]
        %v2985 = vld [vmem:[#allocation4 + $0x1c0] sm:$0xff]
        %v2986 = vld [vmem:[#allocation4 + $0x1c8] sm:$0xff]
        %v2987 = vld [vmem:[#allocation4 + $0x1d0] sm:$0xff]
        %v2988 = vld [vmem:[#allocation4 + $0x1d8] sm:$0xff]
        %v2989 = vld [vmem:[#allocation4 + $0x1e0] sm:$0xff]
        %v2990 = vld [vmem:[#allocation4 + $0x1e8] sm:$0xff]
        %v2991 = vld [vmem:[#allocation4 + $0x1f0] sm:$0xff]
        %v2992 = vld [vmem:[#allocation4 + $0x1f8] sm:$0xff]
        %s2993 = smul.u32 %s24, 512
        %p2994 = scmp.lt.s32.totalorder %s23, 0
        %s2995 = ssub.s32 0, %s23
        %s2996 = scalar_select %p2994, %s2995, %s23
        %s2997 = sand.u32 %s2996, 1
        %s2998 = ssub.s32 0, %s2997
        %s2999 = scalar_select %p2994, %s2998, %s2997
        %p3000 = scmp.ne.s32.totalorder %s2999, 0
        %p3001 = scmp.lt.s32.totalorder %s2999, 0
        %p3002 = pnand %p3001, %p3000
        %p3003 = pneg %p3002
        %s3004 = sadd.s32 %s2999, 2
        %s3005 = scalar_select %p3003, %s3004, %s2999
        %s3006 = smul.u32 %s3005, 512
        %s3007 = sadd.s32 %s2993, %s3006
        %s3008 = scalar_lea.vmem [#allocation2], %s3007
        %3009 = vst [vmem:[%s3008] sm:$0xff] %v2929
        %3010 = vst [vmem:[%s3008 + $0x8] sm:$0xff] %v2930
        %3011 = vst [vmem:[%s3008 + $0x10] sm:$0xff] %v2931
        %3012 = vst [vmem:[%s3008 + $0x18] sm:$0xff] %v2932
        %3013 = vst [vmem:[%s3008 + $0x20] sm:$0xff] %v2933
        %3014 = vst [vmem:[%s3008 + $0x28] sm:$0xff] %v2934
        %3015 = vst [vmem:[%s3008 + $0x30] sm:$0xff] %v2935
        %3016 = vst [vmem:[%s3008 + $0x38] sm:$0xff] %v2936
        %3017 = vst [vmem:[%s3008 + $0x40] sm:$0xff] %v2937
        %3018 = vst [vmem:[%s3008 + $0x48] sm:$0xff] %v2938
        %3019 = vst [vmem:[%s3008 + $0x50] sm:$0xff] %v2939
        %3020 = vst [vmem:[%s3008 + $0x58] sm:$0xff] %v2940
        %3021 = vst [vmem:[%s3008 + $0x60] sm:$0xff] %v2941
        %3022 = vst [vmem:[%s3008 + $0x68] sm:$0xff] %v2942
        %3023 = vst [vmem:[%s3008 + $0x70] sm:$0xff] %v2943
        %3024 = vst [vmem:[%s3008 + $0x78] sm:$0xff] %v2944
        %3025 = vst [vmem:[%s3008 + $0x80] sm:$0xff] %v2945
        %3026 = vst [vmem:[%s3008 + $0x88] sm:$0xff] %v2946
        %3027 = vst [vmem:[%s3008 + $0x90] sm:$0xff] %v2947
        %3028 = vst [vmem:[%s3008 + $0x98] sm:$0xff] %v2948
        %3029 = vst [vmem:[%s3008 + $0xa0] sm:$0xff] %v2949
        %3030 = vst [vmem:[%s3008 + $0xa8] sm:$0xff] %v2950
        %3031 = vst [vmem:[%s3008 + $0xb0] sm:$0xff] %v2951
        %3032 = vst [vmem:[%s3008 + $0xb8] sm:$0xff] %v2952
        %3033 = vst [vmem:[%s3008 + $0xc0] sm:$0xff] %v2953
        %3034 = vst [vmem:[%s3008 + $0xc8] sm:$0xff] %v2954
        %3035 = vst [vmem:[%s3008 + $0xd0] sm:$0xff] %v2955
        %3036 = vst [vmem:[%s3008 + $0xd8] sm:$0xff] %v2956
        %3037 = vst [vmem:[%s3008 + $0xe0] sm:$0xff] %v2957
        %3038 = vst [vmem:[%s3008 + $0xe8] sm:$0xff] %v2958
        %3039 = vst [vmem:[%s3008 + $0xf0] sm:$0xff] %v2959
        %3040 = vst [vmem:[%s3008 + $0xf8] sm:$0xff] %v2960
        %3041 = vst [vmem:[%s3008 + $0x100] sm:$0xff] %v2961
        %3042 = vst [vmem:[%s3008 + $0x108] sm:$0xff] %v2962
        %3043 = vst [vmem:[%s3008 + $0x110] sm:$0xff] %v2963
        %3044 = vst [vmem:[%s3008 + $0x118] sm:$0xff] %v2964
        %3045 = vst [vmem:[%s3008 + $0x120] sm:$0xff] %v2965
        %3046 = vst [vmem:[%s3008 + $0x128] sm:$0xff] %v2966
        %3047 = vst [vmem:[%s3008 + $0x130] sm:$0xff] %v2967
        %3048 = vst [vmem:[%s3008 + $0x138] sm:$0xff] %v2968
        %3049 = vst [vmem:[%s3008 + $0x140] sm:$0xff] %v2969
        %3050 = vst [vmem:[%s3008 + $0x148] sm:$0xff] %v2970
        %3051 = vst [vmem:[%s3008 + $0x150] sm:$0xff] %v2971
        %3052 = vst [vmem:[%s3008 + $0x158] sm:$0xff] %v2972
        %3053 = vst [vmem:[%s3008 + $0x160] sm:$0xff] %v2973
        %3054 = vst [vmem:[%s3008 + $0x168] sm:$0xff] %v2974
        %3055 = vst [vmem:[%s3008 + $0x170] sm:$0xff] %v2975
        %3056 = vst [vmem:[%s3008 + $0x178] sm:$0xff] %v2976
        %3057 = vst [vmem:[%s3008 + $0x180] sm:$0xff] %v2977
        %3058 = vst [vmem:[%s3008 + $0x188] sm:$0xff] %v2978
        %3059 = vst [vmem:[%s3008 + $0x190] sm:$0xff] %v2979
        %3060 = vst [vmem:[%s3008 + $0x198] sm:$0xff] %v2980
        %3061 = vst [vmem:[%s3008 + $0x1a0] sm:$0xff] %v2981
        %3062 = vst [vmem:[%s3008 + $0x1a8] sm:$0xff] %v2982
        %3063 = vst [vmem:[%s3008 + $0x1b0] sm:$0xff] %v2983
        %3064 = vst [vmem:[%s3008 + $0x1b8] sm:$0xff] %v2984
        %3065 = vst [vmem:[%s3008 + $0x1c0] sm:$0xff] %v2985
        %3066 = vst [vmem:[%s3008 + $0x1c8] sm:$0xff] %v2986
        %3067 = vst [vmem:[%s3008 + $0x1d0] sm:$0xff] %v2987
        %3068 = vst [vmem:[%s3008 + $0x1d8] sm:$0xff] %v2988
        %3069 = vst [vmem:[%s3008 + $0x1e0] sm:$0xff] %v2989
        %3070 = vst [vmem:[%s3008 + $0x1e8] sm:$0xff] %v2990
        %3071 = vst [vmem:[%s3008 + $0x1f0] sm:$0xff] %v2991
        %3072 = vst [vmem:[%s3008 + $0x1f8] sm:$0xff] %v2992
        %v3073 = vld [vmem:[%s3] sm:$0x1]
        %v3075 = vlaneseq
        %v3076 = vshrl.u32 %v3075, 7
        %v3077 = vsub.s32 0, %v3076
        %v3078 = vrot.slane %v3073, %v3077
        %v3080 = vmul.f32 %v2929, %v3078
        %v3081 = vmul.f32 %v2930, %v3078
        %v3082 = vmul.f32 %v2931, %v3078
        %v3083 = vmul.f32 %v2932, %v3078
        %v3084 = vmul.f32 %v2933, %v3078
        %v3085 = vmul.f32 %v2934, %v3078
        %v3086 = vmul.f32 %v2935, %v3078
        %v3087 = vmul.f32 %v2936, %v3078
        %v3088 = vmul.f32 %v2937, %v3078
        %v3089 = vmul.f32 %v2938, %v3078
        %v3090 = vmul.f32 %v2939, %v3078
        %v3091 = vmul.f32 %v2940, %v3078
        %v3092 = vmul.f32 %v2941, %v3078
        %v3093 = vmul.f32 %v2942, %v3078
        %v3094 = vmul.f32 %v2943, %v3078
        %v3095 = vmul.f32 %v2944, %v3078
        %v3096 = vmul.f32 %v2945, %v3078
        %v3097 = vmul.f32 %v2946, %v3078
        %v3098 = vmul.f32 %v2947, %v3078
        %v3099 = vmul.f32 %v2948, %v3078
        %v3100 = vmul.f32 %v2949, %v3078
        %v3101 = vmul.f32 %v2950, %v3078
        %v3102 = vmul.f32 %v2951, %v3078
        %v3103 = vmul.f32 %v2952, %v3078
        %v3104 = vmul.f32 %v2953, %v3078
        %v3105 = vmul.f32 %v2954, %v3078
        %v3106 = vmul.f32 %v2955, %v3078
        %v3107 = vmul.f32 %v2956, %v3078
        %v3108 = vmul.f32 %v2957, %v3078
        %v3109 = vmul.f32 %v2958, %v3078
        %v3110 = vmul.f32 %v2959, %v3078
        %v3111 = vmul.f32 %v2960, %v3078
        %v3112 = vmul.f32 %v2961, %v3078
        %v3113 = vmul.f32 %v2962, %v3078
        %v3114 = vmul.f32 %v2963, %v3078
        %v3115 = vmul.f32 %v2964, %v3078
        %v3116 = vmul.f32 %v2965, %v3078
        %v3117 = vmul.f32 %v2966, %v3078
        %v3118 = vmul.f32 %v2967, %v3078
        %v3119 = vmul.f32 %v2968, %v3078
        %v3120 = vmul.f32 %v2969, %v3078
        %v3121 = vmul.f32 %v2970, %v3078
        %v3122 = vmul.f32 %v2971, %v3078
        %v3123 = vmul.f32 %v2972, %v3078
        %v3124 = vmul.f32 %v2973, %v3078
        %v3125 = vmul.f32 %v2974, %v3078
        %v3126 = vmul.f32 %v2975, %v3078
        %v3127 = vmul.f32 %v2976, %v3078
        %v3128 = vmul.f32 %v2977, %v3078
        %v3129 = vmul.f32 %v2978, %v3078
        %v3130 = vmul.f32 %v2979, %v3078
        %v3131 = vmul.f32 %v2980, %v3078
        %v3132 = vmul.f32 %v2981, %v3078
        %v3133 = vmul.f32 %v2982, %v3078
        %v3134 = vmul.f32 %v2983, %v3078
        %v3135 = vmul.f32 %v2984, %v3078
        %v3136 = vmul.f32 %v2985, %v3078
        %v3137 = vmul.f32 %v2986, %v3078
        %v3138 = vmul.f32 %v2987, %v3078
        %v3139 = vmul.f32 %v2988, %v3078
        %v3140 = vmul.f32 %v2989, %v3078
        %v3141 = vmul.f32 %v2990, %v3078
        %v3142 = vmul.f32 %v2991, %v3078
        %v3143 = vmul.f32 %v2992, %v3078
        %3144 = vadd.xlane.f32.xlu0 %v3080
        %v3145 = vpop.xlane.xlu0 %3144
        %3146 = vadd.xlane.f32.xlu0 %v3081
        %v3147 = vpop.xlane.xlu0 %3146
        %3148 = vadd.xlane.f32.xlu0 %v3082
        %v3149 = vpop.xlane.xlu0 %3148
        %3150 = vadd.xlane.f32.xlu0 %v3083
        %v3151 = vpop.xlane.xlu0 %3150
        %3152 = vadd.xlane.f32.xlu0 %v3084
        %v3153 = vpop.xlane.xlu0 %3152
        %3154 = vadd.xlane.f32.xlu0 %v3085
        %v3155 = vpop.xlane.xlu0 %3154
        %3156 = vadd.xlane.f32.xlu0 %v3086
        %v3157 = vpop.xlane.xlu0 %3156
        %3158 = vadd.xlane.f32.xlu0 %v3087
        %v3159 = vpop.xlane.xlu0 %3158
        %3160 = vadd.xlane.f32.xlu0 %v3088
        %v3161 = vpop.xlane.xlu0 %3160
        %3162 = vadd.xlane.f32.xlu0 %v3089
        %v3163 = vpop.xlane.xlu0 %3162
        %3164 = vadd.xlane.f32.xlu0 %v3090
        %v3165 = vpop.xlane.xlu0 %3164
        %3166 = vadd.xlane.f32.xlu0 %v3091
        %v3167 = vpop.xlane.xlu0 %3166
        %3168 = vadd.xlane.f32.xlu0 %v3092
        %v3169 = vpop.xlane.xlu0 %3168
        %3170 = vadd.xlane.f32.xlu0 %v3093
        %v3171 = vpop.xlane.xlu0 %3170
        %3172 = vadd.xlane.f32.xlu0 %v3094
        %v3173 = vpop.xlane.xlu0 %3172
        %3174 = vadd.xlane.f32.xlu0 %v3095
        %v3175 = vpop.xlane.xlu0 %3174
        %3176 = vadd.xlane.f32.xlu0 %v3096
        %v3177 = vpop.xlane.xlu0 %3176
        %3178 = vadd.xlane.f32.xlu0 %v3097
        %v3179 = vpop.xlane.xlu0 %3178
        %3180 = vadd.xlane.f32.xlu0 %v3098
        %v3181 = vpop.xlane.xlu0 %3180
        %3182 = vadd.xlane.f32.xlu0 %v3099
        %v3183 = vpop.xlane.xlu0 %3182
        %3184 = vadd.xlane.f32.xlu0 %v3100
        %v3185 = vpop.xlane.xlu0 %3184
        %3186 = vadd.xlane.f32.xlu0 %v3101
        %v3187 = vpop.xlane.xlu0 %3186
        %3188 = vadd.xlane.f32.xlu0 %v3102
        %v3189 = vpop.xlane.xlu0 %3188
        %3190 = vadd.xlane.f32.xlu0 %v3103
        %v3191 = vpop.xlane.xlu0 %3190
        %3192 = vadd.xlane.f32.xlu0 %v3104
        %v3193 = vpop.xlane.xlu0 %3192
        %3194 = vadd.xlane.f32.xlu0 %v3105
        %v3195 = vpop.xlane.xlu0 %3194
        %3196 = vadd.xlane.f32.xlu0 %v3106
        %v3197 = vpop.xlane.xlu0 %3196
        %3198 = vadd.xlane.f32.xlu0 %v3107
        %v3199 = vpop.xlane.xlu0 %3198
        %3200 = vadd.xlane.f32.xlu0 %v3108
        %v3201 = vpop.xlane.xlu0 %3200
        %3202 = vadd.xlane.f32.xlu0 %v3109
        %v3203 = vpop.xlane.xlu0 %3202
        %3204 = vadd.xlane.f32.xlu0 %v3110
        %v3205 = vpop.xlane.xlu0 %3204
        %3206 = vadd.xlane.f32.xlu0 %v3111
        %v3207 = vpop.xlane.xlu0 %3206
        %3208 = vadd.xlane.f32.xlu0 %v3112
        %v3209 = vpop.xlane.xlu0 %3208
        %3210 = vadd.xlane.f32.xlu0 %v3113
        %v3211 = vpop.xlane.xlu0 %3210
        %3212 = vadd.xlane.f32.xlu0 %v3114
        %v3213 = vpop.xlane.xlu0 %3212
        %3214 = vadd.xlane.f32.xlu0 %v3115
        %v3215 = vpop.xlane.xlu0 %3214
        %3216 = vadd.xlane.f32.xlu0 %v3116
        %v3217 = vpop.xlane.xlu0 %3216
        %3218 = vadd.xlane.f32.xlu0 %v3117
        %v3219 = vpop.xlane.xlu0 %3218
        %3220 = vadd.xlane.f32.xlu0 %v3118
        %v3221 = vpop.xlane.xlu0 %3220
        %3222 = vadd.xlane.f32.xlu0 %v3119
        %v3223 = vpop.xlane.xlu0 %3222
        %3224 = vadd.xlane.f32.xlu0 %v3120
        %v3225 = vpop.xlane.xlu0 %3224
        %3226 = vadd.xlane.f32.xlu0 %v3121
        %v3227 = vpop.xlane.xlu0 %3226
        %3228 = vadd.xlane.f32.xlu0 %v3122
        %v3229 = vpop.xlane.xlu0 %3228
        %3230 = vadd.xlane.f32.xlu0 %v3123
        %v3231 = vpop.xlane.xlu0 %3230
        %3232 = vadd.xlane.f32.xlu0 %v3124
        %v3233 = vpop.xlane.xlu0 %3232
        %3234 = vadd.xlane.f32.xlu0 %v3125
        %v3235 = vpop.xlane.xlu0 %3234
        %3236 = vadd.xlane.f32.xlu0 %v3126
        %v3237 = vpop.xlane.xlu0 %3236
        %3238 = vadd.xlane.f32.xlu0 %v3127
        %v3239 = vpop.xlane.xlu0 %3238
        %3240 = vadd.xlane.f32.xlu0 %v3128
        %v3241 = vpop.xlane.xlu0 %3240
        %3242 = vadd.xlane.f32.xlu0 %v3129
        %v3243 = vpop.xlane.xlu0 %3242
        %3244 = vadd.xlane.f32.xlu0 %v3130
        %v3245 = vpop.xlane.xlu0 %3244
        %3246 = vadd.xlane.f32.xlu0 %v3131
        %v3247 = vpop.xlane.xlu0 %3246
        %3248 = vadd.xlane.f32.xlu0 %v3132
        %v3249 = vpop.xlane.xlu0 %3248
        %3250 = vadd.xlane.f32.xlu0 %v3133
        %v3251 = vpop.xlane.xlu0 %3250
        %3252 = vadd.xlane.f32.xlu0 %v3134
        %v3253 = vpop.xlane.xlu0 %3252
        %3254 = vadd.xlane.f32.xlu0 %v3135
        %v3255 = vpop.xlane.xlu0 %3254
        %3256 = vadd.xlane.f32.xlu0 %v3136
        %v3257 = vpop.xlane.xlu0 %3256
        %3258 = vadd.xlane.f32.xlu0 %v3137
        %v3259 = vpop.xlane.xlu0 %3258
        %3260 = vadd.xlane.f32.xlu0 %v3138
        %v3261 = vpop.xlane.xlu0 %3260
        %3262 = vadd.xlane.f32.xlu0 %v3139
        %v3263 = vpop.xlane.xlu0 %3262
        %3264 = vadd.xlane.f32.xlu0 %v3140
        %v3265 = vpop.xlane.xlu0 %3264
        %3266 = vadd.xlane.f32.xlu0 %v3141
        %v3267 = vpop.xlane.xlu0 %3266
        %3268 = vadd.xlane.f32.xlu0 %v3142
        %v3269 = vpop.xlane.xlu0 %3268
        %3270 = vadd.xlane.f32.xlu0 %v3143
        %v3271 = vpop.xlane.xlu0 %3270
        %v3272 = vld [vmem:[#allocation5] sm:$0x1]
        %v3274 = vlaneseq
        %v3275 = vshrl.u32 %v3274, 7
        %v3276 = vsub.s32 0, %v3275
        %v3277 = vrot.slane %v3272, %v3276
        %v3279 = vadd.f32 %v3145, %v3277
        %v3280 = vadd.f32 %v3147, %v3277
        %v3281 = vadd.f32 %v3149, %v3277
        %v3282 = vadd.f32 %v3151, %v3277
        %v3283 = vadd.f32 %v3153, %v3277
        %v3284 = vadd.f32 %v3155, %v3277
        %v3285 = vadd.f32 %v3157, %v3277
        %v3286 = vadd.f32 %v3159, %v3277
        %v3287 = vadd.f32 %v3161, %v3277
        %v3288 = vadd.f32 %v3163, %v3277
        %v3289 = vadd.f32 %v3165, %v3277
        %v3290 = vadd.f32 %v3167, %v3277
        %v3291 = vadd.f32 %v3169, %v3277
        %v3292 = vadd.f32 %v3171, %v3277
        %v3293 = vadd.f32 %v3173, %v3277
        %v3294 = vadd.f32 %v3175, %v3277
        %v3295 = vadd.f32 %v3177, %v3277
        %v3296 = vadd.f32 %v3179, %v3277
        %v3297 = vadd.f32 %v3181, %v3277
        %v3298 = vadd.f32 %v3183, %v3277
        %v3299 = vadd.f32 %v3185, %v3277
        %v3300 = vadd.f32 %v3187, %v3277
        %v3301 = vadd.f32 %v3189, %v3277
        %v3302 = vadd.f32 %v3191, %v3277
        %v3303 = vadd.f32 %v3193, %v3277
        %v3304 = vadd.f32 %v3195, %v3277
        %v3305 = vadd.f32 %v3197, %v3277
        %v3306 = vadd.f32 %v3199, %v3277
        %v3307 = vadd.f32 %v3201, %v3277
        %v3308 = vadd.f32 %v3203, %v3277
        %v3309 = vadd.f32 %v3205, %v3277
        %v3310 = vadd.f32 %v3207, %v3277
        %v3311 = vadd.f32 %v3209, %v3277
        %v3312 = vadd.f32 %v3211, %v3277
        %v3313 = vadd.f32 %v3213, %v3277
        %v3314 = vadd.f32 %v3215, %v3277
        %v3315 = vadd.f32 %v3217, %v3277
        %v3316 = vadd.f32 %v3219, %v3277
        %v3317 = vadd.f32 %v3221, %v3277
        %v3318 = vadd.f32 %v3223, %v3277
        %v3319 = vadd.f32 %v3225, %v3277
        %v3320 = vadd.f32 %v3227, %v3277
        %v3321 = vadd.f32 %v3229, %v3277
        %v3322 = vadd.f32 %v3231, %v3277
        %v3323 = vadd.f32 %v3233, %v3277
        %v3324 = vadd.f32 %v3235, %v3277
        %v3325 = vadd.f32 %v3237, %v3277
        %v3326 = vadd.f32 %v3239, %v3277
        %v3327 = vadd.f32 %v3241, %v3277
        %v3328 = vadd.f32 %v3243, %v3277
        %v3329 = vadd.f32 %v3245, %v3277
        %v3330 = vadd.f32 %v3247, %v3277
        %v3331 = vadd.f32 %v3249, %v3277
        %v3332 = vadd.f32 %v3251, %v3277
        %v3333 = vadd.f32 %v3253, %v3277
        %v3334 = vadd.f32 %v3255, %v3277
        %v3335 = vadd.f32 %v3257, %v3277
        %v3336 = vadd.f32 %v3259, %v3277
        %v3337 = vadd.f32 %v3261, %v3277
        %v3338 = vadd.f32 %v3263, %v3277
        %v3339 = vadd.f32 %v3265, %v3277
        %v3340 = vadd.f32 %v3267, %v3277
        %v3341 = vadd.f32 %v3269, %v3277
        %v3342 = vadd.f32 %v3271, %v3277
        %v3343 = vxor.u32 %v3279, 2147483648
        %v3344 = vxor.u32 %v3280, 2147483648
        %v3345 = vxor.u32 %v3281, 2147483648
        %v3346 = vxor.u32 %v3282, 2147483648
        %v3347 = vxor.u32 %v3283, 2147483648
        %v3348 = vxor.u32 %v3284, 2147483648
        %v3349 = vxor.u32 %v3285, 2147483648
        %v3350 = vxor.u32 %v3286, 2147483648
        %v3351 = vxor.u32 %v3287, 2147483648
        %v3352 = vxor.u32 %v3288, 2147483648
        %v3353 = vxor.u32 %v3289, 2147483648
        %v3354 = vxor.u32 %v3290, 2147483648
        %v3355 = vxor.u32 %v3291, 2147483648
        %v3356 = vxor.u32 %v3292, 2147483648
        %v3357 = vxor.u32 %v3293, 2147483648
        %v3358 = vxor.u32 %v3294, 2147483648
        %v3359 = vxor.u32 %v3295, 2147483648
        %v3360 = vxor.u32 %v3296, 2147483648
        %v3361 = vxor.u32 %v3297, 2147483648
        %v3362 = vxor.u32 %v3298, 2147483648
        %v3363 = vxor.u32 %v3299, 2147483648
        %v3364 = vxor.u32 %v3300, 2147483648
        %v3365 = vxor.u32 %v3301, 2147483648
        %v3366 = vxor.u32 %v3302, 2147483648
        %v3367 = vxor.u32 %v3303, 2147483648
        %v3368 = vxor.u32 %v3304, 2147483648
        %v3369 = vxor.u32 %v3305, 2147483648
        %v3370 = vxor.u32 %v3306, 2147483648
        %v3371 = vxor.u32 %v3307, 2147483648
        %v3372 = vxor.u32 %v3308, 2147483648
        %v3373 = vxor.u32 %v3309, 2147483648
        %v3374 = vxor.u32 %v3310, 2147483648
        %v3375 = vxor.u32 %v3311, 2147483648
        %v3376 = vxor.u32 %v3312, 2147483648
        %v3377 = vxor.u32 %v3313, 2147483648
        %v3378 = vxor.u32 %v3314, 2147483648
        %v3379 = vxor.u32 %v3315, 2147483648
        %v3380 = vxor.u32 %v3316, 2147483648
        %v3381 = vxor.u32 %v3317, 2147483648
        %v3382 = vxor.u32 %v3318, 2147483648
        %v3383 = vxor.u32 %v3319, 2147483648
        %v3384 = vxor.u32 %v3320, 2147483648
        %v3385 = vxor.u32 %v3321, 2147483648
        %v3386 = vxor.u32 %v3322, 2147483648
        %v3387 = vxor.u32 %v3323, 2147483648
        %v3388 = vxor.u32 %v3324, 2147483648
        %v3389 = vxor.u32 %v3325, 2147483648
        %v3390 = vxor.u32 %v3326, 2147483648
        %v3391 = vxor.u32 %v3327, 2147483648
        %v3392 = vxor.u32 %v3328, 2147483648
        %v3393 = vxor.u32 %v3329, 2147483648
        %v3394 = vxor.u32 %v3330, 2147483648
        %v3395 = vxor.u32 %v3331, 2147483648
        %v3396 = vxor.u32 %v3332, 2147483648
        %v3397 = vxor.u32 %v3333, 2147483648
        %v3398 = vxor.u32 %v3334, 2147483648
        %v3399 = vxor.u32 %v3335, 2147483648
        %v3400 = vxor.u32 %v3336, 2147483648
        %v3401 = vxor.u32 %v3337, 2147483648
        %v3402 = vxor.u32 %v3338, 2147483648
        %v3403 = vxor.u32 %v3339, 2147483648
        %v3404 = vxor.u32 %v3340, 2147483648
        %v3405 = vxor.u32 %v3341, 2147483648
        %v3406 = vxor.u32 %v3342, 2147483648
        %v3407 = vmul.f32 %v3343, 1.442695
        %v3408 = vpow.pop %v3407
        %v3409 = vmul.f32 %v3344, 1.442695
        %v3410 = vpow.pop %v3409
        %v3411 = vmul.f32 %v3345, 1.442695
        %v3412 = vpow.pop %v3411
        %v3413 = vmul.f32 %v3346, 1.442695
        %v3414 = vpow.pop %v3413
        %v3415 = vmul.f32 %v3347, 1.442695
        %v3416 = vpow.pop %v3415
        %v3417 = vmul.f32 %v3348, 1.442695
        %v3418 = vpow.pop %v3417
        %v3419 = vmul.f32 %v3349, 1.442695
        %v3420 = vpow.pop %v3419
        %v3421 = vmul.f32 %v3350, 1.442695
        %v3422 = vpow.pop %v3421
        %v3423 = vmul.f32 %v3351, 1.442695
        %v3424 = vpow.pop %v3423
        %v3425 = vmul.f32 %v3352, 1.442695
        %v3426 = vpow.pop %v3425
        %v3427 = vmul.f32 %v3353, 1.442695
        %v3428 = vpow.pop %v3427
        %v3429 = vmul.f32 %v3354, 1.442695
        %v3430 = vpow.pop %v3429
        %v3431 = vmul.f32 %v3355, 1.442695
        %v3432 = vpow.pop %v3431
        %v3433 = vmul.f32 %v3356, 1.442695
        %v3434 = vpow.pop %v3433
        %v3435 = vmul.f32 %v3357, 1.442695
        %v3436 = vpow.pop %v3435
        %v3437 = vmul.f32 %v3358, 1.442695
        %v3438 = vpow.pop %v3437
        %v3439 = vmul.f32 %v3359, 1.442695
        %v3440 = vpow.pop %v3439
        %v3441 = vmul.f32 %v3360, 1.442695
        %v3442 = vpow.pop %v3441
        %v3443 = vmul.f32 %v3361, 1.442695
        %v3444 = vpow.pop %v3443
        %v3445 = vmul.f32 %v3362, 1.442695
        %v3446 = vpow.pop %v3445
        %v3447 = vmul.f32 %v3363, 1.442695
        %v3448 = vpow.pop %v3447
        %v3449 = vmul.f32 %v3364, 1.442695
        %v3450 = vpow.pop %v3449
        %v3451 = vmul.f32 %v3365, 1.442695
        %v3452 = vpow.pop %v3451
        %v3453 = vmul.f32 %v3366, 1.442695
        %v3454 = vpow.pop %v3453
        %v3455 = vmul.f32 %v3367, 1.442695
        %v3456 = vpow.pop %v3455
        %v3457 = vmul.f32 %v3368, 1.442695
        %v3458 = vpow.pop %v3457
        %v3459 = vmul.f32 %v3369, 1.442695
        %v3460 = vpow.pop %v3459
        %v3461 = vmul.f32 %v3370, 1.442695
        %v3462 = vpow.pop %v3461
        %v3463 = vmul.f32 %v3371, 1.442695
        %v3464 = vpow.pop %v3463
        %v3465 = vmul.f32 %v3372, 1.442695
        %v3466 = vpow.pop %v3465
        %v3467 = vmul.f32 %v3373, 1.442695
        %v3468 = vpow.pop %v3467
        %v3469 = vmul.f32 %v3374, 1.442695
        %v3470 = vpow.pop %v3469
        %v3471 = vmul.f32 %v3375, 1.442695
        %v3472 = vpow.pop %v3471
        %v3473 = vmul.f32 %v3376, 1.442695
        %v3474 = vpow.pop %v3473
        %v3475 = vmul.f32 %v3377, 1.442695
        %v3476 = vpow.pop %v3475
        %v3477 = vmul.f32 %v3378, 1.442695
        %v3478 = vpow.pop %v3477
        %v3479 = vmul.f32 %v3379, 1.442695
        %v3480 = vpow.pop %v3479
        %v3481 = vmul.f32 %v3380, 1.442695
        %v3482 = vpow.pop %v3481
        %v3483 = vmul.f32 %v3381, 1.442695
        %v3484 = vpow.pop %v3483
        %v3485 = vmul.f32 %v3382, 1.442695
        %v3486 = vpow.pop %v3485
        %v3487 = vmul.f32 %v3383, 1.442695
        %v3488 = vpow.pop %v3487
        %v3489 = vmul.f32 %v3384, 1.442695
        %v3490 = vpow.pop %v3489
        %v3491 = vmul.f32 %v3385, 1.442695
        %v3492 = vpow.pop %v3491
        %v3493 = vmul.f32 %v3386, 1.442695
        %v3494 = vpow.pop %v3493
        %v3495 = vmul.f32 %v3387, 1.442695
        %v3496 = vpow.pop %v3495
        %v3497 = vmul.f32 %v3388, 1.442695
        %v3498 = vpow.pop %v3497
        %v3499 = vmul.f32 %v3389, 1.442695
        %v3500 = vpow.pop %v3499
        %v3501 = vmul.f32 %v3390, 1.442695
        %v3502 = vpow.pop %v3501
        %v3503 = vmul.f32 %v3391, 1.442695
        %v3504 = vpow.pop %v3503
        %v3505 = vmul.f32 %v3392, 1.442695
        %v3506 = vpow.pop %v3505
        %v3507 = vmul.f32 %v3393, 1.442695
        %v3508 = vpow.pop %v3507
        %v3509 = vmul.f32 %v3394, 1.442695
        %v3510 = vpow.pop %v3509
        %v3511 = vmul.f32 %v3395, 1.442695
        %v3512 = vpow.pop %v3511
        %v3513 = vmul.f32 %v3396, 1.442695
        %v3514 = vpow.pop %v3513
        %v3515 = vmul.f32 %v3397, 1.442695
        %v3516 = vpow.pop %v3515
        %v3517 = vmul.f32 %v3398, 1.442695
        %v3518 = vpow.pop %v3517
        %v3519 = vmul.f32 %v3399, 1.442695
        %v3520 = vpow.pop %v3519
        %v3521 = vmul.f32 %v3400, 1.442695
        %v3522 = vpow.pop %v3521
        %v3523 = vmul.f32 %v3401, 1.442695
        %v3524 = vpow.pop %v3523
        %v3525 = vmul.f32 %v3402, 1.442695
        %v3526 = vpow.pop %v3525
        %v3527 = vmul.f32 %v3403, 1.442695
        %v3528 = vpow.pop %v3527
        %v3529 = vmul.f32 %v3404, 1.442695
        %v3530 = vpow.pop %v3529
        %v3531 = vmul.f32 %v3405, 1.442695
        %v3532 = vpow.pop %v3531
        %v3533 = vmul.f32 %v3406, 1.442695
        %v3534 = vpow.pop %v3533
        %v3535 = vadd.f32 %v3408, 1.0
        %v3536 = vadd.f32 %v3410, 1.0
        %v3537 = vadd.f32 %v3412, 1.0
        %v3538 = vadd.f32 %v3414, 1.0
        %v3539 = vadd.f32 %v3416, 1.0
        %v3540 = vadd.f32 %v3418, 1.0
        %v3541 = vadd.f32 %v3420, 1.0
        %v3542 = vadd.f32 %v3422, 1.0
        %v3543 = vadd.f32 %v3424, 1.0
        %v3544 = vadd.f32 %v3426, 1.0
        %v3545 = vadd.f32 %v3428, 1.0
        %v3546 = vadd.f32 %v3430, 1.0
        %v3547 = vadd.f32 %v3432, 1.0
        %v3548 = vadd.f32 %v3434, 1.0
        %v3549 = vadd.f32 %v3436, 1.0
        %v3550 = vadd.f32 %v3438, 1.0
        %v3551 = vadd.f32 %v3440, 1.0
        %v3552 = vadd.f32 %v3442, 1.0
        %v3553 = vadd.f32 %v3444, 1.0
        %v3554 = vadd.f32 %v3446, 1.0
        %v3555 = vadd.f32 %v3448, 1.0
        %v3556 = vadd.f32 %v3450, 1.0
        %v3557 = vadd.f32 %v3452, 1.0
        %v3558 = vadd.f32 %v3454, 1.0
        %v3559 = vadd.f32 %v3456, 1.0
        %v3560 = vadd.f32 %v3458, 1.0
        %v3561 = vadd.f32 %v3460, 1.0
        %v3562 = vadd.f32 %v3462, 1.0
        %v3563 = vadd.f32 %v3464, 1.0
        %v3564 = vadd.f32 %v3466, 1.0
        %v3565 = vadd.f32 %v3468, 1.0
        %v3566 = vadd.f32 %v3470, 1.0
        %v3567 = vadd.f32 %v3472, 1.0
        %v3568 = vadd.f32 %v3474, 1.0
        %v3569 = vadd.f32 %v3476, 1.0
        %v3570 = vadd.f32 %v3478, 1.0
        %v3571 = vadd.f32 %v3480, 1.0
        %v3572 = vadd.f32 %v3482, 1.0
        %v3573 = vadd.f32 %v3484, 1.0
        %v3574 = vadd.f32 %v3486, 1.0
        %v3575 = vadd.f32 %v3488, 1.0
        %v3576 = vadd.f32 %v3490, 1.0
        %v3577 = vadd.f32 %v3492, 1.0
        %v3578 = vadd.f32 %v3494, 1.0
        %v3579 = vadd.f32 %v3496, 1.0
        %v3580 = vadd.f32 %v3498, 1.0
        %v3581 = vadd.f32 %v3500, 1.0
        %v3582 = vadd.f32 %v3502, 1.0
        %v3583 = vadd.f32 %v3504, 1.0
        %v3584 = vadd.f32 %v3506, 1.0
        %v3585 = vadd.f32 %v3508, 1.0
        %v3586 = vadd.f32 %v3510, 1.0
        %v3587 = vadd.f32 %v3512, 1.0
        %v3588 = vadd.f32 %v3514, 1.0
        %v3589 = vadd.f32 %v3516, 1.0
        %v3590 = vadd.f32 %v3518, 1.0
        %v3591 = vadd.f32 %v3520, 1.0
        %v3592 = vadd.f32 %v3522, 1.0
        %v3593 = vadd.f32 %v3524, 1.0
        %v3594 = vadd.f32 %v3526, 1.0
        %v3595 = vadd.f32 %v3528, 1.0
        %v3596 = vadd.f32 %v3530, 1.0
        %v3597 = vadd.f32 %v3532, 1.0
        %v3598 = vadd.f32 %v3534, 1.0
        %v3599 = vrcp.pop %v3535
        %v3600 = vmul.f32 1.0, %v3599
        %v3601 = vrcp.pop %v3536
        %v3602 = vmul.f32 1.0, %v3601
        %v3603 = vrcp.pop %v3537
        %v3604 = vmul.f32 1.0, %v3603
        %v3605 = vrcp.pop %v3538
        %v3606 = vmul.f32 1.0, %v3605
        %v3607 = vrcp.pop %v3539
        %v3608 = vmul.f32 1.0, %v3607
        %v3609 = vrcp.pop %v3540
        %v3610 = vmul.f32 1.0, %v3609
        %v3611 = vrcp.pop %v3541
        %v3612 = vmul.f32 1.0, %v3611
        %v3613 = vrcp.pop %v3542
        %v3614 = vmul.f32 1.0, %v3613
        %v3615 = vrcp.pop %v3543
        %v3616 = vmul.f32 1.0, %v3615
        %v3617 = vrcp.pop %v3544
        %v3618 = vmul.f32 1.0, %v3617
        %v3619 = vrcp.pop %v3545
        %v3620 = vmul.f32 1.0, %v3619
        %v3621 = vrcp.pop %v3546
        %v3622 = vmul.f32 1.0, %v3621
        %v3623 = vrcp.pop %v3547
        %v3624 = vmul.f32 1.0, %v3623
        %v3625 = vrcp.pop %v3548
        %v3626 = vmul.f32 1.0, %v3625
        %v3627 = vrcp.pop %v3549
        %v3628 = vmul.f32 1.0, %v3627
        %v3629 = vrcp.pop %v3550
        %v3630 = vmul.f32 1.0, %v3629
        %v3631 = vrcp.pop %v3551
        %v3632 = vmul.f32 1.0, %v3631
        %v3633 = vrcp.pop %v3552
        %v3634 = vmul.f32 1.0, %v3633
        %v3635 = vrcp.pop %v3553
        %v3636 = vmul.f32 1.0, %v3635
        %v3637 = vrcp.pop %v3554
        %v3638 = vmul.f32 1.0, %v3637
        %v3639 = vrcp.pop %v3555
        %v3640 = vmul.f32 1.0, %v3639
        %v3641 = vrcp.pop %v3556
        %v3642 = vmul.f32 1.0, %v3641
        %v3643 = vrcp.pop %v3557
        %v3644 = vmul.f32 1.0, %v3643
        %v3645 = vrcp.pop %v3558
        %v3646 = vmul.f32 1.0, %v3645
        %v3647 = vrcp.pop %v3559
        %v3648 = vmul.f32 1.0, %v3647
        %v3649 = vrcp.pop %v3560
        %v3650 = vmul.f32 1.0, %v3649
        %v3651 = vrcp.pop %v3561
        %v3652 = vmul.f32 1.0, %v3651
        %v3653 = vrcp.pop %v3562
        %v3654 = vmul.f32 1.0, %v3653
        %v3655 = vrcp.pop %v3563
        %v3656 = vmul.f32 1.0, %v3655
        %v3657 = vrcp.pop %v3564
        %v3658 = vmul.f32 1.0, %v3657
        %v3659 = vrcp.pop %v3565
        %v3660 = vmul.f32 1.0, %v3659
        %v3661 = vrcp.pop %v3566
        %v3662 = vmul.f32 1.0, %v3661
        %v3663 = vrcp.pop %v3567
        %v3664 = vmul.f32 1.0, %v3663
        %v3665 = vrcp.pop %v3568
        %v3666 = vmul.f32 1.0, %v3665
        %v3667 = vrcp.pop %v3569
        %v3668 = vmul.f32 1.0, %v3667
        %v3669 = vrcp.pop %v3570
        %v3670 = vmul.f32 1.0, %v3669
        %v3671 = vrcp.pop %v3571
        %v3672 = vmul.f32 1.0, %v3671
        %v3673 = vrcp.pop %v3572
        %v3674 = vmul.f32 1.0, %v3673
        %v3675 = vrcp.pop %v3573
        %v3676 = vmul.f32 1.0, %v3675
        %v3677 = vrcp.pop %v3574
        %v3678 = vmul.f32 1.0, %v3677
        %v3679 = vrcp.pop %v3575
        %v3680 = vmul.f32 1.0, %v3679
        %v3681 = vrcp.pop %v3576
        %v3682 = vmul.f32 1.0, %v3681
        %v3683 = vrcp.pop %v3577
        %v3684 = vmul.f32 1.0, %v3683
        %v3685 = vrcp.pop %v3578
        %v3686 = vmul.f32 1.0, %v3685
        %v3687 = vrcp.pop %v3579
        %v3688 = vmul.f32 1.0, %v3687
        %v3689 = vrcp.pop %v3580
        %v3690 = vmul.f32 1.0, %v3689
        %v3691 = vrcp.pop %v3581
        %v3692 = vmul.f32 1.0, %v3691
        %v3693 = vrcp.pop %v3582
        %v3694 = vmul.f32 1.0, %v3693
        %v3695 = vrcp.pop %v3583
        %v3696 = vmul.f32 1.0, %v3695
        %v3697 = vrcp.pop %v3584
        %v3698 = vmul.f32 1.0, %v3697
        %v3699 = vrcp.pop %v3585
        %v3700 = vmul.f32 1.0, %v3699
        %v3701 = vrcp.pop %v3586
        %v3702 = vmul.f32 1.0, %v3701
        %v3703 = vrcp.pop %v3587
        %v3704 = vmul.f32 1.0, %v3703
        %v3705 = vrcp.pop %v3588
        %v3706 = vmul.f32 1.0, %v3705
        %v3707 = vrcp.pop %v3589
        %v3708 = vmul.f32 1.0, %v3707
        %v3709 = vrcp.pop %v3590
        %v3710 = vmul.f32 1.0, %v3709
        %v3711 = vrcp.pop %v3591
        %v3712 = vmul.f32 1.0, %v3711
        %v3713 = vrcp.pop %v3592
        %v3714 = vmul.f32 1.0, %v3713
        %v3715 = vrcp.pop %v3593
        %v3716 = vmul.f32 1.0, %v3715
        %v3717 = vrcp.pop %v3594
        %v3718 = vmul.f32 1.0, %v3717
        %v3719 = vrcp.pop %v3595
        %v3720 = vmul.f32 1.0, %v3719
        %v3721 = vrcp.pop %v3596
        %v3722 = vmul.f32 1.0, %v3721
        %v3723 = vrcp.pop %v3597
        %v3724 = vmul.f32 1.0, %v3723
        %v3725 = vrcp.pop %v3598
        %v3726 = vmul.f32 1.0, %v3725
        %3728 = vset.pattern.permute.xlu0 0
        %3729 = vperm.xlu0 %3728, %v3600
        %v3730 = vpop.permute.xlu0 %3729
        %3733 = vset.pattern.permute.xlu0 0
        %3734 = vperm.xlu0 %3733, %v3602
        %v3735 = vpop.permute.xlu0 %3734
        %3738 = vset.pattern.permute.xlu0 0
        %3739 = vperm.xlu0 %3738, %v3604
        %v3740 = vpop.permute.xlu0 %3739
        %3743 = vset.pattern.permute.xlu0 0
        %3744 = vperm.xlu0 %3743, %v3606
        %v3745 = vpop.permute.xlu0 %3744
        %3748 = vset.pattern.permute.xlu0 0
        %3749 = vperm.xlu0 %3748, %v3608
        %v3750 = vpop.permute.xlu0 %3749
        %3753 = vset.pattern.permute.xlu0 0
        %3754 = vperm.xlu0 %3753, %v3610
        %v3755 = vpop.permute.xlu0 %3754
        %3758 = vset.pattern.permute.xlu0 0
        %3759 = vperm.xlu0 %3758, %v3612
        %v3760 = vpop.permute.xlu0 %3759
        %3763 = vset.pattern.permute.xlu0 0
        %3764 = vperm.xlu0 %3763, %v3614
        %v3765 = vpop.permute.xlu0 %3764
        %3768 = vset.pattern.permute.xlu0 0
        %3769 = vperm.xlu0 %3768, %v3616
        %v3770 = vpop.permute.xlu0 %3769
        %3773 = vset.pattern.permute.xlu0 0
        %3774 = vperm.xlu0 %3773, %v3618
        %v3775 = vpop.permute.xlu0 %3774
        %3778 = vset.pattern.permute.xlu0 0
        %3779 = vperm.xlu0 %3778, %v3620
        %v3780 = vpop.permute.xlu0 %3779
        %3783 = vset.pattern.permute.xlu0 0
        %3784 = vperm.xlu0 %3783, %v3622
        %v3785 = vpop.permute.xlu0 %3784
        %3788 = vset.pattern.permute.xlu0 0
        %3789 = vperm.xlu0 %3788, %v3624
        %v3790 = vpop.permute.xlu0 %3789
        %3793 = vset.pattern.permute.xlu0 0
        %3794 = vperm.xlu0 %3793, %v3626
        %v3795 = vpop.permute.xlu0 %3794
        %3798 = vset.pattern.permute.xlu0 0
        %3799 = vperm.xlu0 %3798, %v3628
        %v3800 = vpop.permute.xlu0 %3799
        %3803 = vset.pattern.permute.xlu0 0
        %3804 = vperm.xlu0 %3803, %v3630
        %v3805 = vpop.permute.xlu0 %3804
        %3808 = vset.pattern.permute.xlu0 0
        %3809 = vperm.xlu0 %3808, %v3632
        %v3810 = vpop.permute.xlu0 %3809
        %3813 = vset.pattern.permute.xlu0 0
        %3814 = vperm.xlu0 %3813, %v3634
        %v3815 = vpop.permute.xlu0 %3814
        %3818 = vset.pattern.permute.xlu0 0
        %3819 = vperm.xlu0 %3818, %v3636
        %v3820 = vpop.permute.xlu0 %3819
        %3823 = vset.pattern.permute.xlu0 0
        %3824 = vperm.xlu0 %3823, %v3638
        %v3825 = vpop.permute.xlu0 %3824
        %3828 = vset.pattern.permute.xlu0 0
        %3829 = vperm.xlu0 %3828, %v3640
        %v3830 = vpop.permute.xlu0 %3829
        %3833 = vset.pattern.permute.xlu0 0
        %3834 = vperm.xlu0 %3833, %v3642
        %v3835 = vpop.permute.xlu0 %3834
        %3838 = vset.pattern.permute.xlu0 0
        %3839 = vperm.xlu0 %3838, %v3644
        %v3840 = vpop.permute.xlu0 %3839
        %3843 = vset.pattern.permute.xlu0 0
        %3844 = vperm.xlu0 %3843, %v3646
        %v3845 = vpop.permute.xlu0 %3844
        %3848 = vset.pattern.permute.xlu0 0
        %3849 = vperm.xlu0 %3848, %v3648
        %v3850 = vpop.permute.xlu0 %3849
        %3853 = vset.pattern.permute.xlu0 0
        %3854 = vperm.xlu0 %3853, %v3650
        %v3855 = vpop.permute.xlu0 %3854
        %3858 = vset.pattern.permute.xlu0 0
        %3859 = vperm.xlu0 %3858, %v3652
        %v3860 = vpop.permute.xlu0 %3859
        %3863 = vset.pattern.permute.xlu0 0
        %3864 = vperm.xlu0 %3863, %v3654
        %v3865 = vpop.permute.xlu0 %3864
        %3868 = vset.pattern.permute.xlu0 0
        %3869 = vperm.xlu0 %3868, %v3656
        %v3870 = vpop.permute.xlu0 %3869
        %3873 = vset.pattern.permute.xlu0 0
        %3874 = vperm.xlu0 %3873, %v3658
        %v3875 = vpop.permute.xlu0 %3874
        %3878 = vset.pattern.permute.xlu0 0
        %3879 = vperm.xlu0 %3878, %v3660
        %v3880 = vpop.permute.xlu0 %3879
        %3883 = vset.pattern.permute.xlu0 0
        %3884 = vperm.xlu0 %3883, %v3662
        %v3885 = vpop.permute.xlu0 %3884
        %3888 = vset.pattern.permute.xlu0 0
        %3889 = vperm.xlu0 %3888, %v3664
        %v3890 = vpop.permute.xlu0 %3889
        %3893 = vset.pattern.permute.xlu0 0
        %3894 = vperm.xlu0 %3893, %v3666
        %v3895 = vpop.permute.xlu0 %3894
        %3898 = vset.pattern.permute.xlu0 0
        %3899 = vperm.xlu0 %3898, %v3668
        %v3900 = vpop.permute.xlu0 %3899
        %3903 = vset.pattern.permute.xlu0 0
        %3904 = vperm.xlu0 %3903, %v3670
        %v3905 = vpop.permute.xlu0 %3904
        %3908 = vset.pattern.permute.xlu0 0
        %3909 = vperm.xlu0 %3908, %v3672
        %v3910 = vpop.permute.xlu0 %3909
        %3913 = vset.pattern.permute.xlu0 0
        %3914 = vperm.xlu0 %3913, %v3674
        %v3915 = vpop.permute.xlu0 %3914
        %3918 = vset.pattern.permute.xlu0 0
        %3919 = vperm.xlu0 %3918, %v3676
        %v3920 = vpop.permute.xlu0 %3919
        %3923 = vset.pattern.permute.xlu0 0
        %3924 = vperm.xlu0 %3923, %v3678
        %v3925 = vpop.permute.xlu0 %3924
        %3928 = vset.pattern.permute.xlu0 0
        %3929 = vperm.xlu0 %3928, %v3680
        %v3930 = vpop.permute.xlu0 %3929
        %3933 = vset.pattern.permute.xlu0 0
        %3934 = vperm.xlu0 %3933, %v3682
        %v3935 = vpop.permute.xlu0 %3934
        %3938 = vset.pattern.permute.xlu0 0
        %3939 = vperm.xlu0 %3938, %v3684
        %v3940 = vpop.permute.xlu0 %3939
        %3943 = vset.pattern.permute.xlu0 0
        %3944 = vperm.xlu0 %3943, %v3686
        %v3945 = vpop.permute.xlu0 %3944
        %3948 = vset.pattern.permute.xlu0 0
        %3949 = vperm.xlu0 %3948, %v3688
        %v3950 = vpop.permute.xlu0 %3949
        %3953 = vset.pattern.permute.xlu0 0
        %3954 = vperm.xlu0 %3953, %v3690
        %v3955 = vpop.permute.xlu0 %3954
        %3958 = vset.pattern.permute.xlu0 0
        %3959 = vperm.xlu0 %3958, %v3692
        %v3960 = vpop.permute.xlu0 %3959
        %3963 = vset.pattern.permute.xlu0 0
        %3964 = vperm.xlu0 %3963, %v3694
        %v3965 = vpop.permute.xlu0 %3964
        %3968 = vset.pattern.permute.xlu0 0
        %3969 = vperm.xlu0 %3968, %v3696
        %v3970 = vpop.permute.xlu0 %3969
        %3973 = vset.pattern.permute.xlu0 0
        %3974 = vperm.xlu0 %3973, %v3698
        %v3975 = vpop.permute.xlu0 %3974
        %3978 = vset.pattern.permute.xlu0 0
        %3979 = vperm.xlu0 %3978, %v3700
        %v3980 = vpop.permute.xlu0 %3979
        %3983 = vset.pattern.permute.xlu0 0
        %3984 = vperm.xlu0 %3983, %v3702
        %v3985 = vpop.permute.xlu0 %3984
        %3988 = vset.pattern.permute.xlu0 0
        %3989 = vperm.xlu0 %3988, %v3704
        %v3990 = vpop.permute.xlu0 %3989
        %3993 = vset.pattern.permute.xlu0 0
        %3994 = vperm.xlu0 %3993, %v3706
        %v3995 = vpop.permute.xlu0 %3994
        %3998 = vset.pattern.permute.xlu0 0
        %3999 = vperm.xlu0 %3998, %v3708
        %v4000 = vpop.permute.xlu0 %3999
        %4003 = vset.pattern.permute.xlu0 0
        %4004 = vperm.xlu0 %4003, %v3710
        %v4005 = vpop.permute.xlu0 %4004
        %4008 = vset.pattern.permute.xlu0 0
        %4009 = vperm.xlu0 %4008, %v3712
        %v4010 = vpop.permute.xlu0 %4009
        %4013 = vset.pattern.permute.xlu0 0
        %4014 = vperm.xlu0 %4013, %v3714
        %v4015 = vpop.permute.xlu0 %4014
        %4018 = vset.pattern.permute.xlu0 0
        %4019 = vperm.xlu0 %4018, %v3716
        %v4020 = vpop.permute.xlu0 %4019
        %4023 = vset.pattern.permute.xlu0 0
        %4024 = vperm.xlu0 %4023, %v3718
        %v4025 = vpop.permute.xlu0 %4024
        %4028 = vset.pattern.permute.xlu0 0
        %4029 = vperm.xlu0 %4028, %v3720
        %v4030 = vpop.permute.xlu0 %4029
        %4033 = vset.pattern.permute.xlu0 0
        %4034 = vperm.xlu0 %4033, %v3722
        %v4035 = vpop.permute.xlu0 %4034
        %4038 = vset.pattern.permute.xlu0 0
        %4039 = vperm.xlu0 %4038, %v3724
        %v4040 = vpop.permute.xlu0 %4039
        %4043 = vset.pattern.permute.xlu0 0
        %4044 = vperm.xlu0 %4043, %v3726
        %v4045 = vpop.permute.xlu0 %4044
        %v4047 = vmul.f32 %v3730, %v2929
        %v4048 = vmul.f32 %v3735, %v2930
        %v4049 = vmul.f32 %v3740, %v2931
        %v4050 = vmul.f32 %v3745, %v2932
        %v4051 = vmul.f32 %v3750, %v2933
        %v4052 = vmul.f32 %v3755, %v2934
        %v4053 = vmul.f32 %v3760, %v2935
        %v4054 = vmul.f32 %v3765, %v2936
        %v4055 = vmul.f32 %v3770, %v2937
        %v4056 = vmul.f32 %v3775, %v2938
        %v4057 = vmul.f32 %v3780, %v2939
        %v4058 = vmul.f32 %v3785, %v2940
        %v4059 = vmul.f32 %v3790, %v2941
        %v4060 = vmul.f32 %v3795, %v2942
        %v4061 = vmul.f32 %v3800, %v2943
        %v4062 = vmul.f32 %v3805, %v2944
        %v4063 = vmul.f32 %v3810, %v2945
        %v4064 = vmul.f32 %v3815, %v2946
        %v4065 = vmul.f32 %v3820, %v2947
        %v4066 = vmul.f32 %v3825, %v2948
        %v4067 = vmul.f32 %v3830, %v2949
        %v4068 = vmul.f32 %v3835, %v2950
        %v4069 = vmul.f32 %v3840, %v2951
        %v4070 = vmul.f32 %v3845, %v2952
        %v4071 = vmul.f32 %v3850, %v2953
        %v4072 = vmul.f32 %v3855, %v2954
        %v4073 = vmul.f32 %v3860, %v2955
        %v4074 = vmul.f32 %v3865, %v2956
        %v4075 = vmul.f32 %v3870, %v2957
        %v4076 = vmul.f32 %v3875, %v2958
        %v4077 = vmul.f32 %v3880, %v2959
        %v4078 = vmul.f32 %v3885, %v2960
        %v4079 = vmul.f32 %v3890, %v2961
        %v4080 = vmul.f32 %v3895, %v2962
        %v4081 = vmul.f32 %v3900, %v2963
        %v4082 = vmul.f32 %v3905, %v2964
        %v4083 = vmul.f32 %v3910, %v2965
        %v4084 = vmul.f32 %v3915, %v2966
        %v4085 = vmul.f32 %v3920, %v2967
        %v4086 = vmul.f32 %v3925, %v2968
        %v4087 = vmul.f32 %v3930, %v2969
        %v4088 = vmul.f32 %v3935, %v2970
        %v4089 = vmul.f32 %v3940, %v2971
        %v4090 = vmul.f32 %v3945, %v2972
        %v4091 = vmul.f32 %v3950, %v2973
        %v4092 = vmul.f32 %v3955, %v2974
        %v4093 = vmul.f32 %v3960, %v2975
        %v4094 = vmul.f32 %v3965, %v2976
        %v4095 = vmul.f32 %v3970, %v2977
        %v4096 = vmul.f32 %v3975, %v2978
        %v4097 = vmul.f32 %v3980, %v2979
        %v4098 = vmul.f32 %v3985, %v2980
        %v4099 = vmul.f32 %v3990, %v2981
        %v4100 = vmul.f32 %v3995, %v2982
        %v4101 = vmul.f32 %v4000, %v2983
        %v4102 = vmul.f32 %v4005, %v2984
        %v4103 = vmul.f32 %v4010, %v2985
        %v4104 = vmul.f32 %v4015, %v2986
        %v4105 = vmul.f32 %v4020, %v2987
        %v4106 = vmul.f32 %v4025, %v2988
        %v4107 = vmul.f32 %v4030, %v2989
        %v4108 = vmul.f32 %v4035, %v2990
        %v4109 = vmul.f32 %v4040, %v2991
        %v4110 = vmul.f32 %v4045, %v2992
        // Predicated region
        $region57: #{net_forward.3} parent=55 // pred_check
          %p4111 = pneg %p337
        $region58: #{net_forward.3} parent=55 // pred_check_branch
          %4113 = sbr.rel (%p4111) target = $region60
        $region59: #{net_forward.3} parent=55 // pred_region
          %s4114 = scalar_lea.vmem %s2, %s2993
          %v4115 = vld [vmem:[%s4114] sm:$0xff]
          %v4116 = vld [vmem:[%s4114 + $0x8] sm:$0xff]
          %v4117 = vld [vmem:[%s4114 + $0x10] sm:$0xff]
          %v4118 = vld [vmem:[%s4114 + $0x18] sm:$0xff]
          %v4119 = vld [vmem:[%s4114 + $0x20] sm:$0xff]
          %v4120 = vld [vmem:[%s4114 + $0x28] sm:$0xff]
          %v4121 = vld [vmem:[%s4114 + $0x30] sm:$0xff]
          %v4122 = vld [vmem:[%s4114 + $0x38] sm:$0xff]
          %v4123 = vld [vmem:[%s4114 + $0x40] sm:$0xff]
          %v4124 = vld [vmem:[%s4114 + $0x48] sm:$0xff]
          %v4125 = vld [vmem:[%s4114 + $0x50] sm:$0xff]
          %v4126 = vld [vmem:[%s4114 + $0x58] sm:$0xff]
          %v4127 = vld [vmem:[%s4114 + $0x60] sm:$0xff]
          %v4128 = vld [vmem:[%s4114 + $0x68] sm:$0xff]
          %v4129 = vld [vmem:[%s4114 + $0x70] sm:$0xff]
          %v4130 = vld [vmem:[%s4114 + $0x78] sm:$0xff]
          %v4131 = vld [vmem:[%s4114 + $0x80] sm:$0xff]
          %v4132 = vld [vmem:[%s4114 + $0x88] sm:$0xff]
          %v4133 = vld [vmem:[%s4114 + $0x90] sm:$0xff]
          %v4134 = vld [vmem:[%s4114 + $0x98] sm:$0xff]
          %v4135 = vld [vmem:[%s4114 + $0xa0] sm:$0xff]
          %v4136 = vld [vmem:[%s4114 + $0xa8] sm:$0xff]
          %v4137 = vld [vmem:[%s4114 + $0xb0] sm:$0xff]
          %v4138 = vld [vmem:[%s4114 + $0xb8] sm:$0xff]
          %v4139 = vld [vmem:[%s4114 + $0xc0] sm:$0xff]
          %v4140 = vld [vmem:[%s4114 + $0xc8] sm:$0xff]
          %v4141 = vld [vmem:[%s4114 + $0xd0] sm:$0xff]
          %v4142 = vld [vmem:[%s4114 + $0xd8] sm:$0xff]
          %v4143 = vld [vmem:[%s4114 + $0xe0] sm:$0xff]
          %v4144 = vld [vmem:[%s4114 + $0xe8] sm:$0xff]
          %v4145 = vld [vmem:[%s4114 + $0xf0] sm:$0xff]
          %v4146 = vld [vmem:[%s4114 + $0xf8] sm:$0xff]
          %v4147 = vld [vmem:[%s4114 + $0x100] sm:$0xff]
          %v4148 = vld [vmem:[%s4114 + $0x108] sm:$0xff]
          %v4149 = vld [vmem:[%s4114 + $0x110] sm:$0xff]
          %v4150 = vld [vmem:[%s4114 + $0x118] sm:$0xff]
          %v4151 = vld [vmem:[%s4114 + $0x120] sm:$0xff]
          %v4152 = vld [vmem:[%s4114 + $0x128] sm:$0xff]
          %v4153 = vld [vmem:[%s4114 + $0x130] sm:$0xff]
          %v4154 = vld [vmem:[%s4114 + $0x138] sm:$0xff]
          %v4155 = vld [vmem:[%s4114 + $0x140] sm:$0xff]
          %v4156 = vld [vmem:[%s4114 + $0x148] sm:$0xff]
          %v4157 = vld [vmem:[%s4114 + $0x150] sm:$0xff]
          %v4158 = vld [vmem:[%s4114 + $0x158] sm:$0xff]
          %v4159 = vld [vmem:[%s4114 + $0x160] sm:$0xff]
          %v4160 = vld [vmem:[%s4114 + $0x168] sm:$0xff]
          %v4161 = vld [vmem:[%s4114 + $0x170] sm:$0xff]
          %v4162 = vld [vmem:[%s4114 + $0x178] sm:$0xff]
          %v4163 = vld [vmem:[%s4114 + $0x180] sm:$0xff]
          %v4164 = vld [vmem:[%s4114 + $0x188] sm:$0xff]
          %v4165 = vld [vmem:[%s4114 + $0x190] sm:$0xff]
          %v4166 = vld [vmem:[%s4114 + $0x198] sm:$0xff]
          %v4167 = vld [vmem:[%s4114 + $0x1a0] sm:$0xff]
          %v4168 = vld [vmem:[%s4114 + $0x1a8] sm:$0xff]
          %v4169 = vld [vmem:[%s4114 + $0x1b0] sm:$0xff]
          %v4170 = vld [vmem:[%s4114 + $0x1b8] sm:$0xff]
          %v4171 = vld [vmem:[%s4114 + $0x1c0] sm:$0xff]
          %v4172 = vld [vmem:[%s4114 + $0x1c8] sm:$0xff]
          %v4173 = vld [vmem:[%s4114 + $0x1d0] sm:$0xff]
          %v4174 = vld [vmem:[%s4114 + $0x1d8] sm:$0xff]
          %v4175 = vld [vmem:[%s4114 + $0x1e0] sm:$0xff]
          %v4176 = vld [vmem:[%s4114 + $0x1e8] sm:$0xff]
          %v4177 = vld [vmem:[%s4114 + $0x1f0] sm:$0xff]
          %v4178 = vld [vmem:[%s4114 + $0x1f8] sm:$0xff]
          %v4179 = vadd.f32 %v4115, %v4047
          %v4180 = vadd.f32 %v4116, %v4048
          %v4181 = vadd.f32 %v4117, %v4049
          %v4182 = vadd.f32 %v4118, %v4050
          %v4183 = vadd.f32 %v4119, %v4051
          %v4184 = vadd.f32 %v4120, %v4052
          %v4185 = vadd.f32 %v4121, %v4053
          %v4186 = vadd.f32 %v4122, %v4054
          %v4187 = vadd.f32 %v4123, %v4055
          %v4188 = vadd.f32 %v4124, %v4056
          %v4189 = vadd.f32 %v4125, %v4057
          %v4190 = vadd.f32 %v4126, %v4058
          %v4191 = vadd.f32 %v4127, %v4059
          %v4192 = vadd.f32 %v4128, %v4060
          %v4193 = vadd.f32 %v4129, %v4061
          %v4194 = vadd.f32 %v4130, %v4062
          %v4195 = vadd.f32 %v4131, %v4063
          %v4196 = vadd.f32 %v4132, %v4064
          %v4197 = vadd.f32 %v4133, %v4065
          %v4198 = vadd.f32 %v4134, %v4066
          %v4199 = vadd.f32 %v4135, %v4067
          %v4200 = vadd.f32 %v4136, %v4068
          %v4201 = vadd.f32 %v4137, %v4069
          %v4202 = vadd.f32 %v4138, %v4070
          %v4203 = vadd.f32 %v4139, %v4071
          %v4204 = vadd.f32 %v4140, %v4072
          %v4205 = vadd.f32 %v4141, %v4073
          %v4206 = vadd.f32 %v4142, %v4074
          %v4207 = vadd.f32 %v4143, %v4075
          %v4208 = vadd.f32 %v4144, %v4076
          %v4209 = vadd.f32 %v4145, %v4077
          %v4210 = vadd.f32 %v4146, %v4078
          %v4211 = vadd.f32 %v4147, %v4079
          %v4212 = vadd.f32 %v4148, %v4080
          %v4213 = vadd.f32 %v4149, %v4081
          %v4214 = vadd.f32 %v4150, %v4082
          %v4215 = vadd.f32 %v4151, %v4083
          %v4216 = vadd.f32 %v4152, %v4084
          %v4217 = vadd.f32 %v4153, %v4085
          %v4218 = vadd.f32 %v4154, %v4086
          %v4219 = vadd.f32 %v4155, %v4087
          %v4220 = vadd.f32 %v4156, %v4088
          %v4221 = vadd.f32 %v4157, %v4089
          %v4222 = vadd.f32 %v4158, %v4090
          %v4223 = vadd.f32 %v4159, %v4091
          %v4224 = vadd.f32 %v4160, %v4092
          %v4225 = vadd.f32 %v4161, %v4093
          %v4226 = vadd.f32 %v4162, %v4094
          %v4227 = vadd.f32 %v4163, %v4095
          %v4228 = vadd.f32 %v4164, %v4096
          %v4229 = vadd.f32 %v4165, %v4097
          %v4230 = vadd.f32 %v4166, %v4098
          %v4231 = vadd.f32 %v4167, %v4099
          %v4232 = vadd.f32 %v4168, %v4100
          %v4233 = vadd.f32 %v4169, %v4101
          %v4234 = vadd.f32 %v4170, %v4102
          %v4235 = vadd.f32 %v4171, %v4103
          %v4236 = vadd.f32 %v4172, %v4104
          %v4237 = vadd.f32 %v4173, %v4105
          %v4238 = vadd.f32 %v4174, %v4106
          %v4239 = vadd.f32 %v4175, %v4107
          %v4240 = vadd.f32 %v4176, %v4108
          %v4241 = vadd.f32 %v4177, %v4109
          %v4242 = vadd.f32 %v4178, %v4110
          %s4243 = scalar_lea.vmem [#allocation3], %s2993
          %4244 = vst [vmem:[%s4243] sm:$0xff] %v4179
          %4245 = vst [vmem:[%s4243 + $0x8] sm:$0xff] %v4180
          %4246 = vst [vmem:[%s4243 + $0x10] sm:$0xff] %v4181
          %4247 = vst [vmem:[%s4243 + $0x18] sm:$0xff] %v4182
          %4248 = vst [vmem:[%s4243 + $0x20] sm:$0xff] %v4183
          %4249 = vst [vmem:[%s4243 + $0x28] sm:$0xff] %v4184
          %4250 = vst [vmem:[%s4243 + $0x30] sm:$0xff] %v4185
          %4251 = vst [vmem:[%s4243 + $0x38] sm:$0xff] %v4186
          %4252 = vst [vmem:[%s4243 + $0x40] sm:$0xff] %v4187
          %4253 = vst [vmem:[%s4243 + $0x48] sm:$0xff] %v4188
          %4254 = vst [vmem:[%s4243 + $0x50] sm:$0xff] %v4189
          %4255 = vst [vmem:[%s4243 + $0x58] sm:$0xff] %v4190
          %4256 = vst [vmem:[%s4243 + $0x60] sm:$0xff] %v4191
          %4257 = vst [vmem:[%s4243 + $0x68] sm:$0xff] %v4192
          %4258 = vst [vmem:[%s4243 + $0x70] sm:$0xff] %v4193
          %4259 = vst [vmem:[%s4243 + $0x78] sm:$0xff] %v4194
          %4260 = vst [vmem:[%s4243 + $0x80] sm:$0xff] %v4195
          %4261 = vst [vmem:[%s4243 + $0x88] sm:$0xff] %v4196
          %4262 = vst [vmem:[%s4243 + $0x90] sm:$0xff] %v4197
          %4263 = vst [vmem:[%s4243 + $0x98] sm:$0xff] %v4198
          %4264 = vst [vmem:[%s4243 + $0xa0] sm:$0xff] %v4199
          %4265 = vst [vmem:[%s4243 + $0xa8] sm:$0xff] %v4200
          %4266 = vst [vmem:[%s4243 + $0xb0] sm:$0xff] %v4201
          %4267 = vst [vmem:[%s4243 + $0xb8] sm:$0xff] %v4202
          %4268 = vst [vmem:[%s4243 + $0xc0] sm:$0xff] %v4203
          %4269 = vst [vmem:[%s4243 + $0xc8] sm:$0xff] %v4204
          %4270 = vst [vmem:[%s4243 + $0xd0] sm:$0xff] %v4205
          %4271 = vst [vmem:[%s4243 + $0xd8] sm:$0xff] %v4206
          %4272 = vst [vmem:[%s4243 + $0xe0] sm:$0xff] %v4207
          %4273 = vst [vmem:[%s4243 + $0xe8] sm:$0xff] %v4208
          %4274 = vst [vmem:[%s4243 + $0xf0] sm:$0xff] %v4209
          %4275 = vst [vmem:[%s4243 + $0xf8] sm:$0xff] %v4210
          %4276 = vst [vmem:[%s4243 + $0x100] sm:$0xff] %v4211
          %4277 = vst [vmem:[%s4243 + $0x108] sm:$0xff] %v4212
          %4278 = vst [vmem:[%s4243 + $0x110] sm:$0xff] %v4213
          %4279 = vst [vmem:[%s4243 + $0x118] sm:$0xff] %v4214
          %4280 = vst [vmem:[%s4243 + $0x120] sm:$0xff] %v4215
          %4281 = vst [vmem:[%s4243 + $0x128] sm:$0xff] %v4216
          %4282 = vst [vmem:[%s4243 + $0x130] sm:$0xff] %v4217
          %4283 = vst [vmem:[%s4243 + $0x138] sm:$0xff] %v4218
          %4284 = vst [vmem:[%s4243 + $0x140] sm:$0xff] %v4219
          %4285 = vst [vmem:[%s4243 + $0x148] sm:$0xff] %v4220
          %4286 = vst [vmem:[%s4243 + $0x150] sm:$0xff] %v4221
          %4287 = vst [vmem:[%s4243 + $0x158] sm:$0xff] %v4222
          %4288 = vst [vmem:[%s4243 + $0x160] sm:$0xff] %v4223
          %4289 = vst [vmem:[%s4243 + $0x168] sm:$0xff] %v4224
          %4290 = vst [vmem:[%s4243 + $0x170] sm:$0xff] %v4225
          %4291 = vst [vmem:[%s4243 + $0x178] sm:$0xff] %v4226
          %4292 = vst [vmem:[%s4243 + $0x180] sm:$0xff] %v4227
          %4293 = vst [vmem:[%s4243 + $0x188] sm:$0xff] %v4228
          %4294 = vst [vmem:[%s4243 + $0x190] sm:$0xff] %v4229
          %4295 = vst [vmem:[%s4243 + $0x198] sm:$0xff] %v4230
          %4296 = vst [vmem:[%s4243 + $0x1a0] sm:$0xff] %v4231
          %4297 = vst [vmem:[%s4243 + $0x1a8] sm:$0xff] %v4232
          %4298 = vst [vmem:[%s4243 + $0x1b0] sm:$0xff] %v4233
          %4299 = vst [vmem:[%s4243 + $0x1b8] sm:$0xff] %v4234
          %4300 = vst [vmem:[%s4243 + $0x1c0] sm:$0xff] %v4235
          %4301 = vst [vmem:[%s4243 + $0x1c8] sm:$0xff] %v4236
          %4302 = vst [vmem:[%s4243 + $0x1d0] sm:$0xff] %v4237
          %4303 = vst [vmem:[%s4243 + $0x1d8] sm:$0xff] %v4238
          %4304 = vst [vmem:[%s4243 + $0x1e0] sm:$0xff] %v4239
          %4305 = vst [vmem:[%s4243 + $0x1e8] sm:$0xff] %v4240
          %4306 = vst [vmem:[%s4243 + $0x1f0] sm:$0xff] %v4241
          %4307 = vst [vmem:[%s4243 + $0x1f8] sm:$0xff] %v4242
        $region60: #{net_forward.3} parent=55 // pred_fallthru
          _
        // Predicated region
        $region61: #{net_forward.3} parent=55 // pred_check
          %p4308 = pneg %p1624
        $region62: #{net_forward.3} parent=55 // pred_check_branch
          %4310 = sbr.rel (%p4308) target = $region64
        $region63: #{net_forward.3} parent=55 // pred_region
          %s4311 = scalar_lea.vmem [#allocation3], %s2993
          %v4312 = vld [vmem:[%s4311] sm:$0xff]
          %v4313 = vld [vmem:[%s4311 + $0x8] sm:$0xff]
          %v4314 = vld [vmem:[%s4311 + $0x10] sm:$0xff]
          %v4315 = vld [vmem:[%s4311 + $0x18] sm:$0xff]
          %v4316 = vld [vmem:[%s4311 + $0x20] sm:$0xff]
          %v4317 = vld [vmem:[%s4311 + $0x28] sm:$0xff]
          %v4318 = vld [vmem:[%s4311 + $0x30] sm:$0xff]
          %v4319 = vld [vmem:[%s4311 + $0x38] sm:$0xff]
          %v4320 = vld [vmem:[%s4311 + $0x40] sm:$0xff]
          %v4321 = vld [vmem:[%s4311 + $0x48] sm:$0xff]
          %v4322 = vld [vmem:[%s4311 + $0x50] sm:$0xff]
          %v4323 = vld [vmem:[%s4311 + $0x58] sm:$0xff]
          %v4324 = vld [vmem:[%s4311 + $0x60] sm:$0xff]
          %v4325 = vld [vmem:[%s4311 + $0x68] sm:$0xff]
          %v4326 = vld [vmem:[%s4311 + $0x70] sm:$0xff]
          %v4327 = vld [vmem:[%s4311 + $0x78] sm:$0xff]
          %v4328 = vld [vmem:[%s4311 + $0x80] sm:$0xff]
          %v4329 = vld [vmem:[%s4311 + $0x88] sm:$0xff]
          %v4330 = vld [vmem:[%s4311 + $0x90] sm:$0xff]
          %v4331 = vld [vmem:[%s4311 + $0x98] sm:$0xff]
          %v4332 = vld [vmem:[%s4311 + $0xa0] sm:$0xff]
          %v4333 = vld [vmem:[%s4311 + $0xa8] sm:$0xff]
          %v4334 = vld [vmem:[%s4311 + $0xb0] sm:$0xff]
          %v4335 = vld [vmem:[%s4311 + $0xb8] sm:$0xff]
          %v4336 = vld [vmem:[%s4311 + $0xc0] sm:$0xff]
          %v4337 = vld [vmem:[%s4311 + $0xc8] sm:$0xff]
          %v4338 = vld [vmem:[%s4311 + $0xd0] sm:$0xff]
          %v4339 = vld [vmem:[%s4311 + $0xd8] sm:$0xff]
          %v4340 = vld [vmem:[%s4311 + $0xe0] sm:$0xff]
          %v4341 = vld [vmem:[%s4311 + $0xe8] sm:$0xff]
          %v4342 = vld [vmem:[%s4311 + $0xf0] sm:$0xff]
          %v4343 = vld [vmem:[%s4311 + $0xf8] sm:$0xff]
          %v4344 = vld [vmem:[%s4311 + $0x100] sm:$0xff]
          %v4345 = vld [vmem:[%s4311 + $0x108] sm:$0xff]
          %v4346 = vld [vmem:[%s4311 + $0x110] sm:$0xff]
          %v4347 = vld [vmem:[%s4311 + $0x118] sm:$0xff]
          %v4348 = vld [vmem:[%s4311 + $0x120] sm:$0xff]
          %v4349 = vld [vmem:[%s4311 + $0x128] sm:$0xff]
          %v4350 = vld [vmem:[%s4311 + $0x130] sm:$0xff]
          %v4351 = vld [vmem:[%s4311 + $0x138] sm:$0xff]
          %v4352 = vld [vmem:[%s4311 + $0x140] sm:$0xff]
          %v4353 = vld [vmem:[%s4311 + $0x148] sm:$0xff]
          %v4354 = vld [vmem:[%s4311 + $0x150] sm:$0xff]
          %v4355 = vld [vmem:[%s4311 + $0x158] sm:$0xff]
          %v4356 = vld [vmem:[%s4311 + $0x160] sm:$0xff]
          %v4357 = vld [vmem:[%s4311 + $0x168] sm:$0xff]
          %v4358 = vld [vmem:[%s4311 + $0x170] sm:$0xff]
          %v4359 = vld [vmem:[%s4311 + $0x178] sm:$0xff]
          %v4360 = vld [vmem:[%s4311 + $0x180] sm:$0xff]
          %v4361 = vld [vmem:[%s4311 + $0x188] sm:$0xff]
          %v4362 = vld [vmem:[%s4311 + $0x190] sm:$0xff]
          %v4363 = vld [vmem:[%s4311 + $0x198] sm:$0xff]
          %v4364 = vld [vmem:[%s4311 + $0x1a0] sm:$0xff]
          %v4365 = vld [vmem:[%s4311 + $0x1a8] sm:$0xff]
          %v4366 = vld [vmem:[%s4311 + $0x1b0] sm:$0xff]
          %v4367 = vld [vmem:[%s4311 + $0x1b8] sm:$0xff]
          %v4368 = vld [vmem:[%s4311 + $0x1c0] sm:$0xff]
          %v4369 = vld [vmem:[%s4311 + $0x1c8] sm:$0xff]
          %v4370 = vld [vmem:[%s4311 + $0x1d0] sm:$0xff]
          %v4371 = vld [vmem:[%s4311 + $0x1d8] sm:$0xff]
          %v4372 = vld [vmem:[%s4311 + $0x1e0] sm:$0xff]
          %v4373 = vld [vmem:[%s4311 + $0x1e8] sm:$0xff]
          %v4374 = vld [vmem:[%s4311 + $0x1f0] sm:$0xff]
          %v4375 = vld [vmem:[%s4311 + $0x1f8] sm:$0xff]
          %v4376 = vadd.f32 %v4312, %v4047
          %v4377 = vadd.f32 %v4313, %v4048
          %v4378 = vadd.f32 %v4314, %v4049
          %v4379 = vadd.f32 %v4315, %v4050
          %v4380 = vadd.f32 %v4316, %v4051
          %v4381 = vadd.f32 %v4317, %v4052
          %v4382 = vadd.f32 %v4318, %v4053
          %v4383 = vadd.f32 %v4319, %v4054
          %v4384 = vadd.f32 %v4320, %v4055
          %v4385 = vadd.f32 %v4321, %v4056
          %v4386 = vadd.f32 %v4322, %v4057
          %v4387 = vadd.f32 %v4323, %v4058
          %v4388 = vadd.f32 %v4324, %v4059
          %v4389 = vadd.f32 %v4325, %v4060
          %v4390 = vadd.f32 %v4326, %v4061
          %v4391 = vadd.f32 %v4327, %v4062
          %v4392 = vadd.f32 %v4328, %v4063
          %v4393 = vadd.f32 %v4329, %v4064
          %v4394 = vadd.f32 %v4330, %v4065
          %v4395 = vadd.f32 %v4331, %v4066
          %v4396 = vadd.f32 %v4332, %v4067
          %v4397 = vadd.f32 %v4333, %v4068
          %v4398 = vadd.f32 %v4334, %v4069
          %v4399 = vadd.f32 %v4335, %v4070
          %v4400 = vadd.f32 %v4336, %v4071
          %v4401 = vadd.f32 %v4337, %v4072
          %v4402 = vadd.f32 %v4338, %v4073
          %v4403 = vadd.f32 %v4339, %v4074
          %v4404 = vadd.f32 %v4340, %v4075
          %v4405 = vadd.f32 %v4341, %v4076
          %v4406 = vadd.f32 %v4342, %v4077
          %v4407 = vadd.f32 %v4343, %v4078
          %v4408 = vadd.f32 %v4344, %v4079
          %v4409 = vadd.f32 %v4345, %v4080
          %v4410 = vadd.f32 %v4346, %v4081
          %v4411 = vadd.f32 %v4347, %v4082
          %v4412 = vadd.f32 %v4348, %v4083
          %v4413 = vadd.f32 %v4349, %v4084
          %v4414 = vadd.f32 %v4350, %v4085
          %v4415 = vadd.f32 %v4351, %v4086
          %v4416 = vadd.f32 %v4352, %v4087
          %v4417 = vadd.f32 %v4353, %v4088
          %v4418 = vadd.f32 %v4354, %v4089
          %v4419 = vadd.f32 %v4355, %v4090
          %v4420 = vadd.f32 %v4356, %v4091
          %v4421 = vadd.f32 %v4357, %v4092
          %v4422 = vadd.f32 %v4358, %v4093
          %v4423 = vadd.f32 %v4359, %v4094
          %v4424 = vadd.f32 %v4360, %v4095
          %v4425 = vadd.f32 %v4361, %v4096
          %v4426 = vadd.f32 %v4362, %v4097
          %v4427 = vadd.f32 %v4363, %v4098
          %v4428 = vadd.f32 %v4364, %v4099
          %v4429 = vadd.f32 %v4365, %v4100
          %v4430 = vadd.f32 %v4366, %v4101
          %v4431 = vadd.f32 %v4367, %v4102
          %v4432 = vadd.f32 %v4368, %v4103
          %v4433 = vadd.f32 %v4369, %v4104
          %v4434 = vadd.f32 %v4370, %v4105
          %v4435 = vadd.f32 %v4371, %v4106
          %v4436 = vadd.f32 %v4372, %v4107
          %v4437 = vadd.f32 %v4373, %v4108
          %v4438 = vadd.f32 %v4374, %v4109
          %v4439 = vadd.f32 %v4375, %v4110
          %4440 = vst [vmem:[%s4311] sm:$0xff] %v4376
          %4441 = vst [vmem:[%s4311 + $0x8] sm:$0xff] %v4377
          %4442 = vst [vmem:[%s4311 + $0x10] sm:$0xff] %v4378
          %4443 = vst [vmem:[%s4311 + $0x18] sm:$0xff] %v4379
          %4444 = vst [vmem:[%s4311 + $0x20] sm:$0xff] %v4380
          %4445 = vst [vmem:[%s4311 + $0x28] sm:$0xff] %v4381
          %4446 = vst [vmem:[%s4311 + $0x30] sm:$0xff] %v4382
          %4447 = vst [vmem:[%s4311 + $0x38] sm:$0xff] %v4383
          %4448 = vst [vmem:[%s4311 + $0x40] sm:$0xff] %v4384
          %4449 = vst [vmem:[%s4311 + $0x48] sm:$0xff] %v4385
          %4450 = vst [vmem:[%s4311 + $0x50] sm:$0xff] %v4386
          %4451 = vst [vmem:[%s4311 + $0x58] sm:$0xff] %v4387
          %4452 = vst [vmem:[%s4311 + $0x60] sm:$0xff] %v4388
          %4453 = vst [vmem:[%s4311 + $0x68] sm:$0xff] %v4389
          %4454 = vst [vmem:[%s4311 + $0x70] sm:$0xff] %v4390
          %4455 = vst [vmem:[%s4311 + $0x78] sm:$0xff] %v4391
          %4456 = vst [vmem:[%s4311 + $0x80] sm:$0xff] %v4392
          %4457 = vst [vmem:[%s4311 + $0x88] sm:$0xff] %v4393
          %4458 = vst [vmem:[%s4311 + $0x90] sm:$0xff] %v4394
          %4459 = vst [vmem:[%s4311 + $0x98] sm:$0xff] %v4395
          %4460 = vst [vmem:[%s4311 + $0xa0] sm:$0xff] %v4396
          %4461 = vst [vmem:[%s4311 + $0xa8] sm:$0xff] %v4397
          %4462 = vst [vmem:[%s4311 + $0xb0] sm:$0xff] %v4398
          %4463 = vst [vmem:[%s4311 + $0xb8] sm:$0xff] %v4399
          %4464 = vst [vmem:[%s4311 + $0xc0] sm:$0xff] %v4400
          %4465 = vst [vmem:[%s4311 + $0xc8] sm:$0xff] %v4401
          %4466 = vst [vmem:[%s4311 + $0xd0] sm:$0xff] %v4402
          %4467 = vst [vmem:[%s4311 + $0xd8] sm:$0xff] %v4403
          %4468 = vst [vmem:[%s4311 + $0xe0] sm:$0xff] %v4404
          %4469 = vst [vmem:[%s4311 + $0xe8] sm:$0xff] %v4405
          %4470 = vst [vmem:[%s4311 + $0xf0] sm:$0xff] %v4406
          %4471 = vst [vmem:[%s4311 + $0xf8] sm:$0xff] %v4407
          %4472 = vst [vmem:[%s4311 + $0x100] sm:$0xff] %v4408
          %4473 = vst [vmem:[%s4311 + $0x108] sm:$0xff] %v4409
          %4474 = vst [vmem:[%s4311 + $0x110] sm:$0xff] %v4410
          %4475 = vst [vmem:[%s4311 + $0x118] sm:$0xff] %v4411
          %4476 = vst [vmem:[%s4311 + $0x120] sm:$0xff] %v4412
          %4477 = vst [vmem:[%s4311 + $0x128] sm:$0xff] %v4413
          %4478 = vst [vmem:[%s4311 + $0x130] sm:$0xff] %v4414
          %4479 = vst [vmem:[%s4311 + $0x138] sm:$0xff] %v4415
          %4480 = vst [vmem:[%s4311 + $0x140] sm:$0xff] %v4416
          %4481 = vst [vmem:[%s4311 + $0x148] sm:$0xff] %v4417
          %4482 = vst [vmem:[%s4311 + $0x150] sm:$0xff] %v4418
          %4483 = vst [vmem:[%s4311 + $0x158] sm:$0xff] %v4419
          %4484 = vst [vmem:[%s4311 + $0x160] sm:$0xff] %v4420
          %4485 = vst [vmem:[%s4311 + $0x168] sm:$0xff] %v4421
          %4486 = vst [vmem:[%s4311 + $0x170] sm:$0xff] %v4422
          %4487 = vst [vmem:[%s4311 + $0x178] sm:$0xff] %v4423
          %4488 = vst [vmem:[%s4311 + $0x180] sm:$0xff] %v4424
          %4489 = vst [vmem:[%s4311 + $0x188] sm:$0xff] %v4425
          %4490 = vst [vmem:[%s4311 + $0x190] sm:$0xff] %v4426
          %4491 = vst [vmem:[%s4311 + $0x198] sm:$0xff] %v4427
          %4492 = vst [vmem:[%s4311 + $0x1a0] sm:$0xff] %v4428
          %4493 = vst [vmem:[%s4311 + $0x1a8] sm:$0xff] %v4429
          %4494 = vst [vmem:[%s4311 + $0x1b0] sm:$0xff] %v4430
          %4495 = vst [vmem:[%s4311 + $0x1b8] sm:$0xff] %v4431
          %4496 = vst [vmem:[%s4311 + $0x1c0] sm:$0xff] %v4432
          %4497 = vst [vmem:[%s4311 + $0x1c8] sm:$0xff] %v4433
          %4498 = vst [vmem:[%s4311 + $0x1d0] sm:$0xff] %v4434
          %4499 = vst [vmem:[%s4311 + $0x1d8] sm:$0xff] %v4435
          %4500 = vst [vmem:[%s4311 + $0x1e0] sm:$0xff] %v4436
          %4501 = vst [vmem:[%s4311 + $0x1e8] sm:$0xff] %v4437
          %4502 = vst [vmem:[%s4311 + $0x1f0] sm:$0xff] %v4438
          %4503 = vst [vmem:[%s4311 + $0x1f8] sm:$0xff] %v4439
        $region64: #{net_forward.3} parent=55 // pred_fallthru
          _
        %p4504 = scmp.eq.s32.totalorder %s23, 2
        // Predicated region
        $region65: #{net_forward.3} parent=55 // pred_check
          %p4505 = pneg %p4504
        $region66: #{net_forward.3} parent=55 // pred_check_branch
          %4507 = sbr.rel (%p4505) target = $region68
        $region67: #{net_forward.3} parent=55 // pred_region
          %s4508 = scalar_lea.vmem [#allocation3], %s2993
          %v4509 = vld [vmem:[%s4508] sm:$0xff]
          %v4510 = vld [vmem:[%s4508 + $0x8] sm:$0xff]
          %v4511 = vld [vmem:[%s4508 + $0x10] sm:$0xff]
          %v4512 = vld [vmem:[%s4508 + $0x18] sm:$0xff]
          %v4513 = vld [vmem:[%s4508 + $0x20] sm:$0xff]
          %v4514 = vld [vmem:[%s4508 + $0x28] sm:$0xff]
          %v4515 = vld [vmem:[%s4508 + $0x30] sm:$0xff]
          %v4516 = vld [vmem:[%s4508 + $0x38] sm:$0xff]
          %v4517 = vld [vmem:[%s4508 + $0x40] sm:$0xff]
          %v4518 = vld [vmem:[%s4508 + $0x48] sm:$0xff]
          %v4519 = vld [vmem:[%s4508 + $0x50] sm:$0xff]
          %v4520 = vld [vmem:[%s4508 + $0x58] sm:$0xff]
          %v4521 = vld [vmem:[%s4508 + $0x60] sm:$0xff]
          %v4522 = vld [vmem:[%s4508 + $0x68] sm:$0xff]
          %v4523 = vld [vmem:[%s4508 + $0x70] sm:$0xff]
          %v4524 = vld [vmem:[%s4508 + $0x78] sm:$0xff]
          %v4525 = vld [vmem:[%s4508 + $0x80] sm:$0xff]
          %v4526 = vld [vmem:[%s4508 + $0x88] sm:$0xff]
          %v4527 = vld [vmem:[%s4508 + $0x90] sm:$0xff]
          %v4528 = vld [vmem:[%s4508 + $0x98] sm:$0xff]
          %v4529 = vld [vmem:[%s4508 + $0xa0] sm:$0xff]
          %v4530 = vld [vmem:[%s4508 + $0xa8] sm:$0xff]
          %v4531 = vld [vmem:[%s4508 + $0xb0] sm:$0xff]
          %v4532 = vld [vmem:[%s4508 + $0xb8] sm:$0xff]
          %v4533 = vld [vmem:[%s4508 + $0xc0] sm:$0xff]
          %v4534 = vld [vmem:[%s4508 + $0xc8] sm:$0xff]
          %v4535 = vld [vmem:[%s4508 + $0xd0] sm:$0xff]
          %v4536 = vld [vmem:[%s4508 + $0xd8] sm:$0xff]
          %v4537 = vld [vmem:[%s4508 + $0xe0] sm:$0xff]
          %v4538 = vld [vmem:[%s4508 + $0xe8] sm:$0xff]
          %v4539 = vld [vmem:[%s4508 + $0xf0] sm:$0xff]
          %v4540 = vld [vmem:[%s4508 + $0xf8] sm:$0xff]
          %v4541 = vld [vmem:[%s4508 + $0x100] sm:$0xff]
          %v4542 = vld [vmem:[%s4508 + $0x108] sm:$0xff]
          %v4543 = vld [vmem:[%s4508 + $0x110] sm:$0xff]
          %v4544 = vld [vmem:[%s4508 + $0x118] sm:$0xff]
          %v4545 = vld [vmem:[%s4508 + $0x120] sm:$0xff]
          %v4546 = vld [vmem:[%s4508 + $0x128] sm:$0xff]
          %v4547 = vld [vmem:[%s4508 + $0x130] sm:$0xff]
          %v4548 = vld [vmem:[%s4508 + $0x138] sm:$0xff]
          %v4549 = vld [vmem:[%s4508 + $0x140] sm:$0xff]
          %v4550 = vld [vmem:[%s4508 + $0x148] sm:$0xff]
          %v4551 = vld [vmem:[%s4508 + $0x150] sm:$0xff]
          %v4552 = vld [vmem:[%s4508 + $0x158] sm:$0xff]
          %v4553 = vld [vmem:[%s4508 + $0x160] sm:$0xff]
          %v4554 = vld [vmem:[%s4508 + $0x168] sm:$0xff]
          %v4555 = vld [vmem:[%s4508 + $0x170] sm:$0xff]
          %v4556 = vld [vmem:[%s4508 + $0x178] sm:$0xff]
          %v4557 = vld [vmem:[%s4508 + $0x180] sm:$0xff]
          %v4558 = vld [vmem:[%s4508 + $0x188] sm:$0xff]
          %v4559 = vld [vmem:[%s4508 + $0x190] sm:$0xff]
          %v4560 = vld [vmem:[%s4508 + $0x198] sm:$0xff]
          %v4561 = vld [vmem:[%s4508 + $0x1a0] sm:$0xff]
          %v4562 = vld [vmem:[%s4508 + $0x1a8] sm:$0xff]
          %v4563 = vld [vmem:[%s4508 + $0x1b0] sm:$0xff]
          %v4564 = vld [vmem:[%s4508 + $0x1b8] sm:$0xff]
          %v4565 = vld [vmem:[%s4508 + $0x1c0] sm:$0xff]
          %v4566 = vld [vmem:[%s4508 + $0x1c8] sm:$0xff]
          %v4567 = vld [vmem:[%s4508 + $0x1d0] sm:$0xff]
          %v4568 = vld [vmem:[%s4508 + $0x1d8] sm:$0xff]
          %v4569 = vld [vmem:[%s4508 + $0x1e0] sm:$0xff]
          %v4570 = vld [vmem:[%s4508 + $0x1e8] sm:$0xff]
          %v4571 = vld [vmem:[%s4508 + $0x1f0] sm:$0xff]
          %v4572 = vld [vmem:[%s4508 + $0x1f8] sm:$0xff]
          %v4573 = vlaneseq
          %v4574 = vand.u32 %v4573, 127
          %vm4575 = vcmp.lt.s32.totalorder %v4574, 40
          %v4576 = vsel %vm4575, %v4509, -inf
          %v4577 = vsel %vm4575, %v4510, -inf
          %v4578 = vsel %vm4575, %v4511, -inf
          %v4579 = vsel %vm4575, %v4512, -inf
          %v4580 = vsel %vm4575, %v4513, -inf
          %v4581 = vsel %vm4575, %v4514, -inf
          %v4582 = vsel %vm4575, %v4515, -inf
          %v4583 = vsel %vm4575, %v4516, -inf
          %v4584 = vsel %vm4575, %v4517, -inf
          %v4585 = vsel %vm4575, %v4518, -inf
          %v4586 = vsel %vm4575, %v4519, -inf
          %v4587 = vsel %vm4575, %v4520, -inf
          %v4588 = vsel %vm4575, %v4521, -inf
          %v4589 = vsel %vm4575, %v4522, -inf
          %v4590 = vsel %vm4575, %v4523, -inf
          %v4591 = vsel %vm4575, %v4524, -inf
          %v4592 = vsel %vm4575, %v4525, -inf
          %v4593 = vsel %vm4575, %v4526, -inf
          %v4594 = vsel %vm4575, %v4527, -inf
          %v4595 = vsel %vm4575, %v4528, -inf
          %v4596 = vsel %vm4575, %v4529, -inf
          %v4597 = vsel %vm4575, %v4530, -inf
          %v4598 = vsel %vm4575, %v4531, -inf
          %v4599 = vsel %vm4575, %v4532, -inf
          %v4600 = vsel %vm4575, %v4533, -inf
          %v4601 = vsel %vm4575, %v4534, -inf
          %v4602 = vsel %vm4575, %v4535, -inf
          %v4603 = vsel %vm4575, %v4536, -inf
          %v4604 = vsel %vm4575, %v4537, -inf
          %v4605 = vsel %vm4575, %v4538, -inf
          %v4606 = vsel %vm4575, %v4539, -inf
          %v4607 = vsel %vm4575, %v4540, -inf
          %v4608 = vsel %vm4575, %v4541, -inf
          %v4609 = vsel %vm4575, %v4542, -inf
          %v4610 = vsel %vm4575, %v4543, -inf
          %v4611 = vsel %vm4575, %v4544, -inf
          %v4612 = vsel %vm4575, %v4545, -inf
          %v4613 = vsel %vm4575, %v4546, -inf
          %v4614 = vsel %vm4575, %v4547, -inf
          %v4615 = vsel %vm4575, %v4548, -inf
          %v4616 = vsel %vm4575, %v4549, -inf
          %v4617 = vsel %vm4575, %v4550, -inf
          %v4618 = vsel %vm4575, %v4551, -inf
          %v4619 = vsel %vm4575, %v4552, -inf
          %v4620 = vsel %vm4575, %v4553, -inf
          %v4621 = vsel %vm4575, %v4554, -inf
          %v4622 = vsel %vm4575, %v4555, -inf
          %v4623 = vsel %vm4575, %v4556, -inf
          %v4624 = vsel %vm4575, %v4557, -inf
          %v4625 = vsel %vm4575, %v4558, -inf
          %v4626 = vsel %vm4575, %v4559, -inf
          %v4627 = vsel %vm4575, %v4560, -inf
          %v4628 = vsel %vm4575, %v4561, -inf
          %v4629 = vsel %vm4575, %v4562, -inf
          %v4630 = vsel %vm4575, %v4563, -inf
          %v4631 = vsel %vm4575, %v4564, -inf
          %v4632 = vsel %vm4575, %v4565, -inf
          %v4633 = vsel %vm4575, %v4566, -inf
          %v4634 = vsel %vm4575, %v4567, -inf
          %v4635 = vsel %vm4575, %v4568, -inf
          %v4636 = vsel %vm4575, %v4569, -inf
          %v4637 = vsel %vm4575, %v4570, -inf
          %v4638 = vsel %vm4575, %v4571, -inf
          %v4639 = vsel %vm4575, %v4572, -inf
          %4640 = vmax.xlane.f32.xlu0 %v4576
          %v4641 = vpop.xlane.xlu0 %4640
          %4642 = vmax.xlane.f32.xlu0 %v4577
          %v4643 = vpop.xlane.xlu0 %4642
          %4644 = vmax.xlane.f32.xlu0 %v4578
          %v4645 = vpop.xlane.xlu0 %4644
          %4646 = vmax.xlane.f32.xlu0 %v4579
          %v4647 = vpop.xlane.xlu0 %4646
          %4648 = vmax.xlane.f32.xlu0 %v4580
          %v4649 = vpop.xlane.xlu0 %4648
          %4650 = vmax.xlane.f32.xlu0 %v4581
          %v4651 = vpop.xlane.xlu0 %4650
          %4652 = vmax.xlane.f32.xlu0 %v4582
          %v4653 = vpop.xlane.xlu0 %4652
          %4654 = vmax.xlane.f32.xlu0 %v4583
          %v4655 = vpop.xlane.xlu0 %4654
          %4656 = vmax.xlane.f32.xlu0 %v4584
          %v4657 = vpop.xlane.xlu0 %4656
          %4658 = vmax.xlane.f32.xlu0 %v4585
          %v4659 = vpop.xlane.xlu0 %4658
          %4660 = vmax.xlane.f32.xlu0 %v4586
          %v4661 = vpop.xlane.xlu0 %4660
          %4662 = vmax.xlane.f32.xlu0 %v4587
          %v4663 = vpop.xlane.xlu0 %4662
          %4664 = vmax.xlane.f32.xlu0 %v4588
          %v4665 = vpop.xlane.xlu0 %4664
          %4666 = vmax.xlane.f32.xlu0 %v4589
          %v4667 = vpop.xlane.xlu0 %4666
          %4668 = vmax.xlane.f32.xlu0 %v4590
          %v4669 = vpop.xlane.xlu0 %4668
          %4670 = vmax.xlane.f32.xlu0 %v4591
          %v4671 = vpop.xlane.xlu0 %4670
          %4672 = vmax.xlane.f32.xlu0 %v4592
          %v4673 = vpop.xlane.xlu0 %4672
          %4674 = vmax.xlane.f32.xlu0 %v4593
          %v4675 = vpop.xlane.xlu0 %4674
          %4676 = vmax.xlane.f32.xlu0 %v4594
          %v4677 = vpop.xlane.xlu0 %4676
          %4678 = vmax.xlane.f32.xlu0 %v4595
          %v4679 = vpop.xlane.xlu0 %4678
          %4680 = vmax.xlane.f32.xlu0 %v4596
          %v4681 = vpop.xlane.xlu0 %4680
          %4682 = vmax.xlane.f32.xlu0 %v4597
          %v4683 = vpop.xlane.xlu0 %4682
          %4684 = vmax.xlane.f32.xlu0 %v4598
          %v4685 = vpop.xlane.xlu0 %4684
          %4686 = vmax.xlane.f32.xlu0 %v4599
          %v4687 = vpop.xlane.xlu0 %4686
          %4688 = vmax.xlane.f32.xlu0 %v4600
          %v4689 = vpop.xlane.xlu0 %4688
          %4690 = vmax.xlane.f32.xlu0 %v4601
          %v4691 = vpop.xlane.xlu0 %4690
          %4692 = vmax.xlane.f32.xlu0 %v4602
          %v4693 = vpop.xlane.xlu0 %4692
          %4694 = vmax.xlane.f32.xlu0 %v4603
          %v4695 = vpop.xlane.xlu0 %4694
          %4696 = vmax.xlane.f32.xlu0 %v4604
          %v4697 = vpop.xlane.xlu0 %4696
          %4698 = vmax.xlane.f32.xlu0 %v4605
          %v4699 = vpop.xlane.xlu0 %4698
          %4700 = vmax.xlane.f32.xlu0 %v4606
          %v4701 = vpop.xlane.xlu0 %4700
          %4702 = vmax.xlane.f32.xlu0 %v4607
          %v4703 = vpop.xlane.xlu0 %4702
          %4704 = vmax.xlane.f32.xlu0 %v4608
          %v4705 = vpop.xlane.xlu0 %4704
          %4706 = vmax.xlane.f32.xlu0 %v4609
          %v4707 = vpop.xlane.xlu0 %4706
          %4708 = vmax.xlane.f32.xlu0 %v4610
          %v4709 = vpop.xlane.xlu0 %4708
          %4710 = vmax.xlane.f32.xlu0 %v4611
          %v4711 = vpop.xlane.xlu0 %4710
          %4712 = vmax.xlane.f32.xlu0 %v4612
          %v4713 = vpop.xlane.xlu0 %4712
          %4714 = vmax.xlane.f32.xlu0 %v4613
          %v4715 = vpop.xlane.xlu0 %4714
          %4716 = vmax.xlane.f32.xlu0 %v4614
          %v4717 = vpop.xlane.xlu0 %4716
          %4718 = vmax.xlane.f32.xlu0 %v4615
          %v4719 = vpop.xlane.xlu0 %4718
          %4720 = vmax.xlane.f32.xlu0 %v4616
          %v4721 = vpop.xlane.xlu0 %4720
          %4722 = vmax.xlane.f32.xlu0 %v4617
          %v4723 = vpop.xlane.xlu0 %4722
          %4724 = vmax.xlane.f32.xlu0 %v4618
          %v4725 = vpop.xlane.xlu0 %4724
          %4726 = vmax.xlane.f32.xlu0 %v4619
          %v4727 = vpop.xlane.xlu0 %4726
          %4728 = vmax.xlane.f32.xlu0 %v4620
          %v4729 = vpop.xlane.xlu0 %4728
          %4730 = vmax.xlane.f32.xlu0 %v4621
          %v4731 = vpop.xlane.xlu0 %4730
          %4732 = vmax.xlane.f32.xlu0 %v4622
          %v4733 = vpop.xlane.xlu0 %4732
          %4734 = vmax.xlane.f32.xlu0 %v4623
          %v4735 = vpop.xlane.xlu0 %4734
          %4736 = vmax.xlane.f32.xlu0 %v4624
          %v4737 = vpop.xlane.xlu0 %4736
          %4738 = vmax.xlane.f32.xlu0 %v4625
          %v4739 = vpop.xlane.xlu0 %4738
          %4740 = vmax.xlane.f32.xlu0 %v4626
          %v4741 = vpop.xlane.xlu0 %4740
          %4742 = vmax.xlane.f32.xlu0 %v4627
          %v4743 = vpop.xlane.xlu0 %4742
          %4744 = vmax.xlane.f32.xlu0 %v4628
          %v4745 = vpop.xlane.xlu0 %4744
          %4746 = vmax.xlane.f32.xlu0 %v4629
          %v4747 = vpop.xlane.xlu0 %4746
          %4748 = vmax.xlane.f32.xlu0 %v4630
          %v4749 = vpop.xlane.xlu0 %4748
          %4750 = vmax.xlane.f32.xlu0 %v4631
          %v4751 = vpop.xlane.xlu0 %4750
          %4752 = vmax.xlane.f32.xlu0 %v4632
          %v4753 = vpop.xlane.xlu0 %4752
          %4754 = vmax.xlane.f32.xlu0 %v4633
          %v4755 = vpop.xlane.xlu0 %4754
          %4756 = vmax.xlane.f32.xlu0 %v4634
          %v4757 = vpop.xlane.xlu0 %4756
          %4758 = vmax.xlane.f32.xlu0 %v4635
          %v4759 = vpop.xlane.xlu0 %4758
          %4760 = vmax.xlane.f32.xlu0 %v4636
          %v4761 = vpop.xlane.xlu0 %4760
          %4762 = vmax.xlane.f32.xlu0 %v4637
          %v4763 = vpop.xlane.xlu0 %4762
          %4764 = vmax.xlane.f32.xlu0 %v4638
          %v4765 = vpop.xlane.xlu0 %4764
          %4766 = vmax.xlane.f32.xlu0 %v4639
          %v4767 = vpop.xlane.xlu0 %4766
          %v4768 = vsub.f32 %v4509, %v4641
          %v4769 = vsub.f32 %v4510, %v4643
          %v4770 = vsub.f32 %v4511, %v4645
          %v4771 = vsub.f32 %v4512, %v4647
          %v4772 = vsub.f32 %v4513, %v4649
          %v4773 = vsub.f32 %v4514, %v4651
          %v4774 = vsub.f32 %v4515, %v4653
          %v4775 = vsub.f32 %v4516, %v4655
          %v4776 = vsub.f32 %v4517, %v4657
          %v4777 = vsub.f32 %v4518, %v4659
          %v4778 = vsub.f32 %v4519, %v4661
          %v4779 = vsub.f32 %v4520, %v4663
          %v4780 = vsub.f32 %v4521, %v4665
          %v4781 = vsub.f32 %v4522, %v4667
          %v4782 = vsub.f32 %v4523, %v4669
          %v4783 = vsub.f32 %v4524, %v4671
          %v4784 = vsub.f32 %v4525, %v4673
          %v4785 = vsub.f32 %v4526, %v4675
          %v4786 = vsub.f32 %v4527, %v4677
          %v4787 = vsub.f32 %v4528, %v4679
          %v4788 = vsub.f32 %v4529, %v4681
          %v4789 = vsub.f32 %v4530, %v4683
          %v4790 = vsub.f32 %v4531, %v4685
          %v4791 = vsub.f32 %v4532, %v4687
          %v4792 = vsub.f32 %v4533, %v4689
          %v4793 = vsub.f32 %v4534, %v4691
          %v4794 = vsub.f32 %v4535, %v4693
          %v4795 = vsub.f32 %v4536, %v4695
          %v4796 = vsub.f32 %v4537, %v4697
          %v4797 = vsub.f32 %v4538, %v4699
          %v4798 = vsub.f32 %v4539, %v4701
          %v4799 = vsub.f32 %v4540, %v4703
          %v4800 = vsub.f32 %v4541, %v4705
          %v4801 = vsub.f32 %v4542, %v4707
          %v4802 = vsub.f32 %v4543, %v4709
          %v4803 = vsub.f32 %v4544, %v4711
          %v4804 = vsub.f32 %v4545, %v4713
          %v4805 = vsub.f32 %v4546, %v4715
          %v4806 = vsub.f32 %v4547, %v4717
          %v4807 = vsub.f32 %v4548, %v4719
          %v4808 = vsub.f32 %v4549, %v4721
          %v4809 = vsub.f32 %v4550, %v4723
          %v4810 = vsub.f32 %v4551, %v4725
          %v4811 = vsub.f32 %v4552, %v4727
          %v4812 = vsub.f32 %v4553, %v4729
          %v4813 = vsub.f32 %v4554, %v4731
          %v4814 = vsub.f32 %v4555, %v4733
          %v4815 = vsub.f32 %v4556, %v4735
          %v4816 = vsub.f32 %v4557, %v4737
          %v4817 = vsub.f32 %v4558, %v4739
          %v4818 = vsub.f32 %v4559, %v4741
          %v4819 = vsub.f32 %v4560, %v4743
          %v4820 = vsub.f32 %v4561, %v4745
          %v4821 = vsub.f32 %v4562, %v4747
          %v4822 = vsub.f32 %v4563, %v4749
          %v4823 = vsub.f32 %v4564, %v4751
          %v4824 = vsub.f32 %v4565, %v4753
          %v4825 = vsub.f32 %v4566, %v4755
          %v4826 = vsub.f32 %v4567, %v4757
          %v4827 = vsub.f32 %v4568, %v4759
          %v4828 = vsub.f32 %v4569, %v4761
          %v4829 = vsub.f32 %v4570, %v4763
          %v4830 = vsub.f32 %v4571, %v4765
          %v4831 = vsub.f32 %v4572, %v4767
          %v4832 = vmul.f32 %v4768, 1.442695
          %v4833 = vpow.pop %v4832
          %v4834 = vmul.f32 %v4769, 1.442695
          %v4835 = vpow.pop %v4834
          %v4836 = vmul.f32 %v4770, 1.442695
          %v4837 = vpow.pop %v4836
          %v4838 = vmul.f32 %v4771, 1.442695
          %v4839 = vpow.pop %v4838
          %v4840 = vmul.f32 %v4772, 1.442695
          %v4841 = vpow.pop %v4840
          %v4842 = vmul.f32 %v4773, 1.442695
          %v4843 = vpow.pop %v4842
          %v4844 = vmul.f32 %v4774, 1.442695
          %v4845 = vpow.pop %v4844
          %v4846 = vmul.f32 %v4775, 1.442695
          %v4847 = vpow.pop %v4846
          %v4848 = vmul.f32 %v4776, 1.442695
          %v4849 = vpow.pop %v4848
          %v4850 = vmul.f32 %v4777, 1.442695
          %v4851 = vpow.pop %v4850
          %v4852 = vmul.f32 %v4778, 1.442695
          %v4853 = vpow.pop %v4852
          %v4854 = vmul.f32 %v4779, 1.442695
          %v4855 = vpow.pop %v4854
          %v4856 = vmul.f32 %v4780, 1.442695
          %v4857 = vpow.pop %v4856
          %v4858 = vmul.f32 %v4781, 1.442695
          %v4859 = vpow.pop %v4858
          %v4860 = vmul.f32 %v4782, 1.442695
          %v4861 = vpow.pop %v4860
          %v4862 = vmul.f32 %v4783, 1.442695
          %v4863 = vpow.pop %v4862
          %v4864 = vmul.f32 %v4784, 1.442695
          %v4865 = vpow.pop %v4864
          %v4866 = vmul.f32 %v4785, 1.442695
          %v4867 = vpow.pop %v4866
          %v4868 = vmul.f32 %v4786, 1.442695
          %v4869 = vpow.pop %v4868
          %v4870 = vmul.f32 %v4787, 1.442695
          %v4871 = vpow.pop %v4870
          %v4872 = vmul.f32 %v4788, 1.442695
          %v4873 = vpow.pop %v4872
          %v4874 = vmul.f32 %v4789, 1.442695
          %v4875 = vpow.pop %v4874
          %v4876 = vmul.f32 %v4790, 1.442695
          %v4877 = vpow.pop %v4876
          %v4878 = vmul.f32 %v4791, 1.442695
          %v4879 = vpow.pop %v4878
          %v4880 = vmul.f32 %v4792, 1.442695
          %v4881 = vpow.pop %v4880
          %v4882 = vmul.f32 %v4793, 1.442695
          %v4883 = vpow.pop %v4882
          %v4884 = vmul.f32 %v4794, 1.442695
          %v4885 = vpow.pop %v4884
          %v4886 = vmul.f32 %v4795, 1.442695
          %v4887 = vpow.pop %v4886
          %v4888 = vmul.f32 %v4796, 1.442695
          %v4889 = vpow.pop %v4888
          %v4890 = vmul.f32 %v4797, 1.442695
          %v4891 = vpow.pop %v4890
          %v4892 = vmul.f32 %v4798, 1.442695
          %v4893 = vpow.pop %v4892
          %v4894 = vmul.f32 %v4799, 1.442695
          %v4895 = vpow.pop %v4894
          %v4896 = vmul.f32 %v4800, 1.442695
          %v4897 = vpow.pop %v4896
          %v4898 = vmul.f32 %v4801, 1.442695
          %v4899 = vpow.pop %v4898
          %v4900 = vmul.f32 %v4802, 1.442695
          %v4901 = vpow.pop %v4900
          %v4902 = vmul.f32 %v4803, 1.442695
          %v4903 = vpow.pop %v4902
          %v4904 = vmul.f32 %v4804, 1.442695
          %v4905 = vpow.pop %v4904
          %v4906 = vmul.f32 %v4805, 1.442695
          %v4907 = vpow.pop %v4906
          %v4908 = vmul.f32 %v4806, 1.442695
          %v4909 = vpow.pop %v4908
          %v4910 = vmul.f32 %v4807, 1.442695
          %v4911 = vpow.pop %v4910
          %v4912 = vmul.f32 %v4808, 1.442695
          %v4913 = vpow.pop %v4912
          %v4914 = vmul.f32 %v4809, 1.442695
          %v4915 = vpow.pop %v4914
          %v4916 = vmul.f32 %v4810, 1.442695
          %v4917 = vpow.pop %v4916
          %v4918 = vmul.f32 %v4811, 1.442695
          %v4919 = vpow.pop %v4918
          %v4920 = vmul.f32 %v4812, 1.442695
          %v4921 = vpow.pop %v4920
          %v4922 = vmul.f32 %v4813, 1.442695
          %v4923 = vpow.pop %v4922
          %v4924 = vmul.f32 %v4814, 1.442695
          %v4925 = vpow.pop %v4924
          %v4926 = vmul.f32 %v4815, 1.442695
          %v4927 = vpow.pop %v4926
          %v4928 = vmul.f32 %v4816, 1.442695
          %v4929 = vpow.pop %v4928
          %v4930 = vmul.f32 %v4817, 1.442695
          %v4931 = vpow.pop %v4930
          %v4932 = vmul.f32 %v4818, 1.442695
          %v4933 = vpow.pop %v4932
          %v4934 = vmul.f32 %v4819, 1.442695
          %v4935 = vpow.pop %v4934
          %v4936 = vmul.f32 %v4820, 1.442695
          %v4937 = vpow.pop %v4936
          %v4938 = vmul.f32 %v4821, 1.442695
          %v4939 = vpow.pop %v4938
          %v4940 = vmul.f32 %v4822, 1.442695
          %v4941 = vpow.pop %v4940
          %v4942 = vmul.f32 %v4823, 1.442695
          %v4943 = vpow.pop %v4942
          %v4944 = vmul.f32 %v4824, 1.442695
          %v4945 = vpow.pop %v4944
          %v4946 = vmul.f32 %v4825, 1.442695
          %v4947 = vpow.pop %v4946
          %v4948 = vmul.f32 %v4826, 1.442695
          %v4949 = vpow.pop %v4948
          %v4950 = vmul.f32 %v4827, 1.442695
          %v4951 = vpow.pop %v4950
          %v4952 = vmul.f32 %v4828, 1.442695
          %v4953 = vpow.pop %v4952
          %v4954 = vmul.f32 %v4829, 1.442695
          %v4955 = vpow.pop %v4954
          %v4956 = vmul.f32 %v4830, 1.442695
          %v4957 = vpow.pop %v4956
          %v4958 = vmul.f32 %v4831, 1.442695
          %v4959 = vpow.pop %v4958
          %v4960 = vsel %vm4575, %v4833, 0.0
          %v4961 = vsel %vm4575, %v4835, 0.0
          %v4962 = vsel %vm4575, %v4837, 0.0
          %v4963 = vsel %vm4575, %v4839, 0.0
          %v4964 = vsel %vm4575, %v4841, 0.0
          %v4965 = vsel %vm4575, %v4843, 0.0
          %v4966 = vsel %vm4575, %v4845, 0.0
          %v4967 = vsel %vm4575, %v4847, 0.0
          %v4968 = vsel %vm4575, %v4849, 0.0
          %v4969 = vsel %vm4575, %v4851, 0.0
          %v4970 = vsel %vm4575, %v4853, 0.0
          %v4971 = vsel %vm4575, %v4855, 0.0
          %v4972 = vsel %vm4575, %v4857, 0.0
          %v4973 = vsel %vm4575, %v4859, 0.0
          %v4974 = vsel %vm4575, %v4861, 0.0
          %v4975 = vsel %vm4575, %v4863, 0.0
          %v4976 = vsel %vm4575, %v4865, 0.0
          %v4977 = vsel %vm4575, %v4867, 0.0
          %v4978 = vsel %vm4575, %v4869, 0.0
          %v4979 = vsel %vm4575, %v4871, 0.0
          %v4980 = vsel %vm4575, %v4873, 0.0
          %v4981 = vsel %vm4575, %v4875, 0.0
          %v4982 = vsel %vm4575, %v4877, 0.0
          %v4983 = vsel %vm4575, %v4879, 0.0
          %v4984 = vsel %vm4575, %v4881, 0.0
          %v4985 = vsel %vm4575, %v4883, 0.0
          %v4986 = vsel %vm4575, %v4885, 0.0
          %v4987 = vsel %vm4575, %v4887, 0.0
          %v4988 = vsel %vm4575, %v4889, 0.0
          %v4989 = vsel %vm4575, %v4891, 0.0
          %v4990 = vsel %vm4575, %v4893, 0.0
          %v4991 = vsel %vm4575, %v4895, 0.0
          %v4992 = vsel %vm4575, %v4897, 0.0
          %v4993 = vsel %vm4575, %v4899, 0.0
          %v4994 = vsel %vm4575, %v4901, 0.0
          %v4995 = vsel %vm4575, %v4903, 0.0
          %v4996 = vsel %vm4575, %v4905, 0.0
          %v4997 = vsel %vm4575, %v4907, 0.0
          %v4998 = vsel %vm4575, %v4909, 0.0
          %v4999 = vsel %vm4575, %v4911, 0.0
          %v5000 = vsel %vm4575, %v4913, 0.0
          %v5001 = vsel %vm4575, %v4915, 0.0
          %v5002 = vsel %vm4575, %v4917, 0.0
          %v5003 = vsel %vm4575, %v4919, 0.0
          %v5004 = vsel %vm4575, %v4921, 0.0
          %v5005 = vsel %vm4575, %v4923, 0.0
          %v5006 = vsel %vm4575, %v4925, 0.0
          %v5007 = vsel %vm4575, %v4927, 0.0
          %v5008 = vsel %vm4575, %v4929, 0.0
          %v5009 = vsel %vm4575, %v4931, 0.0
          %v5010 = vsel %vm4575, %v4933, 0.0
          %v5011 = vsel %vm4575, %v4935, 0.0
          %v5012 = vsel %vm4575, %v4937, 0.0
          %v5013 = vsel %vm4575, %v4939, 0.0
          %v5014 = vsel %vm4575, %v4941, 0.0
          %v5015 = vsel %vm4575, %v4943, 0.0
          %v5016 = vsel %vm4575, %v4945, 0.0
          %v5017 = vsel %vm4575, %v4947, 0.0
          %v5018 = vsel %vm4575, %v4949, 0.0
          %v5019 = vsel %vm4575, %v4951, 0.0
          %v5020 = vsel %vm4575, %v4953, 0.0
          %v5021 = vsel %vm4575, %v4955, 0.0
          %v5022 = vsel %vm4575, %v4957, 0.0
          %v5023 = vsel %vm4575, %v4959, 0.0
          %5024 = vadd.xlane.f32.xlu0 %v4960
          %v5025 = vpop.xlane.xlu0 %5024
          %5026 = vadd.xlane.f32.xlu0 %v4961
          %v5027 = vpop.xlane.xlu0 %5026
          %5028 = vadd.xlane.f32.xlu0 %v4962
          %v5029 = vpop.xlane.xlu0 %5028
          %5030 = vadd.xlane.f32.xlu0 %v4963
          %v5031 = vpop.xlane.xlu0 %5030
          %5032 = vadd.xlane.f32.xlu0 %v4964
          %v5033 = vpop.xlane.xlu0 %5032
          %5034 = vadd.xlane.f32.xlu0 %v4965
          %v5035 = vpop.xlane.xlu0 %5034
          %5036 = vadd.xlane.f32.xlu0 %v4966
          %v5037 = vpop.xlane.xlu0 %5036
          %5038 = vadd.xlane.f32.xlu0 %v4967
          %v5039 = vpop.xlane.xlu0 %5038
          %5040 = vadd.xlane.f32.xlu0 %v4968
          %v5041 = vpop.xlane.xlu0 %5040
          %5042 = vadd.xlane.f32.xlu0 %v4969
          %v5043 = vpop.xlane.xlu0 %5042
          %5044 = vadd.xlane.f32.xlu0 %v4970
          %v5045 = vpop.xlane.xlu0 %5044
          %5046 = vadd.xlane.f32.xlu0 %v4971
          %v5047 = vpop.xlane.xlu0 %5046
          %5048 = vadd.xlane.f32.xlu0 %v4972
          %v5049 = vpop.xlane.xlu0 %5048
          %5050 = vadd.xlane.f32.xlu0 %v4973
          %v5051 = vpop.xlane.xlu0 %5050
          %5052 = vadd.xlane.f32.xlu0 %v4974
          %v5053 = vpop.xlane.xlu0 %5052
          %5054 = vadd.xlane.f32.xlu0 %v4975
          %v5055 = vpop.xlane.xlu0 %5054
          %5056 = vadd.xlane.f32.xlu0 %v4976
          %v5057 = vpop.xlane.xlu0 %5056
          %5058 = vadd.xlane.f32.xlu0 %v4977
          %v5059 = vpop.xlane.xlu0 %5058
          %5060 = vadd.xlane.f32.xlu0 %v4978
          %v5061 = vpop.xlane.xlu0 %5060
          %5062 = vadd.xlane.f32.xlu0 %v4979
          %v5063 = vpop.xlane.xlu0 %5062
          %5064 = vadd.xlane.f32.xlu0 %v4980
          %v5065 = vpop.xlane.xlu0 %5064
          %5066 = vadd.xlane.f32.xlu0 %v4981
          %v5067 = vpop.xlane.xlu0 %5066
          %5068 = vadd.xlane.f32.xlu0 %v4982
          %v5069 = vpop.xlane.xlu0 %5068
          %5070 = vadd.xlane.f32.xlu0 %v4983
          %v5071 = vpop.xlane.xlu0 %5070
          %5072 = vadd.xlane.f32.xlu0 %v4984
          %v5073 = vpop.xlane.xlu0 %5072
          %5074 = vadd.xlane.f32.xlu0 %v4985
          %v5075 = vpop.xlane.xlu0 %5074
          %5076 = vadd.xlane.f32.xlu0 %v4986
          %v5077 = vpop.xlane.xlu0 %5076
          %5078 = vadd.xlane.f32.xlu0 %v4987
          %v5079 = vpop.xlane.xlu0 %5078
          %5080 = vadd.xlane.f32.xlu0 %v4988
          %v5081 = vpop.xlane.xlu0 %5080
          %5082 = vadd.xlane.f32.xlu0 %v4989
          %v5083 = vpop.xlane.xlu0 %5082
          %5084 = vadd.xlane.f32.xlu0 %v4990
          %v5085 = vpop.xlane.xlu0 %5084
          %5086 = vadd.xlane.f32.xlu0 %v4991
          %v5087 = vpop.xlane.xlu0 %5086
          %5088 = vadd.xlane.f32.xlu0 %v4992
          %v5089 = vpop.xlane.xlu0 %5088
          %5090 = vadd.xlane.f32.xlu0 %v4993
          %v5091 = vpop.xlane.xlu0 %5090
          %5092 = vadd.xlane.f32.xlu0 %v4994
          %v5093 = vpop.xlane.xlu0 %5092
          %5094 = vadd.xlane.f32.xlu0 %v4995
          %v5095 = vpop.xlane.xlu0 %5094
          %5096 = vadd.xlane.f32.xlu0 %v4996
          %v5097 = vpop.xlane.xlu0 %5096
          %5098 = vadd.xlane.f32.xlu0 %v4997
          %v5099 = vpop.xlane.xlu0 %5098
          %5100 = vadd.xlane.f32.xlu0 %v4998
          %v5101 = vpop.xlane.xlu0 %5100
          %5102 = vadd.xlane.f32.xlu0 %v4999
          %v5103 = vpop.xlane.xlu0 %5102
          %5104 = vadd.xlane.f32.xlu0 %v5000
          %v5105 = vpop.xlane.xlu0 %5104
          %5106 = vadd.xlane.f32.xlu0 %v5001
          %v5107 = vpop.xlane.xlu0 %5106
          %5108 = vadd.xlane.f32.xlu0 %v5002
          %v5109 = vpop.xlane.xlu0 %5108
          %5110 = vadd.xlane.f32.xlu0 %v5003
          %v5111 = vpop.xlane.xlu0 %5110
          %5112 = vadd.xlane.f32.xlu0 %v5004
          %v5113 = vpop.xlane.xlu0 %5112
          %5114 = vadd.xlane.f32.xlu0 %v5005
          %v5115 = vpop.xlane.xlu0 %5114
          %5116 = vadd.xlane.f32.xlu0 %v5006
          %v5117 = vpop.xlane.xlu0 %5116
          %5118 = vadd.xlane.f32.xlu0 %v5007
          %v5119 = vpop.xlane.xlu0 %5118
          %5120 = vadd.xlane.f32.xlu0 %v5008
          %v5121 = vpop.xlane.xlu0 %5120
          %5122 = vadd.xlane.f32.xlu0 %v5009
          %v5123 = vpop.xlane.xlu0 %5122
          %5124 = vadd.xlane.f32.xlu0 %v5010
          %v5125 = vpop.xlane.xlu0 %5124
          %5126 = vadd.xlane.f32.xlu0 %v5011
          %v5127 = vpop.xlane.xlu0 %5126
          %5128 = vadd.xlane.f32.xlu0 %v5012
          %v5129 = vpop.xlane.xlu0 %5128
          %5130 = vadd.xlane.f32.xlu0 %v5013
          %v5131 = vpop.xlane.xlu0 %5130
          %5132 = vadd.xlane.f32.xlu0 %v5014
          %v5133 = vpop.xlane.xlu0 %5132
          %5134 = vadd.xlane.f32.xlu0 %v5015
          %v5135 = vpop.xlane.xlu0 %5134
          %5136 = vadd.xlane.f32.xlu0 %v5016
          %v5137 = vpop.xlane.xlu0 %5136
          %5138 = vadd.xlane.f32.xlu0 %v5017
          %v5139 = vpop.xlane.xlu0 %5138
          %5140 = vadd.xlane.f32.xlu0 %v5018
          %v5141 = vpop.xlane.xlu0 %5140
          %5142 = vadd.xlane.f32.xlu0 %v5019
          %v5143 = vpop.xlane.xlu0 %5142
          %5144 = vadd.xlane.f32.xlu0 %v5020
          %v5145 = vpop.xlane.xlu0 %5144
          %5146 = vadd.xlane.f32.xlu0 %v5021
          %v5147 = vpop.xlane.xlu0 %5146
          %5148 = vadd.xlane.f32.xlu0 %v5022
          %v5149 = vpop.xlane.xlu0 %5148
          %5150 = vadd.xlane.f32.xlu0 %v5023
          %v5151 = vpop.xlane.xlu0 %5150
          %v5152 = vlog2.pop %v5025
          %v5153 = vmul.f32 %v5152, 0.6931472
          %v5154 = vlog2.pop %v5027
          %v5155 = vmul.f32 %v5154, 0.6931472
          %v5156 = vlog2.pop %v5029
          %v5157 = vmul.f32 %v5156, 0.6931472
          %v5158 = vlog2.pop %v5031
          %v5159 = vmul.f32 %v5158, 0.6931472
          %v5160 = vlog2.pop %v5033
          %v5161 = vmul.f32 %v5160, 0.6931472
          %v5162 = vlog2.pop %v5035
          %v5163 = vmul.f32 %v5162, 0.6931472
          %v5164 = vlog2.pop %v5037
          %v5165 = vmul.f32 %v5164, 0.6931472
          %v5166 = vlog2.pop %v5039
          %v5167 = vmul.f32 %v5166, 0.6931472
          %v5168 = vlog2.pop %v5041
          %v5169 = vmul.f32 %v5168, 0.6931472
          %v5170 = vlog2.pop %v5043
          %v5171 = vmul.f32 %v5170, 0.6931472
          %v5172 = vlog2.pop %v5045
          %v5173 = vmul.f32 %v5172, 0.6931472
          %v5174 = vlog2.pop %v5047
          %v5175 = vmul.f32 %v5174, 0.6931472
          %v5176 = vlog2.pop %v5049
          %v5177 = vmul.f32 %v5176, 0.6931472
          %v5178 = vlog2.pop %v5051
          %v5179 = vmul.f32 %v5178, 0.6931472
          %v5180 = vlog2.pop %v5053
          %v5181 = vmul.f32 %v5180, 0.6931472
          %v5182 = vlog2.pop %v5055
          %v5183 = vmul.f32 %v5182, 0.6931472
          %v5184 = vlog2.pop %v5057
          %v5185 = vmul.f32 %v5184, 0.6931472
          %v5186 = vlog2.pop %v5059
          %v5187 = vmul.f32 %v5186, 0.6931472
          %v5188 = vlog2.pop %v5061
          %v5189 = vmul.f32 %v5188, 0.6931472
          %v5190 = vlog2.pop %v5063
          %v5191 = vmul.f32 %v5190, 0.6931472
          %v5192 = vlog2.pop %v5065
          %v5193 = vmul.f32 %v5192, 0.6931472
          %v5194 = vlog2.pop %v5067
          %v5195 = vmul.f32 %v5194, 0.6931472
          %v5196 = vlog2.pop %v5069
          %v5197 = vmul.f32 %v5196, 0.6931472
          %v5198 = vlog2.pop %v5071
          %v5199 = vmul.f32 %v5198, 0.6931472
          %v5200 = vlog2.pop %v5073
          %v5201 = vmul.f32 %v5200, 0.6931472
          %v5202 = vlog2.pop %v5075
          %v5203 = vmul.f32 %v5202, 0.6931472
          %v5204 = vlog2.pop %v5077
          %v5205 = vmul.f32 %v5204, 0.6931472
          %v5206 = vlog2.pop %v5079
          %v5207 = vmul.f32 %v5206, 0.6931472
          %v5208 = vlog2.pop %v5081
          %v5209 = vmul.f32 %v5208, 0.6931472
          %v5210 = vlog2.pop %v5083
          %v5211 = vmul.f32 %v5210, 0.6931472
          %v5212 = vlog2.pop %v5085
          %v5213 = vmul.f32 %v5212, 0.6931472
          %v5214 = vlog2.pop %v5087
          %v5215 = vmul.f32 %v5214, 0.6931472
          %v5216 = vlog2.pop %v5089
          %v5217 = vmul.f32 %v5216, 0.6931472
          %v5218 = vlog2.pop %v5091
          %v5219 = vmul.f32 %v5218, 0.6931472
          %v5220 = vlog2.pop %v5093
          %v5221 = vmul.f32 %v5220, 0.6931472
          %v5222 = vlog2.pop %v5095
          %v5223 = vmul.f32 %v5222, 0.6931472
          %v5224 = vlog2.pop %v5097
          %v5225 = vmul.f32 %v5224, 0.6931472
          %v5226 = vlog2.pop %v5099
          %v5227 = vmul.f32 %v5226, 0.6931472
          %v5228 = vlog2.pop %v5101
          %v5229 = vmul.f32 %v5228, 0.6931472
          %v5230 = vlog2.pop %v5103
          %v5231 = vmul.f32 %v5230, 0.6931472
          %v5232 = vlog2.pop %v5105
          %v5233 = vmul.f32 %v5232, 0.6931472
          %v5234 = vlog2.pop %v5107
          %v5235 = vmul.f32 %v5234, 0.6931472
          %v5236 = vlog2.pop %v5109
          %v5237 = vmul.f32 %v5236, 0.6931472
          %v5238 = vlog2.pop %v5111
          %v5239 = vmul.f32 %v5238, 0.6931472
          %v5240 = vlog2.pop %v5113
          %v5241 = vmul.f32 %v5240, 0.6931472
          %v5242 = vlog2.pop %v5115
          %v5243 = vmul.f32 %v5242, 0.6931472
          %v5244 = vlog2.pop %v5117
          %v5245 = vmul.f32 %v5244, 0.6931472
          %v5246 = vlog2.pop %v5119
          %v5247 = vmul.f32 %v5246, 0.6931472
          %v5248 = vlog2.pop %v5121
          %v5249 = vmul.f32 %v5248, 0.6931472
          %v5250 = vlog2.pop %v5123
          %v5251 = vmul.f32 %v5250, 0.6931472
          %v5252 = vlog2.pop %v5125
          %v5253 = vmul.f32 %v5252, 0.6931472
          %v5254 = vlog2.pop %v5127
          %v5255 = vmul.f32 %v5254, 0.6931472
          %v5256 = vlog2.pop %v5129
          %v5257 = vmul.f32 %v5256, 0.6931472
          %v5258 = vlog2.pop %v5131
          %v5259 = vmul.f32 %v5258, 0.6931472
          %v5260 = vlog2.pop %v5133
          %v5261 = vmul.f32 %v5260, 0.6931472
          %v5262 = vlog2.pop %v5135
          %v5263 = vmul.f32 %v5262, 0.6931472
          %v5264 = vlog2.pop %v5137
          %v5265 = vmul.f32 %v5264, 0.6931472
          %v5266 = vlog2.pop %v5139
          %v5267 = vmul.f32 %v5266, 0.6931472
          %v5268 = vlog2.pop %v5141
          %v5269 = vmul.f32 %v5268, 0.6931472
          %v5270 = vlog2.pop %v5143
          %v5271 = vmul.f32 %v5270, 0.6931472
          %v5272 = vlog2.pop %v5145
          %v5273 = vmul.f32 %v5272, 0.6931472
          %v5274 = vlog2.pop %v5147
          %v5275 = vmul.f32 %v5274, 0.6931472
          %v5276 = vlog2.pop %v5149
          %v5277 = vmul.f32 %v5276, 0.6931472
          %v5278 = vlog2.pop %v5151
          %v5279 = vmul.f32 %v5278, 0.6931472
          %v5280 = vadd.f32 %v5153, %v4641
          %v5281 = vadd.f32 %v5155, %v4643
          %v5282 = vadd.f32 %v5157, %v4645
          %v5283 = vadd.f32 %v5159, %v4647
          %v5284 = vadd.f32 %v5161, %v4649
          %v5285 = vadd.f32 %v5163, %v4651
          %v5286 = vadd.f32 %v5165, %v4653
          %v5287 = vadd.f32 %v5167, %v4655
          %v5288 = vadd.f32 %v5169, %v4657
          %v5289 = vadd.f32 %v5171, %v4659
          %v5290 = vadd.f32 %v5173, %v4661
          %v5291 = vadd.f32 %v5175, %v4663
          %v5292 = vadd.f32 %v5177, %v4665
          %v5293 = vadd.f32 %v5179, %v4667
          %v5294 = vadd.f32 %v5181, %v4669
          %v5295 = vadd.f32 %v5183, %v4671
          %v5296 = vadd.f32 %v5185, %v4673
          %v5297 = vadd.f32 %v5187, %v4675
          %v5298 = vadd.f32 %v5189, %v4677
          %v5299 = vadd.f32 %v5191, %v4679
          %v5300 = vadd.f32 %v5193, %v4681
          %v5301 = vadd.f32 %v5195, %v4683
          %v5302 = vadd.f32 %v5197, %v4685
          %v5303 = vadd.f32 %v5199, %v4687
          %v5304 = vadd.f32 %v5201, %v4689
          %v5305 = vadd.f32 %v5203, %v4691
          %v5306 = vadd.f32 %v5205, %v4693
          %v5307 = vadd.f32 %v5207, %v4695
          %v5308 = vadd.f32 %v5209, %v4697
          %v5309 = vadd.f32 %v5211, %v4699
          %v5310 = vadd.f32 %v5213, %v4701
          %v5311 = vadd.f32 %v5215, %v4703
          %v5312 = vadd.f32 %v5217, %v4705
          %v5313 = vadd.f32 %v5219, %v4707
          %v5314 = vadd.f32 %v5221, %v4709
          %v5315 = vadd.f32 %v5223, %v4711
          %v5316 = vadd.f32 %v5225, %v4713
          %v5317 = vadd.f32 %v5227, %v4715
          %v5318 = vadd.f32 %v5229, %v4717
          %v5319 = vadd.f32 %v5231, %v4719
          %v5320 = vadd.f32 %v5233, %v4721
          %v5321 = vadd.f32 %v5235, %v4723
          %v5322 = vadd.f32 %v5237, %v4725
          %v5323 = vadd.f32 %v5239, %v4727
          %v5324 = vadd.f32 %v5241, %v4729
          %v5325 = vadd.f32 %v5243, %v4731
          %v5326 = vadd.f32 %v5245, %v4733
          %v5327 = vadd.f32 %v5247, %v4735
          %v5328 = vadd.f32 %v5249, %v4737
          %v5329 = vadd.f32 %v5251, %v4739
          %v5330 = vadd.f32 %v5253, %v4741
          %v5331 = vadd.f32 %v5255, %v4743
          %v5332 = vadd.f32 %v5257, %v4745
          %v5333 = vadd.f32 %v5259, %v4747
          %v5334 = vadd.f32 %v5261, %v4749
          %v5335 = vadd.f32 %v5263, %v4751
          %v5336 = vadd.f32 %v5265, %v4753
          %v5337 = vadd.f32 %v5267, %v4755
          %v5338 = vadd.f32 %v5269, %v4757
          %v5339 = vadd.f32 %v5271, %v4759
          %v5340 = vadd.f32 %v5273, %v4761
          %v5341 = vadd.f32 %v5275, %v4763
          %v5342 = vadd.f32 %v5277, %v4765
          %v5343 = vadd.f32 %v5279, %v4767
          %v5344 = vsub.f32 %v4509, %v5280
          %v5345 = vsub.f32 %v4510, %v5281
          %v5346 = vsub.f32 %v4511, %v5282
          %v5347 = vsub.f32 %v4512, %v5283
          %v5348 = vsub.f32 %v4513, %v5284
          %v5349 = vsub.f32 %v4514, %v5285
          %v5350 = vsub.f32 %v4515, %v5286
          %v5351 = vsub.f32 %v4516, %v5287
          %v5352 = vsub.f32 %v4517, %v5288
          %v5353 = vsub.f32 %v4518, %v5289
          %v5354 = vsub.f32 %v4519, %v5290
          %v5355 = vsub.f32 %v4520, %v5291
          %v5356 = vsub.f32 %v4521, %v5292
          %v5357 = vsub.f32 %v4522, %v5293
          %v5358 = vsub.f32 %v4523, %v5294
          %v5359 = vsub.f32 %v4524, %v5295
          %v5360 = vsub.f32 %v4525, %v5296
          %v5361 = vsub.f32 %v4526, %v5297
          %v5362 = vsub.f32 %v4527, %v5298
          %v5363 = vsub.f32 %v4528, %v5299
          %v5364 = vsub.f32 %v4529, %v5300
          %v5365 = vsub.f32 %v4530, %v5301
          %v5366 = vsub.f32 %v4531, %v5302
          %v5367 = vsub.f32 %v4532, %v5303
          %v5368 = vsub.f32 %v4533, %v5304
          %v5369 = vsub.f32 %v4534, %v5305
          %v5370 = vsub.f32 %v4535, %v5306
          %v5371 = vsub.f32 %v4536, %v5307
          %v5372 = vsub.f32 %v4537, %v5308
          %v5373 = vsub.f32 %v4538, %v5309
          %v5374 = vsub.f32 %v4539, %v5310
          %v5375 = vsub.f32 %v4540, %v5311
          %v5376 = vsub.f32 %v4541, %v5312
          %v5377 = vsub.f32 %v4542, %v5313
          %v5378 = vsub.f32 %v4543, %v5314
          %v5379 = vsub.f32 %v4544, %v5315
          %v5380 = vsub.f32 %v4545, %v5316
          %v5381 = vsub.f32 %v4546, %v5317
          %v5382 = vsub.f32 %v4547, %v5318
          %v5383 = vsub.f32 %v4548, %v5319
          %v5384 = vsub.f32 %v4549, %v5320
          %v5385 = vsub.f32 %v4550, %v5321
          %v5386 = vsub.f32 %v4551, %v5322
          %v5387 = vsub.f32 %v4552, %v5323
          %v5388 = vsub.f32 %v4553, %v5324
          %v5389 = vsub.f32 %v4554, %v5325
          %v5390 = vsub.f32 %v4555, %v5326
          %v5391 = vsub.f32 %v4556, %v5327
          %v5392 = vsub.f32 %v4557, %v5328
          %v5393 = vsub.f32 %v4558, %v5329
          %v5394 = vsub.f32 %v4559, %v5330
          %v5395 = vsub.f32 %v4560, %v5331
          %v5396 = vsub.f32 %v4561, %v5332
          %v5397 = vsub.f32 %v4562, %v5333
          %v5398 = vsub.f32 %v4563, %v5334
          %v5399 = vsub.f32 %v4564, %v5335
          %v5400 = vsub.f32 %v4565, %v5336
          %v5401 = vsub.f32 %v4566, %v5337
          %v5402 = vsub.f32 %v4567, %v5338
          %v5403 = vsub.f32 %v4568, %v5339
          %v5404 = vsub.f32 %v4569, %v5340
          %v5405 = vsub.f32 %v4570, %v5341
          %v5406 = vsub.f32 %v4571, %v5342
          %v5407 = vsub.f32 %v4572, %v5343
          %5408 = vst [vmem:[%s266] sm:$0xff] %v5344
          %5409 = vst [vmem:[%s266 + $0x8] sm:$0xff] %v5345
          %5410 = vst [vmem:[%s266 + $0x10] sm:$0xff] %v5346
          %5411 = vst [vmem:[%s266 + $0x18] sm:$0xff] %v5347
          %5412 = vst [vmem:[%s266 + $0x20] sm:$0xff] %v5348
          %5413 = vst [vmem:[%s266 + $0x28] sm:$0xff] %v5349
          %5414 = vst [vmem:[%s266 + $0x30] sm:$0xff] %v5350
          %5415 = vst [vmem:[%s266 + $0x38] sm:$0xff] %v5351
          %5416 = vst [vmem:[%s266 + $0x40] sm:$0xff] %v5352
          %5417 = vst [vmem:[%s266 + $0x48] sm:$0xff] %v5353
          %5418 = vst [vmem:[%s266 + $0x50] sm:$0xff] %v5354
          %5419 = vst [vmem:[%s266 + $0x58] sm:$0xff] %v5355
          %5420 = vst [vmem:[%s266 + $0x60] sm:$0xff] %v5356
          %5421 = vst [vmem:[%s266 + $0x68] sm:$0xff] %v5357
          %5422 = vst [vmem:[%s266 + $0x70] sm:$0xff] %v5358
          %5423 = vst [vmem:[%s266 + $0x78] sm:$0xff] %v5359
          %5424 = vst [vmem:[%s266 + $0x80] sm:$0xff] %v5360
          %5425 = vst [vmem:[%s266 + $0x88] sm:$0xff] %v5361
          %5426 = vst [vmem:[%s266 + $0x90] sm:$0xff] %v5362
          %5427 = vst [vmem:[%s266 + $0x98] sm:$0xff] %v5363
          %5428 = vst [vmem:[%s266 + $0xa0] sm:$0xff] %v5364
          %5429 = vst [vmem:[%s266 + $0xa8] sm:$0xff] %v5365
          %5430 = vst [vmem:[%s266 + $0xb0] sm:$0xff] %v5366
          %5431 = vst [vmem:[%s266 + $0xb8] sm:$0xff] %v5367
          %5432 = vst [vmem:[%s266 + $0xc0] sm:$0xff] %v5368
          %5433 = vst [vmem:[%s266 + $0xc8] sm:$0xff] %v5369
          %5434 = vst [vmem:[%s266 + $0xd0] sm:$0xff] %v5370
          %5435 = vst [vmem:[%s266 + $0xd8] sm:$0xff] %v5371
          %5436 = vst [vmem:[%s266 + $0xe0] sm:$0xff] %v5372
          %5437 = vst [vmem:[%s266 + $0xe8] sm:$0xff] %v5373
          %5438 = vst [vmem:[%s266 + $0xf0] sm:$0xff] %v5374
          %5439 = vst [vmem:[%s266 + $0xf8] sm:$0xff] %v5375
          %5440 = vst [vmem:[%s266 + $0x100] sm:$0xff] %v5376
          %5441 = vst [vmem:[%s266 + $0x108] sm:$0xff] %v5377
          %5442 = vst [vmem:[%s266 + $0x110] sm:$0xff] %v5378
          %5443 = vst [vmem:[%s266 + $0x118] sm:$0xff] %v5379
          %5444 = vst [vmem:[%s266 + $0x120] sm:$0xff] %v5380
          %5445 = vst [vmem:[%s266 + $0x128] sm:$0xff] %v5381
          %5446 = vst [vmem:[%s266 + $0x130] sm:$0xff] %v5382
          %5447 = vst [vmem:[%s266 + $0x138] sm:$0xff] %v5383
          %5448 = vst [vmem:[%s266 + $0x140] sm:$0xff] %v5384
          %5449 = vst [vmem:[%s266 + $0x148] sm:$0xff] %v5385
          %5450 = vst [vmem:[%s266 + $0x150] sm:$0xff] %v5386
          %5451 = vst [vmem:[%s266 + $0x158] sm:$0xff] %v5387
          %5452 = vst [vmem:[%s266 + $0x160] sm:$0xff] %v5388
          %5453 = vst [vmem:[%s266 + $0x168] sm:$0xff] %v5389
          %5454 = vst [vmem:[%s266 + $0x170] sm:$0xff] %v5390
          %5455 = vst [vmem:[%s266 + $0x178] sm:$0xff] %v5391
          %5456 = vst [vmem:[%s266 + $0x180] sm:$0xff] %v5392
          %5457 = vst [vmem:[%s266 + $0x188] sm:$0xff] %v5393
          %5458 = vst [vmem:[%s266 + $0x190] sm:$0xff] %v5394
          %5459 = vst [vmem:[%s266 + $0x198] sm:$0xff] %v5395
          %5460 = vst [vmem:[%s266 + $0x1a0] sm:$0xff] %v5396
          %5461 = vst [vmem:[%s266 + $0x1a8] sm:$0xff] %v5397
          %5462 = vst [vmem:[%s266 + $0x1b0] sm:$0xff] %v5398
          %5463 = vst [vmem:[%s266 + $0x1b8] sm:$0xff] %v5399
          %5464 = vst [vmem:[%s266 + $0x1c0] sm:$0xff] %v5400
          %5465 = vst [vmem:[%s266 + $0x1c8] sm:$0xff] %v5401
          %5466 = vst [vmem:[%s266 + $0x1d0] sm:$0xff] %v5402
          %5467 = vst [vmem:[%s266 + $0x1d8] sm:$0xff] %v5403
          %5468 = vst [vmem:[%s266 + $0x1e0] sm:$0xff] %v5404
          %5469 = vst [vmem:[%s266 + $0x1e8] sm:$0xff] %v5405
          %5470 = vst [vmem:[%s266 + $0x1f0] sm:$0xff] %v5406
          %5471 = vst [vmem:[%s266 + $0x1f8] sm:$0xff] %v5407
        $region68: #{net_forward.3} parent=55 // pred_fallthru
          _
      $region56: #{net_forward.3} parent=39 // pred_fallthru
        _
      %s5472 = smul.u32 64, %s24
      %p5473 = scmp.lt.s32.totalorder %s5472, 63
      %s5474 = scalar_select %p5473, %s5472, 63
      %s5475 = smul.addr %s5474, 8
      %s5476 = scalar_lea.vmem %s5, %s5475
      // Predicated region
      $region69: #{net_forward.3} parent=39 // pred_check
        %p5477 = pneg %p167
      $region70: #{net_forward.3} parent=39 // pred_check_branch
        %5479 = sbr.rel (%p5477) target = $region72
      $region71: #{net_forward.3} parent=39 // pred_region
        %s5480 = smul.u32 64, %s24
      $region72: #{net_forward.3} parent=39 // pred_fallthru
        _
      // Predicated region
      $region73: #{net_forward.3} parent=39 // pred_check
        %p5481 = pneg %p167
      $region74: #{net_forward.3} parent=39 // pred_check_branch
        %5483 = sbr.rel (%p5481) target = $region76
      $region75: #{net_forward.3} parent=39 // pred_region
        %s5484 = smul.u32 64, %s24
        %p5485 = scmp.lt.s32.totalorder %s5484, 63
        %s5486 = scalar_select %p5485, %s5484, 63
        %s5487 = smul.addr %s5486, 8
        %s5488 = scalar_lea.vmem %s5, %s5487
      $region76: #{net_forward.3} parent=39 // pred_fallthru
        _
    $region40: #{net_forward.3} parent=5 // pred_fallthru
      _
    %p5489 = scmp.le.s32.totalorder 2, %s13
    // Predicated region
    $region77: #{net_forward.3} parent=5 // pred_check
      %p5490 = pneg %p5489
    $region78: #{net_forward.3} parent=5 // pred_check_branch
      %5492 = sbr.rel (%p5490) target = $region80
    $region79: #{net_forward.3} parent=5 // pred_region
      %s5493 = ssub.s32 %s13, 2
    $region80: #{net_forward.3} parent=5 // pred_fallthru
      _
  $region6: #{net_forward.3} parent=0 // loop_footer
    %s17 = sadd.s32 1, %s13
  $region7: #{net_forward.3} parent=0 // loop_footer_branch
    %12 = sbr.rel target = $region3
  $region8: #{net_forward.3} parent=0 // loop_exit
    _

</llo_original>
